<compile_context>
chip_gen: v7x
topology: tpu7x:2x2x1
jax: 0.10.0
libtpu: 0.0.40
codegen_flags: <defaults>
</compile_context>

<pallas_src>
import functools
from typing import NamedTuple

import numpy as np
import jax
import jax.numpy as jnp
from jax.experimental import pallas as pl
from jax.experimental.pallas import tpu as pltpu


MXU_BF16 = True  # bf16 MXU operands, f32 accumulate. False -> exact f32 matmuls.


def _mxu_dtype():
    return jnp.bfloat16 if MXU_BF16 else jnp.float32


# ----------------------------------------------------------------------------
# Level geometry + tiny host-built constants (border masks, per-axis selectors)
# ----------------------------------------------------------------------------
class LevelGeom(NamedTuple):
    H: int
    W: int
    Hp: int   # H + 2 (1-pixel zero border, "same" padding)
    Wp: int   # W + 2
    Pp: int   # Hp * Wp (padded image, row-major flattened)
    L: int    # Pp rounded up to a multiple of 128 (lane-dense storage width)


def _round_up(x, m):
    return (x + m - 1) // m * m


def _geom(H, W, level):
    h, w = H >> level, W >> level
    hp, wp = h + 2, w + 2
    pp = hp * wp
    return LevelGeom(h, w, hp, wp, pp, _round_up(pp, 128))


def _border_mask(g):
    """(1, L) mask: 1.0 on interior pixels, 0.0 on the zero border / lane tail."""
    m2 = np.zeros((g.Hp, g.Wp), np.float32)
    m2[1:1 + g.H, 1:1 + g.W] = 1.0
    m = np.zeros((1, g.L), np.float32)
    m[0, :g.Pp] = m2.reshape(-1)
    return jnp.asarray(m)


def _pool_col_selectors(fine, coarse):
    """Two tiny (Wp_fine, Wp_coarse) 0/1 matrices picking columns 2j+1 / 2j+2 of
    a fine row into interior column j+1 of a coarse row (O(W) host work)."""
    A = np.zeros((fine.Wp, coarse.Wp), np.float32)
    B = np.zeros((fine.Wp, coarse.Wp), np.float32)
    for j in range(coarse.W):
        A[2 * j + 1, j + 1] = 1.0
        B[2 * j + 2, j + 1] = 1.0
    return jnp.asarray(A), jnp.asarray(B)


def _upsample_col_selector(coarse, fine):
    """Tiny (Wp_coarse, Wp_fine) 0/1 matrix: fine interior column j+1 <- coarse
    interior column j//2+1 (nearest-neighbour along W)."""
    U = np.zeros((coarse.Wp, fine.Wp), np.float32)
    for j in range(fine.W):
        U[j // 2 + 1, j + 1] = 1.0
    return jnp.asarray(U)


def _w3x3_to_mat(w, cin_pad=None):
    """PyTorch OIHW (Cout, Cin, 3, 3) -> (Cout, 9*Cin'), column order (tap, chan)."""
    cout, cin = w.shape[0], w.shape[1]
    if cin_pad is not None and cin_pad > cin:
        w = jnp.pad(w, ((0, 0), (0, cin_pad - cin), (0, 0), (0, 0)))
    return jnp.transpose(w, (0, 2, 3, 1)).reshape(cout, -1)


# ----------------------------------------------------------------------------
# In-kernel helpers
# ----------------------------------------------------------------------------
def _shift(x, off):
    """y[:, p] = x[:, (p + off) mod L].  The circular wrap only touches border /
    tail positions, which are re-masked to zero after every conv."""
    L = x.shape[1]
    s = (-off) % L
    if s == 0:
        return x
    return pltpu.roll(x, shift=s, axis=1)


def _conv3x3(groups, patches_ref, w_ref, b_ref, Wp):
    """groups: list of (C_i, L) f32 activations (conv-input channel groups).
    Writes the 9 shifted taps of every group straight into the VMEM patch
    scratch (row order = (group, tap, channel), matching the weight columns),
    then does ONE MXU matmul (bf16 operands if MXU_BF16, f32 accumulate)."""
    row = 0
    for x in groups:
        c = x.shape[0]
        # Share the +/-Wp row shifts across the three dx shifts (8 rolls/group).
        rows = {dy: (x if dy == 0 else _shift(x, dy * Wp)) for dy in (-1, 0, 1)}
        for dy in (-1, 0, 1):
            base = rows[dy]
            for dx in (-1, 0, 1):
                tap = base if dx == 0 else _shift(base, dx)
                patches_ref[pl.ds(row, c), :] = tap
                row += c
    w = w_ref[...]
    pv = patches_ref[pl.ds(0, row), :].astype(w.dtype)
    return jnp.dot(w, pv, preferred_element_type=jnp.float32) + b_ref[...]


def _build_upsample(cur_ref, usel_ref, up_ref, Wpf, Wpc, Hc):
    """Nearest-2x upsample coarse (C, Lc) -> fine padded-flat (C, Lf) VMEM
    scratch, one tiny (C, Wpc) @ (Wpc, Wpf) matmul per coarse interior row."""
    up_ref[...] = jnp.zeros_like(up_ref)          # keeps border rows / tail zero
    us = usel_ref[...]
    for ic in range(Hc):
        crow = cur_ref[:, pl.ds((ic + 1) * Wpc, Wpc)]
        frow = jnp.dot(crow, us, preferred_element_type=jnp.float32)
        up_ref[:, pl.ds((2 * ic + 1) * Wpf, Wpf)] = frow
        up_ref[:, pl.ds((2 * ic + 2) * Wpf, Wpf)] = frow


# ----------------------------------------------------------------------------
# Fused block kernels (one pallas_call per UNet block, per-batch grid)
# ----------------------------------------------------------------------------
def _encoder_kernel(x_ref, w1_ref, b1_ref, w2_ref, b2_ref, mask_ref,
                    ca_ref, cb_ref, skip_ref, pool_ref, patches_ref,
                    *, Wpf, Wpc, Hc):
    mask = mask_ref[...]
    h1 = jnp.maximum(_conv3x3([x_ref[...]], patches_ref, w1_ref, b1_ref, Wpf),
                     0.0) * mask
    h2 = jnp.maximum(_conv3x3([h1], patches_ref, w2_ref, b2_ref, Wpf),
                     0.0) * mask
    skip_ref[...] = h2
    # 2x2 / stride-2 max pool: per coarse interior row, max the two fine rows
    # (contiguous lane slices of the just-written skip) and column-decimate with
    # two tiny 0/1 selectors; pad rows / lane tail stay zero from the init.
    pool_ref[...] = jnp.zeros_like(pool_ref)
    ca = ca_ref[...]
    cb = cb_ref[...]
    for i in range(Hc):
        ra = skip_ref[:, pl.ds((2 * i + 1) * Wpf, Wpf)]
        rb = skip_ref[:, pl.ds((2 * i + 2) * Wpf, Wpf)]
        rm = jnp.maximum(ra, rb)
        crow = jnp.maximum(
            jnp.dot(rm, ca, preferred_element_type=jnp.float32),
            jnp.dot(rm, cb, preferred_element_type=jnp.float32))
        pool_ref[:, pl.ds((i + 1) * Wpc, Wpc)] = crow


def _base_kernel(x_ref, w1_ref, b1_ref, w2_ref, b2_ref, mask_ref, o_ref,
                 patches_ref, *, Wp):
    mask = mask_ref[...]
    h1 = jnp.maximum(_conv3x3([x_ref[...]], patches_ref, w1_ref, b1_ref, Wp),
                     0.0) * mask
    o_ref[...] = jnp.maximum(_conv3x3([h1], patches_ref, w2_ref, b2_ref, Wp),
                             0.0) * mask


def _decoder_kernel(cur_ref, skip_ref, usel_ref, w1_ref, b1_ref, w2_ref, b2_ref,
                    mask_ref, o_ref, up_ref, patches_ref, *, Wpf, Wpc, Hc):
    _build_upsample(cur_ref, usel_ref, up_ref, Wpf, Wpc, Hc)
    mask = mask_ref[...]
    # conv(concat([up, skip])) == one matmul over the stacked taps of both
    # groups with the weight's input-channel axis split the same way.
    h1 = jnp.maximum(
        _conv3x3([up_ref[...], skip_ref[...]], patches_ref, w1_ref, b1_ref, Wpf),
        0.0) * mask
    o_ref[...] = jnp.maximum(
        _conv3x3([h1], patches_ref, w2_ref, b2_ref, Wpf), 0.0) * mask


def _decoder_final_kernel(cur_ref, skip_ref, usel_ref, w1_ref, b1_ref, w2_ref,
                          b2_ref, wf_ref, bf_ref, mask_ref, o_ref, up_ref,
                          patches_ref, *, Wpf, Wpc, Hc):
    _build_upsample(cur_ref, usel_ref, up_ref, Wpf, Wpc, Hc)
    mask = mask_ref[...]
    h1 = jnp.maximum(
        _conv3x3([up_ref[...], skip_ref[...]], patches_ref, w1_ref, b1_ref, Wpf),
        0.0) * mask
    h2 = jnp.maximum(
        _conv3x3([h1], patches_ref, w2_ref, b2_ref, Wpf), 0.0) * mask
    # Final 1x1 conv fused into the epilogue (saves one pallas_call and one
    # full-resolution HBM round-trip).
    wf = wf_ref[...]
    o_ref[...] = (jnp.dot(wf, h2.astype(wf.dtype),
                          preferred_element_type=jnp.float32) + bf_ref[...])


_CPARAMS = pltpu.CompilerParams(dimension_semantics=("parallel",))


# ----------------------------------------------------------------------------
# pallas_call wrappers
# ----------------------------------------------------------------------------
def encoder_block(x, layer_params, mask, csel_a, csel_b, fine, coarse):
    (w1, b1), (w2, b2) = layer_params
    N, cin, Lf = x.shape
    F = w1.shape[0]
    Lc = coarse.L
    assert fine.H == 2 * coarse.H and fine.W == 2 * coarse.W
    dt = _mxu_dtype()
    w1m = _w3x3_to_mat(w1, cin_pad=cin).astype(dt)
    w2m = _w3x3_to_mat(w2).astype(dt)
    prows = 9 * max(cin, F)
    kernel = functools.partial(_encoder_kernel, Wpf=fine.Wp, Wpc=coarse.Wp,
                               Hc=coarse.H)
    return pl.pallas_call(
        kernel,
        out_shape=(jax.ShapeDtypeStruct((N, F, Lf), jnp.float32),
                   jax.ShapeDtypeStruct((N, F, Lc), jnp.float32)),
        grid_spec=pltpu.PrefetchScalarGridSpec(
            num_scalar_prefetch=0,
            grid=(N,),
            in_specs=[
                pl.BlockSpec((None, cin, Lf), lambda n: (n, 0, 0)),
                pl.BlockSpec(w1m.shape, lambda n: (0, 0)),
                pl.BlockSpec((F, 1), lambda n: (0, 0)),
                pl.BlockSpec(w2m.shape, lambda n: (0, 0)),
                pl.BlockSpec((F, 1), lambda n: (0, 0)),
                pl.BlockSpec((1, Lf), lambda n: (0, 0)),
                pl.BlockSpec(csel_a.shape, lambda n: (0, 0)),
                pl.BlockSpec(csel_b.shape, lambda n: (0, 0)),
            ],
            out_specs=[
                pl.BlockSpec((None, F, Lf), lambda n: (n, 0, 0)),
                pl.BlockSpec((None, F, Lc), lambda n: (n, 0, 0)),
            ],
            scratch_shapes=[pltpu.VMEM((prows, Lf), jnp.float32)],
        ),
        compiler_params=_CPARAMS,
    )(x, w1m, b1.reshape(F, 1), w2m, b2.reshape(F, 1), mask, csel_a, csel_b)


def base_block(x, layer_params, mask, geom):
    (w1, b1), (w2, b2) = layer_params
    N, cin, L = x.shape
    f_mid, f_out = w1.shape[0], w2.shape[0]
    dt = _mxu_dtype()
    w1m = _w3x3_to_mat(w1, cin_pad=cin).astype(dt)
    w2m = _w3x3_to_mat(w2).astype(dt)
    prows = 9 * max(cin, f_mid)
    kernel = functools.partial(_base_kernel, Wp=geom.Wp)
    return pl.pallas_call(
        kernel,
        out_shape=jax.ShapeDtypeStruct((N, f_out, L), jnp.float32),
        grid_spec=pltpu.PrefetchScalarGridSpec(
            num_scalar_prefetch=0,
            grid=(N,),
            in_specs=[
                pl.BlockSpec((None, cin, L), lambda n: (n, 0, 0)),
                pl.BlockSpec(w1m.shape, lambda n: (0, 0)),
                pl.BlockSpec((f_mid, 1), lambda n: (0, 0)),
                pl.BlockSpec(w2m.shape, lambda n: (0, 0)),
                pl.BlockSpec((f_out, 1), lambda n: (0, 0)),
                pl.BlockSpec((1, L), lambda n: (0, 0)),
            ],
            out_specs=pl.BlockSpec((None, f_out, L), lambda n: (n, 0, 0)),
            scratch_shapes=[pltpu.VMEM((prows, L), jnp.float32)],
        ),
        compiler_params=_CPARAMS,
    )(x, w1m, b1.reshape(f_mid, 1), w2m, b2.reshape(f_out, 1), mask)


def decoder_block(cur, skip, layer_params, mask, usel, fine, coarse,
                  final_params=None):
    (w1, b1), (w2, b2) = layer_params
    N, c_up, Lc = cur.shape
    _, c_skip, Lf = skip.shape
    f_mid, f_out = w1.shape[0], w2.shape[0]
    assert fine.H == 2 * coarse.H and fine.W == 2 * coarse.W
    dt = _mxu_dtype()
    w1m = jnp.concatenate([_w3x3_to_mat(w1[:, :c_up]),
                           _w3x3_to_mat(w1[:, c_up:])], axis=1).astype(dt)
    w2m = _w3x3_to_mat(w2).astype(dt)
    prows = 9 * max(c_up + c_skip, f_mid)

    in_specs = [
        pl.BlockSpec((None, c_up, Lc), lambda n: (n, 0, 0)),
        pl.BlockSpec((None, c_skip, Lf), lambda n: (n, 0, 0)),
        pl.BlockSpec(usel.shape, lambda n: (0, 0)),
        pl.BlockSpec(w1m.shape, lambda n: (0, 0)),
        pl.BlockSpec((f_mid, 1), lambda n: (0, 0)),
        pl.BlockSpec(w2m.shape, lambda n: (0, 0)),
        pl.BlockSpec((f_out, 1), lambda n: (0, 0)),
    ]
    args = [cur, skip, usel, w1m, b1.reshape(f_mid, 1), w2m,
            b2.reshape(f_out, 1)]

    if final_params is None:
        kernel = functools.partial(_decoder_kernel, Wpf=fine.Wp, Wpc=coarse.Wp,
                                   Hc=coarse.H)
        out_c = f_out
    else:
        wf, bf = final_params                  # (OutC, f_out, 1, 1), (OutC,)
        out_c = wf.shape[0]
        wfm = wf.reshape(out_c, f_out).astype(dt)
        in_specs += [pl.BlockSpec(wfm.shape, lambda n: (0, 0)),
                     pl.BlockSpec((out_c, 1), lambda n: (0, 0))]
        args += [wfm, bf.reshape(out_c, 1)]
        kernel = functools.partial(_decoder_final_kernel, Wpf=fine.Wp,
                                   Wpc=coarse.Wp, Hc=coarse.H)

    in_specs += [pl.BlockSpec((1, Lf), lambda n: (0, 0))]
    args += [mask]

    return pl.pallas_call(
        kernel,
        out_shape=jax.ShapeDtypeStruct((N, out_c, Lf), jnp.float32),
        grid_spec=pltpu.PrefetchScalarGridSpec(
            num_scalar_prefetch=0,
            grid=(N,),
            in_specs=in_specs,
            out_specs=pl.BlockSpec((None, out_c, Lf), lambda n: (n, 0, 0)),
            scratch_shapes=[pltpu.VMEM((c_up, Lf), jnp.float32),
                            pltpu.VMEM((prows, Lf), jnp.float32)],
        ),
        compiler_params=_CPARAMS,
    )(*args)


# ----------------------------------------------------------------------------
# UNet forward (matches the PyTorch module: Identity input/skip modules, concat
# merge order [upsampled, skip], no norm, ReLU activations, no final activation)
# ----------------------------------------------------------------------------
def unet_forward(x_nchw, params, depth):
    N, cin, H, W = x_nchw.shape
    assert H % (1 << depth) == 0 and W % (1 << depth) == 0

    geoms = [_geom(H, W, l) for l in range(depth + 1)]
    for g in geoms:
        assert g.L % 128 == 0 and g.L >= g.Pp
    masks = [_border_mask(g) for g in geoms]
    pool_csels = [_pool_col_selectors(geoms[l], geoms[l + 1]) for l in range(depth)]
    up_csels = [_upsample_col_selector(geoms[l + 1], geoms[l]) for l in range(depth)]

    # NCHW -> padded-flat (N, C, L0).  Channels padded to a multiple of 8 so the
    # in-kernel tap stacking stays sublane-aligned (padded-channel weights are
    # zero, so the math is unchanged).
    g0 = geoms[0]
    cin_pad = _round_up(max(cin, 8), 8)
    x = jnp.pad(x_nchw, ((0, 0), (0, cin_pad - cin), (1, 1), (1, 1)))
    x = x.reshape(N, cin_pad, g0.Pp)
    cur = jnp.pad(x, ((0, 0), (0, 0), (0, g0.L - g0.Pp)))

    skips = []
    for d in range(depth):
        ca, cb = pool_csels[d]
        skip_d, cur = encoder_block(cur, params["enc"][d], masks[d], ca, cb,
                                    geoms[d], geoms[d + 1])
        skips.append(skip_d)
    cur = base_block(cur, params["base"], masks[depth], geoms[depth])
    for d in reversed(range(1, depth)):
        cur = decoder_block(cur, skips[d], params["dec"][d], masks[d],
                            up_csels[d], geoms[d], geoms[d + 1])
    # Last decoder block with the final 1x1 conv fused into its epilogue.
    y = decoder_block(cur, skips[0], params["dec"][0], masks[0], up_csels[0],
                      geoms[0], geoms[1], final_params=params["final"])

    # padded-flat -> NCHW
    y = y[:, :, :g0.Pp].reshape(N, -1, g0.Hp, g0.Wp)[:, :, 1:H + 1, 1:W + 1]
    return y


# ----------------------------------------------------------------------------
# Deterministic parameter initialization (PyTorch OIHW layout)
# ----------------------------------------------------------------------------
def _init_conv(key, cout, cin, k):
    k_w, k_b = jax.random.split(key)
    fan_in = cin * k * k
    w = jax.random.normal(k_w, (cout, cin, k, k), jnp.float32) / np.sqrt(fan_in)
    b = 0.01 * jax.random.normal(k_b, (cout,), jnp.float32)
    return w, b


def make_params(key, depth, in_channels, out_channels, fmaps):
    keys = iter(jax.random.split(key, 4 * depth + 8))
    params = {"enc": [], "dec": []}
    for d in range(depth):
        f_in = in_channels if d == 0 else fmaps[d - 1]
        f_out = fmaps[d]
        params["enc"].append([_init_conv(next(keys), f_out, f_in, 3),
                              _init_conv(next(keys), f_out, f_out, 3)])
    f_in, f_mid = fmaps[depth - 1], fmaps[depth]
    params["base"] = [_init_conv(next(keys), f_mid, f_in, 3),
                      _init_conv(next(keys), f_in, f_mid, 3)]
    for d in range(depth):
        f_in = 2 * fmaps[d]
        f_mid = fmaps[d]
        f_out = f_mid if d == 0 else fmaps[d - 1]
        params["dec"].append([_init_conv(next(keys), f_mid, f_in, 3),
                              _init_conv(next(keys), f_out, f_mid, 3)])
    params["final"] = _init_conv(next(keys), out_channels, fmaps[0], 1)
    return params


# ----------------------------------------------------------------------------
if __name__ == "__main__":
    DEPTH = 2
    IN_C, OUT_C = 4, 3
    FMAPS = [8] * (DEPTH + 1)          # UNetSkeleton with constant fmaps
    N, H, W = 2, 16, 16                # divisible by prod(scale_factors) = 4

    root = jax.random.PRNGKey(0)
    k_param, k_x = jax.random.split(root)
    params = make_params(k_param, DEPTH, IN_C, OUT_C, FMAPS)
    x = jax.random.normal(k_x, (N, IN_C, H, W), jnp.float32)

    fwd = jax.jit(lambda inp: unet_forward(inp, params, DEPTH))
    out = fwd(x)
    jax.block_until_ready(out)
    assert out.shape == (N, OUT_C, H, W), out.shape
    assert out.dtype == jnp.float32
    assert bool(jnp.all(jnp.isfinite(out)))
    print("KERNEL_OK")
</pallas_src>

<mosaic_0001>
module attributes {stable_mosaic.version = 11 : i64} {
  func.func @_encoder_kernel(%arg0: i32, %arg1: memref<1x8x384xf32, #tpu.memory_space<vmem>>, %arg2: memref<8x72xbf16, #tpu.memory_space<vmem>>, %arg3: memref<8x1xf32, #tpu.memory_space<vmem>>, %arg4: memref<8x72xbf16, #tpu.memory_space<vmem>>, %arg5: memref<8x1xf32, #tpu.memory_space<vmem>>, %arg6: memref<1x384xf32, #tpu.memory_space<vmem>>, %arg7: memref<18x10xf32, #tpu.memory_space<vmem>>, %arg8: memref<18x10xf32, #tpu.memory_space<vmem>>, %arg9: memref<1x8x384xf32, #tpu.memory_space<vmem>>, %arg10: memref<1x8x128xf32, #tpu.memory_space<vmem>>, %arg11: memref<72x384xf32, #tpu.memory_space<vmem>>) attributes {dimension_semantics = [#tpu.dimension_semantics<parallel>], iteration_bounds = array<i64: 2>, scalar_prefetch = 0 : i64, scratch_operands = 1 : i64, tpu.core_type = #tpu.core_type<tc>, window_params = [{transform_indices = @transform_0, window_bounds = array<i64: 1, 8, 384>}, {pipeline_mode = #tpu.pipeline_mode<synchronous>, transform_indices = @transform_1, window_bounds = array<i64: 8, 72>}, {pipeline_mode = #tpu.pipeline_mode<synchronous>, transform_indices = @transform_2, window_bounds = array<i64: 8, 1>}, {pipeline_mode = #tpu.pipeline_mode<synchronous>, transform_indices = @transform_3, window_bounds = array<i64: 8, 72>}, {pipeline_mode = #tpu.pipeline_mode<synchronous>, transform_indices = @transform_4, window_bounds = array<i64: 8, 1>}, {pipeline_mode = #tpu.pipeline_mode<synchronous>, transform_indices = @transform_5, window_bounds = array<i64: 1, 384>}, {pipeline_mode = #tpu.pipeline_mode<synchronous>, transform_indices = @transform_6, window_bounds = array<i64: 18, 10>}, {pipeline_mode = #tpu.pipeline_mode<synchronous>, transform_indices = @transform_7, window_bounds = array<i64: 18, 10>}, {transform_indices = @transform_8, window_bounds = array<i64: 1, 8, 384>}, {transform_indices = @transform_9, window_bounds = array<i64: 1, 8, 128>}]} {
    %c0 = arith.constant 0 : index
    %c0_0 = arith.constant 0 : index
    %0 = vector.load %arg6[%c0, %c0_0] : memref<1x384xf32, #tpu.memory_space<vmem>>, vector<1x384xf32>
    %c0_1 = arith.constant 0 : index
    %c0_2 = arith.constant 0 : index
    %c0_3 = arith.constant 0 : index
    %1 = vector.load %arg1[%c0_1, %c0_2, %c0_3] : memref<1x8x384xf32, #tpu.memory_space<vmem>>, vector<1x8x384xf32>
    %2 = vector.shape_cast %1 : vector<1x8x384xf32> to vector<8x384xf32>
    %c18_i32 = arith.constant 18 : i32
    %3 = tpu.dynamic_rotate %2 by %c18_i32 dim 1 : vector<8x384xf32>, i32 -> vector<8x384xf32>
    %c366_i32 = arith.constant 366 : i32
    %4 = tpu.dynamic_rotate %2 by %c366_i32 dim 1 : vector<8x384xf32>, i32 -> vector<8x384xf32>
    %c1_i32 = arith.constant 1 : i32
    %5 = tpu.dynamic_rotate %3 by %c1_i32 dim 1 : vector<8x384xf32>, i32 -> vector<8x384xf32>
    %c0_4 = arith.constant 0 : index
    %c0_5 = arith.constant 0 : index
    %6 = vector.load %arg11[%c0_4, %c0_5] : memref<72x384xf32, #tpu.memory_space<vmem>>, vector<8x384xf32>
    tpu.vector_store %arg11[%c0_4, %c0_5], %5 {strides = array<i32>} : memref<72x384xf32, #tpu.memory_space<vmem>>, vector<8x384xf32>,
    %c8 = arith.constant 8 : index
    %c0_6 = arith.constant 0 : index
    %7 = vector.load %arg11[%c8, %c0_6] : memref<72x384xf32, #tpu.memory_space<vmem>>, vector<8x384xf32>
    tpu.vector_store %arg11[%c8, %c0_6], %3 {strides = array<i32>} : memref<72x384xf32, #tpu.memory_space<vmem>>, vector<8x384xf32>,
    %c383_i32 = arith.constant 383 : i32
    %8 = tpu.dynamic_rotate %3 by %c383_i32 dim 1 : vector<8x384xf32>, i32 -> vector<8x384xf32>
    %c16 = arith.constant 16 : index
    %c0_7 = arith.constant 0 : index
    %9 = vector.load %arg11[%c16, %c0_7] : memref<72x384xf32, #tpu.memory_space<vmem>>, vector<8x384xf32>
    tpu.vector_store %arg11[%c16, %c0_7], %8 {strides = array<i32>} : memref<72x384xf32, #tpu.memory_space<vmem>>, vector<8x384xf32>,
    %c1_i32_8 = arith.constant 1 : i32
    %10 = tpu.dynamic_rotate %2 by %c1_i32_8 dim 1 : vector<8x384xf32>, i32 -> vector<8x384xf32>
    %c24 = arith.constant 24 : index
    %c0_9 = arith.constant 0 : index
    %11 = vector.load %arg11[%c24, %c0_9] : memref<72x384xf32, #tpu.memory_space<vmem>>, vector<8x384xf32>
    tpu.vector_store %arg11[%c24, %c0_9], %10 {strides = array<i32>} : memref<72x384xf32, #tpu.memory_space<vmem>>, vector<8x384xf32>,
    %c32 = arith.constant 32 : index
    %c0_10 = arith.constant 0 : index
    %12 = vector.load %arg11[%c32, %c0_10] : memref<72x384xf32, #tpu.memory_space<vmem>>, vector<8x384xf32>
    tpu.vector_store %arg11[%c32, %c0_10], %2 {strides = array<i32>} : memref<72x384xf32, #tpu.memory_space<vmem>>, vector<8x384xf32>,
    %c383_i32_11 = arith.constant 383 : i32
    %13 = tpu.dynamic_rotate %2 by %c383_i32_11 dim 1 : vector<8x384xf32>, i32 -> vector<8x384xf32>
    %c40 = arith.constant 40 : index
    %c0_12 = arith.constant 0 : index
    %14 = vector.load %arg11[%c40, %c0_12] : memref<72x384xf32, #tpu.memory_space<vmem>>, vector<8x384xf32>
    tpu.vector_store %arg11[%c40, %c0_12], %13 {strides = array<i32>} : memref<72x384xf32, #tpu.memory_space<vmem>>, vector<8x384xf32>,
    %c1_i32_13 = arith.constant 1 : i32
    %15 = tpu.dynamic_rotate %4 by %c1_i32_13 dim 1 : vector<8x384xf32>, i32 -> vector<8x384xf32>
    %c48 = arith.constant 48 : index
    %c0_14 = arith.constant 0 : index
    %16 = vector.load %arg11[%c48, %c0_14] : memref<72x384xf32, #tpu.memory_space<vmem>>, vector<8x384xf32>
    tpu.vector_store %arg11[%c48, %c0_14], %15 {strides = array<i32>} : memref<72x384xf32, #tpu.memory_space<vmem>>, vector<8x384xf32>,
    %c56 = arith.constant 56 : index
    %c0_15 = arith.constant 0 : index
    %17 = vector.load %arg11[%c56, %c0_15] : memref<72x384xf32, #tpu.memory_space<vmem>>, vector<8x384xf32>
    tpu.vector_store %arg11[%c56, %c0_15], %4 {strides = array<i32>} : memref<72x384xf32, #tpu.memory_space<vmem>>, vector<8x384xf32>,
    %c383_i32_16 = arith.constant 383 : i32
    %18 = tpu.dynamic_rotate %4 by %c383_i32_16 dim 1 : vector<8x384xf32>, i32 -> vector<8x384xf32>
    %c64 = arith.constant 64 : index
    %c0_17 = arith.constant 0 : index
    %19 = vector.load %arg11[%c64, %c0_17] : memref<72x384xf32, #tpu.memory_space<vmem>>, vector<8x384xf32>
    tpu.vector_store %arg11[%c64, %c0_17], %18 {strides = array<i32>} : memref<72x384xf32, #tpu.memory_space<vmem>>, vector<8x384xf32>,
    %c0_18 = arith.constant 0 : index
    %c0_19 = arith.constant 0 : index
    %20 = vector.load %arg2[%c0_18, %c0_19] : memref<8x72xbf16, #tpu.memory_space<vmem>>, vector<8x72xbf16>
    %c0_20 = arith.constant 0 : index
    %c0_21 = arith.constant 0 : index
    %21 = vector.load %arg11[%c0_20, %c0_21] : memref<72x384xf32, #tpu.memory_space<vmem>>, vector<72x384xf32>
    %22 = arith.truncf %21 : vector<72x384xf32> to vector<72x384xbf16>
    %cst = arith.constant dense<0.000000e+00> : vector<8x384xf32>
    %23 = tpu.matmul %20, %22, %cst {dimension_numbers = #tpu.dot_dimension_numbers<[1], [0], [0], [1], [0, 0, 1, 1], [], []>} : vector<8x72xbf16>, vector<72x384xbf16>, vector<8x384xf32> -> vector<8x384xf32>
    %c0_22 = arith.constant 0 : index
    %c0_23 = arith.constant 0 : index
    %24 = vector.load %arg3[%c0_22, %c0_23] : memref<8x1xf32, #tpu.memory_space<vmem>>, vector<8x1xf32>
    %25 = vector.broadcast %24 : vector<8x1xf32> to vector<8x384xf32>
    %26 = arith.addf %23, %25 : vector<8x384xf32>
    %cst_24 = arith.constant 0.000000e+00 : f32
    %27 = vector.broadcast %cst_24 : f32 to vector<8x384xf32>
    %28 = arith.maximumf %26, %27 : vector<8x384xf32>
    %29 = vector.broadcast %0 : vector<1x384xf32> to vector<8x384xf32>
    %30 = arith.mulf %28, %29 : vector<8x384xf32>
    %c18_i32_25 = arith.constant 18 : i32
    %31 = tpu.dynamic_rotate %30 by %c18_i32_25 dim 1 : vector<8x384xf32>, i32 -> vector<8x384xf32>
    %c366_i32_26 = arith.constant 366 : i32
    %32 = tpu.dynamic_rotate %30 by %c366_i32_26 dim 1 : vector<8x384xf32>, i32 -> vector<8x384xf32>
    %c1_i32_27 = arith.constant 1 : i32
    %33 = tpu.dynamic_rotate %31 by %c1_i32_27 dim 1 : vector<8x384xf32>, i32 -> vector<8x384xf32>
    %c0_28 = arith.constant 0 : index
    %c0_29 = arith.constant 0 : index
    %34 = vector.load %arg11[%c0_28, %c0_29] : memref<72x384xf32, #tpu.memory_space<vmem>>, vector<8x384xf32>
    tpu.vector_store %arg11[%c0_28, %c0_29], %33 {strides = array<i32>} : memref<72x384xf32, #tpu.memory_space<vmem>>, vector<8x384xf32>,
    %c8_30 = arith.constant 8 : index
    %c0_31 = arith.constant 0 : index
    %35 = vector.load %arg11[%c8_30, %c0_31] : memref<72x384xf32, #tpu.memory_space<vmem>>, vector<8x384xf32>
    tpu.vector_store %arg11[%c8_30, %c0_31], %31 {strides = array<i32>} : memref<72x384xf32, #tpu.memory_space<vmem>>, vector<8x384xf32>,
    %c383_i32_32 = arith.constant 383 : i32
    %36 = tpu.dynamic_rotate %31 by %c383_i32_32 dim 1 : vector<8x384xf32>, i32 -> vector<8x384xf32>
    %c16_33 = arith.constant 16 : index
    %c0_34 = arith.constant 0 : index
    %37 = vector.load %arg11[%c16_33, %c0_34] : memref<72x384xf32, #tpu.memory_space<vmem>>, vector<8x384xf32>
    tpu.vector_store %arg11[%c16_33, %c0_34], %36 {strides = array<i32>} : memref<72x384xf32, #tpu.memory_space<vmem>>, vector<8x384xf32>,
    %c1_i32_35 = arith.constant 1 : i32
    %38 = tpu.dynamic_rotate %30 by %c1_i32_35 dim 1 : vector<8x384xf32>, i32 -> vector<8x384xf32>
    %c24_36 = arith.constant 24 : index
    %c0_37 = arith.constant 0 : index
    %39 = vector.load %arg11[%c24_36, %c0_37] : memref<72x384xf32, #tpu.memory_space<vmem>>, vector<8x384xf32>
    tpu.vector_store %arg11[%c24_36, %c0_37], %38 {strides = array<i32>} : memref<72x384xf32, #tpu.memory_space<vmem>>, vector<8x384xf32>,
    %c32_38 = arith.constant 32 : index
    %c0_39 = arith.constant 0 : index
    %40 = vector.load %arg11[%c32_38, %c0_39] : memref<72x384xf32, #tpu.memory_space<vmem>>, vector<8x384xf32>
    tpu.vector_store %arg11[%c32_38, %c0_39], %30 {strides = array<i32>} : memref<72x384xf32, #tpu.memory_space<vmem>>, vector<8x384xf32>,
    %c383_i32_40 = arith.constant 383 : i32
    %41 = tpu.dynamic_rotate %30 by %c383_i32_40 dim 1 : vector<8x384xf32>, i32 -> vector<8x384xf32>
    %c40_41 = arith.constant 40 : index
    %c0_42 = arith.constant 0 : index
    %42 = vector.load %arg11[%c40_41, %c0_42] : memref<72x384xf32, #tpu.memory_space<vmem>>, vector<8x384xf32>
    tpu.vector_store %arg11[%c40_41, %c0_42], %41 {strides = array<i32>} : memref<72x384xf32, #tpu.memory_space<vmem>>, vector<8x384xf32>,
    %c1_i32_43 = arith.constant 1 : i32
    %43 = tpu.dynamic_rotate %32 by %c1_i32_43 dim 1 : vector<8x384xf32>, i32 -> vector<8x384xf32>
    %c48_44 = arith.constant 48 : index
    %c0_45 = arith.constant 0 : index
    %44 = vector.load %arg11[%c48_44, %c0_45] : memref<72x384xf32, #tpu.memory_space<vmem>>, vector<8x384xf32>
    tpu.vector_store %arg11[%c48_44, %c0_45], %43 {strides = array<i32>} : memref<72x384xf32, #tpu.memory_space<vmem>>, vector<8x384xf32>,
    %c56_46 = arith.constant 56 : index
    %c0_47 = arith.constant 0 : index
    %45 = vector.load %arg11[%c56_46, %c0_47] : memref<72x384xf32, #tpu.memory_space<vmem>>, vector<8x384xf32>
    tpu.vector_store %arg11[%c56_46, %c0_47], %32 {strides = array<i32>} : memref<72x384xf32, #tpu.memory_space<vmem>>, vector<8x384xf32>,
    %c383_i32_48 = arith.constant 383 : i32
    %46 = tpu.dynamic_rotate %32 by %c383_i32_48 dim 1 : vector<8x384xf32>, i32 -> vector<8x384xf32>
    %c64_49 = arith.constant 64 : index
    %c0_50 = arith.constant 0 : index
    %47 = vector.load %arg11[%c64_49, %c0_50] : memref<72x384xf32, #tpu.memory_space<vmem>>, vector<8x384xf32>
    tpu.vector_store %arg11[%c64_49, %c0_50], %46 {strides = array<i32>} : memref<72x384xf32, #tpu.memory_space<vmem>>, vector<8x384xf32>,
    %c0_51 = arith.constant 0 : index
    %c0_52 = arith.constant 0 : index
    %48 = vector.load %arg4[%c0_51, %c0_52] : memref<8x72xbf16, #tpu.memory_space<vmem>>, vector<8x72xbf16>
    %c0_53 = arith.constant 0 : index
    %c0_54 = arith.constant 0 : index
    %49 = vector.load %arg11[%c0_53, %c0_54] : memref<72x384xf32, #tpu.memory_space<vmem>>, vector<72x384xf32>
    %50 = arith.truncf %49 : vector<72x384xf32> to vector<72x384xbf16>
    %cst_55 = arith.constant dense<0.000000e+00> : vector<8x384xf32>
    %51 = tpu.matmul %48, %50, %cst_55 {dimension_numbers = #tpu.dot_dimension_numbers<[1], [0], [0], [1], [0, 0, 1, 1], [], []>} : vector<8x72xbf16>, vector<72x384xbf16>, vector<8x384xf32> -> vector<8x384xf32>
    %c0_56 = arith.constant 0 : index
    %c0_57 = arith.constant 0 : index
    %52 = vector.load %arg5[%c0_56, %c0_57] : memref<8x1xf32, #tpu.memory_space<vmem>>, vector<8x1xf32>
    %53 = vector.broadcast %52 : vector<8x1xf32> to vector<8x384xf32>
    %54 = arith.addf %51, %53 : vector<8x384xf32>
    %cst_58 = arith.constant 0.000000e+00 : f32
    %55 = vector.broadcast %cst_58 : f32 to vector<8x384xf32>
    %56 = arith.maximumf %54, %55 : vector<8x384xf32>
    %57 = vector.broadcast %0 : vector<1x384xf32> to vector<8x384xf32>
    %58 = arith.mulf %56, %57 : vector<8x384xf32>
    %c0_59 = arith.constant 0 : index
    %c0_60 = arith.constant 0 : index
    %c0_61 = arith.constant 0 : index
    %59 = vector.load %arg9[%c0_59, %c0_60, %c0_61] : memref<1x8x384xf32, #tpu.memory_space<vmem>>, vector<1x8x384xf32>
    %60 = vector.shape_cast %59 : vector<1x8x384xf32> to vector<8x384xf32>
    %61 = vector.shape_cast %58 : vector<8x384xf32> to vector<1x8x384xf32>
    tpu.vector_store %arg9[%c0_59, %c0_60, %c0_61], %61 {strides = array<i32>} : memref<1x8x384xf32, #tpu.memory_space<vmem>>, vector<1x8x384xf32>,
    %cst_62 = arith.constant 0.000000e+00 : f32
    %62 = vector.broadcast %cst_62 : f32 to vector<8x128xf32>
    %c0_63 = arith.constant 0 : index
    %c0_64 = arith.constant 0 : index
    %c0_65 = arith.constant 0 : index
    %63 = vector.load %arg10[%c0_63, %c0_64, %c0_65] : memref<1x8x128xf32, #tpu.memory_space<vmem>>, vector<1x8x128xf32>
    %64 = vector.shape_cast %63 : vector<1x8x128xf32> to vector<8x128xf32>
    %65 = vector.shape_cast %62 : vector<8x128xf32> to vector<1x8x128xf32>
    tpu.vector_store %arg10[%c0_63, %c0_64, %c0_65], %65 {strides = array<i32>} : memref<1x8x128xf32, #tpu.memory_space<vmem>>, vector<1x8x128xf32>,
    %c0_66 = arith.constant 0 : index
    %c0_67 = arith.constant 0 : index
    %66 = vector.load %arg7[%c0_66, %c0_67] : memref<18x10xf32, #tpu.memory_space<vmem>>, vector<18x10xf32>
    %c0_68 = arith.constant 0 : index
    %c0_69 = arith.constant 0 : index
    %67 = vector.load %arg8[%c0_68, %c0_69] : memref<18x10xf32, #tpu.memory_space<vmem>>, vector<18x10xf32>
    %c0_70 = arith.constant 0 : index
    %c0_71 = arith.constant 0 : index
    %c18 = arith.constant 18 : index
    %68 = vector.load %arg9[%c0_70, %c0_71, %c18] : memref<1x8x384xf32, #tpu.memory_space<vmem>>, vector<1x8x18xf32>
    %69 = vector.shape_cast %68 : vector<1x8x18xf32> to vector<8x18xf32>
    %c0_72 = arith.constant 0 : index
    %c0_73 = arith.constant 0 : index
    %c36 = arith.constant 36 : index
    %70 = vector.load %arg9[%c0_72, %c0_73, %c36] : memref<1x8x384xf32, #tpu.memory_space<vmem>>, vector<1x8x18xf32>
    %71 = vector.shape_cast %70 : vector<1x8x18xf32> to vector<8x18xf32>
    %72 = arith.maximumf %69, %71 : vector<8x18xf32>
    %cst_74 = arith.constant dense<0.000000e+00> : vector<8x10xf32>
    %73 = tpu.matmul %72, %66, %cst_74 {dimension_numbers = #tpu.dot_dimension_numbers<[1], [0], [0], [1], [0, 0, 1, 1], [], []>} : vector<8x18xf32>, vector<18x10xf32>, vector<8x10xf32> -> vector<8x10xf32>
    %cst_75 = arith.constant dense<0.000000e+00> : vector<8x10xf32>
    %74 = tpu.matmul %72, %67, %cst_75 {dimension_numbers = #tpu.dot_dimension_numbers<[1], [0], [0], [1], [0, 0, 1, 1], [], []>} : vector<8x18xf32>, vector<18x10xf32>, vector<8x10xf32> -> vector<8x10xf32>
    %75 = arith.maximumf %73, %74 : vector<8x10xf32>
    %c0_76 = arith.constant 0 : index
    %c0_77 = arith.constant 0 : index
    %c10 = arith.constant 10 : index
    %76 = vector.load %arg10[%c0_76, %c0_77, %c10] : memref<1x8x128xf32, #tpu.memory_space<vmem>>, vector<1x8x10xf32>
    %77 = vector.shape_cast %76 : vector<1x8x10xf32> to vector<8x10xf32>
    %78 = vector.shape_cast %75 : vector<8x10xf32> to vector<1x8x10xf32>
    tpu.vector_store %arg10[%c0_76, %c0_77, %c10], %78 {strides = array<i32>} : memref<1x8x128xf32, #tpu.memory_space<vmem>>, vector<1x8x10xf32>,
    %c0_78 = arith.constant 0 : index
    %c0_79 = arith.constant 0 : index
    %c54 = arith.constant 54 : index
    %79 = vector.load %arg9[%c0_78, %c0_79, %c54] : memref<1x8x384xf32, #tpu.memory_space<vmem>>, vector<1x8x18xf32>
    %80 = vector.shape_cast %79 : vector<1x8x18xf32> to vector<8x18xf32>
    %c0_80 = arith.constant 0 : index
    %c0_81 = arith.constant 0 : index
    %c72 = arith.constant 72 : index
    %81 = vector.load %arg9[%c0_80, %c0_81, %c72] : memref<1x8x384xf32, #tpu.memory_space<vmem>>, vector<1x8x18xf32>
    %82 = vector.shape_cast %81 : vector<1x8x18xf32> to vector<8x18xf32>
    %83 = arith.maximumf %80, %82 : vector<8x18xf32>
    %cst_82 = arith.constant dense<0.000000e+00> : vector<8x10xf32>
    %84 = tpu.matmul %83, %66, %cst_82 {dimension_numbers = #tpu.dot_dimension_numbers<[1], [0], [0], [1], [0, 0, 1, 1], [], []>} : vector<8x18xf32>, vector<18x10xf32>, vector<8x10xf32> -> vector<8x10xf32>
    %cst_83 = arith.constant dense<0.000000e+00> : vector<8x10xf32>
    %85 = tpu.matmul %83, %67, %cst_83 {dimension_numbers = #tpu.dot_dimension_numbers<[1], [0], [0], [1], [0, 0, 1, 1], [], []>} : vector<8x18xf32>, vector<18x10xf32>, vector<8x10xf32> -> vector<8x10xf32>
    %86 = arith.maximumf %84, %85 : vector<8x10xf32>
    %c0_84 = arith.constant 0 : index
    %c0_85 = arith.constant 0 : index
    %c20 = arith.constant 20 : index
    %87 = vector.load %arg10[%c0_84, %c0_85, %c20] : memref<1x8x128xf32, #tpu.memory_space<vmem>>, vector<1x8x10xf32>
    %88 = vector.shape_cast %87 : vector<1x8x10xf32> to vector<8x10xf32>
    %89 = vector.shape_cast %86 : vector<8x10xf32> to vector<1x8x10xf32>
    tpu.vector_store %arg10[%c0_84, %c0_85, %c20], %89 {strides = array<i32>} : memref<1x8x128xf32, #tpu.memory_space<vmem>>, vector<1x8x10xf32>,
    %c0_86 = arith.constant 0 : index
    %c0_87 = arith.constant 0 : index
    %c90 = arith.constant 90 : index
    %90 = vector.load %arg9[%c0_86, %c0_87, %c90] : memref<1x8x384xf32, #tpu.memory_space<vmem>>, vector<1x8x18xf32>
    %91 = vector.shape_cast %90 : vector<1x8x18xf32> to vector<8x18xf32>
    %c0_88 = arith.constant 0 : index
    %c0_89 = arith.constant 0 : index
    %c108 = arith.constant 108 : index
    %92 = vector.load %arg9[%c0_88, %c0_89, %c108] : memref<1x8x384xf32, #tpu.memory_space<vmem>>, vector<1x8x18xf32>
    %93 = vector.shape_cast %92 : vector<1x8x18xf32> to vector<8x18xf32>
    %94 = arith.maximumf %91, %93 : vector<8x18xf32>
    %cst_90 = arith.constant dense<0.000000e+00> : vector<8x10xf32>
    %95 = tpu.matmul %94, %66, %cst_90 {dimension_numbers = #tpu.dot_dimension_numbers<[1], [0], [0], [1], [0, 0, 1, 1], [], []>} : vector<8x18xf32>, vector<18x10xf32>, vector<8x10xf32> -> vector<8x10xf32>
    %cst_91 = arith.constant dense<0.000000e+00> : vector<8x10xf32>
    %96 = tpu.matmul %94, %67, %cst_91 {dimension_numbers = #tpu.dot_dimension_numbers<[1], [0], [0], [1], [0, 0, 1, 1], [], []>} : vector<8x18xf32>, vector<18x10xf32>, vector<8x10xf32> -> vector<8x10xf32>
    %97 = arith.maximumf %95, %96 : vector<8x10xf32>
    %c0_92 = arith.constant 0 : index
    %c0_93 = arith.constant 0 : index
    %c30 = arith.constant 30 : index
    %98 = vector.load %arg10[%c0_92, %c0_93, %c30] : memref<1x8x128xf32, #tpu.memory_space<vmem>>, vector<1x8x10xf32>
    %99 = vector.shape_cast %98 : vector<1x8x10xf32> to vector<8x10xf32>
    %100 = vector.shape_cast %97 : vector<8x10xf32> to vector<1x8x10xf32>
    tpu.vector_store %arg10[%c0_92, %c0_93, %c30], %100 {strides = array<i32>} : memref<1x8x128xf32, #tpu.memory_space<vmem>>, vector<1x8x10xf32>,
    %c0_94 = arith.constant 0 : index
    %c0_95 = arith.constant 0 : index
    %c126 = arith.constant 126 : index
    %101 = vector.load %arg9[%c0_94, %c0_95, %c126] : memref<1x8x384xf32, #tpu.memory_space<vmem>>, vector<1x8x18xf32>
    %102 = vector.shape_cast %101 : vector<1x8x18xf32> to vector<8x18xf32>
    %c0_96 = arith.constant 0 : index
    %c0_97 = arith.constant 0 : index
    %c144 = arith.constant 144 : index
    %103 = vector.load %arg9[%c0_96, %c0_97, %c144] : memref<1x8x384xf32, #tpu.memory_space<vmem>>, vector<1x8x18xf32>
    %104 = vector.shape_cast %103 : vector<1x8x18xf32> to vector<8x18xf32>
    %105 = arith.maximumf %102, %104 : vector<8x18xf32>
    %cst_98 = arith.constant dense<0.000000e+00> : vector<8x10xf32>
    %106 = tpu.matmul %105, %66, %cst_98 {dimension_numbers = #tpu.dot_dimension_numbers<[1], [0], [0], [1], [0, 0, 1, 1], [], []>} : vector<8x18xf32>, vector<18x10xf32>, vector<8x10xf32> -> vector<8x10xf32>
    %cst_99 = arith.constant dense<0.000000e+00> : vector<8x10xf32>
    %107 = tpu.matmul %105, %67, %cst_99 {dimension_numbers = #tpu.dot_dimension_numbers<[1], [0], [0], [1], [0, 0, 1, 1], [], []>} : vector<8x18xf32>, vector<18x10xf32>, vector<8x10xf32> -> vector<8x10xf32>
    %108 = arith.maximumf %106, %107 : vector<8x10xf32>
    %c0_100 = arith.constant 0 : index
    %c0_101 = arith.constant 0 : index
    %c40_102 = arith.constant 40 : index
    %109 = vector.load %arg10[%c0_100, %c0_101, %c40_102] : memref<1x8x128xf32, #tpu.memory_space<vmem>>, vector<1x8x10xf32>
    %110 = vector.shape_cast %109 : vector<1x8x10xf32> to vector<8x10xf32>
    %111 = vector.shape_cast %108 : vector<8x10xf32> to vector<1x8x10xf32>
    tpu.vector_store %arg10[%c0_100, %c0_101, %c40_102], %111 {strides = array<i32>} : memref<1x8x128xf32, #tpu.memory_space<vmem>>, vector<1x8x10xf32>,
    %c0_103 = arith.constant 0 : index
    %c0_104 = arith.constant 0 : index
    %c162 = arith.constant 162 : index
    %112 = vector.load %arg9[%c0_103, %c0_104, %c162] : memref<1x8x384xf32, #tpu.memory_space<vmem>>, vector<1x8x18xf32>
    %113 = vector.shape_cast %112 : vector<1x8x18xf32> to vector<8x18xf32>
    %c0_105 = arith.constant 0 : index
    %c0_106 = arith.constant 0 : index
    %c180 = arith.constant 180 : index
    %114 = vector.load %arg9[%c0_105, %c0_106, %c180] : memref<1x8x384xf32, #tpu.memory_space<vmem>>, vector<1x8x18xf32>
    %115 = vector.shape_cast %114 : vector<1x8x18xf32> to vector<8x18xf32>
    %116 = arith.maximumf %113, %115 : vector<8x18xf32>
    %cst_107 = arith.constant dense<0.000000e+00> : vector<8x10xf32>
    %117 = tpu.matmul %116, %66, %cst_107 {dimension_numbers = #tpu.dot_dimension_numbers<[1], [0], [0], [1], [0, 0, 1, 1], [], []>} : vector<8x18xf32>, vector<18x10xf32>, vector<8x10xf32> -> vector<8x10xf32>
    %cst_108 = arith.constant dense<0.000000e+00> : vector<8x10xf32>
    %118 = tpu.matmul %116, %67, %cst_108 {dimension_numbers = #tpu.dot_dimension_numbers<[1], [0], [0], [1], [0, 0, 1, 1], [], []>} : vector<8x18xf32>, vector<18x10xf32>, vector<8x10xf32> -> vector<8x10xf32>
    %119 = arith.maximumf %117, %118 : vector<8x10xf32>
    %c0_109 = arith.constant 0 : index
    %c0_110 = arith.constant 0 : index
    %c50 = arith.constant 50 : index
    %120 = vector.load %arg10[%c0_109, %c0_110, %c50] : memref<1x8x128xf32, #tpu.memory_space<vmem>>, vector<1x8x10xf32>
    %121 = vector.shape_cast %120 : vector<1x8x10xf32> to vector<8x10xf32>
    %122 = vector.shape_cast %119 : vector<8x10xf32> to vector<1x8x10xf32>
    tpu.vector_store %arg10[%c0_109, %c0_110, %c50], %122 {strides = array<i32>} : memref<1x8x128xf32, #tpu.memory_space<vmem>>, vector<1x8x10xf32>,
    %c0_111 = arith.constant 0 : index
    %c0_112 = arith.constant 0 : index
    %c198 = arith.constant 198 : index
    %123 = vector.load %arg9[%c0_111, %c0_112, %c198] : memref<1x8x384xf32, #tpu.memory_space<vmem>>, vector<1x8x18xf32>
    %124 = vector.shape_cast %123 : vector<1x8x18xf32> to vector<8x18xf32>
    %c0_113 = arith.constant 0 : index
    %c0_114 = arith.constant 0 : index
    %c216 = arith.constant 216 : index
    %125 = vector.load %arg9[%c0_113, %c0_114, %c216] : memref<1x8x384xf32, #tpu.memory_space<vmem>>, vector<1x8x18xf32>
    %126 = vector.shape_cast %125 : vector<1x8x18xf32> to vector<8x18xf32>
    %127 = arith.maximumf %124, %126 : vector<8x18xf32>
    %cst_115 = arith.constant dense<0.000000e+00> : vector<8x10xf32>
    %128 = tpu.matmul %127, %66, %cst_115 {dimension_numbers = #tpu.dot_dimension_numbers<[1], [0], [0], [1], [0, 0, 1, 1], [], []>} : vector<8x18xf32>, vector<18x10xf32>, vector<8x10xf32> -> vector<8x10xf32>
    %cst_116 = arith.constant dense<0.000000e+00> : vector<8x10xf32>
    %129 = tpu.matmul %127, %67, %cst_116 {dimension_numbers = #tpu.dot_dimension_numbers<[1], [0], [0], [1], [0, 0, 1, 1], [], []>} : vector<8x18xf32>, vector<18x10xf32>, vector<8x10xf32> -> vector<8x10xf32>
    %130 = arith.maximumf %128, %129 : vector<8x10xf32>
    %c0_117 = arith.constant 0 : index
    %c0_118 = arith.constant 0 : index
    %c60 = arith.constant 60 : index
    %131 = vector.load %arg10[%c0_117, %c0_118, %c60] : memref<1x8x128xf32, #tpu.memory_space<vmem>>, vector<1x8x10xf32>
    %132 = vector.shape_cast %131 : vector<1x8x10xf32> to vector<8x10xf32>
    %133 = vector.shape_cast %130 : vector<8x10xf32> to vector<1x8x10xf32>
    tpu.vector_store %arg10[%c0_117, %c0_118, %c60], %133 {strides = array<i32>} : memref<1x8x128xf32, #tpu.memory_space<vmem>>, vector<1x8x10xf32>,
    %c0_119 = arith.constant 0 : index
    %c0_120 = arith.constant 0 : index
    %c234 = arith.constant 234 : index
    %134 = vector.load %arg9[%c0_119, %c0_120, %c234] : memref<1x8x384xf32, #tpu.memory_space<vmem>>, vector<1x8x18xf32>
    %135 = vector.shape_cast %134 : vector<1x8x18xf32> to vector<8x18xf32>
    %c0_121 = arith.constant 0 : index
    %c0_122 = arith.constant 0 : index
    %c252 = arith.constant 252 : index
    %136 = vector.load %arg9[%c0_121, %c0_122, %c252] : memref<1x8x384xf32, #tpu.memory_space<vmem>>, vector<1x8x18xf32>
    %137 = vector.shape_cast %136 : vector<1x8x18xf32> to vector<8x18xf32>
    %138 = arith.maximumf %135, %137 : vector<8x18xf32>
    %cst_123 = arith.constant dense<0.000000e+00> : vector<8x10xf32>
    %139 = tpu.matmul %138, %66, %cst_123 {dimension_numbers = #tpu.dot_dimension_numbers<[1], [0], [0], [1], [0, 0, 1, 1], [], []>} : vector<8x18xf32>, vector<18x10xf32>, vector<8x10xf32> -> vector<8x10xf32>
    %cst_124 = arith.constant dense<0.000000e+00> : vector<8x10xf32>
    %140 = tpu.matmul %138, %67, %cst_124 {dimension_numbers = #tpu.dot_dimension_numbers<[1], [0], [0], [1], [0, 0, 1, 1], [], []>} : vector<8x18xf32>, vector<18x10xf32>, vector<8x10xf32> -> vector<8x10xf32>
    %141 = arith.maximumf %139, %140 : vector<8x10xf32>
    %c0_125 = arith.constant 0 : index
    %c0_126 = arith.constant 0 : index
    %c70 = arith.constant 70 : index
    %142 = vector.load %arg10[%c0_125, %c0_126, %c70] : memref<1x8x128xf32, #tpu.memory_space<vmem>>, vector<1x8x10xf32>
    %143 = vector.shape_cast %142 : vector<1x8x10xf32> to vector<8x10xf32>
    %144 = vector.shape_cast %141 : vector<8x10xf32> to vector<1x8x10xf32>
    tpu.vector_store %arg10[%c0_125, %c0_126, %c70], %144 {strides = array<i32>} : memref<1x8x128xf32, #tpu.memory_space<vmem>>, vector<1x8x10xf32>,
    %c0_127 = arith.constant 0 : index
    %c0_128 = arith.constant 0 : index
    %c270 = arith.constant 270 : index
    %145 = vector.load %arg9[%c0_127, %c0_128, %c270] : memref<1x8x384xf32, #tpu.memory_space<vmem>>, vector<1x8x18xf32>
    %146 = vector.shape_cast %145 : vector<1x8x18xf32> to vector<8x18xf32>
    %c0_129 = arith.constant 0 : index
    %c0_130 = arith.constant 0 : index
    %c288 = arith.constant 288 : index
    %147 = vector.load %arg9[%c0_129, %c0_130, %c288] : memref<1x8x384xf32, #tpu.memory_space<vmem>>, vector<1x8x18xf32>
    %148 = vector.shape_cast %147 : vector<1x8x18xf32> to vector<8x18xf32>
    %149 = arith.maximumf %146, %148 : vector<8x18xf32>
    %cst_131 = arith.constant dense<0.000000e+00> : vector<8x10xf32>
    %150 = tpu.matmul %149, %66, %cst_131 {dimension_numbers = #tpu.dot_dimension_numbers<[1], [0], [0], [1], [0, 0, 1, 1], [], []>} : vector<8x18xf32>, vector<18x10xf32>, vector<8x10xf32> -> vector<8x10xf32>
    %cst_132 = arith.constant dense<0.000000e+00> : vector<8x10xf32>
    %151 = tpu.matmul %149, %67, %cst_132 {dimension_numbers = #tpu.dot_dimension_numbers<[1], [0], [0], [1], [0, 0, 1, 1], [], []>} : vector<8x18xf32>, vector<18x10xf32>, vector<8x10xf32> -> vector<8x10xf32>
    %152 = arith.maximumf %150, %151 : vector<8x10xf32>
    %c0_133 = arith.constant 0 : index
    %c0_134 = arith.constant 0 : index
    %c80 = arith.constant 80 : index
    %153 = vector.load %arg10[%c0_133, %c0_134, %c80] : memref<1x8x128xf32, #tpu.memory_space<vmem>>, vector<1x8x10xf32>
    %154 = vector.shape_cast %153 : vector<1x8x10xf32> to vector<8x10xf32>
    %155 = vector.shape_cast %152 : vector<8x10xf32> to vector<1x8x10xf32>
    tpu.vector_store %arg10[%c0_133, %c0_134, %c80], %155 {strides = array<i32>} : memref<1x8x128xf32, #tpu.memory_space<vmem>>, vector<1x8x10xf32>,
    return
  }
  func.func @transform_0(%arg0: i32) -> (i32, i32, i32) {
    %c0_i32 = arith.constant 0 : i32
    %c0_i32_0 = arith.constant 0 : i32
    %c0_i32_1 = arith.constant 0 : i32
    return %arg0, %c0_i32, %c0_i32_0 : i32, i32, i32
  }
  func.func @transform_1(%arg0: i32) -> (i32, i32) {
    %c0_i32 = arith.constant 0 : i32
    %c0_i32_0 = arith.constant 0 : i32
    %c0_i32_1 = arith.constant 0 : i32
    return %c0_i32, %c0_i32_0 : i32, i32
  }
  func.func @transform_2(%arg0: i32) -> (i32, i32) {
    %c0_i32 = arith.constant 0 : i32
    %c0_i32_0 = arith.constant 0 : i32
    %c0_i32_1 = arith.constant 0 : i32
    return %c0_i32, %c0_i32_0 : i32, i32
  }
  func.func @transform_3(%arg0: i32) -> (i32, i32) {
    %c0_i32 = arith.constant 0 : i32
    %c0_i32_0 = arith.constant 0 : i32
    %c0_i32_1 = arith.constant 0 : i32
    return %c0_i32, %c0_i32_0 : i32, i32
  }
  func.func @transform_4(%arg0: i32) -> (i32, i32) {
    %c0_i32 = arith.constant 0 : i32
    %c0_i32_0 = arith.constant 0 : i32
    %c0_i32_1 = arith.constant 0 : i32
    return %c0_i32, %c0_i32_0 : i32, i32
  }
  func.func @transform_5(%arg0: i32) -> (i32, i32) {
    %c0_i32 = arith.constant 0 : i32
    %c0_i32_0 = arith.constant 0 : i32
    %c0_i32_1 = arith.constant 0 : i32
    return %c0_i32, %c0_i32_0 : i32, i32
  }
  func.func @transform_6(%arg0: i32) -> (i32, i32) {
    %c0_i32 = arith.constant 0 : i32
    %c0_i32_0 = arith.constant 0 : i32
    %c0_i32_1 = arith.constant 0 : i32
    return %c0_i32, %c0_i32_0 : i32, i32
  }
  func.func @transform_7(%arg0: i32) -> (i32, i32) {
    %c0_i32 = arith.constant 0 : i32
    %c0_i32_0 = arith.constant 0 : i32
    %c0_i32_1 = arith.constant 0 : i32
    return %c0_i32, %c0_i32_0 : i32, i32
  }
  func.func @transform_8(%arg0: i32) -> (i32, i32, i32) {
    %c0_i32 = arith.constant 0 : i32
    %c0_i32_0 = arith.constant 0 : i32
    %c0_i32_1 = arith.constant 0 : i32
    return %arg0, %c0_i32, %c0_i32_0 : i32, i32, i32
  }
  func.func @transform_9(%arg0: i32) -> (i32, i32, i32) {
    %c0_i32 = arith.constant 0 : i32
    %c0_i32_0 = arith.constant 0 : i32
    %c0_i32_1 = arith.constant 0 : i32
    return %arg0, %c0_i32, %c0_i32_0 : i32, i32, i32
  }
}

module attributes {stable_mosaic.version = 11 : i64} {
  func.func @_base_kernel(%arg0: i32, %arg1: memref<1x8x128xf32, #tpu.memory_space<vmem>>, %arg2: memref<8x72xbf16, #tpu.memory_space<vmem>>, %arg3: memref<8x1xf32, #tpu.memory_space<vmem>>, %arg4: memref<8x72xbf16, #tpu.memory_space<vmem>>, %arg5: memref<8x1xf32, #tpu.memory_space<vmem>>, %arg6: memref<1x128xf32, #tpu.memory_space<vmem>>, %arg7: memref<1x8x128xf32, #tpu.memory_space<vmem>>, %arg8: memref<72x128xf32, #tpu.memory_space<vmem>>) attributes {dimension_semantics = [#tpu.dimension_semantics<parallel>], iteration_bounds = array<i64: 2>, scalar_prefetch = 0 : i64, scratch_operands = 1 : i64, tpu.core_type = #tpu.core_type<tc>, window_params = [{transform_indices = @transform_0, window_bounds = array<i64: 1, 8, 128>}, {pipeline_mode = #tpu.pipeline_mode<synchronous>, transform_indices = @transform_1, window_bounds = array<i64: 8, 72>}, {pipeline_mode = #tpu.pipeline_mode<synchronous>, transform_indices = @transform_2, window_bounds = array<i64: 8, 1>}, {pipeline_mode = #tpu.pipeline_mode<synchronous>, transform_indices = @transform_3, window_bounds = array<i64: 8, 72>}, {pipeline_mode = #tpu.pipeline_mode<synchronous>, transform_indices = @transform_4, window_bounds = array<i64: 8, 1>}, {pipeline_mode = #tpu.pipeline_mode<synchronous>, transform_indices = @transform_5, window_bounds = array<i64: 1, 128>}, {transform_indices = @transform_6, window_bounds = array<i64: 1, 8, 128>}]} {
    %c0 = arith.constant 0 : index
    %c0_0 = arith.constant 0 : index
    %0 = vector.load %arg6[%c0, %c0_0] : memref<1x128xf32, #tpu.memory_space<vmem>>, vector<1x128xf32>
    %c0_1 = arith.constant 0 : index
    %c0_2 = arith.constant 0 : index
    %c0_3 = arith.constant 0 : index
    %1 = vector.load %arg1[%c0_1, %c0_2, %c0_3] : memref<1x8x128xf32, #tpu.memory_space<vmem>>, vector<1x8x128xf32>
    %2 = vector.shape_cast %1 : vector<1x8x128xf32> to vector<8x128xf32>
    %c6_i32 = arith.constant 6 : i32
    %3 = tpu.dynamic_rotate %2 by %c6_i32 dim 1 : vector<8x128xf32>, i32 -> vector<8x128xf32>
    %c122_i32 = arith.constant 122 : i32
    %4 = tpu.dynamic_rotate %2 by %c122_i32 dim 1 : vector<8x128xf32>, i32 -> vector<8x128xf32>
    %c1_i32 = arith.constant 1 : i32
    %5 = tpu.dynamic_rotate %3 by %c1_i32 dim 1 : vector<8x128xf32>, i32 -> vector<8x128xf32>
    %c0_4 = arith.constant 0 : index
    %c0_5 = arith.constant 0 : index
    %6 = vector.load %arg8[%c0_4, %c0_5] : memref<72x128xf32, #tpu.memory_space<vmem>>, vector<8x128xf32>
    tpu.vector_store %arg8[%c0_4, %c0_5], %5 {strides = array<i32>} : memref<72x128xf32, #tpu.memory_space<vmem>>, vector<8x128xf32>,
    %c8 = arith.constant 8 : index
    %c0_6 = arith.constant 0 : index
    %7 = vector.load %arg8[%c8, %c0_6] : memref<72x128xf32, #tpu.memory_space<vmem>>, vector<8x128xf32>
    tpu.vector_store %arg8[%c8, %c0_6], %3 {strides = array<i32>} : memref<72x128xf32, #tpu.memory_space<vmem>>, vector<8x128xf32>,
    %c127_i32 = arith.constant 127 : i32
    %8 = tpu.dynamic_rotate %3 by %c127_i32 dim 1 : vector<8x128xf32>, i32 -> vector<8x128xf32>
    %c16 = arith.constant 16 : index
    %c0_7 = arith.constant 0 : index
    %9 = vector.load %arg8[%c16, %c0_7] : memref<72x128xf32, #tpu.memory_space<vmem>>, vector<8x128xf32>
    tpu.vector_store %arg8[%c16, %c0_7], %8 {strides = array<i32>} : memref<72x128xf32, #tpu.memory_space<vmem>>, vector<8x128xf32>,
    %c1_i32_8 = arith.constant 1 : i32
    %10 = tpu.dynamic_rotate %2 by %c1_i32_8 dim 1 : vector<8x128xf32>, i32 -> vector<8x128xf32>
    %c24 = arith.constant 24 : index
    %c0_9 = arith.constant 0 : index
    %11 = vector.load %arg8[%c24, %c0_9] : memref<72x128xf32, #tpu.memory_space<vmem>>, vector<8x128xf32>
    tpu.vector_store %arg8[%c24, %c0_9], %10 {strides = array<i32>} : memref<72x128xf32, #tpu.memory_space<vmem>>, vector<8x128xf32>,
    %c32 = arith.constant 32 : index
    %c0_10 = arith.constant 0 : index
    %12 = vector.load %arg8[%c32, %c0_10] : memref<72x128xf32, #tpu.memory_space<vmem>>, vector<8x128xf32>
    tpu.vector_store %arg8[%c32, %c0_10], %2 {strides = array<i32>} : memref<72x128xf32, #tpu.memory_space<vmem>>, vector<8x128xf32>,
    %c127_i32_11 = arith.constant 127 : i32
    %13 = tpu.dynamic_rotate %2 by %c127_i32_11 dim 1 : vector<8x128xf32>, i32 -> vector<8x128xf32>
    %c40 = arith.constant 40 : index
    %c0_12 = arith.constant 0 : index
    %14 = vector.load %arg8[%c40, %c0_12] : memref<72x128xf32, #tpu.memory_space<vmem>>, vector<8x128xf32>
    tpu.vector_store %arg8[%c40, %c0_12], %13 {strides = array<i32>} : memref<72x128xf32, #tpu.memory_space<vmem>>, vector<8x128xf32>,
    %c1_i32_13 = arith.constant 1 : i32
    %15 = tpu.dynamic_rotate %4 by %c1_i32_13 dim 1 : vector<8x128xf32>, i32 -> vector<8x128xf32>
    %c48 = arith.constant 48 : index
    %c0_14 = arith.constant 0 : index
    %16 = vector.load %arg8[%c48, %c0_14] : memref<72x128xf32, #tpu.memory_space<vmem>>, vector<8x128xf32>
    tpu.vector_store %arg8[%c48, %c0_14], %15 {strides = array<i32>} : memref<72x128xf32, #tpu.memory_space<vmem>>, vector<8x128xf32>,
    %c56 = arith.constant 56 : index
    %c0_15 = arith.constant 0 : index
    %17 = vector.load %arg8[%c56, %c0_15] : memref<72x128xf32, #tpu.memory_space<vmem>>, vector<8x128xf32>
    tpu.vector_store %arg8[%c56, %c0_15], %4 {strides = array<i32>} : memref<72x128xf32, #tpu.memory_space<vmem>>, vector<8x128xf32>,
    %c127_i32_16 = arith.constant 127 : i32
    %18 = tpu.dynamic_rotate %4 by %c127_i32_16 dim 1 : vector<8x128xf32>, i32 -> vector<8x128xf32>
    %c64 = arith.constant 64 : index
    %c0_17 = arith.constant 0 : index
    %19 = vector.load %arg8[%c64, %c0_17] : memref<72x128xf32, #tpu.memory_space<vmem>>, vector<8x128xf32>
    tpu.vector_store %arg8[%c64, %c0_17], %18 {strides = array<i32>} : memref<72x128xf32, #tpu.memory_space<vmem>>, vector<8x128xf32>,
    %c0_18 = arith.constant 0 : index
    %c0_19 = arith.constant 0 : index
    %20 = vector.load %arg2[%c0_18, %c0_19] : memref<8x72xbf16, #tpu.memory_space<vmem>>, vector<8x72xbf16>
    %c0_20 = arith.constant 0 : index
    %c0_21 = arith.constant 0 : index
    %21 = vector.load %arg8[%c0_20, %c0_21] : memref<72x128xf32, #tpu.memory_space<vmem>>, vector<72x128xf32>
    %22 = arith.truncf %21 : vector<72x128xf32> to vector<72x128xbf16>
    %cst = arith.constant dense<0.000000e+00> : vector<8x128xf32>
    %23 = tpu.matmul %20, %22, %cst {dimension_numbers = #tpu.dot_dimension_numbers<[1], [0], [0], [1], [0, 0, 1, 1], [], []>} : vector<8x72xbf16>, vector<72x128xbf16>, vector<8x128xf32> -> vector<8x128xf32>
    %c0_22 = arith.constant 0 : index
    %c0_23 = arith.constant 0 : index
    %24 = vector.load %arg3[%c0_22, %c0_23] : memref<8x1xf32, #tpu.memory_space<vmem>>, vector<8x1xf32>
    %25 = vector.broadcast %24 : vector<8x1xf32> to vector<8x128xf32>
    %26 = arith.addf %23, %25 : vector<8x128xf32>
    %cst_24 = arith.constant 0.000000e+00 : f32
    %27 = vector.broadcast %cst_24 : f32 to vector<8x128xf32>
    %28 = arith.maximumf %26, %27 : vector<8x128xf32>
    %29 = vector.broadcast %0 : vector<1x128xf32> to vector<8x128xf32>
    %30 = arith.mulf %28, %29 : vector<8x128xf32>
    %c6_i32_25 = arith.constant 6 : i32
    %31 = tpu.dynamic_rotate %30 by %c6_i32_25 dim 1 : vector<8x128xf32>, i32 -> vector<8x128xf32>
    %c122_i32_26 = arith.constant 122 : i32
    %32 = tpu.dynamic_rotate %30 by %c122_i32_26 dim 1 : vector<8x128xf32>, i32 -> vector<8x128xf32>
    %c1_i32_27 = arith.constant 1 : i32
    %33 = tpu.dynamic_rotate %31 by %c1_i32_27 dim 1 : vector<8x128xf32>, i32 -> vector<8x128xf32>
    %c0_28 = arith.constant 0 : index
    %c0_29 = arith.constant 0 : index
    %34 = vector.load %arg8[%c0_28, %c0_29] : memref<72x128xf32, #tpu.memory_space<vmem>>, vector<8x128xf32>
    tpu.vector_store %arg8[%c0_28, %c0_29], %33 {strides = array<i32>} : memref<72x128xf32, #tpu.memory_space<vmem>>, vector<8x128xf32>,
    %c8_30 = arith.constant 8 : index
    %c0_31 = arith.constant 0 : index
    %35 = vector.load %arg8[%c8_30, %c0_31] : memref<72x128xf32, #tpu.memory_space<vmem>>, vector<8x128xf32>
    tpu.vector_store %arg8[%c8_30, %c0_31], %31 {strides = array<i32>} : memref<72x128xf32, #tpu.memory_space<vmem>>, vector<8x128xf32>,
    %c127_i32_32 = arith.constant 127 : i32
    %36 = tpu.dynamic_rotate %31 by %c127_i32_32 dim 1 : vector<8x128xf32>, i32 -> vector<8x128xf32>
    %c16_33 = arith.constant 16 : index
    %c0_34 = arith.constant 0 : index
    %37 = vector.load %arg8[%c16_33, %c0_34] : memref<72x128xf32, #tpu.memory_space<vmem>>, vector<8x128xf32>
    tpu.vector_store %arg8[%c16_33, %c0_34], %36 {strides = array<i32>} : memref<72x128xf32, #tpu.memory_space<vmem>>, vector<8x128xf32>,
    %c1_i32_35 = arith.constant 1 : i32
    %38 = tpu.dynamic_rotate %30 by %c1_i32_35 dim 1 : vector<8x128xf32>, i32 -> vector<8x128xf32>
    %c24_36 = arith.constant 24 : index
    %c0_37 = arith.constant 0 : index
    %39 = vector.load %arg8[%c24_36, %c0_37] : memref<72x128xf32, #tpu.memory_space<vmem>>, vector<8x128xf32>
    tpu.vector_store %arg8[%c24_36, %c0_37], %38 {strides = array<i32>} : memref<72x128xf32, #tpu.memory_space<vmem>>, vector<8x128xf32>,
    %c32_38 = arith.constant 32 : index
    %c0_39 = arith.constant 0 : index
    %40 = vector.load %arg8[%c32_38, %c0_39] : memref<72x128xf32, #tpu.memory_space<vmem>>, vector<8x128xf32>
    tpu.vector_store %arg8[%c32_38, %c0_39], %30 {strides = array<i32>} : memref<72x128xf32, #tpu.memory_space<vmem>>, vector<8x128xf32>,
    %c127_i32_40 = arith.constant 127 : i32
    %41 = tpu.dynamic_rotate %30 by %c127_i32_40 dim 1 : vector<8x128xf32>, i32 -> vector<8x128xf32>
    %c40_41 = arith.constant 40 : index
    %c0_42 = arith.constant 0 : index
    %42 = vector.load %arg8[%c40_41, %c0_42] : memref<72x128xf32, #tpu.memory_space<vmem>>, vector<8x128xf32>
    tpu.vector_store %arg8[%c40_41, %c0_42], %41 {strides = array<i32>} : memref<72x128xf32, #tpu.memory_space<vmem>>, vector<8x128xf32>,
    %c1_i32_43 = arith.constant 1 : i32
    %43 = tpu.dynamic_rotate %32 by %c1_i32_43 dim 1 : vector<8x128xf32>, i32 -> vector<8x128xf32>
    %c48_44 = arith.constant 48 : index
    %c0_45 = arith.constant 0 : index
    %44 = vector.load %arg8[%c48_44, %c0_45] : memref<72x128xf32, #tpu.memory_space<vmem>>, vector<8x128xf32>
    tpu.vector_store %arg8[%c48_44, %c0_45], %43 {strides = array<i32>} : memref<72x128xf32, #tpu.memory_space<vmem>>, vector<8x128xf32>,
    %c56_46 = arith.constant 56 : index
    %c0_47 = arith.constant 0 : index
    %45 = vector.load %arg8[%c56_46, %c0_47] : memref<72x128xf32, #tpu.memory_space<vmem>>, vector<8x128xf32>
    tpu.vector_store %arg8[%c56_46, %c0_47], %32 {strides = array<i32>} : memref<72x128xf32, #tpu.memory_space<vmem>>, vector<8x128xf32>,
    %c127_i32_48 = arith.constant 127 : i32
    %46 = tpu.dynamic_rotate %32 by %c127_i32_48 dim 1 : vector<8x128xf32>, i32 -> vector<8x128xf32>
    %c64_49 = arith.constant 64 : index
    %c0_50 = arith.constant 0 : index
    %47 = vector.load %arg8[%c64_49, %c0_50] : memref<72x128xf32, #tpu.memory_space<vmem>>, vector<8x128xf32>
    tpu.vector_store %arg8[%c64_49, %c0_50], %46 {strides = array<i32>} : memref<72x128xf32, #tpu.memory_space<vmem>>, vector<8x128xf32>,
    %c0_51 = arith.constant 0 : index
    %c0_52 = arith.constant 0 : index
    %48 = vector.load %arg4[%c0_51, %c0_52] : memref<8x72xbf16, #tpu.memory_space<vmem>>, vector<8x72xbf16>
    %c0_53 = arith.constant 0 : index
    %c0_54 = arith.constant 0 : index
    %49 = vector.load %arg8[%c0_53, %c0_54] : memref<72x128xf32, #tpu.memory_space<vmem>>, vector<72x128xf32>
    %50 = arith.truncf %49 : vector<72x128xf32> to vector<72x128xbf16>
    %cst_55 = arith.constant dense<0.000000e+00> : vector<8x128xf32>
    %51 = tpu.matmul %48, %50, %cst_55 {dimension_numbers = #tpu.dot_dimension_numbers<[1], [0], [0], [1], [0, 0, 1, 1], [], []>} : vector<8x72xbf16>, vector<72x128xbf16>, vector<8x128xf32> -> vector<8x128xf32>
    %c0_56 = arith.constant 0 : index
    %c0_57 = arith.constant 0 : index
    %52 = vector.load %arg5[%c0_56, %c0_57] : memref<8x1xf32, #tpu.memory_space<vmem>>, vector<8x1xf32>
    %53 = vector.broadcast %52 : vector<8x1xf32> to vector<8x128xf32>
    %54 = arith.addf %51, %53 : vector<8x128xf32>
    %cst_58 = arith.constant 0.000000e+00 : f32
    %55 = vector.broadcast %cst_58 : f32 to vector<8x128xf32>
    %56 = arith.maximumf %54, %55 : vector<8x128xf32>
    %57 = vector.broadcast %0 : vector<1x128xf32> to vector<8x128xf32>
    %58 = arith.mulf %56, %57 : vector<8x128xf32>
    %c0_59 = arith.constant 0 : index
    %c0_60 = arith.constant 0 : index
    %c0_61 = arith.constant 0 : index
    %59 = vector.load %arg7[%c0_59, %c0_60, %c0_61] : memref<1x8x128xf32, #tpu.memory_space<vmem>>, vector<1x8x128xf32>
    %60 = vector.shape_cast %59 : vector<1x8x128xf32> to vector<8x128xf32>
    %61 = vector.shape_cast %58 : vector<8x128xf32> to vector<1x8x128xf32>
    tpu.vector_store %arg7[%c0_59, %c0_60, %c0_61], %61 {strides = array<i32>} : memref<1x8x128xf32, #tpu.memory_space<vmem>>, vector<1x8x128xf32>,
    return
  }
  func.func @transform_0(%arg0: i32) -> (i32, i32, i32) {
    %c0_i32 = arith.constant 0 : i32
    %c0_i32_0 = arith.constant 0 : i32
    %c0_i32_1 = arith.constant 0 : i32
    return %arg0, %c0_i32, %c0_i32_0 : i32, i32, i32
  }
  func.func @transform_1(%arg0: i32) -> (i32, i32) {
    %c0_i32 = arith.constant 0 : i32
    %c0_i32_0 = arith.constant 0 : i32
    %c0_i32_1 = arith.constant 0 : i32
    return %c0_i32, %c0_i32_0 : i32, i32
  }
  func.func @transform_2(%arg0: i32) -> (i32, i32) {
    %c0_i32 = arith.constant 0 : i32
    %c0_i32_0 = arith.constant 0 : i32
    %c0_i32_1 = arith.constant 0 : i32
    return %c0_i32, %c0_i32_0 : i32, i32
  }
  func.func @transform_3(%arg0: i32) -> (i32, i32) {
    %c0_i32 = arith.constant 0 : i32
    %c0_i32_0 = arith.constant 0 : i32
    %c0_i32_1 = arith.constant 0 : i32
    return %c0_i32, %c0_i32_0 : i32, i32
  }
  func.func @transform_4(%arg0: i32) -> (i32, i32) {
    %c0_i32 = arith.constant 0 : i32
    %c0_i32_0 = arith.constant 0 : i32
    %c0_i32_1 = arith.constant 0 : i32
    return %c0_i32, %c0_i32_0 : i32, i32
  }
  func.func @transform_5(%arg0: i32) -> (i32, i32) {
    %c0_i32 = arith.constant 0 : i32
    %c0_i32_0 = arith.constant 0 : i32
    %c0_i32_1 = arith.constant 0 : i32
    return %c0_i32, %c0_i32_0 : i32, i32
  }
  func.func @transform_6(%arg0: i32) -> (i32, i32, i32) {
    %c0_i32 = arith.constant 0 : i32
    %c0_i32_0 = arith.constant 0 : i32
    %c0_i32_1 = arith.constant 0 : i32
    return %arg0, %c0_i32, %c0_i32_0 : i32, i32, i32
  }
}

module attributes {stable_mosaic.version = 11 : i64} {
  func.func @_encoder_kernel(%arg0: i32, %arg1: memref<1x8x128xf32, #tpu.memory_space<vmem>>, %arg2: memref<8x72xbf16, #tpu.memory_space<vmem>>, %arg3: memref<8x1xf32, #tpu.memory_space<vmem>>, %arg4: memref<8x72xbf16, #tpu.memory_space<vmem>>, %arg5: memref<8x1xf32, #tpu.memory_space<vmem>>, %arg6: memref<1x128xf32, #tpu.memory_space<vmem>>, %arg7: memref<10x6xf32, #tpu.memory_space<vmem>>, %arg8: memref<10x6xf32, #tpu.memory_space<vmem>>, %arg9: memref<1x8x128xf32, #tpu.memory_space<vmem>>, %arg10: memref<1x8x128xf32, #tpu.memory_space<vmem>>, %arg11: memref<72x128xf32, #tpu.memory_space<vmem>>) attributes {dimension_semantics = [#tpu.dimension_semantics<parallel>], iteration_bounds = array<i64: 2>, scalar_prefetch = 0 : i64, scratch_operands = 1 : i64, tpu.core_type = #tpu.core_type<tc>, window_params = [{transform_indices = @transform_0, window_bounds = array<i64: 1, 8, 128>}, {pipeline_mode = #tpu.pipeline_mode<synchronous>, transform_indices = @transform_1, window_bounds = array<i64: 8, 72>}, {pipeline_mode = #tpu.pipeline_mode<synchronous>, transform_indices = @transform_2, window_bounds = array<i64: 8, 1>}, {pipeline_mode = #tpu.pipeline_mode<synchronous>, transform_indices = @transform_3, window_bounds = array<i64: 8, 72>}, {pipeline_mode = #tpu.pipeline_mode<synchronous>, transform_indices = @transform_4, window_bounds = array<i64: 8, 1>}, {pipeline_mode = #tpu.pipeline_mode<synchronous>, transform_indices = @transform_5, window_bounds = array<i64: 1, 128>}, {pipeline_mode = #tpu.pipeline_mode<synchronous>, transform_indices = @transform_6, window_bounds = array<i64: 10, 6>}, {pipeline_mode = #tpu.pipeline_mode<synchronous>, transform_indices = @transform_7, window_bounds = array<i64: 10, 6>}, {transform_indices = @transform_8, window_bounds = array<i64: 1, 8, 128>}, {transform_indices = @transform_9, window_bounds = array<i64: 1, 8, 128>}]} {
    %c0 = arith.constant 0 : index
    %c0_0 = arith.constant 0 : index
    %0 = vector.load %arg6[%c0, %c0_0] : memref<1x128xf32, #tpu.memory_space<vmem>>, vector<1x128xf32>
    %c0_1 = arith.constant 0 : index
    %c0_2 = arith.constant 0 : index
    %c0_3 = arith.constant 0 : index
    %1 = vector.load %arg1[%c0_1, %c0_2, %c0_3] : memref<1x8x128xf32, #tpu.memory_space<vmem>>, vector<1x8x128xf32>
    %2 = vector.shape_cast %1 : vector<1x8x128xf32> to vector<8x128xf32>
    %c10_i32 = arith.constant 10 : i32
    %3 = tpu.dynamic_rotate %2 by %c10_i32 dim 1 : vector<8x128xf32>, i32 -> vector<8x128xf32>
    %c118_i32 = arith.constant 118 : i32
    %4 = tpu.dynamic_rotate %2 by %c118_i32 dim 1 : vector<8x128xf32>, i32 -> vector<8x128xf32>
    %c1_i32 = arith.constant 1 : i32
    %5 = tpu.dynamic_rotate %3 by %c1_i32 dim 1 : vector<8x128xf32>, i32 -> vector<8x128xf32>
    %c0_4 = arith.constant 0 : index
    %c0_5 = arith.constant 0 : index
    %6 = vector.load %arg11[%c0_4, %c0_5] : memref<72x128xf32, #tpu.memory_space<vmem>>, vector<8x128xf32>
    tpu.vector_store %arg11[%c0_4, %c0_5], %5 {strides = array<i32>} : memref<72x128xf32, #tpu.memory_space<vmem>>, vector<8x128xf32>,
    %c8 = arith.constant 8 : index
    %c0_6 = arith.constant 0 : index
    %7 = vector.load %arg11[%c8, %c0_6] : memref<72x128xf32, #tpu.memory_space<vmem>>, vector<8x128xf32>
    tpu.vector_store %arg11[%c8, %c0_6], %3 {strides = array<i32>} : memref<72x128xf32, #tpu.memory_space<vmem>>, vector<8x128xf32>,
    %c127_i32 = arith.constant 127 : i32
    %8 = tpu.dynamic_rotate %3 by %c127_i32 dim 1 : vector<8x128xf32>, i32 -> vector<8x128xf32>
    %c16 = arith.constant 16 : index
    %c0_7 = arith.constant 0 : index
    %9 = vector.load %arg11[%c16, %c0_7] : memref<72x128xf32, #tpu.memory_space<vmem>>, vector<8x128xf32>
    tpu.vector_store %arg11[%c16, %c0_7], %8 {strides = array<i32>} : memref<72x128xf32, #tpu.memory_space<vmem>>, vector<8x128xf32>,
    %c1_i32_8 = arith.constant 1 : i32
    %10 = tpu.dynamic_rotate %2 by %c1_i32_8 dim 1 : vector<8x128xf32>, i32 -> vector<8x128xf32>
    %c24 = arith.constant 24 : index
    %c0_9 = arith.constant 0 : index
    %11 = vector.load %arg11[%c24, %c0_9] : memref<72x128xf32, #tpu.memory_space<vmem>>, vector<8x128xf32>
    tpu.vector_store %arg11[%c24, %c0_9], %10 {strides = array<i32>} : memref<72x128xf32, #tpu.memory_space<vmem>>, vector<8x128xf32>,
    %c32 = arith.constant 32 : index
    %c0_10 = arith.constant 0 : index
    %12 = vector.load %arg11[%c32, %c0_10] : memref<72x128xf32, #tpu.memory_space<vmem>>, vector<8x128xf32>
    tpu.vector_store %arg11[%c32, %c0_10], %2 {strides = array<i32>} : memref<72x128xf32, #tpu.memory_space<vmem>>, vector<8x128xf32>,
    %c127_i32_11 = arith.constant 127 : i32
    %13 = tpu.dynamic_rotate %2 by %c127_i32_11 dim 1 : vector<8x128xf32>, i32 -> vector<8x128xf32>
    %c40 = arith.constant 40 : index
    %c0_12 = arith.constant 0 : index
    %14 = vector.load %arg11[%c40, %c0_12] : memref<72x128xf32, #tpu.memory_space<vmem>>, vector<8x128xf32>
    tpu.vector_store %arg11[%c40, %c0_12], %13 {strides = array<i32>} : memref<72x128xf32, #tpu.memory_space<vmem>>, vector<8x128xf32>,
    %c1_i32_13 = arith.constant 1 : i32
    %15 = tpu.dynamic_rotate %4 by %c1_i32_13 dim 1 : vector<8x128xf32>, i32 -> vector<8x128xf32>
    %c48 = arith.constant 48 : index
    %c0_14 = arith.constant 0 : index
    %16 = vector.load %arg11[%c48, %c0_14] : memref<72x128xf32, #tpu.memory_space<vmem>>, vector<8x128xf32>
    tpu.vector_store %arg11[%c48, %c0_14], %15 {strides = array<i32>} : memref<72x128xf32, #tpu.memory_space<vmem>>, vector<8x128xf32>,
    %c56 = arith.constant 56 : index
    %c0_15 = arith.constant 0 : index
    %17 = vector.load %arg11[%c56, %c0_15] : memref<72x128xf32, #tpu.memory_space<vmem>>, vector<8x128xf32>
    tpu.vector_store %arg11[%c56, %c0_15], %4 {strides = array<i32>} : memref<72x128xf32, #tpu.memory_space<vmem>>, vector<8x128xf32>,
    %c127_i32_16 = arith.constant 127 : i32
    %18 = tpu.dynamic_rotate %4 by %c127_i32_16 dim 1 : vector<8x128xf32>, i32 -> vector<8x128xf32>
    %c64 = arith.constant 64 : index
    %c0_17 = arith.constant 0 : index
    %19 = vector.load %arg11[%c64, %c0_17] : memref<72x128xf32, #tpu.memory_space<vmem>>, vector<8x128xf32>
    tpu.vector_store %arg11[%c64, %c0_17], %18 {strides = array<i32>} : memref<72x128xf32, #tpu.memory_space<vmem>>, vector<8x128xf32>,
    %c0_18 = arith.constant 0 : index
    %c0_19 = arith.constant 0 : index
    %20 = vector.load %arg2[%c0_18, %c0_19] : memref<8x72xbf16, #tpu.memory_space<vmem>>, vector<8x72xbf16>
    %c0_20 = arith.constant 0 : index
    %c0_21 = arith.constant 0 : index
    %21 = vector.load %arg11[%c0_20, %c0_21] : memref<72x128xf32, #tpu.memory_space<vmem>>, vector<72x128xf32>
    %22 = arith.truncf %21 : vector<72x128xf32> to vector<72x128xbf16>
    %cst = arith.constant dense<0.000000e+00> : vector<8x128xf32>
    %23 = tpu.matmul %20, %22, %cst {dimension_numbers = #tpu.dot_dimension_numbers<[1], [0], [0], [1], [0, 0, 1, 1], [], []>} : vector<8x72xbf16>, vector<72x128xbf16>, vector<8x128xf32> -> vector<8x128xf32>
    %c0_22 = arith.constant 0 : index
    %c0_23 = arith.constant 0 : index
    %24 = vector.load %arg3[%c0_22, %c0_23] : memref<8x1xf32, #tpu.memory_space<vmem>>, vector<8x1xf32>
    %25 = vector.broadcast %24 : vector<8x1xf32> to vector<8x128xf32>
    %26 = arith.addf %23, %25 : vector<8x128xf32>
    %cst_24 = arith.constant 0.000000e+00 : f32
    %27 = vector.broadcast %cst_24 : f32 to vector<8x128xf32>
    %28 = arith.maximumf %26, %27 : vector<8x128xf32>
    %29 = vector.broadcast %0 : vector<1x128xf32> to vector<8x128xf32>
    %30 = arith.mulf %28, %29 : vector<8x128xf32>
    %c10_i32_25 = arith.constant 10 : i32
    %31 = tpu.dynamic_rotate %30 by %c10_i32_25 dim 1 : vector<8x128xf32>, i32 -> vector<8x128xf32>
    %c118_i32_26 = arith.constant 118 : i32
    %32 = tpu.dynamic_rotate %30 by %c118_i32_26 dim 1 : vector<8x128xf32>, i32 -> vector<8x128xf32>
    %c1_i32_27 = arith.constant 1 : i32
    %33 = tpu.dynamic_rotate %31 by %c1_i32_27 dim 1 : vector<8x128xf32>, i32 -> vector<8x128xf32>
    %c0_28 = arith.constant 0 : index
    %c0_29 = arith.constant 0 : index
    %34 = vector.load %arg11[%c0_28, %c0_29] : memref<72x128xf32, #tpu.memory_space<vmem>>, vector<8x128xf32>
    tpu.vector_store %arg11[%c0_28, %c0_29], %33 {strides = array<i32>} : memref<72x128xf32, #tpu.memory_space<vmem>>, vector<8x128xf32>,
    %c8_30 = arith.constant 8 : index
    %c0_31 = arith.constant 0 : index
    %35 = vector.load %arg11[%c8_30, %c0_31] : memref<72x128xf32, #tpu.memory_space<vmem>>, vector<8x128xf32>
    tpu.vector_store %arg11[%c8_30, %c0_31], %31 {strides = array<i32>} : memref<72x128xf32, #tpu.memory_space<vmem>>, vector<8x128xf32>,
    %c127_i32_32 = arith.constant 127 : i32
    %36 = tpu.dynamic_rotate %31 by %c127_i32_32 dim 1 : vector<8x128xf32>, i32 -> vector<8x128xf32>
    %c16_33 = arith.constant 16 : index
    %c0_34 = arith.constant 0 : index
    %37 = vector.load %arg11[%c16_33, %c0_34] : memref<72x128xf32, #tpu.memory_space<vmem>>, vector<8x128xf32>
    tpu.vector_store %arg11[%c16_33, %c0_34], %36 {strides = array<i32>} : memref<72x128xf32, #tpu.memory_space<vmem>>, vector<8x128xf32>,
    %c1_i32_35 = arith.constant 1 : i32
    %38 = tpu.dynamic_rotate %30 by %c1_i32_35 dim 1 : vector<8x128xf32>, i32 -> vector<8x128xf32>
    %c24_36 = arith.constant 24 : index
    %c0_37 = arith.constant 0 : index
    %39 = vector.load %arg11[%c24_36, %c0_37] : memref<72x128xf32, #tpu.memory_space<vmem>>, vector<8x128xf32>
    tpu.vector_store %arg11[%c24_36, %c0_37], %38 {strides = array<i32>} : memref<72x128xf32, #tpu.memory_space<vmem>>, vector<8x128xf32>,
    %c32_38 = arith.constant 32 : index
    %c0_39 = arith.constant 0 : index
    %40 = vector.load %arg11[%c32_38, %c0_39] : memref<72x128xf32, #tpu.memory_space<vmem>>, vector<8x128xf32>
    tpu.vector_store %arg11[%c32_38, %c0_39], %30 {strides = array<i32>} : memref<72x128xf32, #tpu.memory_space<vmem>>, vector<8x128xf32>,
    %c127_i32_40 = arith.constant 127 : i32
    %41 = tpu.dynamic_rotate %30 by %c127_i32_40 dim 1 : vector<8x128xf32>, i32 -> vector<8x128xf32>
    %c40_41 = arith.constant 40 : index
    %c0_42 = arith.constant 0 : index
    %42 = vector.load %arg11[%c40_41, %c0_42] : memref<72x128xf32, #tpu.memory_space<vmem>>, vector<8x128xf32>
    tpu.vector_store %arg11[%c40_41, %c0_42], %41 {strides = array<i32>} : memref<72x128xf32, #tpu.memory_space<vmem>>, vector<8x128xf32>,
    %c1_i32_43 = arith.constant 1 : i32
    %43 = tpu.dynamic_rotate %32 by %c1_i32_43 dim 1 : vector<8x128xf32>, i32 -> vector<8x128xf32>
    %c48_44 = arith.constant 48 : index
    %c0_45 = arith.constant 0 : index
    %44 = vector.load %arg11[%c48_44, %c0_45] : memref<72x128xf32, #tpu.memory_space<vmem>>, vector<8x128xf32>
    tpu.vector_store %arg11[%c48_44, %c0_45], %43 {strides = array<i32>} : memref<72x128xf32, #tpu.memory_space<vmem>>, vector<8x128xf32>,
    %c56_46 = arith.constant 56 : index
    %c0_47 = arith.constant 0 : index
    %45 = vector.load %arg11[%c56_46, %c0_47] : memref<72x128xf32, #tpu.memory_space<vmem>>, vector<8x128xf32>
    tpu.vector_store %arg11[%c56_46, %c0_47], %32 {strides = array<i32>} : memref<72x128xf32, #tpu.memory_space<vmem>>, vector<8x128xf32>,
    %c127_i32_48 = arith.constant 127 : i32
    %46 = tpu.dynamic_rotate %32 by %c127_i32_48 dim 1 : vector<8x128xf32>, i32 -> vector<8x128xf32>
    %c64_49 = arith.constant 64 : index
    %c0_50 = arith.constant 0 : index
    %47 = vector.load %arg11[%c64_49, %c0_50] : memref<72x128xf32, #tpu.memory_space<vmem>>, vector<8x128xf32>
    tpu.vector_store %arg11[%c64_49, %c0_50], %46 {strides = array<i32>} : memref<72x128xf32, #tpu.memory_space<vmem>>, vector<8x128xf32>,
    %c0_51 = arith.constant 0 : index
    %c0_52 = arith.constant 0 : index
    %48 = vector.load %arg4[%c0_51, %c0_52] : memref<8x72xbf16, #tpu.memory_space<vmem>>, vector<8x72xbf16>
    %c0_53 = arith.constant 0 : index
    %c0_54 = arith.constant 0 : index
    %49 = vector.load %arg11[%c0_53, %c0_54] : memref<72x128xf32, #tpu.memory_space<vmem>>, vector<72x128xf32>
    %50 = arith.truncf %49 : vector<72x128xf32> to vector<72x128xbf16>
    %cst_55 = arith.constant dense<0.000000e+00> : vector<8x128xf32>
    %51 = tpu.matmul %48, %50, %cst_55 {dimension_numbers = #tpu.dot_dimension_numbers<[1], [0], [0], [1], [0, 0, 1, 1], [], []>} : vector<8x72xbf16>, vector<72x128xbf16>, vector<8x128xf32> -> vector<8x128xf32>
    %c0_56 = arith.constant 0 : index
    %c0_57 = arith.constant 0 : index
    %52 = vector.load %arg5[%c0_56, %c0_57] : memref<8x1xf32, #tpu.memory_space<vmem>>, vector<8x1xf32>
    %53 = vector.broadcast %52 : vector<8x1xf32> to vector<8x128xf32>
    %54 = arith.addf %51, %53 : vector<8x128xf32>
    %cst_58 = arith.constant 0.000000e+00 : f32
    %55 = vector.broadcast %cst_58 : f32 to vector<8x128xf32>
    %56 = arith.maximumf %54, %55 : vector<8x128xf32>
    %57 = vector.broadcast %0 : vector<1x128xf32> to vector<8x128xf32>
    %58 = arith.mulf %56, %57 : vector<8x128xf32>
    %c0_59 = arith.constant 0 : index
    %c0_60 = arith.constant 0 : index
    %c0_61 = arith.constant 0 : index
    %59 = vector.load %arg9[%c0_59, %c0_60, %c0_61] : memref<1x8x128xf32, #tpu.memory_space<vmem>>, vector<1x8x128xf32>
    %60 = vector.shape_cast %59 : vector<1x8x128xf32> to vector<8x128xf32>
    %61 = vector.shape_cast %58 : vector<8x128xf32> to vector<1x8x128xf32>
    tpu.vector_store %arg9[%c0_59, %c0_60, %c0_61], %61 {strides = array<i32>} : memref<1x8x128xf32, #tpu.memory_space<vmem>>, vector<1x8x128xf32>,
    %cst_62 = arith.constant 0.000000e+00 : f32
    %62 = vector.broadcast %cst_62 : f32 to vector<8x128xf32>
    %c0_63 = arith.constant 0 : index
    %c0_64 = arith.constant 0 : index
    %c0_65 = arith.constant 0 : index
    %63 = vector.load %arg10[%c0_63, %c0_64, %c0_65] : memref<1x8x128xf32, #tpu.memory_space<vmem>>, vector<1x8x128xf32>
    %64 = vector.shape_cast %63 : vector<1x8x128xf32> to vector<8x128xf32>
    %65 = vector.shape_cast %62 : vector<8x128xf32> to vector<1x8x128xf32>
    tpu.vector_store %arg10[%c0_63, %c0_64, %c0_65], %65 {strides = array<i32>} : memref<1x8x128xf32, #tpu.memory_space<vmem>>, vector<1x8x128xf32>,
    %c0_66 = arith.constant 0 : index
    %c0_67 = arith.constant 0 : index
    %66 = vector.load %arg7[%c0_66, %c0_67] : memref<10x6xf32, #tpu.memory_space<vmem>>, vector<10x6xf32>
    %c0_68 = arith.constant 0 : index
    %c0_69 = arith.constant 0 : index
    %67 = vector.load %arg8[%c0_68, %c0_69] : memref<10x6xf32, #tpu.memory_space<vmem>>, vector<10x6xf32>
    %c0_70 = arith.constant 0 : index
    %c0_71 = arith.constant 0 : index
    %c10 = arith.constant 10 : index
    %68 = vector.load %arg9[%c0_70, %c0_71, %c10] : memref<1x8x128xf32, #tpu.memory_space<vmem>>, vector<1x8x10xf32>
    %69 = vector.shape_cast %68 : vector<1x8x10xf32> to vector<8x10xf32>
    %c0_72 = arith.constant 0 : index
    %c0_73 = arith.constant 0 : index
    %c20 = arith.constant 20 : index
    %70 = vector.load %arg9[%c0_72, %c0_73, %c20] : memref<1x8x128xf32, #tpu.memory_space<vmem>>, vector<1x8x10xf32>
    %71 = vector.shape_cast %70 : vector<1x8x10xf32> to vector<8x10xf32>
    %72 = arith.maximumf %69, %71 : vector<8x10xf32>
    %cst_74 = arith.constant dense<0.000000e+00> : vector<8x6xf32>
    %73 = tpu.matmul %72, %66, %cst_74 {dimension_numbers = #tpu.dot_dimension_numbers<[1], [0], [0], [1], [0, 0, 1, 1], [], []>} : vector<8x10xf32>, vector<10x6xf32>, vector<8x6xf32> -> vector<8x6xf32>
    %cst_75 = arith.constant dense<0.000000e+00> : vector<8x6xf32>
    %74 = tpu.matmul %72, %67, %cst_75 {dimension_numbers = #tpu.dot_dimension_numbers<[1], [0], [0], [1], [0, 0, 1, 1], [], []>} : vector<8x10xf32>, vector<10x6xf32>, vector<8x6xf32> -> vector<8x6xf32>
    %75 = arith.maximumf %73, %74 : vector<8x6xf32>
    %c0_76 = arith.constant 0 : index
    %c0_77 = arith.constant 0 : index
    %c6 = arith.constant 6 : index
    %76 = vector.load %arg10[%c0_76, %c0_77, %c6] : memref<1x8x128xf32, #tpu.memory_space<vmem>>, vector<1x8x6xf32>
    %77 = vector.shape_cast %76 : vector<1x8x6xf32> to vector<8x6xf32>
    %78 = vector.shape_cast %75 : vector<8x6xf32> to vector<1x8x6xf32>
    tpu.vector_store %arg10[%c0_76, %c0_77, %c6], %78 {strides = array<i32>} : memref<1x8x128xf32, #tpu.memory_space<vmem>>, vector<1x8x6xf32>,
    %c0_78 = arith.constant 0 : index
    %c0_79 = arith.constant 0 : index
    %c30 = arith.constant 30 : index
    %79 = vector.load %arg9[%c0_78, %c0_79, %c30] : memref<1x8x128xf32, #tpu.memory_space<vmem>>, vector<1x8x10xf32>
    %80 = vector.shape_cast %79 : vector<1x8x10xf32> to vector<8x10xf32>
    %c0_80 = arith.constant 0 : index
    %c0_81 = arith.constant 0 : index
    %c40_82 = arith.constant 40 : index
    %81 = vector.load %arg9[%c0_80, %c0_81, %c40_82] : memref<1x8x128xf32, #tpu.memory_space<vmem>>, vector<1x8x10xf32>
    %82 = vector.shape_cast %81 : vector<1x8x10xf32> to vector<8x10xf32>
    %83 = arith.maximumf %80, %82 : vector<8x10xf32>
    %cst_83 = arith.constant dense<0.000000e+00> : vector<8x6xf32>
    %84 = tpu.matmul %83, %66, %cst_83 {dimension_numbers = #tpu.dot_dimension_numbers<[1], [0], [0], [1], [0, 0, 1, 1], [], []>} : vector<8x10xf32>, vector<10x6xf32>, vector<8x6xf32> -> vector<8x6xf32>
    %cst_84 = arith.constant dense<0.000000e+00> : vector<8x6xf32>
    %85 = tpu.matmul %83, %67, %cst_84 {dimension_numbers = #tpu.dot_dimension_numbers<[1], [0], [0], [1], [0, 0, 1, 1], [], []>} : vector<8x10xf32>, vector<10x6xf32>, vector<8x6xf32> -> vector<8x6xf32>
    %86 = arith.maximumf %84, %85 : vector<8x6xf32>
    %c0_85 = arith.constant 0 : index
    %c0_86 = arith.constant 0 : index
    %c12 = arith.constant 12 : index
    %87 = vector.load %arg10[%c0_85, %c0_86, %c12] : memref<1x8x128xf32, #tpu.memory_space<vmem>>, vector<1x8x6xf32>
    %88 = vector.shape_cast %87 : vector<1x8x6xf32> to vector<8x6xf32>
    %89 = vector.shape_cast %86 : vector<8x6xf32> to vector<1x8x6xf32>
    tpu.vector_store %arg10[%c0_85, %c0_86, %c12], %89 {strides = array<i32>} : memref<1x8x128xf32, #tpu.memory_space<vmem>>, vector<1x8x6xf32>,
    %c0_87 = arith.constant 0 : index
    %c0_88 = arith.constant 0 : index
    %c50 = arith.constant 50 : index
    %90 = vector.load %arg9[%c0_87, %c0_88, %c50] : memref<1x8x128xf32, #tpu.memory_space<vmem>>, vector<1x8x10xf32>
    %91 = vector.shape_cast %90 : vector<1x8x10xf32> to vector<8x10xf32>
    %c0_89 = arith.constant 0 : index
    %c0_90 = arith.constant 0 : index
    %c60 = arith.constant 60 : index
    %92 = vector.load %arg9[%c0_89, %c0_90, %c60] : memref<1x8x128xf32, #tpu.memory_space<vmem>>, vector<1x8x10xf32>
    %93 = vector.shape_cast %92 : vector<1x8x10xf32> to vector<8x10xf32>
    %94 = arith.maximumf %91, %93 : vector<8x10xf32>
    %cst_91 = arith.constant dense<0.000000e+00> : vector<8x6xf32>
    %95 = tpu.matmul %94, %66, %cst_91 {dimension_numbers = #tpu.dot_dimension_numbers<[1], [0], [0], [1], [0, 0, 1, 1], [], []>} : vector<8x10xf32>, vector<10x6xf32>, vector<8x6xf32> -> vector<8x6xf32>
    %cst_92 = arith.constant dense<0.000000e+00> : vector<8x6xf32>
    %96 = tpu.matmul %94, %67, %cst_92 {dimension_numbers = #tpu.dot_dimension_numbers<[1], [0], [0], [1], [0, 0, 1, 1], [], []>} : vector<8x10xf32>, vector<10x6xf32>, vector<8x6xf32> -> vector<8x6xf32>
    %97 = arith.maximumf %95, %96 : vector<8x6xf32>
    %c0_93 = arith.constant 0 : index
    %c0_94 = arith.constant 0 : index
    %c18 = arith.constant 18 : index
    %98 = vector.load %arg10[%c0_93, %c0_94, %c18] : memref<1x8x128xf32, #tpu.memory_space<vmem>>, vector<1x8x6xf32>
    %99 = vector.shape_cast %98 : vector<1x8x6xf32> to vector<8x6xf32>
    %100 = vector.shape_cast %97 : vector<8x6xf32> to vector<1x8x6xf32>
    tpu.vector_store %arg10[%c0_93, %c0_94, %c18], %100 {strides = array<i32>} : memref<1x8x128xf32, #tpu.memory_space<vmem>>, vector<1x8x6xf32>,
    %c0_95 = arith.constant 0 : index
    %c0_96 = arith.constant 0 : index
    %c70 = arith.constant 70 : index
    %101 = vector.load %arg9[%c0_95, %c0_96, %c70] : memref<1x8x128xf32, #tpu.memory_space<vmem>>, vector<1x8x10xf32>
    %102 = vector.shape_cast %101 : vector<1x8x10xf32> to vector<8x10xf32>
    %c0_97 = arith.constant 0 : index
    %c0_98 = arith.constant 0 : index
    %c80 = arith.constant 80 : index
    %103 = vector.load %arg9[%c0_97, %c0_98, %c80] : memref<1x8x128xf32, #tpu.memory_space<vmem>>, vector<1x8x10xf32>
    %104 = vector.shape_cast %103 : vector<1x8x10xf32> to vector<8x10xf32>
    %105 = arith.maximumf %102, %104 : vector<8x10xf32>
    %cst_99 = arith.constant dense<0.000000e+00> : vector<8x6xf32>
    %106 = tpu.matmul %105, %66, %cst_99 {dimension_numbers = #tpu.dot_dimension_numbers<[1], [0], [0], [1], [0, 0, 1, 1], [], []>} : vector<8x10xf32>, vector<10x6xf32>, vector<8x6xf32> -> vector<8x6xf32>
    %cst_100 = arith.constant dense<0.000000e+00> : vector<8x6xf32>
    %107 = tpu.matmul %105, %67, %cst_100 {dimension_numbers = #tpu.dot_dimension_numbers<[1], [0], [0], [1], [0, 0, 1, 1], [], []>} : vector<8x10xf32>, vector<10x6xf32>, vector<8x6xf32> -> vector<8x6xf32>
    %108 = arith.maximumf %106, %107 : vector<8x6xf32>
    %c0_101 = arith.constant 0 : index
    %c0_102 = arith.constant 0 : index
    %c24_103 = arith.constant 24 : index
    %109 = vector.load %arg10[%c0_101, %c0_102, %c24_103] : memref<1x8x128xf32, #tpu.memory_space<vmem>>, vector<1x8x6xf32>
    %110 = vector.shape_cast %109 : vector<1x8x6xf32> to vector<8x6xf32>
    %111 = vector.shape_cast %108 : vector<8x6xf32> to vector<1x8x6xf32>
    tpu.vector_store %arg10[%c0_101, %c0_102, %c24_103], %111 {strides = array<i32>} : memref<1x8x128xf32, #tpu.memory_space<vmem>>, vector<1x8x6xf32>,
    return
  }
  func.func @transform_0(%arg0: i32) -> (i32, i32, i32) {
    %c0_i32 = arith.constant 0 : i32
    %c0_i32_0 = arith.constant 0 : i32
    %c0_i32_1 = arith.constant 0 : i32
    return %arg0, %c0_i32, %c0_i32_0 : i32, i32, i32
  }
  func.func @transform_1(%arg0: i32) -> (i32, i32) {
    %c0_i32 = arith.constant 0 : i32
    %c0_i32_0 = arith.constant 0 : i32
    %c0_i32_1 = arith.constant 0 : i32
    return %c0_i32, %c0_i32_0 : i32, i32
  }
  func.func @transform_2(%arg0: i32) -> (i32, i32) {
    %c0_i32 = arith.constant 0 : i32
    %c0_i32_0 = arith.constant 0 : i32
    %c0_i32_1 = arith.constant 0 : i32
    return %c0_i32, %c0_i32_0 : i32, i32
  }
  func.func @transform_3(%arg0: i32) -> (i32, i32) {
    %c0_i32 = arith.constant 0 : i32
    %c0_i32_0 = arith.constant 0 : i32
    %c0_i32_1 = arith.constant 0 : i32
    return %c0_i32, %c0_i32_0 : i32, i32
  }
  func.func @transform_4(%arg0: i32) -> (i32, i32) {
    %c0_i32 = arith.constant 0 : i32
    %c0_i32_0 = arith.constant 0 : i32
    %c0_i32_1 = arith.constant 0 : i32
    return %c0_i32, %c0_i32_0 : i32, i32
  }
  func.func @transform_5(%arg0: i32) -> (i32, i32) {
    %c0_i32 = arith.constant 0 : i32
    %c0_i32_0 = arith.constant 0 : i32
    %c0_i32_1 = arith.constant 0 : i32
    return %c0_i32, %c0_i32_0 : i32, i32
  }
  func.func @transform_6(%arg0: i32) -> (i32, i32) {
    %c0_i32 = arith.constant 0 : i32
    %c0_i32_0 = arith.constant 0 : i32
    %c0_i32_1 = arith.constant 0 : i32
    return %c0_i32, %c0_i32_0 : i32, i32
  }
  func.func @transform_7(%arg0: i32) -> (i32, i32) {
    %c0_i32 = arith.constant 0 : i32
    %c0_i32_0 = arith.constant 0 : i32
    %c0_i32_1 = arith.constant 0 : i32
    return %c0_i32, %c0_i32_0 : i32, i32
  }
  func.func @transform_8(%arg0: i32) -> (i32, i32, i32) {
    %c0_i32 = arith.constant 0 : i32
    %c0_i32_0 = arith.constant 0 : i32
    %c0_i32_1 = arith.constant 0 : i32
    return %arg0, %c0_i32, %c0_i32_0 : i32, i32, i32
  }
  func.func @transform_9(%arg0: i32) -> (i32, i32, i32) {
    %c0_i32 = arith.constant 0 : i32
    %c0_i32_0 = arith.constant 0 : i32
    %c0_i32_1 = arith.constant 0 : i32
    return %arg0, %c0_i32, %c0_i32_0 : i32, i32, i32
  }
}

module attributes {stable_mosaic.version = 11 : i64} {
  func.func @_decoder_kernel(%arg0: i32, %arg1: memref<1x8x128xf32, #tpu.memory_space<vmem>>, %arg2: memref<1x8x128xf32, #tpu.memory_space<vmem>>, %arg3: memref<6x10xf32, #tpu.memory_space<vmem>>, %arg4: memref<8x144xbf16, #tpu.memory_space<vmem>>, %arg5: memref<8x1xf32, #tpu.memory_space<vmem>>, %arg6: memref<8x72xbf16, #tpu.memory_space<vmem>>, %arg7: memref<8x1xf32, #tpu.memory_space<vmem>>, %arg8: memref<1x128xf32, #tpu.memory_space<vmem>>, %arg9: memref<1x8x128xf32, #tpu.memory_space<vmem>>, %arg10: memref<8x128xf32, #tpu.memory_space<vmem>>, %arg11: memref<144x128xf32, #tpu.memory_space<vmem>>) attributes {dimension_semantics = [#tpu.dimension_semantics<parallel>], iteration_bounds = array<i64: 2>, scalar_prefetch = 0 : i64, scratch_operands = 2 : i64, tpu.core_type = #tpu.core_type<tc>, window_params = [{transform_indices = @transform_0, window_bounds = array<i64: 1, 8, 128>}, {transform_indices = @transform_1, window_bounds = array<i64: 1, 8, 128>}, {pipeline_mode = #tpu.pipeline_mode<synchronous>, transform_indices = @transform_2, window_bounds = array<i64: 6, 10>}, {pipeline_mode = #tpu.pipeline_mode<synchronous>, transform_indices = @transform_3, window_bounds = array<i64: 8, 144>}, {pipeline_mode = #tpu.pipeline_mode<synchronous>, transform_indices = @transform_4, window_bounds = array<i64: 8, 1>}, {pipeline_mode = #tpu.pipeline_mode<synchronous>, transform_indices = @transform_5, window_bounds = array<i64: 8, 72>}, {pipeline_mode = #tpu.pipeline_mode<synchronous>, transform_indices = @transform_6, window_bounds = array<i64: 8, 1>}, {pipeline_mode = #tpu.pipeline_mode<synchronous>, transform_indices = @transform_7, window_bounds = array<i64: 1, 128>}, {transform_indices = @transform_8, window_bounds = array<i64: 1, 8, 128>}]} {
    %cst = arith.constant 0.000000e+00 : f32
    %0 = vector.broadcast %cst : f32 to vector<8x128xf32>
    %c0 = arith.constant 0 : index
    %c0_0 = arith.constant 0 : index
    %1 = vector.load %arg10[%c0, %c0_0] : memref<8x128xf32, #tpu.memory_space<vmem>>, vector<8x128xf32>
    tpu.vector_store %arg10[%c0, %c0_0], %0 {strides = array<i32>} : memref<8x128xf32, #tpu.memory_space<vmem>>, vector<8x128xf32>,
    %c0_1 = arith.constant 0 : index
    %c0_2 = arith.constant 0 : index
    %2 = vector.load %arg3[%c0_1, %c0_2] : memref<6x10xf32, #tpu.memory_space<vmem>>, vector<6x10xf32>
    %c0_3 = arith.constant 0 : index
    %c0_4 = arith.constant 0 : index
    %c6 = arith.constant 6 : index
    %3 = vector.load %arg1[%c0_3, %c0_4, %c6] : memref<1x8x128xf32, #tpu.memory_space<vmem>>, vector<1x8x6xf32>
    %4 = vector.shape_cast %3 : vector<1x8x6xf32> to vector<8x6xf32>
    %cst_5 = arith.constant dense<0.000000e+00> : vector<8x10xf32>
    %5 = tpu.matmul %4, %2, %cst_5 {dimension_numbers = #tpu.dot_dimension_numbers<[1], [0], [0], [1], [0, 0, 1, 1], [], []>} : vector<8x6xf32>, vector<6x10xf32>, vector<8x10xf32> -> vector<8x10xf32>
    %c0_6 = arith.constant 0 : index
    %c10 = arith.constant 10 : index
    %6 = vector.load %arg10[%c0_6, %c10] : memref<8x128xf32, #tpu.memory_space<vmem>>, vector<8x10xf32>
    tpu.vector_store %arg10[%c0_6, %c10], %5 {strides = array<i32>} : memref<8x128xf32, #tpu.memory_space<vmem>>, vector<8x10xf32>,
    %c0_7 = arith.constant 0 : index
    %c20 = arith.constant 20 : index
    %7 = vector.load %arg10[%c0_7, %c20] : memref<8x128xf32, #tpu.memory_space<vmem>>, vector<8x10xf32>
    tpu.vector_store %arg10[%c0_7, %c20], %5 {strides = array<i32>} : memref<8x128xf32, #tpu.memory_space<vmem>>, vector<8x10xf32>,
    %c0_8 = arith.constant 0 : index
    %c0_9 = arith.constant 0 : index
    %c12 = arith.constant 12 : index
    %8 = vector.load %arg1[%c0_8, %c0_9, %c12] : memref<1x8x128xf32, #tpu.memory_space<vmem>>, vector<1x8x6xf32>
    %9 = vector.shape_cast %8 : vector<1x8x6xf32> to vector<8x6xf32>
    %cst_10 = arith.constant dense<0.000000e+00> : vector<8x10xf32>
    %10 = tpu.matmul %9, %2, %cst_10 {dimension_numbers = #tpu.dot_dimension_numbers<[1], [0], [0], [1], [0, 0, 1, 1], [], []>} : vector<8x6xf32>, vector<6x10xf32>, vector<8x10xf32> -> vector<8x10xf32>
    %c0_11 = arith.constant 0 : index
    %c30 = arith.constant 30 : index
    %11 = vector.load %arg10[%c0_11, %c30] : memref<8x128xf32, #tpu.memory_space<vmem>>, vector<8x10xf32>
    tpu.vector_store %arg10[%c0_11, %c30], %10 {strides = array<i32>} : memref<8x128xf32, #tpu.memory_space<vmem>>, vector<8x10xf32>,
    %c0_12 = arith.constant 0 : index
    %c40 = arith.constant 40 : index
    %12 = vector.load %arg10[%c0_12, %c40] : memref<8x128xf32, #tpu.memory_space<vmem>>, vector<8x10xf32>
    tpu.vector_store %arg10[%c0_12, %c40], %10 {strides = array<i32>} : memref<8x128xf32, #tpu.memory_space<vmem>>, vector<8x10xf32>,
    %c0_13 = arith.constant 0 : index
    %c0_14 = arith.constant 0 : index
    %c18 = arith.constant 18 : index
    %13 = vector.load %arg1[%c0_13, %c0_14, %c18] : memref<1x8x128xf32, #tpu.memory_space<vmem>>, vector<1x8x6xf32>
    %14 = vector.shape_cast %13 : vector<1x8x6xf32> to vector<8x6xf32>
    %cst_15 = arith.constant dense<0.000000e+00> : vector<8x10xf32>
    %15 = tpu.matmul %14, %2, %cst_15 {dimension_numbers = #tpu.dot_dimension_numbers<[1], [0], [0], [1], [0, 0, 1, 1], [], []>} : vector<8x6xf32>, vector<6x10xf32>, vector<8x10xf32> -> vector<8x10xf32>
    %c0_16 = arith.constant 0 : index
    %c50 = arith.constant 50 : index
    %16 = vector.load %arg10[%c0_16, %c50] : memref<8x128xf32, #tpu.memory_space<vmem>>, vector<8x10xf32>
    tpu.vector_store %arg10[%c0_16, %c50], %15 {strides = array<i32>} : memref<8x128xf32, #tpu.memory_space<vmem>>, vector<8x10xf32>,
    %c0_17 = arith.constant 0 : index
    %c60 = arith.constant 60 : index
    %17 = vector.load %arg10[%c0_17, %c60] : memref<8x128xf32, #tpu.memory_space<vmem>>, vector<8x10xf32>
    tpu.vector_store %arg10[%c0_17, %c60], %15 {strides = array<i32>} : memref<8x128xf32, #tpu.memory_space<vmem>>, vector<8x10xf32>,
    %c0_18 = arith.constant 0 : index
    %c0_19 = arith.constant 0 : index
    %c24 = arith.constant 24 : index
    %18 = vector.load %arg1[%c0_18, %c0_19, %c24] : memref<1x8x128xf32, #tpu.memory_space<vmem>>, vector<1x8x6xf32>
    %19 = vector.shape_cast %18 : vector<1x8x6xf32> to vector<8x6xf32>
    %cst_20 = arith.constant dense<0.000000e+00> : vector<8x10xf32>
    %20 = tpu.matmul %19, %2, %cst_20 {dimension_numbers = #tpu.dot_dimension_numbers<[1], [0], [0], [1], [0, 0, 1, 1], [], []>} : vector<8x6xf32>, vector<6x10xf32>, vector<8x10xf32> -> vector<8x10xf32>
    %c0_21 = arith.constant 0 : index
    %c70 = arith.constant 70 : index
    %21 = vector.load %arg10[%c0_21, %c70] : memref<8x128xf32, #tpu.memory_space<vmem>>, vector<8x10xf32>
    tpu.vector_store %arg10[%c0_21, %c70], %20 {strides = array<i32>} : memref<8x128xf32, #tpu.memory_space<vmem>>, vector<8x10xf32>,
    %c0_22 = arith.constant 0 : index
    %c80 = arith.constant 80 : index
    %22 = vector.load %arg10[%c0_22, %c80] : memref<8x128xf32, #tpu.memory_space<vmem>>, vector<8x10xf32>
    tpu.vector_store %arg10[%c0_22, %c80], %20 {strides = array<i32>} : memref<8x128xf32, #tpu.memory_space<vmem>>, vector<8x10xf32>,
    %c0_23 = arith.constant 0 : index
    %c0_24 = arith.constant 0 : index
    %23 = vector.load %arg8[%c0_23, %c0_24] : memref<1x128xf32, #tpu.memory_space<vmem>>, vector<1x128xf32>
    %c0_25 = arith.constant 0 : index
    %c0_26 = arith.constant 0 : index
    %24 = vector.load %arg10[%c0_25, %c0_26] : memref<8x128xf32, #tpu.memory_space<vmem>>, vector<8x128xf32>
    %c0_27 = arith.constant 0 : index
    %c0_28 = arith.constant 0 : index
    %c0_29 = arith.constant 0 : index
    %25 = vector.load %arg2[%c0_27, %c0_28, %c0_29] : memref<1x8x128xf32, #tpu.memory_space<vmem>>, vector<1x8x128xf32>
    %26 = vector.shape_cast %25 : vector<1x8x128xf32> to vector<8x128xf32>
    %c10_i32 = arith.constant 10 : i32
    %27 = tpu.dynamic_rotate %24 by %c10_i32 dim 1 : vector<8x128xf32>, i32 -> vector<8x128xf32>
    %c118_i32 = arith.constant 118 : i32
    %28 = tpu.dynamic_rotate %24 by %c118_i32 dim 1 : vector<8x128xf32>, i32 -> vector<8x128xf32>
    %c1_i32 = arith.constant 1 : i32
    %29 = tpu.dynamic_rotate %27 by %c1_i32 dim 1 : vector<8x128xf32>, i32 -> vector<8x128xf32>
    %c0_30 = arith.constant 0 : index
    %c0_31 = arith.constant 0 : index
    %30 = vector.load %arg11[%c0_30, %c0_31] : memref<144x128xf32, #tpu.memory_space<vmem>>, vector<8x128xf32>
    tpu.vector_store %arg11[%c0_30, %c0_31], %29 {strides = array<i32>} : memref<144x128xf32, #tpu.memory_space<vmem>>, vector<8x128xf32>,
    %c8 = arith.constant 8 : index
    %c0_32 = arith.constant 0 : index
    %31 = vector.load %arg11[%c8, %c0_32] : memref<144x128xf32, #tpu.memory_space<vmem>>, vector<8x128xf32>
    tpu.vector_store %arg11[%c8, %c0_32], %27 {strides = array<i32>} : memref<144x128xf32, #tpu.memory_space<vmem>>, vector<8x128xf32>,
    %c127_i32 = arith.constant 127 : i32
    %32 = tpu.dynamic_rotate %27 by %c127_i32 dim 1 : vector<8x128xf32>, i32 -> vector<8x128xf32>
    %c16 = arith.constant 16 : index
    %c0_33 = arith.constant 0 : index
    %33 = vector.load %arg11[%c16, %c0_33] : memref<144x128xf32, #tpu.memory_space<vmem>>, vector<8x128xf32>
    tpu.vector_store %arg11[%c16, %c0_33], %32 {strides = array<i32>} : memref<144x128xf32, #tpu.memory_space<vmem>>, vector<8x128xf32>,
    %c1_i32_34 = arith.constant 1 : i32
    %34 = tpu.dynamic_rotate %24 by %c1_i32_34 dim 1 : vector<8x128xf32>, i32 -> vector<8x128xf32>
    %c24_35 = arith.constant 24 : index
    %c0_36 = arith.constant 0 : index
    %35 = vector.load %arg11[%c24_35, %c0_36] : memref<144x128xf32, #tpu.memory_space<vmem>>, vector<8x128xf32>
    tpu.vector_store %arg11[%c24_35, %c0_36], %34 {strides = array<i32>} : memref<144x128xf32, #tpu.memory_space<vmem>>, vector<8x128xf32>,
    %c32 = arith.constant 32 : index
    %c0_37 = arith.constant 0 : index
    %36 = vector.load %arg11[%c32, %c0_37] : memref<144x128xf32, #tpu.memory_space<vmem>>, vector<8x128xf32>
    tpu.vector_store %arg11[%c32, %c0_37], %24 {strides = array<i32>} : memref<144x128xf32, #tpu.memory_space<vmem>>, vector<8x128xf32>,
    %c127_i32_38 = arith.constant 127 : i32
    %37 = tpu.dynamic_rotate %24 by %c127_i32_38 dim 1 : vector<8x128xf32>, i32 -> vector<8x128xf32>
    %c40_39 = arith.constant 40 : index
    %c0_40 = arith.constant 0 : index
    %38 = vector.load %arg11[%c40_39, %c0_40] : memref<144x128xf32, #tpu.memory_space<vmem>>, vector<8x128xf32>
    tpu.vector_store %arg11[%c40_39, %c0_40], %37 {strides = array<i32>} : memref<144x128xf32, #tpu.memory_space<vmem>>, vector<8x128xf32>,
    %c1_i32_41 = arith.constant 1 : i32
    %39 = tpu.dynamic_rotate %28 by %c1_i32_41 dim 1 : vector<8x128xf32>, i32 -> vector<8x128xf32>
    %c48 = arith.constant 48 : index
    %c0_42 = arith.constant 0 : index
    %40 = vector.load %arg11[%c48, %c0_42] : memref<144x128xf32, #tpu.memory_space<vmem>>, vector<8x128xf32>
    tpu.vector_store %arg11[%c48, %c0_42], %39 {strides = array<i32>} : memref<144x128xf32, #tpu.memory_space<vmem>>, vector<8x128xf32>,
    %c56 = arith.constant 56 : index
    %c0_43 = arith.constant 0 : index
    %41 = vector.load %arg11[%c56, %c0_43] : memref<144x128xf32, #tpu.memory_space<vmem>>, vector<8x128xf32>
    tpu.vector_store %arg11[%c56, %c0_43], %28 {strides = array<i32>} : memref<144x128xf32, #tpu.memory_space<vmem>>, vector<8x128xf32>,
    %c127_i32_44 = arith.constant 127 : i32
    %42 = tpu.dynamic_rotate %28 by %c127_i32_44 dim 1 : vector<8x128xf32>, i32 -> vector<8x128xf32>
    %c64 = arith.constant 64 : index
    %c0_45 = arith.constant 0 : index
    %43 = vector.load %arg11[%c64, %c0_45] : memref<144x128xf32, #tpu.memory_space<vmem>>, vector<8x128xf32>
    tpu.vector_store %arg11[%c64, %c0_45], %42 {strides = array<i32>} : memref<144x128xf32, #tpu.memory_space<vmem>>, vector<8x128xf32>,
    %c10_i32_46 = arith.constant 10 : i32
    %44 = tpu.dynamic_rotate %26 by %c10_i32_46 dim 1 : vector<8x128xf32>, i32 -> vector<8x128xf32>
    %c118_i32_47 = arith.constant 118 : i32
    %45 = tpu.dynamic_rotate %26 by %c118_i32_47 dim 1 : vector<8x128xf32>, i32 -> vector<8x128xf32>
    %c1_i32_48 = arith.constant 1 : i32
    %46 = tpu.dynamic_rotate %44 by %c1_i32_48 dim 1 : vector<8x128xf32>, i32 -> vector<8x128xf32>
    %c72 = arith.constant 72 : index
    %c0_49 = arith.constant 0 : index
    %47 = vector.load %arg11[%c72, %c0_49] : memref<144x128xf32, #tpu.memory_space<vmem>>, vector<8x128xf32>
    tpu.vector_store %arg11[%c72, %c0_49], %46 {strides = array<i32>} : memref<144x128xf32, #tpu.memory_space<vmem>>, vector<8x128xf32>,
    %c80_50 = arith.constant 80 : index
    %c0_51 = arith.constant 0 : index
    %48 = vector.load %arg11[%c80_50, %c0_51] : memref<144x128xf32, #tpu.memory_space<vmem>>, vector<8x128xf32>
    tpu.vector_store %arg11[%c80_50, %c0_51], %44 {strides = array<i32>} : memref<144x128xf32, #tpu.memory_space<vmem>>, vector<8x128xf32>,
    %c127_i32_52 = arith.constant 127 : i32
    %49 = tpu.dynamic_rotate %44 by %c127_i32_52 dim 1 : vector<8x128xf32>, i32 -> vector<8x128xf32>
    %c88 = arith.constant 88 : index
    %c0_53 = arith.constant 0 : index
    %50 = vector.load %arg11[%c88, %c0_53] : memref<144x128xf32, #tpu.memory_space<vmem>>, vector<8x128xf32>
    tpu.vector_store %arg11[%c88, %c0_53], %49 {strides = array<i32>} : memref<144x128xf32, #tpu.memory_space<vmem>>, vector<8x128xf32>,
    %c1_i32_54 = arith.constant 1 : i32
    %51 = tpu.dynamic_rotate %26 by %c1_i32_54 dim 1 : vector<8x128xf32>, i32 -> vector<8x128xf32>
    %c96 = arith.constant 96 : index
    %c0_55 = arith.constant 0 : index
    %52 = vector.load %arg11[%c96, %c0_55] : memref<144x128xf32, #tpu.memory_space<vmem>>, vector<8x128xf32>
    tpu.vector_store %arg11[%c96, %c0_55], %51 {strides = array<i32>} : memref<144x128xf32, #tpu.memory_space<vmem>>, vector<8x128xf32>,
    %c104 = arith.constant 104 : index
    %c0_56 = arith.constant 0 : index
    %53 = vector.load %arg11[%c104, %c0_56] : memref<144x128xf32, #tpu.memory_space<vmem>>, vector<8x128xf32>
    tpu.vector_store %arg11[%c104, %c0_56], %26 {strides = array<i32>} : memref<144x128xf32, #tpu.memory_space<vmem>>, vector<8x128xf32>,
    %c127_i32_57 = arith.constant 127 : i32
    %54 = tpu.dynamic_rotate %26 by %c127_i32_57 dim 1 : vector<8x128xf32>, i32 -> vector<8x128xf32>
    %c112 = arith.constant 112 : index
    %c0_58 = arith.constant 0 : index
    %55 = vector.load %arg11[%c112, %c0_58] : memref<144x128xf32, #tpu.memory_space<vmem>>, vector<8x128xf32>
    tpu.vector_store %arg11[%c112, %c0_58], %54 {strides = array<i32>} : memref<144x128xf32, #tpu.memory_space<vmem>>, vector<8x128xf32>,
    %c1_i32_59 = arith.constant 1 : i32
    %56 = tpu.dynamic_rotate %45 by %c1_i32_59 dim 1 : vector<8x128xf32>, i32 -> vector<8x128xf32>
    %c120 = arith.constant 120 : index
    %c0_60 = arith.constant 0 : index
    %57 = vector.load %arg11[%c120, %c0_60] : memref<144x128xf32, #tpu.memory_space<vmem>>, vector<8x128xf32>
    tpu.vector_store %arg11[%c120, %c0_60], %56 {strides = array<i32>} : memref<144x128xf32, #tpu.memory_space<vmem>>, vector<8x128xf32>,
    %c128 = arith.constant 128 : index
    %c0_61 = arith.constant 0 : index
    %58 = vector.load %arg11[%c128, %c0_61] : memref<144x128xf32, #tpu.memory_space<vmem>>, vector<8x128xf32>
    tpu.vector_store %arg11[%c128, %c0_61], %45 {strides = array<i32>} : memref<144x128xf32, #tpu.memory_space<vmem>>, vector<8x128xf32>,
    %c127_i32_62 = arith.constant 127 : i32
    %59 = tpu.dynamic_rotate %45 by %c127_i32_62 dim 1 : vector<8x128xf32>, i32 -> vector<8x128xf32>
    %c136 = arith.constant 136 : index
    %c0_63 = arith.constant 0 : index
    %60 = vector.load %arg11[%c136, %c0_63] : memref<144x128xf32, #tpu.memory_space<vmem>>, vector<8x128xf32>
    tpu.vector_store %arg11[%c136, %c0_63], %59 {strides = array<i32>} : memref<144x128xf32, #tpu.memory_space<vmem>>, vector<8x128xf32>,
    %c0_64 = arith.constant 0 : index
    %c0_65 = arith.constant 0 : index
    %61 = vector.load %arg4[%c0_64, %c0_65] : memref<8x144xbf16, #tpu.memory_space<vmem>>, vector<8x144xbf16>
    %c0_66 = arith.constant 0 : index
    %c0_67 = arith.constant 0 : index
    %62 = vector.load %arg11[%c0_66, %c0_67] : memref<144x128xf32, #tpu.memory_space<vmem>>, vector<144x128xf32>
    %63 = arith.truncf %62 : vector<144x128xf32> to vector<144x128xbf16>
    %cst_68 = arith.constant dense<0.000000e+00> : vector<8x128xf32>
    %64 = tpu.matmul %61, %63, %cst_68 {dimension_numbers = #tpu.dot_dimension_numbers<[1], [0], [0], [1], [0, 0, 1, 1], [], []>} : vector<8x144xbf16>, vector<144x128xbf16>, vector<8x128xf32> -> vector<8x128xf32>
    %c0_69 = arith.constant 0 : index
    %c0_70 = arith.constant 0 : index
    %65 = vector.load %arg5[%c0_69, %c0_70] : memref<8x1xf32, #tpu.memory_space<vmem>>, vector<8x1xf32>
    %66 = vector.broadcast %65 : vector<8x1xf32> to vector<8x128xf32>
    %67 = arith.addf %64, %66 : vector<8x128xf32>
    %cst_71 = arith.constant 0.000000e+00 : f32
    %68 = vector.broadcast %cst_71 : f32 to vector<8x128xf32>
    %69 = arith.maximumf %67, %68 : vector<8x128xf32>
    %70 = vector.broadcast %23 : vector<1x128xf32> to vector<8x128xf32>
    %71 = arith.mulf %69, %70 : vector<8x128xf32>
    %c10_i32_72 = arith.constant 10 : i32
    %72 = tpu.dynamic_rotate %71 by %c10_i32_72 dim 1 : vector<8x128xf32>, i32 -> vector<8x128xf32>
    %c118_i32_73 = arith.constant 118 : i32
    %73 = tpu.dynamic_rotate %71 by %c118_i32_73 dim 1 : vector<8x128xf32>, i32 -> vector<8x128xf32>
    %c1_i32_74 = arith.constant 1 : i32
    %74 = tpu.dynamic_rotate %72 by %c1_i32_74 dim 1 : vector<8x128xf32>, i32 -> vector<8x128xf32>
    %c0_75 = arith.constant 0 : index
    %c0_76 = arith.constant 0 : index
    %75 = vector.load %arg11[%c0_75, %c0_76] : memref<144x128xf32, #tpu.memory_space<vmem>>, vector<8x128xf32>
    tpu.vector_store %arg11[%c0_75, %c0_76], %74 {strides = array<i32>} : memref<144x128xf32, #tpu.memory_space<vmem>>, vector<8x128xf32>,
    %c8_77 = arith.constant 8 : index
    %c0_78 = arith.constant 0 : index
    %76 = vector.load %arg11[%c8_77, %c0_78] : memref<144x128xf32, #tpu.memory_space<vmem>>, vector<8x128xf32>
    tpu.vector_store %arg11[%c8_77, %c0_78], %72 {strides = array<i32>} : memref<144x128xf32, #tpu.memory_space<vmem>>, vector<8x128xf32>,
    %c127_i32_79 = arith.constant 127 : i32
    %77 = tpu.dynamic_rotate %72 by %c127_i32_79 dim 1 : vector<8x128xf32>, i32 -> vector<8x128xf32>
    %c16_80 = arith.constant 16 : index
    %c0_81 = arith.constant 0 : index
    %78 = vector.load %arg11[%c16_80, %c0_81] : memref<144x128xf32, #tpu.memory_space<vmem>>, vector<8x128xf32>
    tpu.vector_store %arg11[%c16_80, %c0_81], %77 {strides = array<i32>} : memref<144x128xf32, #tpu.memory_space<vmem>>, vector<8x128xf32>,
    %c1_i32_82 = arith.constant 1 : i32
    %79 = tpu.dynamic_rotate %71 by %c1_i32_82 dim 1 : vector<8x128xf32>, i32 -> vector<8x128xf32>
    %c24_83 = arith.constant 24 : index
    %c0_84 = arith.constant 0 : index
    %80 = vector.load %arg11[%c24_83, %c0_84] : memref<144x128xf32, #tpu.memory_space<vmem>>, vector<8x128xf32>
    tpu.vector_store %arg11[%c24_83, %c0_84], %79 {strides = array<i32>} : memref<144x128xf32, #tpu.memory_space<vmem>>, vector<8x128xf32>,
    %c32_85 = arith.constant 32 : index
    %c0_86 = arith.constant 0 : index
    %81 = vector.load %arg11[%c32_85, %c0_86] : memref<144x128xf32, #tpu.memory_space<vmem>>, vector<8x128xf32>
    tpu.vector_store %arg11[%c32_85, %c0_86], %71 {strides = array<i32>} : memref<144x128xf32, #tpu.memory_space<vmem>>, vector<8x128xf32>,
    %c127_i32_87 = arith.constant 127 : i32
    %82 = tpu.dynamic_rotate %71 by %c127_i32_87 dim 1 : vector<8x128xf32>, i32 -> vector<8x128xf32>
    %c40_88 = arith.constant 40 : index
    %c0_89 = arith.constant 0 : index
    %83 = vector.load %arg11[%c40_88, %c0_89] : memref<144x128xf32, #tpu.memory_space<vmem>>, vector<8x128xf32>
    tpu.vector_store %arg11[%c40_88, %c0_89], %82 {strides = array<i32>} : memref<144x128xf32, #tpu.memory_space<vmem>>, vector<8x128xf32>,
    %c1_i32_90 = arith.constant 1 : i32
    %84 = tpu.dynamic_rotate %73 by %c1_i32_90 dim 1 : vector<8x128xf32>, i32 -> vector<8x128xf32>
    %c48_91 = arith.constant 48 : index
    %c0_92 = arith.constant 0 : index
    %85 = vector.load %arg11[%c48_91, %c0_92] : memref<144x128xf32, #tpu.memory_space<vmem>>, vector<8x128xf32>
    tpu.vector_store %arg11[%c48_91, %c0_92], %84 {strides = array<i32>} : memref<144x128xf32, #tpu.memory_space<vmem>>, vector<8x128xf32>,
    %c56_93 = arith.constant 56 : index
    %c0_94 = arith.constant 0 : index
    %86 = vector.load %arg11[%c56_93, %c0_94] : memref<144x128xf32, #tpu.memory_space<vmem>>, vector<8x128xf32>
    tpu.vector_store %arg11[%c56_93, %c0_94], %73 {strides = array<i32>} : memref<144x128xf32, #tpu.memory_space<vmem>>, vector<8x128xf32>,
    %c127_i32_95 = arith.constant 127 : i32
    %87 = tpu.dynamic_rotate %73 by %c127_i32_95 dim 1 : vector<8x128xf32>, i32 -> vector<8x128xf32>
    %c64_96 = arith.constant 64 : index
    %c0_97 = arith.constant 0 : index
    %88 = vector.load %arg11[%c64_96, %c0_97] : memref<144x128xf32, #tpu.memory_space<vmem>>, vector<8x128xf32>
    tpu.vector_store %arg11[%c64_96, %c0_97], %87 {strides = array<i32>} : memref<144x128xf32, #tpu.memory_space<vmem>>, vector<8x128xf32>,
    %c0_98 = arith.constant 0 : index
    %c0_99 = arith.constant 0 : index
    %89 = vector.load %arg6[%c0_98, %c0_99] : memref<8x72xbf16, #tpu.memory_space<vmem>>, vector<8x72xbf16>
    %c0_100 = arith.constant 0 : index
    %c0_101 = arith.constant 0 : index
    %90 = vector.load %arg11[%c0_100, %c0_101] : memref<144x128xf32, #tpu.memory_space<vmem>>, vector<72x128xf32>
    %91 = arith.truncf %90 : vector<72x128xf32> to vector<72x128xbf16>
    %cst_102 = arith.constant dense<0.000000e+00> : vector<8x128xf32>
    %92 = tpu.matmul %89, %91, %cst_102 {dimension_numbers = #tpu.dot_dimension_numbers<[1], [0], [0], [1], [0, 0, 1, 1], [], []>} : vector<8x72xbf16>, vector<72x128xbf16>, vector<8x128xf32> -> vector<8x128xf32>
    %c0_103 = arith.constant 0 : index
    %c0_104 = arith.constant 0 : index
    %93 = vector.load %arg7[%c0_103, %c0_104] : memref<8x1xf32, #tpu.memory_space<vmem>>, vector<8x1xf32>
    %94 = vector.broadcast %93 : vector<8x1xf32> to vector<8x128xf32>
    %95 = arith.addf %92, %94 : vector<8x128xf32>
    %cst_105 = arith.constant 0.000000e+00 : f32
    %96 = vector.broadcast %cst_105 : f32 to vector<8x128xf32>
    %97 = arith.maximumf %95, %96 : vector<8x128xf32>
    %98 = vector.broadcast %23 : vector<1x128xf32> to vector<8x128xf32>
    %99 = arith.mulf %97, %98 : vector<8x128xf32>
    %c0_106 = arith.constant 0 : index
    %c0_107 = arith.constant 0 : index
    %c0_108 = arith.constant 0 : index
    %100 = vector.load %arg9[%c0_106, %c0_107, %c0_108] : memref<1x8x128xf32, #tpu.memory_space<vmem>>, vector<1x8x128xf32>
    %101 = vector.shape_cast %100 : vector<1x8x128xf32> to vector<8x128xf32>
    %102 = vector.shape_cast %99 : vector<8x128xf32> to vector<1x8x128xf32>
    tpu.vector_store %arg9[%c0_106, %c0_107, %c0_108], %102 {strides = array<i32>} : memref<1x8x128xf32, #tpu.memory_space<vmem>>, vector<1x8x128xf32>,
    return
  }
  func.func @transform_0(%arg0: i32) -> (i32, i32, i32) {
    %c0_i32 = arith.constant 0 : i32
    %c0_i32_0 = arith.constant 0 : i32
    %c0_i32_1 = arith.constant 0 : i32
    return %arg0, %c0_i32, %c0_i32_0 : i32, i32, i32
  }
  func.func @transform_1(%arg0: i32) -> (i32, i32, i32) {
    %c0_i32 = arith.constant 0 : i32
    %c0_i32_0 = arith.constant 0 : i32
    %c0_i32_1 = arith.constant 0 : i32
    return %arg0, %c0_i32, %c0_i32_0 : i32, i32, i32
  }
  func.func @transform_2(%arg0: i32) -> (i32, i32) {
    %c0_i32 = arith.constant 0 : i32
    %c0_i32_0 = arith.constant 0 : i32
    %c0_i32_1 = arith.constant 0 : i32
    return %c0_i32, %c0_i32_0 : i32, i32
  }
  func.func @transform_3(%arg0: i32) -> (i32, i32) {
    %c0_i32 = arith.constant 0 : i32
    %c0_i32_0 = arith.constant 0 : i32
    %c0_i32_1 = arith.constant 0 : i32
    return %c0_i32, %c0_i32_0 : i32, i32
  }
  func.func @transform_4(%arg0: i32) -> (i32, i32) {
    %c0_i32 = arith.constant 0 : i32
    %c0_i32_0 = arith.constant 0 : i32
    %c0_i32_1 = arith.constant 0 : i32
    return %c0_i32, %c0_i32_0 : i32, i32
  }
  func.func @transform_5(%arg0: i32) -> (i32, i32) {
    %c0_i32 = arith.constant 0 : i32
    %c0_i32_0 = arith.constant 0 : i32
    %c0_i32_1 = arith.constant 0 : i32
    return %c0_i32, %c0_i32_0 : i32, i32
  }
  func.func @transform_6(%arg0: i32) -> (i32, i32) {
    %c0_i32 = arith.constant 0 : i32
    %c0_i32_0 = arith.constant 0 : i32
    %c0_i32_1 = arith.constant 0 : i32
    return %c0_i32, %c0_i32_0 : i32, i32
  }
  func.func @transform_7(%arg0: i32) -> (i32, i32) {
    %c0_i32 = arith.constant 0 : i32
    %c0_i32_0 = arith.constant 0 : i32
    %c0_i32_1 = arith.constant 0 : i32
    return %c0_i32, %c0_i32_0 : i32, i32
  }
  func.func @transform_8(%arg0: i32) -> (i32, i32, i32) {
    %c0_i32 = arith.constant 0 : i32
    %c0_i32_0 = arith.constant 0 : i32
    %c0_i32_1 = arith.constant 0 : i32
    return %arg0, %c0_i32, %c0_i32_0 : i32, i32, i32
  }
}

module attributes {stable_mosaic.version = 11 : i64} {
  func.func @_decoder_final_kernel(%arg0: i32, %arg1: memref<1x8x128xf32, #tpu.memory_space<vmem>>, %arg2: memref<1x8x384xf32, #tpu.memory_space<vmem>>, %arg3: memref<10x18xf32, #tpu.memory_space<vmem>>, %arg4: memref<8x144xbf16, #tpu.memory_space<vmem>>, %arg5: memref<8x1xf32, #tpu.memory_space<vmem>>, %arg6: memref<8x72xbf16, #tpu.memory_space<vmem>>, %arg7: memref<8x1xf32, #tpu.memory_space<vmem>>, %arg8: memref<3x8xbf16, #tpu.memory_space<vmem>>, %arg9: memref<3x1xf32, #tpu.memory_space<vmem>>, %arg10: memref<1x384xf32, #tpu.memory_space<vmem>>, %arg11: memref<1x3x384xf32, #tpu.memory_space<vmem>>, %arg12: memref<8x384xf32, #tpu.memory_space<vmem>>, %arg13: memref<144x384xf32, #tpu.memory_space<vmem>>) attributes {dimension_semantics = [#tpu.dimension_semantics<parallel>], iteration_bounds = array<i64: 2>, scalar_prefetch = 0 : i64, scratch_operands = 2 : i64, tpu.core_type = #tpu.core_type<tc>, window_params = [{transform_indices = @transform_0, window_bounds = array<i64: 1, 8, 128>}, {transform_indices = @transform_1, window_bounds = array<i64: 1, 8, 384>}, {pipeline_mode = #tpu.pipeline_mode<synchronous>, transform_indices = @transform_2, window_bounds = array<i64: 10, 18>}, {pipeline_mode = #tpu.pipeline_mode<synchronous>, transform_indices = @transform_3, window_bounds = array<i64: 8, 144>}, {pipeline_mode = #tpu.pipeline_mode<synchronous>, transform_indices = @transform_4, window_bounds = array<i64: 8, 1>}, {pipeline_mode = #tpu.pipeline_mode<synchronous>, transform_indices = @transform_5, window_bounds = array<i64: 8, 72>}, {pipeline_mode = #tpu.pipeline_mode<synchronous>, transform_indices = @transform_6, window_bounds = array<i64: 8, 1>}, {pipeline_mode = #tpu.pipeline_mode<synchronous>, transform_indices = @transform_7, window_bounds = array<i64: 3, 8>}, {pipeline_mode = #tpu.pipeline_mode<synchronous>, transform_indices = @transform_8, window_bounds = array<i64: 3, 1>}, {pipeline_mode = #tpu.pipeline_mode<synchronous>, transform_indices = @transform_9, window_bounds = array<i64: 1, 384>}, {transform_indices = @transform_10, window_bounds = array<i64: 1, 3, 384>}]} {
    %cst = arith.constant 0.000000e+00 : f32
    %0 = vector.broadcast %cst : f32 to vector<8x384xf32>
    %c0 = arith.constant 0 : index
    %c0_0 = arith.constant 0 : index
    %1 = vector.load %arg12[%c0, %c0_0] : memref<8x384xf32, #tpu.memory_space<vmem>>, vector<8x384xf32>
    tpu.vector_store %arg12[%c0, %c0_0], %0 {strides = array<i32>} : memref<8x384xf32, #tpu.memory_space<vmem>>, vector<8x384xf32>,
    %c0_1 = arith.constant 0 : index
    %c0_2 = arith.constant 0 : index
    %2 = vector.load %arg3[%c0_1, %c0_2] : memref<10x18xf32, #tpu.memory_space<vmem>>, vector<10x18xf32>
    %c0_3 = arith.constant 0 : index
    %c0_4 = arith.constant 0 : index
    %c10 = arith.constant 10 : index
    %3 = vector.load %arg1[%c0_3, %c0_4, %c10] : memref<1x8x128xf32, #tpu.memory_space<vmem>>, vector<1x8x10xf32>
    %4 = vector.shape_cast %3 : vector<1x8x10xf32> to vector<8x10xf32>
    %cst_5 = arith.constant dense<0.000000e+00> : vector<8x18xf32>
    %5 = tpu.matmul %4, %2, %cst_5 {dimension_numbers = #tpu.dot_dimension_numbers<[1], [0], [0], [1], [0, 0, 1, 1], [], []>} : vector<8x10xf32>, vector<10x18xf32>, vector<8x18xf32> -> vector<8x18xf32>
    %c0_6 = arith.constant 0 : index
    %c18 = arith.constant 18 : index
    %6 = vector.load %arg12[%c0_6, %c18] : memref<8x384xf32, #tpu.memory_space<vmem>>, vector<8x18xf32>
    tpu.vector_store %arg12[%c0_6, %c18], %5 {strides = array<i32>} : memref<8x384xf32, #tpu.memory_space<vmem>>, vector<8x18xf32>,
    %c0_7 = arith.constant 0 : index
    %c36 = arith.constant 36 : index
    %7 = vector.load %arg12[%c0_7, %c36] : memref<8x384xf32, #tpu.memory_space<vmem>>, vector<8x18xf32>
    tpu.vector_store %arg12[%c0_7, %c36], %5 {strides = array<i32>} : memref<8x384xf32, #tpu.memory_space<vmem>>, vector<8x18xf32>,
    %c0_8 = arith.constant 0 : index
    %c0_9 = arith.constant 0 : index
    %c20 = arith.constant 20 : index
    %8 = vector.load %arg1[%c0_8, %c0_9, %c20] : memref<1x8x128xf32, #tpu.memory_space<vmem>>, vector<1x8x10xf32>
    %9 = vector.shape_cast %8 : vector<1x8x10xf32> to vector<8x10xf32>
    %cst_10 = arith.constant dense<0.000000e+00> : vector<8x18xf32>
    %10 = tpu.matmul %9, %2, %cst_10 {dimension_numbers = #tpu.dot_dimension_numbers<[1], [0], [0], [1], [0, 0, 1, 1], [], []>} : vector<8x10xf32>, vector<10x18xf32>, vector<8x18xf32> -> vector<8x18xf32>
    %c0_11 = arith.constant 0 : index
    %c54 = arith.constant 54 : index
    %11 = vector.load %arg12[%c0_11, %c54] : memref<8x384xf32, #tpu.memory_space<vmem>>, vector<8x18xf32>
    tpu.vector_store %arg12[%c0_11, %c54], %10 {strides = array<i32>} : memref<8x384xf32, #tpu.memory_space<vmem>>, vector<8x18xf32>,
    %c0_12 = arith.constant 0 : index
    %c72 = arith.constant 72 : index
    %12 = vector.load %arg12[%c0_12, %c72] : memref<8x384xf32, #tpu.memory_space<vmem>>, vector<8x18xf32>
    tpu.vector_store %arg12[%c0_12, %c72], %10 {strides = array<i32>} : memref<8x384xf32, #tpu.memory_space<vmem>>, vector<8x18xf32>,
    %c0_13 = arith.constant 0 : index
    %c0_14 = arith.constant 0 : index
    %c30 = arith.constant 30 : index
    %13 = vector.load %arg1[%c0_13, %c0_14, %c30] : memref<1x8x128xf32, #tpu.memory_space<vmem>>, vector<1x8x10xf32>
    %14 = vector.shape_cast %13 : vector<1x8x10xf32> to vector<8x10xf32>
    %cst_15 = arith.constant dense<0.000000e+00> : vector<8x18xf32>
    %15 = tpu.matmul %14, %2, %cst_15 {dimension_numbers = #tpu.dot_dimension_numbers<[1], [0], [0], [1], [0, 0, 1, 1], [], []>} : vector<8x10xf32>, vector<10x18xf32>, vector<8x18xf32> -> vector<8x18xf32>
    %c0_16 = arith.constant 0 : index
    %c90 = arith.constant 90 : index
    %16 = vector.load %arg12[%c0_16, %c90] : memref<8x384xf32, #tpu.memory_space<vmem>>, vector<8x18xf32>
    tpu.vector_store %arg12[%c0_16, %c90], %15 {strides = array<i32>} : memref<8x384xf32, #tpu.memory_space<vmem>>, vector<8x18xf32>,
    %c0_17 = arith.constant 0 : index
    %c108 = arith.constant 108 : index
    %17 = vector.load %arg12[%c0_17, %c108] : memref<8x384xf32, #tpu.memory_space<vmem>>, vector<8x18xf32>
    tpu.vector_store %arg12[%c0_17, %c108], %15 {strides = array<i32>} : memref<8x384xf32, #tpu.memory_space<vmem>>, vector<8x18xf32>,
    %c0_18 = arith.constant 0 : index
    %c0_19 = arith.constant 0 : index
    %c40 = arith.constant 40 : index
    %18 = vector.load %arg1[%c0_18, %c0_19, %c40] : memref<1x8x128xf32, #tpu.memory_space<vmem>>, vector<1x8x10xf32>
    %19 = vector.shape_cast %18 : vector<1x8x10xf32> to vector<8x10xf32>
    %cst_20 = arith.constant dense<0.000000e+00> : vector<8x18xf32>
    %20 = tpu.matmul %19, %2, %cst_20 {dimension_numbers = #tpu.dot_dimension_numbers<[1], [0], [0], [1], [0, 0, 1, 1], [], []>} : vector<8x10xf32>, vector<10x18xf32>, vector<8x18xf32> -> vector<8x18xf32>
    %c0_21 = arith.constant 0 : index
    %c126 = arith.constant 126 : index
    %21 = vector.load %arg12[%c0_21, %c126] : memref<8x384xf32, #tpu.memory_space<vmem>>, vector<8x18xf32>
    tpu.vector_store %arg12[%c0_21, %c126], %20 {strides = array<i32>} : memref<8x384xf32, #tpu.memory_space<vmem>>, vector<8x18xf32>,
    %c0_22 = arith.constant 0 : index
    %c144 = arith.constant 144 : index
    %22 = vector.load %arg12[%c0_22, %c144] : memref<8x384xf32, #tpu.memory_space<vmem>>, vector<8x18xf32>
    tpu.vector_store %arg12[%c0_22, %c144], %20 {strides = array<i32>} : memref<8x384xf32, #tpu.memory_space<vmem>>, vector<8x18xf32>,
    %c0_23 = arith.constant 0 : index
    %c0_24 = arith.constant 0 : index
    %c50 = arith.constant 50 : index
    %23 = vector.load %arg1[%c0_23, %c0_24, %c50] : memref<1x8x128xf32, #tpu.memory_space<vmem>>, vector<1x8x10xf32>
    %24 = vector.shape_cast %23 : vector<1x8x10xf32> to vector<8x10xf32>
    %cst_25 = arith.constant dense<0.000000e+00> : vector<8x18xf32>
    %25 = tpu.matmul %24, %2, %cst_25 {dimension_numbers = #tpu.dot_dimension_numbers<[1], [0], [0], [1], [0, 0, 1, 1], [], []>} : vector<8x10xf32>, vector<10x18xf32>, vector<8x18xf32> -> vector<8x18xf32>
    %c0_26 = arith.constant 0 : index
    %c162 = arith.constant 162 : index
    %26 = vector.load %arg12[%c0_26, %c162] : memref<8x384xf32, #tpu.memory_space<vmem>>, vector<8x18xf32>
    tpu.vector_store %arg12[%c0_26, %c162], %25 {strides = array<i32>} : memref<8x384xf32, #tpu.memory_space<vmem>>, vector<8x18xf32>,
    %c0_27 = arith.constant 0 : index
    %c180 = arith.constant 180 : index
    %27 = vector.load %arg12[%c0_27, %c180] : memref<8x384xf32, #tpu.memory_space<vmem>>, vector<8x18xf32>
    tpu.vector_store %arg12[%c0_27, %c180], %25 {strides = array<i32>} : memref<8x384xf32, #tpu.memory_space<vmem>>, vector<8x18xf32>,
    %c0_28 = arith.constant 0 : index
    %c0_29 = arith.constant 0 : index
    %c60 = arith.constant 60 : index
    %28 = vector.load %arg1[%c0_28, %c0_29, %c60] : memref<1x8x128xf32, #tpu.memory_space<vmem>>, vector<1x8x10xf32>
    %29 = vector.shape_cast %28 : vector<1x8x10xf32> to vector<8x10xf32>
    %cst_30 = arith.constant dense<0.000000e+00> : vector<8x18xf32>
    %30 = tpu.matmul %29, %2, %cst_30 {dimension_numbers = #tpu.dot_dimension_numbers<[1], [0], [0], [1], [0, 0, 1, 1], [], []>} : vector<8x10xf32>, vector<10x18xf32>, vector<8x18xf32> -> vector<8x18xf32>
    %c0_31 = arith.constant 0 : index
    %c198 = arith.constant 198 : index
    %31 = vector.load %arg12[%c0_31, %c198] : memref<8x384xf32, #tpu.memory_space<vmem>>, vector<8x18xf32>
    tpu.vector_store %arg12[%c0_31, %c198], %30 {strides = array<i32>} : memref<8x384xf32, #tpu.memory_space<vmem>>, vector<8x18xf32>,
    %c0_32 = arith.constant 0 : index
    %c216 = arith.constant 216 : index
    %32 = vector.load %arg12[%c0_32, %c216] : memref<8x384xf32, #tpu.memory_space<vmem>>, vector<8x18xf32>
    tpu.vector_store %arg12[%c0_32, %c216], %30 {strides = array<i32>} : memref<8x384xf32, #tpu.memory_space<vmem>>, vector<8x18xf32>,
    %c0_33 = arith.constant 0 : index
    %c0_34 = arith.constant 0 : index
    %c70 = arith.constant 70 : index
    %33 = vector.load %arg1[%c0_33, %c0_34, %c70] : memref<1x8x128xf32, #tpu.memory_space<vmem>>, vector<1x8x10xf32>
    %34 = vector.shape_cast %33 : vector<1x8x10xf32> to vector<8x10xf32>
    %cst_35 = arith.constant dense<0.000000e+00> : vector<8x18xf32>
    %35 = tpu.matmul %34, %2, %cst_35 {dimension_numbers = #tpu.dot_dimension_numbers<[1], [0], [0], [1], [0, 0, 1, 1], [], []>} : vector<8x10xf32>, vector<10x18xf32>, vector<8x18xf32> -> vector<8x18xf32>
    %c0_36 = arith.constant 0 : index
    %c234 = arith.constant 234 : index
    %36 = vector.load %arg12[%c0_36, %c234] : memref<8x384xf32, #tpu.memory_space<vmem>>, vector<8x18xf32>
    tpu.vector_store %arg12[%c0_36, %c234], %35 {strides = array<i32>} : memref<8x384xf32, #tpu.memory_space<vmem>>, vector<8x18xf32>,
    %c0_37 = arith.constant 0 : index
    %c252 = arith.constant 252 : index
    %37 = vector.load %arg12[%c0_37, %c252] : memref<8x384xf32, #tpu.memory_space<vmem>>, vector<8x18xf32>
    tpu.vector_store %arg12[%c0_37, %c252], %35 {strides = array<i32>} : memref<8x384xf32, #tpu.memory_space<vmem>>, vector<8x18xf32>,
    %c0_38 = arith.constant 0 : index
    %c0_39 = arith.constant 0 : index
    %c80 = arith.constant 80 : index
    %38 = vector.load %arg1[%c0_38, %c0_39, %c80] : memref<1x8x128xf32, #tpu.memory_space<vmem>>, vector<1x8x10xf32>
    %39 = vector.shape_cast %38 : vector<1x8x10xf32> to vector<8x10xf32>
    %cst_40 = arith.constant dense<0.000000e+00> : vector<8x18xf32>
    %40 = tpu.matmul %39, %2, %cst_40 {dimension_numbers = #tpu.dot_dimension_numbers<[1], [0], [0], [1], [0, 0, 1, 1], [], []>} : vector<8x10xf32>, vector<10x18xf32>, vector<8x18xf32> -> vector<8x18xf32>
    %c0_41 = arith.constant 0 : index
    %c270 = arith.constant 270 : index
    %41 = vector.load %arg12[%c0_41, %c270] : memref<8x384xf32, #tpu.memory_space<vmem>>, vector<8x18xf32>
    tpu.vector_store %arg12[%c0_41, %c270], %40 {strides = array<i32>} : memref<8x384xf32, #tpu.memory_space<vmem>>, vector<8x18xf32>,
    %c0_42 = arith.constant 0 : index
    %c288 = arith.constant 288 : index
    %42 = vector.load %arg12[%c0_42, %c288] : memref<8x384xf32, #tpu.memory_space<vmem>>, vector<8x18xf32>
    tpu.vector_store %arg12[%c0_42, %c288], %40 {strides = array<i32>} : memref<8x384xf32, #tpu.memory_space<vmem>>, vector<8x18xf32>,
    %c0_43 = arith.constant 0 : index
    %c0_44 = arith.constant 0 : index
    %43 = vector.load %arg10[%c0_43, %c0_44] : memref<1x384xf32, #tpu.memory_space<vmem>>, vector<1x384xf32>
    %c0_45 = arith.constant 0 : index
    %c0_46 = arith.constant 0 : index
    %44 = vector.load %arg12[%c0_45, %c0_46] : memref<8x384xf32, #tpu.memory_space<vmem>>, vector<8x384xf32>
    %c0_47 = arith.constant 0 : index
    %c0_48 = arith.constant 0 : index
    %c0_49 = arith.constant 0 : index
    %45 = vector.load %arg2[%c0_47, %c0_48, %c0_49] : memref<1x8x384xf32, #tpu.memory_space<vmem>>, vector<1x8x384xf32>
    %46 = vector.shape_cast %45 : vector<1x8x384xf32> to vector<8x384xf32>
    %c18_i32 = arith.constant 18 : i32
    %47 = tpu.dynamic_rotate %44 by %c18_i32 dim 1 : vector<8x384xf32>, i32 -> vector<8x384xf32>
    %c366_i32 = arith.constant 366 : i32
    %48 = tpu.dynamic_rotate %44 by %c366_i32 dim 1 : vector<8x384xf32>, i32 -> vector<8x384xf32>
    %c1_i32 = arith.constant 1 : i32
    %49 = tpu.dynamic_rotate %47 by %c1_i32 dim 1 : vector<8x384xf32>, i32 -> vector<8x384xf32>
    %c0_50 = arith.constant 0 : index
    %c0_51 = arith.constant 0 : index
    %50 = vector.load %arg13[%c0_50, %c0_51] : memref<144x384xf32, #tpu.memory_space<vmem>>, vector<8x384xf32>
    tpu.vector_store %arg13[%c0_50, %c0_51], %49 {strides = array<i32>} : memref<144x384xf32, #tpu.memory_space<vmem>>, vector<8x384xf32>,
    %c8 = arith.constant 8 : index
    %c0_52 = arith.constant 0 : index
    %51 = vector.load %arg13[%c8, %c0_52] : memref<144x384xf32, #tpu.memory_space<vmem>>, vector<8x384xf32>
    tpu.vector_store %arg13[%c8, %c0_52], %47 {strides = array<i32>} : memref<144x384xf32, #tpu.memory_space<vmem>>, vector<8x384xf32>,
    %c383_i32 = arith.constant 383 : i32
    %52 = tpu.dynamic_rotate %47 by %c383_i32 dim 1 : vector<8x384xf32>, i32 -> vector<8x384xf32>
    %c16 = arith.constant 16 : index
    %c0_53 = arith.constant 0 : index
    %53 = vector.load %arg13[%c16, %c0_53] : memref<144x384xf32, #tpu.memory_space<vmem>>, vector<8x384xf32>
    tpu.vector_store %arg13[%c16, %c0_53], %52 {strides = array<i32>} : memref<144x384xf32, #tpu.memory_space<vmem>>, vector<8x384xf32>,
    %c1_i32_54 = arith.constant 1 : i32
    %54 = tpu.dynamic_rotate %44 by %c1_i32_54 dim 1 : vector<8x384xf32>, i32 -> vector<8x384xf32>
    %c24 = arith.constant 24 : index
    %c0_55 = arith.constant 0 : index
    %55 = vector.load %arg13[%c24, %c0_55] : memref<144x384xf32, #tpu.memory_space<vmem>>, vector<8x384xf32>
    tpu.vector_store %arg13[%c24, %c0_55], %54 {strides = array<i32>} : memref<144x384xf32, #tpu.memory_space<vmem>>, vector<8x384xf32>,
    %c32 = arith.constant 32 : index
    %c0_56 = arith.constant 0 : index
    %56 = vector.load %arg13[%c32, %c0_56] : memref<144x384xf32, #tpu.memory_space<vmem>>, vector<8x384xf32>
    tpu.vector_store %arg13[%c32, %c0_56], %44 {strides = array<i32>} : memref<144x384xf32, #tpu.memory_space<vmem>>, vector<8x384xf32>,
    %c383_i32_57 = arith.constant 383 : i32
    %57 = tpu.dynamic_rotate %44 by %c383_i32_57 dim 1 : vector<8x384xf32>, i32 -> vector<8x384xf32>
    %c40_58 = arith.constant 40 : index
    %c0_59 = arith.constant 0 : index
    %58 = vector.load %arg13[%c40_58, %c0_59] : memref<144x384xf32, #tpu.memory_space<vmem>>, vector<8x384xf32>
    tpu.vector_store %arg13[%c40_58, %c0_59], %57 {strides = array<i32>} : memref<144x384xf32, #tpu.memory_space<vmem>>, vector<8x384xf32>,
    %c1_i32_60 = arith.constant 1 : i32
    %59 = tpu.dynamic_rotate %48 by %c1_i32_60 dim 1 : vector<8x384xf32>, i32 -> vector<8x384xf32>
    %c48 = arith.constant 48 : index
    %c0_61 = arith.constant 0 : index
    %60 = vector.load %arg13[%c48, %c0_61] : memref<144x384xf32, #tpu.memory_space<vmem>>, vector<8x384xf32>
    tpu.vector_store %arg13[%c48, %c0_61], %59 {strides = array<i32>} : memref<144x384xf32, #tpu.memory_space<vmem>>, vector<8x384xf32>,
    %c56 = arith.constant 56 : index
    %c0_62 = arith.constant 0 : index
    %61 = vector.load %arg13[%c56, %c0_62] : memref<144x384xf32, #tpu.memory_space<vmem>>, vector<8x384xf32>
    tpu.vector_store %arg13[%c56, %c0_62], %48 {strides = array<i32>} : memref<144x384xf32, #tpu.memory_space<vmem>>, vector<8x384xf32>,
    %c383_i32_63 = arith.constant 383 : i32
    %62 = tpu.dynamic_rotate %48 by %c383_i32_63 dim 1 : vector<8x384xf32>, i32 -> vector<8x384xf32>
    %c64 = arith.constant 64 : index
    %c0_64 = arith.constant 0 : index
    %63 = vector.load %arg13[%c64, %c0_64] : memref<144x384xf32, #tpu.memory_space<vmem>>, vector<8x384xf32>
    tpu.vector_store %arg13[%c64, %c0_64], %62 {strides = array<i32>} : memref<144x384xf32, #tpu.memory_space<vmem>>, vector<8x384xf32>,
    %c18_i32_65 = arith.constant 18 : i32
    %64 = tpu.dynamic_rotate %46 by %c18_i32_65 dim 1 : vector<8x384xf32>, i32 -> vector<8x384xf32>
    %c366_i32_66 = arith.constant 366 : i32
    %65 = tpu.dynamic_rotate %46 by %c366_i32_66 dim 1 : vector<8x384xf32>, i32 -> vector<8x384xf32>
    %c1_i32_67 = arith.constant 1 : i32
    %66 = tpu.dynamic_rotate %64 by %c1_i32_67 dim 1 : vector<8x384xf32>, i32 -> vector<8x384xf32>
    %c72_68 = arith.constant 72 : index
    %c0_69 = arith.constant 0 : index
    %67 = vector.load %arg13[%c72_68, %c0_69] : memref<144x384xf32, #tpu.memory_space<vmem>>, vector<8x384xf32>
    tpu.vector_store %arg13[%c72_68, %c0_69], %66 {strides = array<i32>} : memref<144x384xf32, #tpu.memory_space<vmem>>, vector<8x384xf32>,
    %c80_70 = arith.constant 80 : index
    %c0_71 = arith.constant 0 : index
    %68 = vector.load %arg13[%c80_70, %c0_71] : memref<144x384xf32, #tpu.memory_space<vmem>>, vector<8x384xf32>
    tpu.vector_store %arg13[%c80_70, %c0_71], %64 {strides = array<i32>} : memref<144x384xf32, #tpu.memory_space<vmem>>, vector<8x384xf32>,
    %c383_i32_72 = arith.constant 383 : i32
    %69 = tpu.dynamic_rotate %64 by %c383_i32_72 dim 1 : vector<8x384xf32>, i32 -> vector<8x384xf32>
    %c88 = arith.constant 88 : index
    %c0_73 = arith.constant 0 : index
    %70 = vector.load %arg13[%c88, %c0_73] : memref<144x384xf32, #tpu.memory_space<vmem>>, vector<8x384xf32>
    tpu.vector_store %arg13[%c88, %c0_73], %69 {strides = array<i32>} : memref<144x384xf32, #tpu.memory_space<vmem>>, vector<8x384xf32>,
    %c1_i32_74 = arith.constant 1 : i32
    %71 = tpu.dynamic_rotate %46 by %c1_i32_74 dim 1 : vector<8x384xf32>, i32 -> vector<8x384xf32>
    %c96 = arith.constant 96 : index
    %c0_75 = arith.constant 0 : index
    %72 = vector.load %arg13[%c96, %c0_75] : memref<144x384xf32, #tpu.memory_space<vmem>>, vector<8x384xf32>
    tpu.vector_store %arg13[%c96, %c0_75], %71 {strides = array<i32>} : memref<144x384xf32, #tpu.memory_space<vmem>>, vector<8x384xf32>,
    %c104 = arith.constant 104 : index
    %c0_76 = arith.constant 0 : index
    %73 = vector.load %arg13[%c104, %c0_76] : memref<144x384xf32, #tpu.memory_space<vmem>>, vector<8x384xf32>
    tpu.vector_store %arg13[%c104, %c0_76], %46 {strides = array<i32>} : memref<144x384xf32, #tpu.memory_space<vmem>>, vector<8x384xf32>,
    %c383_i32_77 = arith.constant 383 : i32
    %74 = tpu.dynamic_rotate %46 by %c383_i32_77 dim 1 : vector<8x384xf32>, i32 -> vector<8x384xf32>
    %c112 = arith.constant 112 : index
    %c0_78 = arith.constant 0 : index
    %75 = vector.load %arg13[%c112, %c0_78] : memref<144x384xf32, #tpu.memory_space<vmem>>, vector<8x384xf32>
    tpu.vector_store %arg13[%c112, %c0_78], %74 {strides = array<i32>} : memref<144x384xf32, #tpu.memory_space<vmem>>, vector<8x384xf32>,
    %c1_i32_79 = arith.constant 1 : i32
    %76 = tpu.dynamic_rotate %65 by %c1_i32_79 dim 1 : vector<8x384xf32>, i32 -> vector<8x384xf32>
    %c120 = arith.constant 120 : index
    %c0_80 = arith.constant 0 : index
    %77 = vector.load %arg13[%c120, %c0_80] : memref<144x384xf32, #tpu.memory_space<vmem>>, vector<8x384xf32>
    tpu.vector_store %arg13[%c120, %c0_80], %76 {strides = array<i32>} : memref<144x384xf32, #tpu.memory_space<vmem>>, vector<8x384xf32>,
    %c128 = arith.constant 128 : index
    %c0_81 = arith.constant 0 : index
    %78 = vector.load %arg13[%c128, %c0_81] : memref<144x384xf32, #tpu.memory_space<vmem>>, vector<8x384xf32>
    tpu.vector_store %arg13[%c128, %c0_81], %65 {strides = array<i32>} : memref<144x384xf32, #tpu.memory_space<vmem>>, vector<8x384xf32>,
    %c383_i32_82 = arith.constant 383 : i32
    %79 = tpu.dynamic_rotate %65 by %c383_i32_82 dim 1 : vector<8x384xf32>, i32 -> vector<8x384xf32>
    %c136 = arith.constant 136 : index
    %c0_83 = arith.constant 0 : index
    %80 = vector.load %arg13[%c136, %c0_83] : memref<144x384xf32, #tpu.memory_space<vmem>>, vector<8x384xf32>
    tpu.vector_store %arg13[%c136, %c0_83], %79 {strides = array<i32>} : memref<144x384xf32, #tpu.memory_space<vmem>>, vector<8x384xf32>,
    %c0_84 = arith.constant 0 : index
    %c0_85 = arith.constant 0 : index
    %81 = vector.load %arg4[%c0_84, %c0_85] : memref<8x144xbf16, #tpu.memory_space<vmem>>, vector<8x144xbf16>
    %c0_86 = arith.constant 0 : index
    %c0_87 = arith.constant 0 : index
    %82 = vector.load %arg13[%c0_86, %c0_87] : memref<144x384xf32, #tpu.memory_space<vmem>>, vector<144x384xf32>
    %83 = arith.truncf %82 : vector<144x384xf32> to vector<144x384xbf16>
    %cst_88 = arith.constant dense<0.000000e+00> : vector<8x384xf32>
    %84 = tpu.matmul %81, %83, %cst_88 {dimension_numbers = #tpu.dot_dimension_numbers<[1], [0], [0], [1], [0, 0, 1, 1], [], []>} : vector<8x144xbf16>, vector<144x384xbf16>, vector<8x384xf32> -> vector<8x384xf32>
    %c0_89 = arith.constant 0 : index
    %c0_90 = arith.constant 0 : index
    %85 = vector.load %arg5[%c0_89, %c0_90] : memref<8x1xf32, #tpu.memory_space<vmem>>, vector<8x1xf32>
    %86 = vector.broadcast %85 : vector<8x1xf32> to vector<8x384xf32>
    %87 = arith.addf %84, %86 : vector<8x384xf32>
    %cst_91 = arith.constant 0.000000e+00 : f32
    %88 = vector.broadcast %cst_91 : f32 to vector<8x384xf32>
    %89 = arith.maximumf %87, %88 : vector<8x384xf32>
    %90 = vector.broadcast %43 : vector<1x384xf32> to vector<8x384xf32>
    %91 = arith.mulf %89, %90 : vector<8x384xf32>
    %c18_i32_92 = arith.constant 18 : i32
    %92 = tpu.dynamic_rotate %91 by %c18_i32_92 dim 1 : vector<8x384xf32>, i32 -> vector<8x384xf32>
    %c366_i32_93 = arith.constant 366 : i32
    %93 = tpu.dynamic_rotate %91 by %c366_i32_93 dim 1 : vector<8x384xf32>, i32 -> vector<8x384xf32>
    %c1_i32_94 = arith.constant 1 : i32
    %94 = tpu.dynamic_rotate %92 by %c1_i32_94 dim 1 : vector<8x384xf32>, i32 -> vector<8x384xf32>
    %c0_95 = arith.constant 0 : index
    %c0_96 = arith.constant 0 : index
    %95 = vector.load %arg13[%c0_95, %c0_96] : memref<144x384xf32, #tpu.memory_space<vmem>>, vector<8x384xf32>
    tpu.vector_store %arg13[%c0_95, %c0_96], %94 {strides = array<i32>} : memref<144x384xf32, #tpu.memory_space<vmem>>, vector<8x384xf32>,
    %c8_97 = arith.constant 8 : index
    %c0_98 = arith.constant 0 : index
    %96 = vector.load %arg13[%c8_97, %c0_98] : memref<144x384xf32, #tpu.memory_space<vmem>>, vector<8x384xf32>
    tpu.vector_store %arg13[%c8_97, %c0_98], %92 {strides = array<i32>} : memref<144x384xf32, #tpu.memory_space<vmem>>, vector<8x384xf32>,
    %c383_i32_99 = arith.constant 383 : i32
    %97 = tpu.dynamic_rotate %92 by %c383_i32_99 dim 1 : vector<8x384xf32>, i32 -> vector<8x384xf32>
    %c16_100 = arith.constant 16 : index
    %c0_101 = arith.constant 0 : index
    %98 = vector.load %arg13[%c16_100, %c0_101] : memref<144x384xf32, #tpu.memory_space<vmem>>, vector<8x384xf32>
    tpu.vector_store %arg13[%c16_100, %c0_101], %97 {strides = array<i32>} : memref<144x384xf32, #tpu.memory_space<vmem>>, vector<8x384xf32>,
    %c1_i32_102 = arith.constant 1 : i32
    %99 = tpu.dynamic_rotate %91 by %c1_i32_102 dim 1 : vector<8x384xf32>, i32 -> vector<8x384xf32>
    %c24_103 = arith.constant 24 : index
    %c0_104 = arith.constant 0 : index
    %100 = vector.load %arg13[%c24_103, %c0_104] : memref<144x384xf32, #tpu.memory_space<vmem>>, vector<8x384xf32>
    tpu.vector_store %arg13[%c24_103, %c0_104], %99 {strides = array<i32>} : memref<144x384xf32, #tpu.memory_space<vmem>>, vector<8x384xf32>,
    %c32_105 = arith.constant 32 : index
    %c0_106 = arith.constant 0 : index
    %101 = vector.load %arg13[%c32_105, %c0_106] : memref<144x384xf32, #tpu.memory_space<vmem>>, vector<8x384xf32>
    tpu.vector_store %arg13[%c32_105, %c0_106], %91 {strides = array<i32>} : memref<144x384xf32, #tpu.memory_space<vmem>>, vector<8x384xf32>,
    %c383_i32_107 = arith.constant 383 : i32
    %102 = tpu.dynamic_rotate %91 by %c383_i32_107 dim 1 : vector<8x384xf32>, i32 -> vector<8x384xf32>
    %c40_108 = arith.constant 40 : index
    %c0_109 = arith.constant 0 : index
    %103 = vector.load %arg13[%c40_108, %c0_109] : memref<144x384xf32, #tpu.memory_space<vmem>>, vector<8x384xf32>
    tpu.vector_store %arg13[%c40_108, %c0_109], %102 {strides = array<i32>} : memref<144x384xf32, #tpu.memory_space<vmem>>, vector<8x384xf32>,
    %c1_i32_110 = arith.constant 1 : i32
    %104 = tpu.dynamic_rotate %93 by %c1_i32_110 dim 1 : vector<8x384xf32>, i32 -> vector<8x384xf32>
    %c48_111 = arith.constant 48 : index
    %c0_112 = arith.constant 0 : index
    %105 = vector.load %arg13[%c48_111, %c0_112] : memref<144x384xf32, #tpu.memory_space<vmem>>, vector<8x384xf32>
    tpu.vector_store %arg13[%c48_111, %c0_112], %104 {strides = array<i32>} : memref<144x384xf32, #tpu.memory_space<vmem>>, vector<8x384xf32>,
    %c56_113 = arith.constant 56 : index
    %c0_114 = arith.constant 0 : index
    %106 = vector.load %arg13[%c56_113, %c0_114] : memref<144x384xf32, #tpu.memory_space<vmem>>, vector<8x384xf32>
    tpu.vector_store %arg13[%c56_113, %c0_114], %93 {strides = array<i32>} : memref<144x384xf32, #tpu.memory_space<vmem>>, vector<8x384xf32>,
    %c383_i32_115 = arith.constant 383 : i32
    %107 = tpu.dynamic_rotate %93 by %c383_i32_115 dim 1 : vector<8x384xf32>, i32 -> vector<8x384xf32>
    %c64_116 = arith.constant 64 : index
    %c0_117 = arith.constant 0 : index
    %108 = vector.load %arg13[%c64_116, %c0_117] : memref<144x384xf32, #tpu.memory_space<vmem>>, vector<8x384xf32>
    tpu.vector_store %arg13[%c64_116, %c0_117], %107 {strides = array<i32>} : memref<144x384xf32, #tpu.memory_space<vmem>>, vector<8x384xf32>,
    %c0_118 = arith.constant 0 : index
    %c0_119 = arith.constant 0 : index
    %109 = vector.load %arg6[%c0_118, %c0_119] : memref<8x72xbf16, #tpu.memory_space<vmem>>, vector<8x72xbf16>
    %c0_120 = arith.constant 0 : index
    %c0_121 = arith.constant 0 : index
    %110 = vector.load %arg13[%c0_120, %c0_121] : memref<144x384xf32, #tpu.memory_space<vmem>>, vector<72x384xf32>
    %111 = arith.truncf %110 : vector<72x384xf32> to vector<72x384xbf16>
    %cst_122 = arith.constant dense<0.000000e+00> : vector<8x384xf32>
    %112 = tpu.matmul %109, %111, %cst_122 {dimension_numbers = #tpu.dot_dimension_numbers<[1], [0], [0], [1], [0, 0, 1, 1], [], []>} : vector<8x72xbf16>, vector<72x384xbf16>, vector<8x384xf32> -> vector<8x384xf32>
    %c0_123 = arith.constant 0 : index
    %c0_124 = arith.constant 0 : index
    %113 = vector.load %arg7[%c0_123, %c0_124] : memref<8x1xf32, #tpu.memory_space<vmem>>, vector<8x1xf32>
    %114 = vector.broadcast %113 : vector<8x1xf32> to vector<8x384xf32>
    %115 = arith.addf %112, %114 : vector<8x384xf32>
    %cst_125 = arith.constant 0.000000e+00 : f32
    %116 = vector.broadcast %cst_125 : f32 to vector<8x384xf32>
    %117 = arith.maximumf %115, %116 : vector<8x384xf32>
    %118 = vector.broadcast %43 : vector<1x384xf32> to vector<8x384xf32>
    %119 = arith.mulf %117, %118 : vector<8x384xf32>
    %c0_126 = arith.constant 0 : index
    %c0_127 = arith.constant 0 : index
    %120 = vector.load %arg8[%c0_126, %c0_127] : memref<3x8xbf16, #tpu.memory_space<vmem>>, vector<3x8xbf16>
    %121 = arith.truncf %119 : vector<8x384xf32> to vector<8x384xbf16>
    %cst_128 = arith.constant dense<0.000000e+00> : vector<3x384xf32>
    %122 = tpu.matmul %120, %121, %cst_128 {dimension_numbers = #tpu.dot_dimension_numbers<[1], [0], [0], [1], [0, 0, 1, 1], [], []>} : vector<3x8xbf16>, vector<8x384xbf16>, vector<3x384xf32> -> vector<3x384xf32>
    %c0_129 = arith.constant 0 : index
    %c0_130 = arith.constant 0 : index
    %123 = vector.load %arg9[%c0_129, %c0_130] : memref<3x1xf32, #tpu.memory_space<vmem>>, vector<3x1xf32>
    %124 = vector.broadcast %123 : vector<3x1xf32> to vector<3x384xf32>
    %125 = arith.addf %122, %124 : vector<3x384xf32>
    %c0_131 = arith.constant 0 : index
    %c0_132 = arith.constant 0 : index
    %c0_133 = arith.constant 0 : index
    %126 = vector.load %arg11[%c0_131, %c0_132, %c0_133] : memref<1x3x384xf32, #tpu.memory_space<vmem>>, vector<1x3x384xf32>
    %127 = vector.shape_cast %126 : vector<1x3x384xf32> to vector<3x384xf32>
    %128 = vector.shape_cast %125 : vector<3x384xf32> to vector<1x3x384xf32>
    tpu.vector_store %arg11[%c0_131, %c0_132, %c0_133], %128 {strides = array<i32>} : memref<1x3x384xf32, #tpu.memory_space<vmem>>, vector<1x3x384xf32>,
    return
  }
  func.func @transform_0(%arg0: i32) -> (i32, i32, i32) {
    %c0_i32 = arith.constant 0 : i32
    %c0_i32_0 = arith.constant 0 : i32
    %c0_i32_1 = arith.constant 0 : i32
    return %arg0, %c0_i32, %c0_i32_0 : i32, i32, i32
  }
  func.func @transform_1(%arg0: i32) -> (i32, i32, i32) {
    %c0_i32 = arith.constant 0 : i32
    %c0_i32_0 = arith.constant 0 : i32
    %c0_i32_1 = arith.constant 0 : i32
    return %arg0, %c0_i32, %c0_i32_0 : i32, i32, i32
  }
  func.func @transform_2(%arg0: i32) -> (i32, i32) {
    %c0_i32 = arith.constant 0 : i32
    %c0_i32_0 = arith.constant 0 : i32
    %c0_i32_1 = arith.constant 0 : i32
    return %c0_i32, %c0_i32_0 : i32, i32
  }
  func.func @transform_3(%arg0: i32) -> (i32, i32) {
    %c0_i32 = arith.constant 0 : i32
    %c0_i32_0 = arith.constant 0 : i32
    %c0_i32_1 = arith.constant 0 : i32
    return %c0_i32, %c0_i32_0 : i32, i32
  }
  func.func @transform_4(%arg0: i32) -> (i32, i32) {
    %c0_i32 = arith.constant 0 : i32
    %c0_i32_0 = arith.constant 0 : i32
    %c0_i32_1 = arith.constant 0 : i32
    return %c0_i32, %c0_i32_0 : i32, i32
  }
  func.func @transform_5(%arg0: i32) -> (i32, i32) {
    %c0_i32 = arith.constant 0 : i32
    %c0_i32_0 = arith.constant 0 : i32
    %c0_i32_1 = arith.constant 0 : i32
    return %c0_i32, %c0_i32_0 : i32, i32
  }
  func.func @transform_6(%arg0: i32) -> (i32, i32) {
    %c0_i32 = arith.constant 0 : i32
    %c0_i32_0 = arith.constant 0 : i32
    %c0_i32_1 = arith.constant 0 : i32
    return %c0_i32, %c0_i32_0 : i32, i32
  }
  func.func @transform_7(%arg0: i32) -> (i32, i32) {
    %c0_i32 = arith.constant 0 : i32
    %c0_i32_0 = arith.constant 0 : i32
    %c0_i32_1 = arith.constant 0 : i32
    return %c0_i32, %c0_i32_0 : i32, i32
  }
  func.func @transform_8(%arg0: i32) -> (i32, i32) {
    %c0_i32 = arith.constant 0 : i32
    %c0_i32_0 = arith.constant 0 : i32
    %c0_i32_1 = arith.constant 0 : i32
    return %c0_i32, %c0_i32_0 : i32, i32
  }
  func.func @transform_9(%arg0: i32) -> (i32, i32) {
    %c0_i32 = arith.constant 0 : i32
    %c0_i32_0 = arith.constant 0 : i32
    %c0_i32_1 = arith.constant 0 : i32
    return %c0_i32, %c0_i32_0 : i32, i32
  }
  func.func @transform_10(%arg0: i32) -> (i32, i32, i32) {
    %c0_i32 = arith.constant 0 : i32
    %c0_i32_0 = arith.constant 0 : i32
    %c0_i32_1 = arith.constant 0 : i32
    return %arg0, %c0_i32, %c0_i32_0 : i32, i32, i32
  }
}

</mosaic_0001>

<llo_original>
// kernel: _lambda_.7
$region0: #{_lambda_.7}
  #allocation0 [shape = 'u32[]', space=smem, size = 0x4, offset = 0x4, fixed_abs, tag = 'smem constant byte address 0x4 - core index']
  #allocation1 [shape = 'u32[144,128]{1,0:T(1,128)}', space=vmem, size = 0x12000, scoped, tag = 'internal scratch']
  #allocation2 [shape = 'f32[72,128]{1,0:T(8,128)}', space=vmem, size = 0x9000, scoped, tag = 'scratch operand']
  %s0 = inlined_call_operand.vmem [shape: f32[2,8,128], index: 0, kind: input, shape index: {}]
  %s1 = inlined_call_operand.vmem [shape: bf16[8,72], index: 1, kind: input, shape index: {}]
  %s2 = inlined_call_operand.vmem [shape: f32[8,1], index: 2, kind: input, shape index: {}]
  %s3 = inlined_call_operand.vmem [shape: bf16[8,72], index: 3, kind: input, shape index: {}]
  %s4 = inlined_call_operand.vmem [shape: f32[8,1], index: 4, kind: input, shape index: {}]
  %s5 = inlined_call_operand.vmem [shape: f32[1,128], index: 5, kind: input, shape index: {}]
  %s6 = inlined_call_operand.vmem [shape: f32[2,8,128], index: 6, kind: output, shape index: {}]
  %s7 = sld [smem:[#allocation0]]
  $region57: #{_lambda_.7} parent=0
    _
  %s9 = ssub.s32 1, %s7
  %s10 = scalar_select 0, %s9, %s7
  loop: start=0, step=1, limit=4
  $region2: #{_lambda_.7} parent=0 // loop_pre_header
    _
  $region3: #{_lambda_.7} parent=0 // loop_header
    %s12 = sphi 0, %s16
    %p13 = scmp.ge.s32.totalorder %s12, 4
    %s22 = sphi 0, %s24
    %s25 = sphi 0, %s22
    %s26 = sphi 0, %s25
    %s42 = sphi 0, %s26
    %s46 = sphi 0, %s46
    %s48 = sphi 0, %s46
    %s49 = sphi 0, %s48
    %s63 = sphi 0, %s49
    %s67 = sphi 0, %s67
    %s69 = sphi 0, %s67
    %s70 = sphi 0, %s69
    %s84 = sphi 0, %s70
    %s88 = sphi 0, %s88
    %s90 = sphi 0, %s88
    %s91 = sphi 0, %s90
    %s105 = sphi 0, %s91
    %s109 = sphi 0, %s109
    %s111 = sphi 0, %s109
    %s112 = sphi 0, %s111
    %s126 = sphi 0, %s112
    %s130 = sphi 0, %s130
    %s132 = sphi 0, %s130
    %s133 = sphi 0, %s132
    %s147 = sphi 0, %s133
    %s153 = sphi 0, %s155
    %s156 = sphi 0, %s153
    %s157 = sphi 0, %s156
    %s173 = sphi 0, %s157
  $region4: #{_lambda_.7} parent=0 // loop_header_branch
    %15 = sbr.rel (%p13) target = $region8
  $region5: #{_lambda_.7} parent=0 // loop_body
    %s17 = ssub.s32 %s12, 1
    %s18 = ssub.s32 %s12, 2
    %s19 = sadd.s32 %s12, 1
    %s20 = ssub.s32 %s12, %s19
    %p21 = scmp.eq.s32.totalorder %s20, 0
    %s23 = sadd.s32 %s22, 1
    %s24 = scalar_select %p21, %s22, %s23
    %p27 = pneg %p21
    %p28 = scmp.eq.s32.totalorder %s12, 1
    %p29 = por %p27, %p28
    %p30 = scmp.ne.s32.totalorder %s22, %s25
    %p31 = scmp.eq.s32.totalorder %s12, 0
    %p32 = por %p30, %p31
    %p33 = scmp.ne.s32.totalorder %s22, %s25
    %p34 = scmp.eq.s32.totalorder %s17, 1
    %p35 = por %p33, %p34
    %p36 = scmp.ne.s32.totalorder %s25, %s26
    %p37 = scmp.eq.s32.totalorder %s17, 0
    %p38 = por %p36, %p37
    %p39 = scmp.ne.s32.totalorder %s25, %s26
    %p40 = scmp.eq.s32.totalorder %s18, 1
    %p41 = por %p39, %p40
    %p43 = scmp.ne.s32.totalorder %s26, %s42
    %p44 = scmp.eq.s32.totalorder %s18, 0
    %p45 = por %p43, %p44
    %s47 = sadd.s32 %s46, 1
    %p50 = scmp.eq.s32.totalorder %s12, 1
    %p51 = scmp.ne.s32.totalorder %s46, %s48
    %p52 = scmp.eq.s32.totalorder %s12, 0
    %p53 = por %p51, %p52
    %p54 = scmp.ne.s32.totalorder %s46, %s48
    %p55 = scmp.eq.s32.totalorder %s17, 1
    %p56 = por %p54, %p55
    %p57 = scmp.ne.s32.totalorder %s48, %s49
    %p58 = scmp.eq.s32.totalorder %s17, 0
    %p59 = por %p57, %p58
    %p60 = scmp.ne.s32.totalorder %s48, %s49
    %p61 = scmp.eq.s32.totalorder %s18, 1
    %p62 = por %p60, %p61
    %p64 = scmp.ne.s32.totalorder %s49, %s63
    %p65 = scmp.eq.s32.totalorder %s18, 0
    %p66 = por %p64, %p65
    %s68 = sadd.s32 %s67, 1
    %p71 = scmp.eq.s32.totalorder %s12, 1
    %p72 = scmp.ne.s32.totalorder %s67, %s69
    %p73 = scmp.eq.s32.totalorder %s12, 0
    %p74 = por %p72, %p73
    %p75 = scmp.ne.s32.totalorder %s67, %s69
    %p76 = scmp.eq.s32.totalorder %s17, 1
    %p77 = por %p75, %p76
    %p78 = scmp.ne.s32.totalorder %s69, %s70
    %p79 = scmp.eq.s32.totalorder %s17, 0
    %p80 = por %p78, %p79
    %p81 = scmp.ne.s32.totalorder %s69, %s70
    %p82 = scmp.eq.s32.totalorder %s18, 1
    %p83 = por %p81, %p82
    %p85 = scmp.ne.s32.totalorder %s70, %s84
    %p86 = scmp.eq.s32.totalorder %s18, 0
    %p87 = por %p85, %p86
    %s89 = sadd.s32 %s88, 1
    %p92 = scmp.eq.s32.totalorder %s12, 1
    %p93 = scmp.ne.s32.totalorder %s88, %s90
    %p94 = scmp.eq.s32.totalorder %s12, 0
    %p95 = por %p93, %p94
    %p96 = scmp.ne.s32.totalorder %s88, %s90
    %p97 = scmp.eq.s32.totalorder %s17, 1
    %p98 = por %p96, %p97
    %p99 = scmp.ne.s32.totalorder %s90, %s91
    %p100 = scmp.eq.s32.totalorder %s17, 0
    %p101 = por %p99, %p100
    %p102 = scmp.ne.s32.totalorder %s90, %s91
    %p103 = scmp.eq.s32.totalorder %s18, 1
    %p104 = por %p102, %p103
    %p106 = scmp.ne.s32.totalorder %s91, %s105
    %p107 = scmp.eq.s32.totalorder %s18, 0
    %p108 = por %p106, %p107
    %s110 = sadd.s32 %s109, 1
    %p113 = scmp.eq.s32.totalorder %s12, 1
    %p114 = scmp.ne.s32.totalorder %s109, %s111
    %p115 = scmp.eq.s32.totalorder %s12, 0
    %p116 = por %p114, %p115
    %p117 = scmp.ne.s32.totalorder %s109, %s111
    %p118 = scmp.eq.s32.totalorder %s17, 1
    %p119 = por %p117, %p118
    %p120 = scmp.ne.s32.totalorder %s111, %s112
    %p121 = scmp.eq.s32.totalorder %s17, 0
    %p122 = por %p120, %p121
    %p123 = scmp.ne.s32.totalorder %s111, %s112
    %p124 = scmp.eq.s32.totalorder %s18, 1
    %p125 = por %p123, %p124
    %p127 = scmp.ne.s32.totalorder %s112, %s126
    %p128 = scmp.eq.s32.totalorder %s18, 0
    %p129 = por %p127, %p128
    %s131 = sadd.s32 %s130, 1
    %p134 = scmp.eq.s32.totalorder %s12, 1
    %p135 = scmp.ne.s32.totalorder %s130, %s132
    %p136 = scmp.eq.s32.totalorder %s12, 0
    %p137 = por %p135, %p136
    %p138 = scmp.ne.s32.totalorder %s130, %s132
    %p139 = scmp.eq.s32.totalorder %s17, 1
    %p140 = por %p138, %p139
    %p141 = scmp.ne.s32.totalorder %s132, %s133
    %p142 = scmp.eq.s32.totalorder %s17, 0
    %p143 = por %p141, %p142
    %p144 = scmp.ne.s32.totalorder %s132, %s133
    %p145 = scmp.eq.s32.totalorder %s18, 1
    %p146 = por %p144, %p145
    %p148 = scmp.ne.s32.totalorder %s133, %s147
    %p149 = scmp.eq.s32.totalorder %s18, 0
    %p150 = por %p148, %p149
    %s151 = ssub.s32 %s12, %s19
    %p152 = scmp.eq.s32.totalorder %s151, 0
    %s154 = sadd.s32 %s153, 1
    %s155 = scalar_select %p152, %s153, %s154
    %p158 = pneg %p152
    %p159 = scmp.eq.s32.totalorder %s12, 1
    %p160 = por %p158, %p159
    %p161 = scmp.ne.s32.totalorder %s153, %s156
    %p162 = scmp.eq.s32.totalorder %s12, 0
    %p163 = por %p161, %p162
    %p164 = scmp.ne.s32.totalorder %s153, %s156
    %p165 = scmp.eq.s32.totalorder %s17, 1
    %p166 = por %p164, %p165
    %p167 = scmp.ne.s32.totalorder %s156, %s157
    %p168 = scmp.eq.s32.totalorder %s17, 0
    %p169 = por %p167, %p168
    %p170 = scmp.ne.s32.totalorder %s156, %s157
    %p171 = scmp.eq.s32.totalorder %s18, 1
    %p172 = por %p170, %p171
    %p174 = scmp.ne.s32.totalorder %s157, %s173
    %p175 = scmp.eq.s32.totalorder %s18, 0
    %p176 = por %p174, %p175
    %p177 = scmp.le.s32.totalorder 1, %s12
    %p178 = scmp.lt.s32.totalorder %s12, 3
    %p179 = pnand %p177, %p178
    %p180 = pneg %p179
    // Predicated region
    $region9: #{_lambda_.7} parent=5 // pred_check
      _
    $region10: #{_lambda_.7} parent=5 // pred_check_branch
      %182 = sbr.rel (%p179) target = $region12
    $region11: #{_lambda_.7} parent=5 // pred_region
      %s183 = ssub.s32 %s12, 1
      // Predicated region
      $region13: #{_lambda_.7} parent=11 // pred_check
        %p184 = pneg %p59
      $region14: #{_lambda_.7} parent=11 // pred_check_branch
        %186 = sbr.rel (%p184) target = $region16
      $region15: #{_lambda_.7} parent=11 // pred_region
        _
      $region16: #{_lambda_.7} parent=11 // pred_fallthru
        _
      // Predicated region
      $region17: #{_lambda_.7} parent=11 // pred_check
        %p187 = pneg %p80
      $region18: #{_lambda_.7} parent=11 // pred_check_branch
        %189 = sbr.rel (%p187) target = $region20
      $region19: #{_lambda_.7} parent=11 // pred_region
        _
      $region20: #{_lambda_.7} parent=11 // pred_fallthru
        _
      // Predicated region
      $region21: #{_lambda_.7} parent=11 // pred_check
        %p190 = pneg %p101
      $region22: #{_lambda_.7} parent=11 // pred_check_branch
        %192 = sbr.rel (%p190) target = $region24
      $region23: #{_lambda_.7} parent=11 // pred_region
        _
      $region24: #{_lambda_.7} parent=11 // pred_fallthru
        _
      // Predicated region
      $region25: #{_lambda_.7} parent=11 // pred_check
        %p193 = pneg %p122
      $region26: #{_lambda_.7} parent=11 // pred_check_branch
        %195 = sbr.rel (%p193) target = $region28
      $region27: #{_lambda_.7} parent=11 // pred_region
        _
      $region28: #{_lambda_.7} parent=11 // pred_fallthru
        _
      // Predicated region
      $region29: #{_lambda_.7} parent=11 // pred_check
        %p196 = pneg %p143
      $region30: #{_lambda_.7} parent=11 // pred_check_branch
        %198 = sbr.rel (%p196) target = $region32
      $region31: #{_lambda_.7} parent=11 // pred_region
        _
      $region32: #{_lambda_.7} parent=11 // pred_fallthru
        _
    $region12: #{_lambda_.7} parent=5 // pred_fallthru
      _
    %p199 = scmp.lt.s32.totalorder %s12, 2
    // Predicated region
    $region33: #{_lambda_.7} parent=5 // pred_check
      %p200 = pneg %p199
    $region34: #{_lambda_.7} parent=5 // pred_check_branch
      %202 = sbr.rel (%p200) target = $region36
    $region35: #{_lambda_.7} parent=5 // pred_region
      // Predicated region
      $region37: #{_lambda_.7} parent=35 // pred_check
        %p203 = pneg %p32
      $region38: #{_lambda_.7} parent=35 // pred_check_branch
        %205 = sbr.rel (%p203) target = $region40
      $region39: #{_lambda_.7} parent=35 // pred_region
        %p206 = scmp.lt.s32.totalorder %s12, 1
        %s207 = scalar_select %p206, %s12, 1
        %s208 = smul.addr %s207, 8
        %s209 = scalar_lea.vmem %s0, %s208
      $region40: #{_lambda_.7} parent=35 // pred_fallthru
        _
    $region36: #{_lambda_.7} parent=5 // pred_fallthru
      _
    %p210 = scmp.le.s32.totalorder 1, %s12
    %p211 = scmp.lt.s32.totalorder %s12, 3
    %p212 = pnand %p210, %p211
    %p213 = pneg %p212
    // Predicated region
    $region41: #{_lambda_.7} parent=5 // pred_check
      _
    $region42: #{_lambda_.7} parent=5 // pred_check_branch
      %215 = sbr.rel (%p212) target = $region44
    $region43: #{_lambda_.7} parent=5 // pred_region
      %s216 = ssub.s32 %s12, 1
      %p217 = scmp.lt.s32.totalorder %s17, 1
      %s218 = scalar_select %p217, %s17, 1
      %s219 = smul.addr %s218, 8
      %s220 = scalar_lea.vmem %s0, %s219
      %p221 = pneg %p38
      %p222 = pneg %p35
      %p223 = pneg %p59
      %p224 = pneg %p56
      %p225 = pneg %p80
      %p226 = pneg %p77
      %p227 = pneg %p101
      %p228 = pneg %p98
      %p229 = pneg %p122
      %p230 = pneg %p119
      %p231 = pneg %p143
      %p232 = pneg %p140
      %p233 = pneg %p169
      %p234 = pneg %p166
      %p235 = scmp.lt.s32.totalorder %s17, 1
      %s236 = scalar_select %p235, %s17, 1
      %s237 = smul.addr %s236, 8
      %s238 = scalar_lea.vmem %s6, %s237
      %p239 = scmp.lt.s32.totalorder %s17, 1
      %s240 = scalar_select %p239, %s17, 1
      %s241 = smul.addr %s240, 8
      %s242 = scalar_lea.vmem %s0, %s241
      %p243 = scmp.lt.s32.totalorder %s17, 1
      %s244 = scalar_select %p243, %s17, 1
      %s245 = smul.addr %s244, 8
      %s246 = scalar_lea.vmem %s6, %s245
      %v248 = vld [vmem:[%s5] sm:$0x1]
      %v249 = vld [vmem:[%s242] sm:$0xff]
      %250 = vrot.lane.b32.xlu0 %v249, 6
      %v251 = vpop.permute.xlu0 %250
      %252 = vrot.lane.b32.xlu0 %v249, 122
      %v253 = vpop.permute.xlu0 %252
      %254 = vrot.lane.b32.xlu0 %v251, 1
      %v255 = vpop.permute.xlu0 %254
      %256 = vst [vmem:[#allocation2] sm:$0xff] %v255
      %257 = vst [vmem:[#allocation2 + $0x8] sm:$0xff] %v251
      %258 = vrot.lane.b32.xlu0 %v251, 127
      %v259 = vpop.permute.xlu0 %258
      %260 = vst [vmem:[#allocation2 + $0x10] sm:$0xff] %v259
      %261 = vrot.lane.b32.xlu0 %v249, 1
      %v262 = vpop.permute.xlu0 %261
      %263 = vst [vmem:[#allocation2 + $0x18] sm:$0xff] %v262
      %264 = vst [vmem:[#allocation2 + $0x20] sm:$0xff] %v249
      %265 = vrot.lane.b32.xlu0 %v249, 127
      %v266 = vpop.permute.xlu0 %265
      %267 = vst [vmem:[#allocation2 + $0x28] sm:$0xff] %v266
      %268 = vrot.lane.b32.xlu0 %v253, 1
      %v269 = vpop.permute.xlu0 %268
      %270 = vst [vmem:[#allocation2 + $0x30] sm:$0xff] %v269
      %271 = vst [vmem:[#allocation2 + $0x38] sm:$0xff] %v253
      %272 = vrot.lane.b32.xlu0 %v253, 127
      %v273 = vpop.permute.xlu0 %272
      %274 = vst [vmem:[#allocation2 + $0x40] sm:$0xff] %v273
      %v275 = vld [vmem:[%s1] sm:$0xf]
      %v276 = vld [vmem:[#allocation2] sm:$0xff]
      %v277 = vld [vmem:[#allocation2 + $0x8] sm:$0xff]
      %v278 = vld [vmem:[#allocation2 + $0x10] sm:$0xff]
      %v279 = vld [vmem:[#allocation2 + $0x18] sm:$0xff]
      %v280 = vld [vmem:[#allocation2 + $0x20] sm:$0xff]
      %v281 = vld [vmem:[#allocation2 + $0x28] sm:$0xff]
      %v282 = vld [vmem:[#allocation2 + $0x30] sm:$0xff]
      %v283 = vld [vmem:[#allocation2 + $0x38] sm:$0xff]
      %v284 = vld [vmem:[#allocation2 + $0x40] sm:$0xff]
      %v285 = vpack.c.bf16 %v277, %v276
      %v286 = vpack.c.bf16 %v279, %v278
      %v287 = vpack.c.bf16 %v281, %v280
      %v288 = vpack.c.bf16 %v283, %v282
      %v289 = vpack.c.bf16 %v284, %v284
      %v290 = vld [vmem:[%s2] sm:$0xff]
      %292 = vset.pattern.permute.xlu0 0
      %293 = vperm.xlu0 %292, %v290
      %v294 = vpop.permute.xlu0 %293
      %vm296 = vcmask 588800
      %v298 = vsel %vm296, %v275, 0
      %vm300 = vcmask 1043456
      %v302 = vsel %vm300, %v289, 0
      %304 = vmatprep.subr.bf16.mxu0 0
      %305 = vmatpush1.bf16.msra.mxu0 %v285
      %306 = vmatprep.subr.bf16.mxu0 0
      %307 = vmatpush1.bf16.msra.mxu0 %v286
      %308 = vmatprep.subr.bf16.mxu0 0
      %309 = vmatpush1.bf16.msra.mxu0 %v287
      %310 = vmatprep.subr.bf16.mxu0 0
      %311 = vmatpush1.bf16.msra.mxu0 %v288
      %312 = vmatprep.subr.bf16.mxu0 0
      %313 = vmatpush1.bf16.msra.mxu0 %v302
      %314 = vmatprep.subr.bf16.mxu0 0
      %315 = vmatpush1.bf16.msra.mxu0 0
      %316 = vmatprep.subr.bf16.mxu0 0
      %317 = vmatpush1.bf16.msra.mxu0 0
      %318 = vmatprep.subr.bf16.mxu0 0
      %319 = vmatpush1.bf16.msra.mxu0 0
      %320 = vmatprep.subr.bf16.mxu0 0
      %321 = vmatpush1.bf16.msra.mxu0 0
      %322 = vmatprep.subr.bf16.mxu0 0
      %323 = vmatpush1.bf16.msra.mxu0 0
      %324 = vmatprep.subr.bf16.mxu0 0
      %325 = vmatpush1.bf16.msra.mxu0 0
      %326 = vmatprep.subr.bf16.mxu0 0
      %327 = vmatpush1.bf16.msra.mxu0 0
      %328 = vmatprep.subr.bf16.mxu0 0
      %329 = vmatpush1.bf16.msra.mxu0 0
      %330 = vmatprep.subr.bf16.mxu0 0
      %331 = vmatpush1.bf16.msra.mxu0 0
      %332 = vmatprep.subr.bf16.mxu0 0
      %333 = vmatpush1.bf16.msra.mxu0 0
      %334 = vmatprep.subr.bf16.mxu0 0
      %335 = vmatpush1.bf16.msra.mxu0 0
      %336 = vmatprep.mubr.bf16.mxu0 0
      %337 = vmatmul.mubr.bf16.gmra.mrb[0].mxu0 %v298
      %v338 = vpop.f32.mrb[0].mxu0
      %v339 = vadd.f32 %v294, %v338
      %v340 = vpop.f32.mrb[0].mxu0
      %v341 = vpop.f32.mrb[0].mxu0
      %v342 = vpop.f32.mrb[0].mxu0
      %343 = vdwg.mxu0
      %v344 = vmax.f32 %v339, 0.0
      %v346 = vlaneseq
      %v347 = vshrl.u32 %v346, 7
      %v348 = vsub.s32 0, %v347
      %v349 = vrot.slane %v248, %v348
      %v351 = vmul.f32 %v344, %v349
      %352 = vrot.lane.b32.xlu0 %v351, 6
      %v353 = vpop.permute.xlu0 %352
      %354 = vrot.lane.b32.xlu0 %v351, 122
      %v355 = vpop.permute.xlu0 %354
      %356 = vrot.lane.b32.xlu0 %v353, 1
      %v357 = vpop.permute.xlu0 %356
      %358 = vst [vmem:[#allocation2] sm:$0xff] %v357
      %359 = vst [vmem:[#allocation2 + $0x8] sm:$0xff] %v353
      %360 = vrot.lane.b32.xlu0 %v353, 127
      %v361 = vpop.permute.xlu0 %360
      %362 = vst [vmem:[#allocation2 + $0x10] sm:$0xff] %v361
      %363 = vrot.lane.b32.xlu0 %v351, 1
      %v364 = vpop.permute.xlu0 %363
      %365 = vst [vmem:[#allocation2 + $0x18] sm:$0xff] %v364
      %366 = vst [vmem:[#allocation2 + $0x20] sm:$0xff] %v351
      %367 = vrot.lane.b32.xlu0 %v351, 127
      %v368 = vpop.permute.xlu0 %367
      %369 = vst [vmem:[#allocation2 + $0x28] sm:$0xff] %v368
      %370 = vrot.lane.b32.xlu0 %v355, 1
      %v371 = vpop.permute.xlu0 %370
      %372 = vst [vmem:[#allocation2 + $0x30] sm:$0xff] %v371
      %373 = vst [vmem:[#allocation2 + $0x38] sm:$0xff] %v355
      %374 = vrot.lane.b32.xlu0 %v355, 127
      %v375 = vpop.permute.xlu0 %374
      %376 = vst [vmem:[#allocation2 + $0x40] sm:$0xff] %v375
      %v377 = vld [vmem:[%s3] sm:$0xf]
      %v378 = vld [vmem:[#allocation2] sm:$0xff]
      %v379 = vld [vmem:[#allocation2 + $0x8] sm:$0xff]
      %v380 = vld [vmem:[#allocation2 + $0x10] sm:$0xff]
      %v381 = vld [vmem:[#allocation2 + $0x18] sm:$0xff]
      %v382 = vld [vmem:[#allocation2 + $0x20] sm:$0xff]
      %v383 = vld [vmem:[#allocation2 + $0x28] sm:$0xff]
      %v384 = vld [vmem:[#allocation2 + $0x30] sm:$0xff]
      %v385 = vld [vmem:[#allocation2 + $0x38] sm:$0xff]
      %v386 = vld [vmem:[#allocation2 + $0x40] sm:$0xff]
      %v387 = vpack.c.bf16 %v379, %v378
      %v388 = vpack.c.bf16 %v381, %v380
      %v389 = vpack.c.bf16 %v383, %v382
      %v390 = vpack.c.bf16 %v385, %v384
      %v391 = vpack.c.bf16 %v386, %v386
      %v392 = vld [vmem:[%s4] sm:$0xff]
      %394 = vset.pattern.permute.xlu0 0
      %395 = vperm.xlu0 %394, %v392
      %v396 = vpop.permute.xlu0 %395
      %v399 = vsel %vm296, %v377, 0
      %v402 = vsel %vm300, %v391, 0
      %404 = vmatprep.subr.bf16.mxu0 0
      %405 = vmatpush1.bf16.msra.mxu0 %v387
      %406 = vmatprep.subr.bf16.mxu0 0
      %407 = vmatpush1.bf16.msra.mxu0 %v388
      %408 = vmatprep.subr.bf16.mxu0 0
      %409 = vmatpush1.bf16.msra.mxu0 %v389
      %410 = vmatprep.subr.bf16.mxu0 0
      %411 = vmatpush1.bf16.msra.mxu0 %v390
      %412 = vmatprep.subr.bf16.mxu0 0
      %413 = vmatpush1.bf16.msra.mxu0 %v402
      %414 = vmatprep.subr.bf16.mxu0 0
      %415 = vmatpush1.bf16.msra.mxu0 0
      %416 = vmatprep.subr.bf16.mxu0 0
      %417 = vmatpush1.bf16.msra.mxu0 0
      %418 = vmatprep.subr.bf16.mxu0 0
      %419 = vmatpush1.bf16.msra.mxu0 0
      %420 = vmatprep.subr.bf16.mxu0 0
      %421 = vmatpush1.bf16.msra.mxu0 0
      %422 = vmatprep.subr.bf16.mxu0 0
      %423 = vmatpush1.bf16.msra.mxu0 0
      %424 = vmatprep.subr.bf16.mxu0 0
      %425 = vmatpush1.bf16.msra.mxu0 0
      %426 = vmatprep.subr.bf16.mxu0 0
      %427 = vmatpush1.bf16.msra.mxu0 0
      %428 = vmatprep.subr.bf16.mxu0 0
      %429 = vmatpush1.bf16.msra.mxu0 0
      %430 = vmatprep.subr.bf16.mxu0 0
      %431 = vmatpush1.bf16.msra.mxu0 0
      %432 = vmatprep.subr.bf16.mxu0 0
      %433 = vmatpush1.bf16.msra.mxu0 0
      %434 = vmatprep.subr.bf16.mxu0 0
      %435 = vmatpush1.bf16.msra.mxu0 0
      %436 = vmatprep.mubr.bf16.mxu0 0
      %437 = vmatmul.mubr.bf16.gmra.mrb[0].mxu0 %v399
      %v438 = vpop.f32.mrb[0].mxu0
      %v439 = vadd.f32 %v396, %v438
      %v440 = vpop.f32.mrb[0].mxu0
      %v441 = vpop.f32.mrb[0].mxu0
      %v442 = vpop.f32.mrb[0].mxu0
      %443 = vdwg.mxu0
      %v444 = vmax.f32 %v439, 0.0
      %v445 = vmul.f32 %v444, %v349
      %446 = vst [vmem:[%s246] sm:$0xff] %v445
      %p447 = scmp.lt.s32.totalorder %s17, 1
      %s448 = scalar_select %p447, %s17, 1
      %s449 = smul.addr %s448, 8
      %s450 = scalar_lea.vmem %s6, %s449
      // Predicated region
      $region45: #{_lambda_.7} parent=43 // pred_check
        %p451 = pneg %p166
      $region46: #{_lambda_.7} parent=43 // pred_check_branch
        %453 = sbr.rel (%p451) target = $region48
      $region47: #{_lambda_.7} parent=43 // pred_region
        _
      $region48: #{_lambda_.7} parent=43 // pred_fallthru
        _
    $region44: #{_lambda_.7} parent=5 // pred_fallthru
      _
    %p454 = scmp.le.s32.totalorder 2, %s12
    // Predicated region
    $region49: #{_lambda_.7} parent=5 // pred_check
      %p455 = pneg %p454
    $region50: #{_lambda_.7} parent=5 // pred_check_branch
      %457 = sbr.rel (%p455) target = $region52
    $region51: #{_lambda_.7} parent=5 // pred_region
      %s458 = ssub.s32 %s12, 2
      // Predicated region
      $region53: #{_lambda_.7} parent=51 // pred_check
        %p459 = pneg %p172
      $region54: #{_lambda_.7} parent=51 // pred_check_branch
        %461 = sbr.rel (%p459) target = $region56
      $region55: #{_lambda_.7} parent=51 // pred_region
        %p462 = scmp.lt.s32.totalorder %s18, 1
        %s463 = scalar_select %p462, %s18, 1
        %s464 = smul.addr %s463, 8
        %s465 = scalar_lea.vmem %s6, %s464
      $region56: #{_lambda_.7} parent=51 // pred_fallthru
        _
    $region52: #{_lambda_.7} parent=5 // pred_fallthru
      _
  $region6: #{_lambda_.7} parent=0 // loop_footer
    %s16 = sadd.s32 1, %s12
  $region7: #{_lambda_.7} parent=0 // loop_footer_branch
    %11 = sbr.rel target = $region3
  $region8: #{_lambda_.7} parent=0 // loop_exit
    _

// kernel: _lambda_.8
$region0: #{_lambda_.8}
  #allocation0 [shape = 'u32[]', space=smem, size = 0x4, offset = 0x4, fixed_abs, tag = 'smem constant byte address 0x4 - core index']
  #allocation1 [shape = 'u32[144,128]{1,0:T(1,128)}', space=vmem, size = 0x12000, scoped, tag = 'internal scratch']
  #allocation2 [shape = 'f32[8,128]{1,0:T(8,128)}', space=vmem, size = 0x1000, scoped, tag = 'scratch operand']
  #allocation3 [shape = 'f32[144,128]{1,0:T(8,128)}', space=vmem, size = 0x12000, scoped, tag = 'scratch operand']
  %s0 = inlined_call_operand.vmem [shape: f32[2,8,128], index: 0, kind: input, shape index: {}]
  %s1 = inlined_call_operand.vmem [shape: f32[2,8,128], index: 1, kind: input, shape index: {}]
  %s2 = inlined_call_operand.vmem [shape: f32[6,10], index: 2, kind: input, shape index: {}]
  %s3 = inlined_call_operand.vmem [shape: bf16[8,144], index: 3, kind: input, shape index: {}]
  %s4 = inlined_call_operand.vmem [shape: f32[8,1], index: 4, kind: input, shape index: {}]
  %s5 = inlined_call_operand.vmem [shape: bf16[8,72], index: 5, kind: input, shape index: {}]
  %s6 = inlined_call_operand.vmem [shape: f32[8,1], index: 6, kind: input, shape index: {}]
  %s7 = inlined_call_operand.vmem [shape: f32[1,128], index: 7, kind: input, shape index: {}]
  %s8 = inlined_call_operand.vmem [shape: f32[2,8,128], index: 8, kind: output, shape index: {}]
  %s9 = sld [smem:[#allocation0]]
  $region65: #{_lambda_.8} parent=0
    _
  %s11 = ssub.s32 1, %s9
  %s12 = scalar_select 0, %s11, %s9
  loop: start=0, step=1, limit=4
  $region2: #{_lambda_.8} parent=0 // loop_pre_header
    _
  $region3: #{_lambda_.8} parent=0 // loop_header
    %s14 = sphi 0, %s18
    %p15 = scmp.ge.s32.totalorder %s14, 4
    %s24 = sphi 0, %s26
    %s27 = sphi 0, %s24
    %s28 = sphi 0, %s27
    %s44 = sphi 0, %s28
    %s50 = sphi 0, %s52
    %s53 = sphi 0, %s50
    %s54 = sphi 0, %s53
    %s70 = sphi 0, %s54
    %s74 = sphi 0, %s74
    %s76 = sphi 0, %s74
    %s77 = sphi 0, %s76
    %s91 = sphi 0, %s77
    %s95 = sphi 0, %s95
    %s97 = sphi 0, %s95
    %s98 = sphi 0, %s97
    %s112 = sphi 0, %s98
    %s116 = sphi 0, %s116
    %s118 = sphi 0, %s116
    %s119 = sphi 0, %s118
    %s133 = sphi 0, %s119
    %s137 = sphi 0, %s137
    %s139 = sphi 0, %s137
    %s140 = sphi 0, %s139
    %s154 = sphi 0, %s140
    %s158 = sphi 0, %s158
    %s160 = sphi 0, %s158
    %s161 = sphi 0, %s160
    %s175 = sphi 0, %s161
    %s179 = sphi 0, %s179
    %s181 = sphi 0, %s179
    %s182 = sphi 0, %s181
    %s196 = sphi 0, %s182
    %s202 = sphi 0, %s204
    %s205 = sphi 0, %s202
    %s206 = sphi 0, %s205
    %s222 = sphi 0, %s206
  $region4: #{_lambda_.8} parent=0 // loop_header_branch
    %17 = sbr.rel (%p15) target = $region8
  $region5: #{_lambda_.8} parent=0 // loop_body
    %s19 = ssub.s32 %s14, 1
    %s20 = ssub.s32 %s14, 2
    %s21 = sadd.s32 %s14, 1
    %s22 = ssub.s32 %s14, %s21
    %p23 = scmp.eq.s32.totalorder %s22, 0
    %s25 = sadd.s32 %s24, 1
    %s26 = scalar_select %p23, %s24, %s25
    %p29 = pneg %p23
    %p30 = scmp.eq.s32.totalorder %s14, 1
    %p31 = por %p29, %p30
    %p32 = scmp.ne.s32.totalorder %s24, %s27
    %p33 = scmp.eq.s32.totalorder %s14, 0
    %p34 = por %p32, %p33
    %p35 = scmp.ne.s32.totalorder %s24, %s27
    %p36 = scmp.eq.s32.totalorder %s19, 1
    %p37 = por %p35, %p36
    %p38 = scmp.ne.s32.totalorder %s27, %s28
    %p39 = scmp.eq.s32.totalorder %s19, 0
    %p40 = por %p38, %p39
    %p41 = scmp.ne.s32.totalorder %s27, %s28
    %p42 = scmp.eq.s32.totalorder %s20, 1
    %p43 = por %p41, %p42
    %p45 = scmp.ne.s32.totalorder %s28, %s44
    %p46 = scmp.eq.s32.totalorder %s20, 0
    %p47 = por %p45, %p46
    %s48 = ssub.s32 %s14, %s21
    %p49 = scmp.eq.s32.totalorder %s48, 0
    %s51 = sadd.s32 %s50, 1
    %s52 = scalar_select %p49, %s50, %s51
    %p55 = pneg %p49
    %p56 = scmp.eq.s32.totalorder %s14, 1
    %p57 = por %p55, %p56
    %p58 = scmp.ne.s32.totalorder %s50, %s53
    %p59 = scmp.eq.s32.totalorder %s14, 0
    %p60 = por %p58, %p59
    %p61 = scmp.ne.s32.totalorder %s50, %s53
    %p62 = scmp.eq.s32.totalorder %s19, 1
    %p63 = por %p61, %p62
    %p64 = scmp.ne.s32.totalorder %s53, %s54
    %p65 = scmp.eq.s32.totalorder %s19, 0
    %p66 = por %p64, %p65
    %p67 = scmp.ne.s32.totalorder %s53, %s54
    %p68 = scmp.eq.s32.totalorder %s20, 1
    %p69 = por %p67, %p68
    %p71 = scmp.ne.s32.totalorder %s54, %s70
    %p72 = scmp.eq.s32.totalorder %s20, 0
    %p73 = por %p71, %p72
    %s75 = sadd.s32 %s74, 1
    %p78 = scmp.eq.s32.totalorder %s14, 1
    %p79 = scmp.ne.s32.totalorder %s74, %s76
    %p80 = scmp.eq.s32.totalorder %s14, 0
    %p81 = por %p79, %p80
    %p82 = scmp.ne.s32.totalorder %s74, %s76
    %p83 = scmp.eq.s32.totalorder %s19, 1
    %p84 = por %p82, %p83
    %p85 = scmp.ne.s32.totalorder %s76, %s77
    %p86 = scmp.eq.s32.totalorder %s19, 0
    %p87 = por %p85, %p86
    %p88 = scmp.ne.s32.totalorder %s76, %s77
    %p89 = scmp.eq.s32.totalorder %s20, 1
    %p90 = por %p88, %p89
    %p92 = scmp.ne.s32.totalorder %s77, %s91
    %p93 = scmp.eq.s32.totalorder %s20, 0
    %p94 = por %p92, %p93
    %s96 = sadd.s32 %s95, 1
    %p99 = scmp.eq.s32.totalorder %s14, 1
    %p100 = scmp.ne.s32.totalorder %s95, %s97
    %p101 = scmp.eq.s32.totalorder %s14, 0
    %p102 = por %p100, %p101
    %p103 = scmp.ne.s32.totalorder %s95, %s97
    %p104 = scmp.eq.s32.totalorder %s19, 1
    %p105 = por %p103, %p104
    %p106 = scmp.ne.s32.totalorder %s97, %s98
    %p107 = scmp.eq.s32.totalorder %s19, 0
    %p108 = por %p106, %p107
    %p109 = scmp.ne.s32.totalorder %s97, %s98
    %p110 = scmp.eq.s32.totalorder %s20, 1
    %p111 = por %p109, %p110
    %p113 = scmp.ne.s32.totalorder %s98, %s112
    %p114 = scmp.eq.s32.totalorder %s20, 0
    %p115 = por %p113, %p114
    %s117 = sadd.s32 %s116, 1
    %p120 = scmp.eq.s32.totalorder %s14, 1
    %p121 = scmp.ne.s32.totalorder %s116, %s118
    %p122 = scmp.eq.s32.totalorder %s14, 0
    %p123 = por %p121, %p122
    %p124 = scmp.ne.s32.totalorder %s116, %s118
    %p125 = scmp.eq.s32.totalorder %s19, 1
    %p126 = por %p124, %p125
    %p127 = scmp.ne.s32.totalorder %s118, %s119
    %p128 = scmp.eq.s32.totalorder %s19, 0
    %p129 = por %p127, %p128
    %p130 = scmp.ne.s32.totalorder %s118, %s119
    %p131 = scmp.eq.s32.totalorder %s20, 1
    %p132 = por %p130, %p131
    %p134 = scmp.ne.s32.totalorder %s119, %s133
    %p135 = scmp.eq.s32.totalorder %s20, 0
    %p136 = por %p134, %p135
    %s138 = sadd.s32 %s137, 1
    %p141 = scmp.eq.s32.totalorder %s14, 1
    %p142 = scmp.ne.s32.totalorder %s137, %s139
    %p143 = scmp.eq.s32.totalorder %s14, 0
    %p144 = por %p142, %p143
    %p145 = scmp.ne.s32.totalorder %s137, %s139
    %p146 = scmp.eq.s32.totalorder %s19, 1
    %p147 = por %p145, %p146
    %p148 = scmp.ne.s32.totalorder %s139, %s140
    %p149 = scmp.eq.s32.totalorder %s19, 0
    %p150 = por %p148, %p149
    %p151 = scmp.ne.s32.totalorder %s139, %s140
    %p152 = scmp.eq.s32.totalorder %s20, 1
    %p153 = por %p151, %p152
    %p155 = scmp.ne.s32.totalorder %s140, %s154
    %p156 = scmp.eq.s32.totalorder %s20, 0
    %p157 = por %p155, %p156
    %s159 = sadd.s32 %s158, 1
    %p162 = scmp.eq.s32.totalorder %s14, 1
    %p163 = scmp.ne.s32.totalorder %s158, %s160
    %p164 = scmp.eq.s32.totalorder %s14, 0
    %p165 = por %p163, %p164
    %p166 = scmp.ne.s32.totalorder %s158, %s160
    %p167 = scmp.eq.s32.totalorder %s19, 1
    %p168 = por %p166, %p167
    %p169 = scmp.ne.s32.totalorder %s160, %s161
    %p170 = scmp.eq.s32.totalorder %s19, 0
    %p171 = por %p169, %p170
    %p172 = scmp.ne.s32.totalorder %s160, %s161
    %p173 = scmp.eq.s32.totalorder %s20, 1
    %p174 = por %p172, %p173
    %p176 = scmp.ne.s32.totalorder %s161, %s175
    %p177 = scmp.eq.s32.totalorder %s20, 0
    %p178 = por %p176, %p177
    %s180 = sadd.s32 %s179, 1
    %p183 = scmp.eq.s32.totalorder %s14, 1
    %p184 = scmp.ne.s32.totalorder %s179, %s181
    %p185 = scmp.eq.s32.totalorder %s14, 0
    %p186 = por %p184, %p185
    %p187 = scmp.ne.s32.totalorder %s179, %s181
    %p188 = scmp.eq.s32.totalorder %s19, 1
    %p189 = por %p187, %p188
    %p190 = scmp.ne.s32.totalorder %s181, %s182
    %p191 = scmp.eq.s32.totalorder %s19, 0
    %p192 = por %p190, %p191
    %p193 = scmp.ne.s32.totalorder %s181, %s182
    %p194 = scmp.eq.s32.totalorder %s20, 1
    %p195 = por %p193, %p194
    %p197 = scmp.ne.s32.totalorder %s182, %s196
    %p198 = scmp.eq.s32.totalorder %s20, 0
    %p199 = por %p197, %p198
    %s200 = ssub.s32 %s14, %s21
    %p201 = scmp.eq.s32.totalorder %s200, 0
    %s203 = sadd.s32 %s202, 1
    %s204 = scalar_select %p201, %s202, %s203
    %p207 = pneg %p201
    %p208 = scmp.eq.s32.totalorder %s14, 1
    %p209 = por %p207, %p208
    %p210 = scmp.ne.s32.totalorder %s202, %s205
    %p211 = scmp.eq.s32.totalorder %s14, 0
    %p212 = por %p210, %p211
    %p213 = scmp.ne.s32.totalorder %s202, %s205
    %p214 = scmp.eq.s32.totalorder %s19, 1
    %p215 = por %p213, %p214
    %p216 = scmp.ne.s32.totalorder %s205, %s206
    %p217 = scmp.eq.s32.totalorder %s19, 0
    %p218 = por %p216, %p217
    %p219 = scmp.ne.s32.totalorder %s205, %s206
    %p220 = scmp.eq.s32.totalorder %s20, 1
    %p221 = por %p219, %p220
    %p223 = scmp.ne.s32.totalorder %s206, %s222
    %p224 = scmp.eq.s32.totalorder %s20, 0
    %p225 = por %p223, %p224
    %p226 = scmp.le.s32.totalorder 1, %s14
    %p227 = scmp.lt.s32.totalorder %s14, 3
    %p228 = pnand %p226, %p227
    %p229 = pneg %p228
    // Predicated region
    $region9: #{_lambda_.8} parent=5 // pred_check
      _
    $region10: #{_lambda_.8} parent=5 // pred_check_branch
      %231 = sbr.rel (%p228) target = $region12
    $region11: #{_lambda_.8} parent=5 // pred_region
      %s232 = ssub.s32 %s14, 1
      // Predicated region
      $region13: #{_lambda_.8} parent=11 // pred_check
        %p233 = pneg %p87
      $region14: #{_lambda_.8} parent=11 // pred_check_branch
        %235 = sbr.rel (%p233) target = $region16
      $region15: #{_lambda_.8} parent=11 // pred_region
        _
      $region16: #{_lambda_.8} parent=11 // pred_fallthru
        _
      // Predicated region
      $region17: #{_lambda_.8} parent=11 // pred_check
        %p236 = pneg %p108
      $region18: #{_lambda_.8} parent=11 // pred_check_branch
        %238 = sbr.rel (%p236) target = $region20
      $region19: #{_lambda_.8} parent=11 // pred_region
        _
      $region20: #{_lambda_.8} parent=11 // pred_fallthru
        _
      // Predicated region
      $region21: #{_lambda_.8} parent=11 // pred_check
        %p239 = pneg %p129
      $region22: #{_lambda_.8} parent=11 // pred_check_branch
        %241 = sbr.rel (%p239) target = $region24
      $region23: #{_lambda_.8} parent=11 // pred_region
        _
      $region24: #{_lambda_.8} parent=11 // pred_fallthru
        _
      // Predicated region
      $region25: #{_lambda_.8} parent=11 // pred_check
        %p242 = pneg %p150
      $region26: #{_lambda_.8} parent=11 // pred_check_branch
        %244 = sbr.rel (%p242) target = $region28
      $region27: #{_lambda_.8} parent=11 // pred_region
        _
      $region28: #{_lambda_.8} parent=11 // pred_fallthru
        _
      // Predicated region
      $region29: #{_lambda_.8} parent=11 // pred_check
        %p245 = pneg %p171
      $region30: #{_lambda_.8} parent=11 // pred_check_branch
        %247 = sbr.rel (%p245) target = $region32
      $region31: #{_lambda_.8} parent=11 // pred_region
        _
      $region32: #{_lambda_.8} parent=11 // pred_fallthru
        _
      // Predicated region
      $region33: #{_lambda_.8} parent=11 // pred_check
        %p248 = pneg %p192
      $region34: #{_lambda_.8} parent=11 // pred_check_branch
        %250 = sbr.rel (%p248) target = $region36
      $region35: #{_lambda_.8} parent=11 // pred_region
        _
      $region36: #{_lambda_.8} parent=11 // pred_fallthru
        _
    $region12: #{_lambda_.8} parent=5 // pred_fallthru
      _
    %p251 = scmp.lt.s32.totalorder %s14, 2
    // Predicated region
    $region37: #{_lambda_.8} parent=5 // pred_check
      %p252 = pneg %p251
    $region38: #{_lambda_.8} parent=5 // pred_check_branch
      %254 = sbr.rel (%p252) target = $region40
    $region39: #{_lambda_.8} parent=5 // pred_region
      // Predicated region
      $region41: #{_lambda_.8} parent=39 // pred_check
        %p255 = pneg %p34
      $region42: #{_lambda_.8} parent=39 // pred_check_branch
        %257 = sbr.rel (%p255) target = $region44
      $region43: #{_lambda_.8} parent=39 // pred_region
        %p258 = scmp.lt.s32.totalorder %s14, 1
        %s259 = scalar_select %p258, %s14, 1
        %s260 = smul.addr %s259, 8
        %s261 = scalar_lea.vmem %s0, %s260
      $region44: #{_lambda_.8} parent=39 // pred_fallthru
        _
      // Predicated region
      $region45: #{_lambda_.8} parent=39 // pred_check
        %p262 = pneg %p60
      $region46: #{_lambda_.8} parent=39 // pred_check_branch
        %264 = sbr.rel (%p262) target = $region48
      $region47: #{_lambda_.8} parent=39 // pred_region
        %p265 = scmp.lt.s32.totalorder %s14, 1
        %s266 = scalar_select %p265, %s14, 1
        %s267 = smul.addr %s266, 8
        %s268 = scalar_lea.vmem %s1, %s267
      $region48: #{_lambda_.8} parent=39 // pred_fallthru
        _
    $region40: #{_lambda_.8} parent=5 // pred_fallthru
      _
    %p269 = scmp.le.s32.totalorder 1, %s14
    %p270 = scmp.lt.s32.totalorder %s14, 3
    %p271 = pnand %p269, %p270
    %p272 = pneg %p271
    // Predicated region
    $region49: #{_lambda_.8} parent=5 // pred_check
      _
    $region50: #{_lambda_.8} parent=5 // pred_check_branch
      %274 = sbr.rel (%p271) target = $region52
    $region51: #{_lambda_.8} parent=5 // pred_region
      %s275 = ssub.s32 %s14, 1
      %p276 = scmp.lt.s32.totalorder %s19, 1
      %s277 = scalar_select %p276, %s19, 1
      %s278 = smul.addr %s277, 8
      %s279 = scalar_lea.vmem %s0, %s278
      %p280 = pneg %p40
      %p281 = pneg %p37
      %p282 = scmp.lt.s32.totalorder %s19, 1
      %s283 = scalar_select %p282, %s19, 1
      %s284 = smul.addr %s283, 8
      %s285 = scalar_lea.vmem %s1, %s284
      %p286 = pneg %p66
      %p287 = pneg %p63
      %p288 = pneg %p87
      %p289 = pneg %p84
      %p290 = pneg %p108
      %p291 = pneg %p105
      %p292 = pneg %p129
      %p293 = pneg %p126
      %p294 = pneg %p150
      %p295 = pneg %p147
      %p296 = pneg %p171
      %p297 = pneg %p168
      %p298 = pneg %p192
      %p299 = pneg %p189
      %p300 = pneg %p218
      %p301 = pneg %p215
      %p302 = scmp.lt.s32.totalorder %s19, 1
      %s303 = scalar_select %p302, %s19, 1
      %s304 = smul.addr %s303, 8
      %s305 = scalar_lea.vmem %s8, %s304
      %p306 = scmp.lt.s32.totalorder %s19, 1
      %s307 = scalar_select %p306, %s19, 1
      %s308 = smul.addr %s307, 8
      %s309 = scalar_lea.vmem %s0, %s308
      %p310 = scmp.lt.s32.totalorder %s19, 1
      %s311 = scalar_select %p310, %s19, 1
      %s312 = smul.addr %s311, 8
      %s313 = scalar_lea.vmem %s1, %s312
      %p314 = scmp.lt.s32.totalorder %s19, 1
      %s315 = scalar_select %p314, %s19, 1
      %s316 = smul.addr %s315, 8
      %s317 = scalar_lea.vmem %s8, %s316
      %319 = vst [vmem:[#allocation2] sm:$0xff] 0.0
      %v320 = vld [vmem:[%s2] sm:$0x3f]
      %v321 = vld [vmem:[%s309] sm:$0xff]
      %323 = vrot.lane.b32.xlu0 %v321, 122
      %v324 = vpop.permute.xlu0 %323
      %vm325 = vcmask 48128
      %v326 = vsel %vm325, %v324, 0
      %vm328 = vcmask 1045504
      %v330 = vsel %vm328, %v320, 0
      %332 = vmatprep.subr.mxu0 0.0
      %333 = vmatpush1.msra.mxu0 %v330
      %334 = vmatprep.subr.mxu0 0.0
      %335 = vmatpush1.msra.mxu0 0.0
      %336 = vmatprep.subr.mxu0 0.0
      %337 = vmatpush1.msra.mxu0 0.0
      %338 = vmatprep.subr.mxu0 0.0
      %339 = vmatpush1.msra.mxu0 0.0
      %340 = vmatprep.subr.mxu0 0.0
      %341 = vmatpush1.msra.mxu0 0.0
      %342 = vmatprep.subr.mxu0 0.0
      %343 = vmatpush1.msra.mxu0 0.0
      %344 = vmatprep.subr.mxu0 0.0
      %345 = vmatpush1.msra.mxu0 0.0
      %346 = vmatprep.subr.mxu0 0.0
      %347 = vmatpush1.msra.mxu0 0.0
      %348 = vmatprep.subr.mxu0 0.0
      %349 = vmatpush1.msra.mxu0 0.0
      %350 = vmatprep.subr.mxu0 0.0
      %351 = vmatpush1.msra.mxu0 0.0
      %352 = vmatprep.subr.mxu0 0.0
      %353 = vmatpush1.msra.mxu0 0.0
      %354 = vmatprep.subr.mxu0 0.0
      %355 = vmatpush1.msra.mxu0 0.0
      %356 = vmatprep.subr.mxu0 0.0
      %357 = vmatpush1.msra.mxu0 0.0
      %358 = vmatprep.subr.mxu0 0.0
      %359 = vmatpush1.msra.mxu0 0.0
      %360 = vmatprep.subr.mxu0 0.0
      %361 = vmatpush1.msra.mxu0 0.0
      %362 = vmatprep.subr.mxu0 0.0
      %363 = vmatpush1.msra.mxu0 0.0
      %364 = vmatprep.subr.mxu0 0.0
      %365 = vmatpush1.msra.mxu0 0.0
      %366 = vmatprep.subr.mxu0 0.0
      %367 = vmatpush1.msra.mxu0 0.0
      %368 = vmatprep.subr.mxu0 0.0
      %369 = vmatpush1.msra.mxu0 0.0
      %370 = vmatprep.subr.mxu0 0.0
      %371 = vmatpush1.msra.mxu0 0.0
      %372 = vmatprep.subr.mxu0 0.0
      %373 = vmatpush1.msra.mxu0 0.0
      %374 = vmatprep.subr.mxu0 0.0
      %375 = vmatpush1.msra.mxu0 0.0
      %376 = vmatprep.subr.mxu0 0.0
      %377 = vmatpush1.msra.mxu0 0.0
      %378 = vmatprep.subr.mxu0 0.0
      %379 = vmatpush1.msra.mxu0 0.0
      %380 = vmatprep.subr.mxu0 0.0
      %381 = vmatpush1.msra.mxu0 0.0
      %382 = vmatprep.subr.mxu0 0.0
      %383 = vmatpush1.msra.mxu0 0.0
      %384 = vmatprep.subr.mxu0 0.0
      %385 = vmatpush1.msra.mxu0 0.0
      %386 = vmatprep.subr.mxu0 0.0
      %387 = vmatpush1.msra.mxu0 0.0
      %388 = vmatprep.subr.mxu0 0.0
      %389 = vmatpush1.msra.mxu0 0.0
      %390 = vmatprep.subr.mxu0 0.0
      %391 = vmatpush1.msra.mxu0 0.0
      %392 = vmatprep.subr.mxu0 0.0
      %393 = vmatpush1.msra.mxu0 0.0
      %394 = vmatprep.subr.mxu0 0.0
      %395 = vmatpush1.msra.mxu0 0.0
      %396 = vmatprep.mubr.f32.mxu0 0.0
      %397 = vmatmul.mubr.f32.gmra.mrb[0].mxu0 %v326
      %v398 = vpop.f32.mrb[0].mxu0
      %v399 = vadd.f32 0.0, %v398
      %v400 = vpop.f32.mrb[0].mxu0
      %401 = vdwg.mxu0
      %403 = vrot.lane.b32.xlu0 %v399, 10
      %v404 = vpop.permute.xlu0 %403
      %vm406 = vcmask 162896
      %407 = vst.msk [vmem:[#allocation2] sm:$0xff] %vm406, %v404
      %408 = vrot.lane.b32.xlu0 %v399, 20
      %v409 = vpop.permute.xlu0 %408
      %vm411 = vcmask 244896
      %412 = vst.msk [vmem:[#allocation2] sm:$0xff] %vm411, %v409
      %v413 = vld [vmem:[%s309] sm:$0xff]
      %415 = vrot.lane.b32.xlu0 %v413, 116
      %v416 = vpop.permute.xlu0 %415
      %v417 = vsel %vm325, %v416, 0
      %419 = vmatprep.subr.mxu0 0.0
      %420 = vmatpush1.msra.mxu0 %v330
      %421 = vmatprep.subr.mxu0 0.0
      %422 = vmatpush1.msra.mxu0 0.0
      %423 = vmatprep.subr.mxu0 0.0
      %424 = vmatpush1.msra.mxu0 0.0
      %425 = vmatprep.subr.mxu0 0.0
      %426 = vmatpush1.msra.mxu0 0.0
      %427 = vmatprep.subr.mxu0 0.0
      %428 = vmatpush1.msra.mxu0 0.0
      %429 = vmatprep.subr.mxu0 0.0
      %430 = vmatpush1.msra.mxu0 0.0
      %431 = vmatprep.subr.mxu0 0.0
      %432 = vmatpush1.msra.mxu0 0.0
      %433 = vmatprep.subr.mxu0 0.0
      %434 = vmatpush1.msra.mxu0 0.0
      %435 = vmatprep.subr.mxu0 0.0
      %436 = vmatpush1.msra.mxu0 0.0
      %437 = vmatprep.subr.mxu0 0.0
      %438 = vmatpush1.msra.mxu0 0.0
      %439 = vmatprep.subr.mxu0 0.0
      %440 = vmatpush1.msra.mxu0 0.0
      %441 = vmatprep.subr.mxu0 0.0
      %442 = vmatpush1.msra.mxu0 0.0
      %443 = vmatprep.subr.mxu0 0.0
      %444 = vmatpush1.msra.mxu0 0.0
      %445 = vmatprep.subr.mxu0 0.0
      %446 = vmatpush1.msra.mxu0 0.0
      %447 = vmatprep.subr.mxu0 0.0
      %448 = vmatpush1.msra.mxu0 0.0
      %449 = vmatprep.subr.mxu0 0.0
      %450 = vmatpush1.msra.mxu0 0.0
      %451 = vmatprep.subr.mxu0 0.0
      %452 = vmatpush1.msra.mxu0 0.0
      %453 = vmatprep.subr.mxu0 0.0
      %454 = vmatpush1.msra.mxu0 0.0
      %455 = vmatprep.subr.mxu0 0.0
      %456 = vmatpush1.msra.mxu0 0.0
      %457 = vmatprep.subr.mxu0 0.0
      %458 = vmatpush1.msra.mxu0 0.0
      %459 = vmatprep.subr.mxu0 0.0
      %460 = vmatpush1.msra.mxu0 0.0
      %461 = vmatprep.subr.mxu0 0.0
      %462 = vmatpush1.msra.mxu0 0.0
      %463 = vmatprep.subr.mxu0 0.0
      %464 = vmatpush1.msra.mxu0 0.0
      %465 = vmatprep.subr.mxu0 0.0
      %466 = vmatpush1.msra.mxu0 0.0
      %467 = vmatprep.subr.mxu0 0.0
      %468 = vmatpush1.msra.mxu0 0.0
      %469 = vmatprep.subr.mxu0 0.0
      %470 = vmatpush1.msra.mxu0 0.0
      %471 = vmatprep.subr.mxu0 0.0
      %472 = vmatpush1.msra.mxu0 0.0
      %473 = vmatprep.subr.mxu0 0.0
      %474 = vmatpush1.msra.mxu0 0.0
      %475 = vmatprep.subr.mxu0 0.0
      %476 = vmatpush1.msra.mxu0 0.0
      %477 = vmatprep.subr.mxu0 0.0
      %478 = vmatpush1.msra.mxu0 0.0
      %479 = vmatprep.subr.mxu0 0.0
      %480 = vmatpush1.msra.mxu0 0.0
      %481 = vmatprep.subr.mxu0 0.0
      %482 = vmatpush1.msra.mxu0 0.0
      %483 = vmatprep.mubr.f32.mxu0 0.0
      %484 = vmatmul.mubr.f32.gmra.mrb[0].mxu0 %v417
      %v485 = vpop.f32.mrb[0].mxu0
      %v486 = vadd.f32 0.0, %v485
      %v487 = vpop.f32.mrb[0].mxu0
      %488 = vdwg.mxu0
      %490 = vrot.lane.b32.xlu0 %v486, 30
      %v491 = vpop.permute.xlu0 %490
      %vm493 = vcmask 326896
      %494 = vst.msk [vmem:[#allocation2] sm:$0xff] %vm493, %v491
      %495 = vrot.lane.b32.xlu0 %v486, 40
      %v496 = vpop.permute.xlu0 %495
      %vm498 = vcmask 408896
      %499 = vst.msk [vmem:[#allocation2] sm:$0xff] %vm498, %v496
      %v500 = vld [vmem:[%s309] sm:$0xff]
      %502 = vrot.lane.b32.xlu0 %v500, 110
      %v503 = vpop.permute.xlu0 %502
      %v504 = vsel %vm325, %v503, 0
      %506 = vmatprep.subr.mxu0 0.0
      %507 = vmatpush1.msra.mxu0 %v330
      %508 = vmatprep.subr.mxu0 0.0
      %509 = vmatpush1.msra.mxu0 0.0
      %510 = vmatprep.subr.mxu0 0.0
      %511 = vmatpush1.msra.mxu0 0.0
      %512 = vmatprep.subr.mxu0 0.0
      %513 = vmatpush1.msra.mxu0 0.0
      %514 = vmatprep.subr.mxu0 0.0
      %515 = vmatpush1.msra.mxu0 0.0
      %516 = vmatprep.subr.mxu0 0.0
      %517 = vmatpush1.msra.mxu0 0.0
      %518 = vmatprep.subr.mxu0 0.0
      %519 = vmatpush1.msra.mxu0 0.0
      %520 = vmatprep.subr.mxu0 0.0
      %521 = vmatpush1.msra.mxu0 0.0
      %522 = vmatprep.subr.mxu0 0.0
      %523 = vmatpush1.msra.mxu0 0.0
      %524 = vmatprep.subr.mxu0 0.0
      %525 = vmatpush1.msra.mxu0 0.0
      %526 = vmatprep.subr.mxu0 0.0
      %527 = vmatpush1.msra.mxu0 0.0
      %528 = vmatprep.subr.mxu0 0.0
      %529 = vmatpush1.msra.mxu0 0.0
      %530 = vmatprep.subr.mxu0 0.0
      %531 = vmatpush1.msra.mxu0 0.0
      %532 = vmatprep.subr.mxu0 0.0
      %533 = vmatpush1.msra.mxu0 0.0
      %534 = vmatprep.subr.mxu0 0.0
      %535 = vmatpush1.msra.mxu0 0.0
      %536 = vmatprep.subr.mxu0 0.0
      %537 = vmatpush1.msra.mxu0 0.0
      %538 = vmatprep.subr.mxu0 0.0
      %539 = vmatpush1.msra.mxu0 0.0
      %540 = vmatprep.subr.mxu0 0.0
      %541 = vmatpush1.msra.mxu0 0.0
      %542 = vmatprep.subr.mxu0 0.0
      %543 = vmatpush1.msra.mxu0 0.0
      %544 = vmatprep.subr.mxu0 0.0
      %545 = vmatpush1.msra.mxu0 0.0
      %546 = vmatprep.subr.mxu0 0.0
      %547 = vmatpush1.msra.mxu0 0.0
      %548 = vmatprep.subr.mxu0 0.0
      %549 = vmatpush1.msra.mxu0 0.0
      %550 = vmatprep.subr.mxu0 0.0
      %551 = vmatpush1.msra.mxu0 0.0
      %552 = vmatprep.subr.mxu0 0.0
      %553 = vmatpush1.msra.mxu0 0.0
      %554 = vmatprep.subr.mxu0 0.0
      %555 = vmatpush1.msra.mxu0 0.0
      %556 = vmatprep.subr.mxu0 0.0
      %557 = vmatpush1.msra.mxu0 0.0
      %558 = vmatprep.subr.mxu0 0.0
      %559 = vmatpush1.msra.mxu0 0.0
      %560 = vmatprep.subr.mxu0 0.0
      %561 = vmatpush1.msra.mxu0 0.0
      %562 = vmatprep.subr.mxu0 0.0
      %563 = vmatpush1.msra.mxu0 0.0
      %564 = vmatprep.subr.mxu0 0.0
      %565 = vmatpush1.msra.mxu0 0.0
      %566 = vmatprep.subr.mxu0 0.0
      %567 = vmatpush1.msra.mxu0 0.0
      %568 = vmatprep.subr.mxu0 0.0
      %569 = vmatpush1.msra.mxu0 0.0
      %570 = vmatprep.mubr.f32.mxu0 0.0
      %571 = vmatmul.mubr.f32.gmra.mrb[0].mxu0 %v504
      %v572 = vpop.f32.mrb[0].mxu0
      %v573 = vadd.f32 0.0, %v572
      %v574 = vpop.f32.mrb[0].mxu0
      %575 = vdwg.mxu0
      %577 = vrot.lane.b32.xlu0 %v573, 50
      %v578 = vpop.permute.xlu0 %577
      %vm580 = vcmask 490896
      %581 = vst.msk [vmem:[#allocation2] sm:$0xff] %vm580, %v578
      %582 = vrot.lane.b32.xlu0 %v573, 60
      %v583 = vpop.permute.xlu0 %582
      %vm585 = vcmask 572896
      %586 = vst.msk [vmem:[#allocation2] sm:$0xff] %vm585, %v583
      %v587 = vld [vmem:[%s309] sm:$0xff]
      %589 = vrot.lane.b32.xlu0 %v587, 104
      %v590 = vpop.permute.xlu0 %589
      %v591 = vsel %vm325, %v590, 0
      %593 = vmatprep.subr.mxu0 0.0
      %594 = vmatpush1.msra.mxu0 %v330
      %595 = vmatprep.subr.mxu0 0.0
      %596 = vmatpush1.msra.mxu0 0.0
      %597 = vmatprep.subr.mxu0 0.0
      %598 = vmatpush1.msra.mxu0 0.0
      %599 = vmatprep.subr.mxu0 0.0
      %600 = vmatpush1.msra.mxu0 0.0
      %601 = vmatprep.subr.mxu0 0.0
      %602 = vmatpush1.msra.mxu0 0.0
      %603 = vmatprep.subr.mxu0 0.0
      %604 = vmatpush1.msra.mxu0 0.0
      %605 = vmatprep.subr.mxu0 0.0
      %606 = vmatpush1.msra.mxu0 0.0
      %607 = vmatprep.subr.mxu0 0.0
      %608 = vmatpush1.msra.mxu0 0.0
      %609 = vmatprep.subr.mxu0 0.0
      %610 = vmatpush1.msra.mxu0 0.0
      %611 = vmatprep.subr.mxu0 0.0
      %612 = vmatpush1.msra.mxu0 0.0
      %613 = vmatprep.subr.mxu0 0.0
      %614 = vmatpush1.msra.mxu0 0.0
      %615 = vmatprep.subr.mxu0 0.0
      %616 = vmatpush1.msra.mxu0 0.0
      %617 = vmatprep.subr.mxu0 0.0
      %618 = vmatpush1.msra.mxu0 0.0
      %619 = vmatprep.subr.mxu0 0.0
      %620 = vmatpush1.msra.mxu0 0.0
      %621 = vmatprep.subr.mxu0 0.0
      %622 = vmatpush1.msra.mxu0 0.0
      %623 = vmatprep.subr.mxu0 0.0
      %624 = vmatpush1.msra.mxu0 0.0
      %625 = vmatprep.subr.mxu0 0.0
      %626 = vmatpush1.msra.mxu0 0.0
      %627 = vmatprep.subr.mxu0 0.0
      %628 = vmatpush1.msra.mxu0 0.0
      %629 = vmatprep.subr.mxu0 0.0
      %630 = vmatpush1.msra.mxu0 0.0
      %631 = vmatprep.subr.mxu0 0.0
      %632 = vmatpush1.msra.mxu0 0.0
      %633 = vmatprep.subr.mxu0 0.0
      %634 = vmatpush1.msra.mxu0 0.0
      %635 = vmatprep.subr.mxu0 0.0
      %636 = vmatpush1.msra.mxu0 0.0
      %637 = vmatprep.subr.mxu0 0.0
      %638 = vmatpush1.msra.mxu0 0.0
      %639 = vmatprep.subr.mxu0 0.0
      %640 = vmatpush1.msra.mxu0 0.0
      %641 = vmatprep.subr.mxu0 0.0
      %642 = vmatpush1.msra.mxu0 0.0
      %643 = vmatprep.subr.mxu0 0.0
      %644 = vmatpush1.msra.mxu0 0.0
      %645 = vmatprep.subr.mxu0 0.0
      %646 = vmatpush1.msra.mxu0 0.0
      %647 = vmatprep.subr.mxu0 0.0
      %648 = vmatpush1.msra.mxu0 0.0
      %649 = vmatprep.subr.mxu0 0.0
      %650 = vmatpush1.msra.mxu0 0.0
      %651 = vmatprep.subr.mxu0 0.0
      %652 = vmatpush1.msra.mxu0 0.0
      %653 = vmatprep.subr.mxu0 0.0
      %654 = vmatpush1.msra.mxu0 0.0
      %655 = vmatprep.subr.mxu0 0.0
      %656 = vmatpush1.msra.mxu0 0.0
      %657 = vmatprep.mubr.f32.mxu0 0.0
      %658 = vmatmul.mubr.f32.gmra.mrb[0].mxu0 %v591
      %v659 = vpop.f32.mrb[0].mxu0
      %v660 = vadd.f32 0.0, %v659
      %v661 = vpop.f32.mrb[0].mxu0
      %662 = vdwg.mxu0
      %664 = vrot.lane.b32.xlu0 %v660, 70
      %v665 = vpop.permute.xlu0 %664
      %vm667 = vcmask 654896
      %668 = vst.msk [vmem:[#allocation2] sm:$0xff] %vm667, %v665
      %669 = vrot.lane.b32.xlu0 %v660, 80
      %v670 = vpop.permute.xlu0 %669
      %vm672 = vcmask 736896
      %673 = vst.msk [vmem:[#allocation2] sm:$0xff] %vm672, %v670
      %v674 = vld [vmem:[%s7] sm:$0x1]
      %v675 = vld [vmem:[#allocation2] sm:$0xff]
      %v676 = vld [vmem:[%s313] sm:$0xff]
      %677 = vrot.lane.b32.xlu0 %v675, 10
      %v678 = vpop.permute.xlu0 %677
      %679 = vrot.lane.b32.xlu0 %v675, 118
      %v680 = vpop.permute.xlu0 %679
      %681 = vrot.lane.b32.xlu0 %v678, 1
      %v682 = vpop.permute.xlu0 %681
      %683 = vst [vmem:[#allocation3] sm:$0xff] %v682
      %684 = vst [vmem:[#allocation3 + $0x8] sm:$0xff] %v678
      %685 = vrot.lane.b32.xlu0 %v678, 127
      %v686 = vpop.permute.xlu0 %685
      %687 = vst [vmem:[#allocation3 + $0x10] sm:$0xff] %v686
      %688 = vrot.lane.b32.xlu0 %v675, 1
      %v689 = vpop.permute.xlu0 %688
      %690 = vst [vmem:[#allocation3 + $0x18] sm:$0xff] %v689
      %691 = vst [vmem:[#allocation3 + $0x20] sm:$0xff] %v675
      %692 = vrot.lane.b32.xlu0 %v675, 127
      %v693 = vpop.permute.xlu0 %692
      %694 = vst [vmem:[#allocation3 + $0x28] sm:$0xff] %v693
      %695 = vrot.lane.b32.xlu0 %v680, 1
      %v696 = vpop.permute.xlu0 %695
      %697 = vst [vmem:[#allocation3 + $0x30] sm:$0xff] %v696
      %698 = vst [vmem:[#allocation3 + $0x38] sm:$0xff] %v680
      %699 = vrot.lane.b32.xlu0 %v680, 127
      %v700 = vpop.permute.xlu0 %699
      %701 = vst [vmem:[#allocation3 + $0x40] sm:$0xff] %v700
      %702 = vrot.lane.b32.xlu0 %v676, 10
      %v703 = vpop.permute.xlu0 %702
      %704 = vrot.lane.b32.xlu0 %v676, 118
      %v705 = vpop.permute.xlu0 %704
      %706 = vrot.lane.b32.xlu0 %v703, 1
      %v707 = vpop.permute.xlu0 %706
      %708 = vst [vmem:[#allocation3 + $0x48] sm:$0xff] %v707
      %709 = vst [vmem:[#allocation3 + $0x50] sm:$0xff] %v703
      %710 = vrot.lane.b32.xlu0 %v703, 127
      %v711 = vpop.permute.xlu0 %710
      %712 = vst [vmem:[#allocation3 + $0x58] sm:$0xff] %v711
      %713 = vrot.lane.b32.xlu0 %v676, 1
      %v714 = vpop.permute.xlu0 %713
      %715 = vst [vmem:[#allocation3 + $0x60] sm:$0xff] %v714
      %716 = vst [vmem:[#allocation3 + $0x68] sm:$0xff] %v676
      %717 = vrot.lane.b32.xlu0 %v676, 127
      %v718 = vpop.permute.xlu0 %717
      %719 = vst [vmem:[#allocation3 + $0x70] sm:$0xff] %v718
      %720 = vrot.lane.b32.xlu0 %v705, 1
      %v721 = vpop.permute.xlu0 %720
      %722 = vst [vmem:[#allocation3 + $0x78] sm:$0xff] %v721
      %723 = vst [vmem:[#allocation3 + $0x80] sm:$0xff] %v705
      %724 = vrot.lane.b32.xlu0 %v705, 127
      %v725 = vpop.permute.xlu0 %724
      %726 = vst [vmem:[#allocation3 + $0x88] sm:$0xff] %v725
      %v727 = vld [vmem:[%s3] sm:$0xff]
      %v728 = vld [vmem:[#allocation3] sm:$0xff]
      %v729 = vld [vmem:[#allocation3 + $0x8] sm:$0xff]
      %v730 = vld [vmem:[#allocation3 + $0x10] sm:$0xff]
      %v731 = vld [vmem:[#allocation3 + $0x18] sm:$0xff]
      %v732 = vld [vmem:[#allocation3 + $0x20] sm:$0xff]
      %v733 = vld [vmem:[#allocation3 + $0x28] sm:$0xff]
      %v734 = vld [vmem:[#allocation3 + $0x30] sm:$0xff]
      %v735 = vld [vmem:[#allocation3 + $0x38] sm:$0xff]
      %v736 = vld [vmem:[#allocation3 + $0x40] sm:$0xff]
      %v737 = vld [vmem:[#allocation3 + $0x48] sm:$0xff]
      %v738 = vld [vmem:[#allocation3 + $0x50] sm:$0xff]
      %v739 = vld [vmem:[#allocation3 + $0x58] sm:$0xff]
      %v740 = vld [vmem:[#allocation3 + $0x60] sm:$0xff]
      %v741 = vld [vmem:[#allocation3 + $0x68] sm:$0xff]
      %v742 = vld [vmem:[#allocation3 + $0x70] sm:$0xff]
      %v743 = vld [vmem:[#allocation3 + $0x78] sm:$0xff]
      %v744 = vld [vmem:[#allocation3 + $0x80] sm:$0xff]
      %v745 = vld [vmem:[#allocation3 + $0x88] sm:$0xff]
      %v746 = vpack.c.bf16 %v729, %v728
      %v747 = vpack.c.bf16 %v731, %v730
      %v748 = vpack.c.bf16 %v733, %v732
      %v749 = vpack.c.bf16 %v735, %v734
      %v750 = vpack.c.bf16 %v737, %v736
      %v751 = vpack.c.bf16 %v739, %v738
      %v752 = vpack.c.bf16 %v741, %v740
      %v753 = vpack.c.bf16 %v743, %v742
      %v754 = vpack.c.bf16 %v745, %v744
      %v755 = vld [vmem:[%s4] sm:$0xff]
      %757 = vset.pattern.permute.xlu0 0
      %758 = vperm.xlu0 %757, %v755
      %v759 = vpop.permute.xlu0 %758
      %v762 = vunpack.c.l.b16 %v727
      %v763 = vunpack.c.h.b16 %v727
      %v764 = vpack.c.b16 %v762, %v762
      %v765 = vpack.c.b16 %v763, %v763
      %vm767 = vcmask 130048
      %v769 = vsel %vm767, %v765, 0
      %771 = vmatprep.subr.bf16.mxu0 0
      %772 = vmatpush1.bf16.msra.mxu0 %v746
      %773 = vmatprep.subr.bf16.mxu0 0
      %774 = vmatpush1.bf16.msra.mxu0 %v747
      %775 = vmatprep.subr.bf16.mxu0 0
      %776 = vmatpush1.bf16.msra.mxu0 %v748
      %777 = vmatprep.subr.bf16.mxu0 0
      %778 = vmatpush1.bf16.msra.mxu0 %v749
      %779 = vmatprep.subr.bf16.mxu0 0
      %780 = vmatpush1.bf16.msra.mxu0 %v750
      %781 = vmatprep.subr.bf16.mxu0 0
      %782 = vmatpush1.bf16.msra.mxu0 %v751
      %783 = vmatprep.subr.bf16.mxu0 0
      %784 = vmatpush1.bf16.msra.mxu0 %v752
      %785 = vmatprep.subr.bf16.mxu0 0
      %786 = vmatpush1.bf16.msra.mxu0 %v753
      %787 = vmatprep.subr.bf16.mxu0 0
      %788 = vmatpush1.bf16.msra.mxu0 %v754
      %789 = vmatprep.subr.bf16.mxu0 0
      %790 = vmatpush1.bf16.msra.mxu0 0
      %791 = vmatprep.subr.bf16.mxu0 0
      %792 = vmatpush1.bf16.msra.mxu0 0
      %793 = vmatprep.subr.bf16.mxu0 0
      %794 = vmatpush1.bf16.msra.mxu0 0
      %795 = vmatprep.subr.bf16.mxu0 0
      %796 = vmatpush1.bf16.msra.mxu0 0
      %797 = vmatprep.subr.bf16.mxu0 0
      %798 = vmatpush1.bf16.msra.mxu0 0
      %799 = vmatprep.subr.bf16.mxu0 0
      %800 = vmatpush1.bf16.msra.mxu0 0
      %801 = vmatprep.subr.bf16.mxu0 0
      %802 = vmatpush1.bf16.msra.mxu0 0
      %803 = vmatprep.mubr.bf16.mxu0 %v769
      %804 = vmatmul.mubr.bf16.gmra.mrb[0].mxu0 %v764
      %v805 = vpop.f32.mrb[0].mxu0
      %v806 = vadd.f32 %v759, %v805
      %v807 = vpop.f32.mrb[0].mxu0
      %v808 = vpop.f32.mrb[0].mxu0
      %v809 = vpop.f32.mrb[0].mxu0
      %810 = vdwg.mxu0
      %v811 = vmax.f32 %v806, 0.0
      %v813 = vlaneseq
      %v814 = vshrl.u32 %v813, 7
      %v815 = vsub.s32 0, %v814
      %v816 = vrot.slane %v674, %v815
      %v818 = vmul.f32 %v811, %v816
      %819 = vrot.lane.b32.xlu0 %v818, 10
      %v820 = vpop.permute.xlu0 %819
      %821 = vrot.lane.b32.xlu0 %v818, 118
      %v822 = vpop.permute.xlu0 %821
      %823 = vrot.lane.b32.xlu0 %v820, 1
      %v824 = vpop.permute.xlu0 %823
      %825 = vst [vmem:[#allocation3] sm:$0xff] %v824
      %826 = vst [vmem:[#allocation3 + $0x8] sm:$0xff] %v820
      %827 = vrot.lane.b32.xlu0 %v820, 127
      %v828 = vpop.permute.xlu0 %827
      %829 = vst [vmem:[#allocation3 + $0x10] sm:$0xff] %v828
      %830 = vrot.lane.b32.xlu0 %v818, 1
      %v831 = vpop.permute.xlu0 %830
      %832 = vst [vmem:[#allocation3 + $0x18] sm:$0xff] %v831
      %833 = vst [vmem:[#allocation3 + $0x20] sm:$0xff] %v818
      %834 = vrot.lane.b32.xlu0 %v818, 127
      %v835 = vpop.permute.xlu0 %834
      %836 = vst [vmem:[#allocation3 + $0x28] sm:$0xff] %v835
      %837 = vrot.lane.b32.xlu0 %v822, 1
      %v838 = vpop.permute.xlu0 %837
      %839 = vst [vmem:[#allocation3 + $0x30] sm:$0xff] %v838
      %840 = vst [vmem:[#allocation3 + $0x38] sm:$0xff] %v822
      %841 = vrot.lane.b32.xlu0 %v822, 127
      %v842 = vpop.permute.xlu0 %841
      %843 = vst [vmem:[#allocation3 + $0x40] sm:$0xff] %v842
      %v844 = vld [vmem:[%s5] sm:$0xf]
      %v845 = vld [vmem:[#allocation3] sm:$0xff]
      %v846 = vld [vmem:[#allocation3 + $0x8] sm:$0xff]
      %v847 = vld [vmem:[#allocation3 + $0x10] sm:$0xff]
      %v848 = vld [vmem:[#allocation3 + $0x18] sm:$0xff]
      %v849 = vld [vmem:[#allocation3 + $0x20] sm:$0xff]
      %v850 = vld [vmem:[#allocation3 + $0x28] sm:$0xff]
      %v851 = vld [vmem:[#allocation3 + $0x30] sm:$0xff]
      %v852 = vld [vmem:[#allocation3 + $0x38] sm:$0xff]
      %v853 = vld [vmem:[#allocation3 + $0x40] sm:$0xff]
      %v854 = vpack.c.bf16 %v846, %v845
      %v855 = vpack.c.bf16 %v848, %v847
      %v856 = vpack.c.bf16 %v850, %v849
      %v857 = vpack.c.bf16 %v852, %v851
      %v858 = vpack.c.bf16 %v853, %v853
      %v859 = vld [vmem:[%s6] sm:$0xff]
      %861 = vset.pattern.permute.xlu0 0
      %862 = vperm.xlu0 %861, %v859
      %v863 = vpop.permute.xlu0 %862
      %vm865 = vcmask 588800
      %v867 = vsel %vm865, %v844, 0
      %vm869 = vcmask 1043456
      %v871 = vsel %vm869, %v858, 0
      %873 = vmatprep.subr.bf16.mxu0 0
      %874 = vmatpush1.bf16.msra.mxu0 %v854
      %875 = vmatprep.subr.bf16.mxu0 0
      %876 = vmatpush1.bf16.msra.mxu0 %v855
      %877 = vmatprep.subr.bf16.mxu0 0
      %878 = vmatpush1.bf16.msra.mxu0 %v856
      %879 = vmatprep.subr.bf16.mxu0 0
      %880 = vmatpush1.bf16.msra.mxu0 %v857
      %881 = vmatprep.subr.bf16.mxu0 0
      %882 = vmatpush1.bf16.msra.mxu0 %v871
      %883 = vmatprep.subr.bf16.mxu0 0
      %884 = vmatpush1.bf16.msra.mxu0 0
      %885 = vmatprep.subr.bf16.mxu0 0
      %886 = vmatpush1.bf16.msra.mxu0 0
      %887 = vmatprep.subr.bf16.mxu0 0
      %888 = vmatpush1.bf16.msra.mxu0 0
      %889 = vmatprep.subr.bf16.mxu0 0
      %890 = vmatpush1.bf16.msra.mxu0 0
      %891 = vmatprep.subr.bf16.mxu0 0
      %892 = vmatpush1.bf16.msra.mxu0 0
      %893 = vmatprep.subr.bf16.mxu0 0
      %894 = vmatpush1.bf16.msra.mxu0 0
      %895 = vmatprep.subr.bf16.mxu0 0
      %896 = vmatpush1.bf16.msra.mxu0 0
      %897 = vmatprep.subr.bf16.mxu0 0
      %898 = vmatpush1.bf16.msra.mxu0 0
      %899 = vmatprep.subr.bf16.mxu0 0
      %900 = vmatpush1.bf16.msra.mxu0 0
      %901 = vmatprep.subr.bf16.mxu0 0
      %902 = vmatpush1.bf16.msra.mxu0 0
      %903 = vmatprep.subr.bf16.mxu0 0
      %904 = vmatpush1.bf16.msra.mxu0 0
      %905 = vmatprep.mubr.bf16.mxu0 0
      %906 = vmatmul.mubr.bf16.gmra.mrb[0].mxu0 %v867
      %v907 = vpop.f32.mrb[0].mxu0
      %v908 = vadd.f32 %v863, %v907
      %v909 = vpop.f32.mrb[0].mxu0
      %v910 = vpop.f32.mrb[0].mxu0
      %v911 = vpop.f32.mrb[0].mxu0
      %912 = vdwg.mxu0
      %v913 = vmax.f32 %v908, 0.0
      %v914 = vmul.f32 %v913, %v816
      %915 = vst [vmem:[%s317] sm:$0xff] %v914
      %p916 = scmp.lt.s32.totalorder %s19, 1
      %s917 = scalar_select %p916, %s19, 1
      %s918 = smul.addr %s917, 8
      %s919 = scalar_lea.vmem %s8, %s918
      // Predicated region
      $region53: #{_lambda_.8} parent=51 // pred_check
        %p920 = pneg %p215
      $region54: #{_lambda_.8} parent=51 // pred_check_branch
        %922 = sbr.rel (%p920) target = $region56
      $region55: #{_lambda_.8} parent=51 // pred_region
        _
      $region56: #{_lambda_.8} parent=51 // pred_fallthru
        _
    $region52: #{_lambda_.8} parent=5 // pred_fallthru
      _
    %p923 = scmp.le.s32.totalorder 2, %s14
    // Predicated region
    $region57: #{_lambda_.8} parent=5 // pred_check
      %p924 = pneg %p923
    $region58: #{_lambda_.8} parent=5 // pred_check_branch
      %926 = sbr.rel (%p924) target = $region60
    $region59: #{_lambda_.8} parent=5 // pred_region
      %s927 = ssub.s32 %s14, 2
      // Predicated region
      $region61: #{_lambda_.8} parent=59 // pred_check
        %p928 = pneg %p221
      $region62: #{_lambda_.8} parent=59 // pred_check_branch
        %930 = sbr.rel (%p928) target = $region64
      $region63: #{_lambda_.8} parent=59 // pred_region
        %p931 = scmp.lt.s32.totalorder %s20, 1
        %s932 = scalar_select %p931, %s20, 1
        %s933 = smul.addr %s932, 8
        %s934 = scalar_lea.vmem %s8, %s933
      $region64: #{_lambda_.8} parent=59 // pred_fallthru
        _
    $region60: #{_lambda_.8} parent=5 // pred_fallthru
      _
  $region6: #{_lambda_.8} parent=0 // loop_footer
    %s18 = sadd.s32 1, %s14
  $region7: #{_lambda_.8} parent=0 // loop_footer_branch
    %13 = sbr.rel target = $region3
  $region8: #{_lambda_.8} parent=0 // loop_exit
    _

// kernel: _lambda_.6
$region0: #{_lambda_.6}
  #allocation0 [shape = 'u32[]', space=smem, size = 0x4, offset = 0x4, fixed_abs, tag = 'smem constant byte address 0x4 - core index']
  #allocation1 [shape = 'u32[144,128]{1,0:T(1,128)}', space=vmem, size = 0x12000, scoped, tag = 'internal scratch']
  #allocation2 [shape = 'f32[72,128]{1,0:T(8,128)}', space=vmem, size = 0x9000, scoped, tag = 'scratch operand']
  %s0 = inlined_call_operand.vmem [shape: f32[2,8,128], index: 0, kind: input, shape index: {}]
  %s1 = inlined_call_operand.vmem [shape: bf16[8,72], index: 1, kind: input, shape index: {}]
  %s2 = inlined_call_operand.vmem [shape: f32[8,1], index: 2, kind: input, shape index: {}]
  %s3 = inlined_call_operand.vmem [shape: bf16[8,72], index: 3, kind: input, shape index: {}]
  %s4 = inlined_call_operand.vmem [shape: f32[8,1], index: 4, kind: input, shape index: {}]
  %s5 = inlined_call_operand.vmem [shape: f32[1,128], index: 5, kind: input, shape index: {}]
  %s6 = inlined_call_operand.vmem [shape: f32[10,6], index: 6, kind: input, shape index: {}]
  %s7 = inlined_call_operand.vmem [shape: f32[10,6], index: 7, kind: input, shape index: {}]
  %s8 = inlined_call_operand.vmem [shape: f32[2,8,128], index: 8, kind: output, shape index: {0}]
  %s9 = inlined_call_operand.vmem [shape: f32[2,8,128], index: 9, kind: output, shape index: {1}]
  %10 = xla_tuple %s8, %s9
  %s11 = sld [smem:[#allocation0]]
  $region73: #{_lambda_.6} parent=0
    _
  %s13 = ssub.s32 1, %s11
  %s14 = scalar_select 0, %s13, %s11
  loop: start=0, step=1, limit=4
  $region2: #{_lambda_.6} parent=0 // loop_pre_header
    _
  $region3: #{_lambda_.6} parent=0 // loop_header
    %s16 = sphi 0, %s20
    %p17 = scmp.ge.s32.totalorder %s16, 4
    %s26 = sphi 0, %s28
    %s29 = sphi 0, %s26
    %s30 = sphi 0, %s29
    %s46 = sphi 0, %s30
    %s50 = sphi 0, %s50
    %s52 = sphi 0, %s50
    %s53 = sphi 0, %s52
    %s67 = sphi 0, %s53
    %s71 = sphi 0, %s71
    %s73 = sphi 0, %s71
    %s74 = sphi 0, %s73
    %s88 = sphi 0, %s74
    %s92 = sphi 0, %s92
    %s94 = sphi 0, %s92
    %s95 = sphi 0, %s94
    %s109 = sphi 0, %s95
    %s113 = sphi 0, %s113
    %s115 = sphi 0, %s113
    %s116 = sphi 0, %s115
    %s130 = sphi 0, %s116
    %s134 = sphi 0, %s134
    %s136 = sphi 0, %s134
    %s137 = sphi 0, %s136
    %s151 = sphi 0, %s137
    %s155 = sphi 0, %s155
    %s157 = sphi 0, %s155
    %s158 = sphi 0, %s157
    %s172 = sphi 0, %s158
    %s176 = sphi 0, %s176
    %s178 = sphi 0, %s176
    %s179 = sphi 0, %s178
    %s193 = sphi 0, %s179
    %s199 = sphi 0, %s201
    %s202 = sphi 0, %s199
    %s203 = sphi 0, %s202
    %s219 = sphi 0, %s203
    %s225 = sphi 0, %s227
    %s228 = sphi 0, %s225
    %s229 = sphi 0, %s228
    %s245 = sphi 0, %s229
  $region4: #{_lambda_.6} parent=0 // loop_header_branch
    %19 = sbr.rel (%p17) target = $region8
  $region5: #{_lambda_.6} parent=0 // loop_body
    %s21 = ssub.s32 %s16, 1
    %s22 = ssub.s32 %s16, 2
    %s23 = sadd.s32 %s16, 1
    %s24 = ssub.s32 %s16, %s23
    %p25 = scmp.eq.s32.totalorder %s24, 0
    %s27 = sadd.s32 %s26, 1
    %s28 = scalar_select %p25, %s26, %s27
    %p31 = pneg %p25
    %p32 = scmp.eq.s32.totalorder %s16, 1
    %p33 = por %p31, %p32
    %p34 = scmp.ne.s32.totalorder %s26, %s29
    %p35 = scmp.eq.s32.totalorder %s16, 0
    %p36 = por %p34, %p35
    %p37 = scmp.ne.s32.totalorder %s26, %s29
    %p38 = scmp.eq.s32.totalorder %s21, 1
    %p39 = por %p37, %p38
    %p40 = scmp.ne.s32.totalorder %s29, %s30
    %p41 = scmp.eq.s32.totalorder %s21, 0
    %p42 = por %p40, %p41
    %p43 = scmp.ne.s32.totalorder %s29, %s30
    %p44 = scmp.eq.s32.totalorder %s22, 1
    %p45 = por %p43, %p44
    %p47 = scmp.ne.s32.totalorder %s30, %s46
    %p48 = scmp.eq.s32.totalorder %s22, 0
    %p49 = por %p47, %p48
    %s51 = sadd.s32 %s50, 1
    %p54 = scmp.eq.s32.totalorder %s16, 1
    %p55 = scmp.ne.s32.totalorder %s50, %s52
    %p56 = scmp.eq.s32.totalorder %s16, 0
    %p57 = por %p55, %p56
    %p58 = scmp.ne.s32.totalorder %s50, %s52
    %p59 = scmp.eq.s32.totalorder %s21, 1
    %p60 = por %p58, %p59
    %p61 = scmp.ne.s32.totalorder %s52, %s53
    %p62 = scmp.eq.s32.totalorder %s21, 0
    %p63 = por %p61, %p62
    %p64 = scmp.ne.s32.totalorder %s52, %s53
    %p65 = scmp.eq.s32.totalorder %s22, 1
    %p66 = por %p64, %p65
    %p68 = scmp.ne.s32.totalorder %s53, %s67
    %p69 = scmp.eq.s32.totalorder %s22, 0
    %p70 = por %p68, %p69
    %s72 = sadd.s32 %s71, 1
    %p75 = scmp.eq.s32.totalorder %s16, 1
    %p76 = scmp.ne.s32.totalorder %s71, %s73
    %p77 = scmp.eq.s32.totalorder %s16, 0
    %p78 = por %p76, %p77
    %p79 = scmp.ne.s32.totalorder %s71, %s73
    %p80 = scmp.eq.s32.totalorder %s21, 1
    %p81 = por %p79, %p80
    %p82 = scmp.ne.s32.totalorder %s73, %s74
    %p83 = scmp.eq.s32.totalorder %s21, 0
    %p84 = por %p82, %p83
    %p85 = scmp.ne.s32.totalorder %s73, %s74
    %p86 = scmp.eq.s32.totalorder %s22, 1
    %p87 = por %p85, %p86
    %p89 = scmp.ne.s32.totalorder %s74, %s88
    %p90 = scmp.eq.s32.totalorder %s22, 0
    %p91 = por %p89, %p90
    %s93 = sadd.s32 %s92, 1
    %p96 = scmp.eq.s32.totalorder %s16, 1
    %p97 = scmp.ne.s32.totalorder %s92, %s94
    %p98 = scmp.eq.s32.totalorder %s16, 0
    %p99 = por %p97, %p98
    %p100 = scmp.ne.s32.totalorder %s92, %s94
    %p101 = scmp.eq.s32.totalorder %s21, 1
    %p102 = por %p100, %p101
    %p103 = scmp.ne.s32.totalorder %s94, %s95
    %p104 = scmp.eq.s32.totalorder %s21, 0
    %p105 = por %p103, %p104
    %p106 = scmp.ne.s32.totalorder %s94, %s95
    %p107 = scmp.eq.s32.totalorder %s22, 1
    %p108 = por %p106, %p107
    %p110 = scmp.ne.s32.totalorder %s95, %s109
    %p111 = scmp.eq.s32.totalorder %s22, 0
    %p112 = por %p110, %p111
    %s114 = sadd.s32 %s113, 1
    %p117 = scmp.eq.s32.totalorder %s16, 1
    %p118 = scmp.ne.s32.totalorder %s113, %s115
    %p119 = scmp.eq.s32.totalorder %s16, 0
    %p120 = por %p118, %p119
    %p121 = scmp.ne.s32.totalorder %s113, %s115
    %p122 = scmp.eq.s32.totalorder %s21, 1
    %p123 = por %p121, %p122
    %p124 = scmp.ne.s32.totalorder %s115, %s116
    %p125 = scmp.eq.s32.totalorder %s21, 0
    %p126 = por %p124, %p125
    %p127 = scmp.ne.s32.totalorder %s115, %s116
    %p128 = scmp.eq.s32.totalorder %s22, 1
    %p129 = por %p127, %p128
    %p131 = scmp.ne.s32.totalorder %s116, %s130
    %p132 = scmp.eq.s32.totalorder %s22, 0
    %p133 = por %p131, %p132
    %s135 = sadd.s32 %s134, 1
    %p138 = scmp.eq.s32.totalorder %s16, 1
    %p139 = scmp.ne.s32.totalorder %s134, %s136
    %p140 = scmp.eq.s32.totalorder %s16, 0
    %p141 = por %p139, %p140
    %p142 = scmp.ne.s32.totalorder %s134, %s136
    %p143 = scmp.eq.s32.totalorder %s21, 1
    %p144 = por %p142, %p143
    %p145 = scmp.ne.s32.totalorder %s136, %s137
    %p146 = scmp.eq.s32.totalorder %s21, 0
    %p147 = por %p145, %p146
    %p148 = scmp.ne.s32.totalorder %s136, %s137
    %p149 = scmp.eq.s32.totalorder %s22, 1
    %p150 = por %p148, %p149
    %p152 = scmp.ne.s32.totalorder %s137, %s151
    %p153 = scmp.eq.s32.totalorder %s22, 0
    %p154 = por %p152, %p153
    %s156 = sadd.s32 %s155, 1
    %p159 = scmp.eq.s32.totalorder %s16, 1
    %p160 = scmp.ne.s32.totalorder %s155, %s157
    %p161 = scmp.eq.s32.totalorder %s16, 0
    %p162 = por %p160, %p161
    %p163 = scmp.ne.s32.totalorder %s155, %s157
    %p164 = scmp.eq.s32.totalorder %s21, 1
    %p165 = por %p163, %p164
    %p166 = scmp.ne.s32.totalorder %s157, %s158
    %p167 = scmp.eq.s32.totalorder %s21, 0
    %p168 = por %p166, %p167
    %p169 = scmp.ne.s32.totalorder %s157, %s158
    %p170 = scmp.eq.s32.totalorder %s22, 1
    %p171 = por %p169, %p170
    %p173 = scmp.ne.s32.totalorder %s158, %s172
    %p174 = scmp.eq.s32.totalorder %s22, 0
    %p175 = por %p173, %p174
    %s177 = sadd.s32 %s176, 1
    %p180 = scmp.eq.s32.totalorder %s16, 1
    %p181 = scmp.ne.s32.totalorder %s176, %s178
    %p182 = scmp.eq.s32.totalorder %s16, 0
    %p183 = por %p181, %p182
    %p184 = scmp.ne.s32.totalorder %s176, %s178
    %p185 = scmp.eq.s32.totalorder %s21, 1
    %p186 = por %p184, %p185
    %p187 = scmp.ne.s32.totalorder %s178, %s179
    %p188 = scmp.eq.s32.totalorder %s21, 0
    %p189 = por %p187, %p188
    %p190 = scmp.ne.s32.totalorder %s178, %s179
    %p191 = scmp.eq.s32.totalorder %s22, 1
    %p192 = por %p190, %p191
    %p194 = scmp.ne.s32.totalorder %s179, %s193
    %p195 = scmp.eq.s32.totalorder %s22, 0
    %p196 = por %p194, %p195
    %s197 = ssub.s32 %s16, %s23
    %p198 = scmp.eq.s32.totalorder %s197, 0
    %s200 = sadd.s32 %s199, 1
    %s201 = scalar_select %p198, %s199, %s200
    %p204 = pneg %p198
    %p205 = scmp.eq.s32.totalorder %s16, 1
    %p206 = por %p204, %p205
    %p207 = scmp.ne.s32.totalorder %s199, %s202
    %p208 = scmp.eq.s32.totalorder %s16, 0
    %p209 = por %p207, %p208
    %p210 = scmp.ne.s32.totalorder %s199, %s202
    %p211 = scmp.eq.s32.totalorder %s21, 1
    %p212 = por %p210, %p211
    %p213 = scmp.ne.s32.totalorder %s202, %s203
    %p214 = scmp.eq.s32.totalorder %s21, 0
    %p215 = por %p213, %p214
    %p216 = scmp.ne.s32.totalorder %s202, %s203
    %p217 = scmp.eq.s32.totalorder %s22, 1
    %p218 = por %p216, %p217
    %p220 = scmp.ne.s32.totalorder %s203, %s219
    %p221 = scmp.eq.s32.totalorder %s22, 0
    %p222 = por %p220, %p221
    %s223 = ssub.s32 %s16, %s23
    %p224 = scmp.eq.s32.totalorder %s223, 0
    %s226 = sadd.s32 %s225, 1
    %s227 = scalar_select %p224, %s225, %s226
    %p230 = pneg %p224
    %p231 = scmp.eq.s32.totalorder %s16, 1
    %p232 = por %p230, %p231
    %p233 = scmp.ne.s32.totalorder %s225, %s228
    %p234 = scmp.eq.s32.totalorder %s16, 0
    %p235 = por %p233, %p234
    %p236 = scmp.ne.s32.totalorder %s225, %s228
    %p237 = scmp.eq.s32.totalorder %s21, 1
    %p238 = por %p236, %p237
    %p239 = scmp.ne.s32.totalorder %s228, %s229
    %p240 = scmp.eq.s32.totalorder %s21, 0
    %p241 = por %p239, %p240
    %p242 = scmp.ne.s32.totalorder %s228, %s229
    %p243 = scmp.eq.s32.totalorder %s22, 1
    %p244 = por %p242, %p243
    %p246 = scmp.ne.s32.totalorder %s229, %s245
    %p247 = scmp.eq.s32.totalorder %s22, 0
    %p248 = por %p246, %p247
    %p249 = scmp.le.s32.totalorder 1, %s16
    %p250 = scmp.lt.s32.totalorder %s16, 3
    %p251 = pnand %p249, %p250
    %p252 = pneg %p251
    // Predicated region
    $region9: #{_lambda_.6} parent=5 // pred_check
      _
    $region10: #{_lambda_.6} parent=5 // pred_check_branch
      %254 = sbr.rel (%p251) target = $region12
    $region11: #{_lambda_.6} parent=5 // pred_region
      %s255 = ssub.s32 %s16, 1
      // Predicated region
      $region13: #{_lambda_.6} parent=11 // pred_check
        %p256 = pneg %p63
      $region14: #{_lambda_.6} parent=11 // pred_check_branch
        %258 = sbr.rel (%p256) target = $region16
      $region15: #{_lambda_.6} parent=11 // pred_region
        _
      $region16: #{_lambda_.6} parent=11 // pred_fallthru
        _
      // Predicated region
      $region17: #{_lambda_.6} parent=11 // pred_check
        %p259 = pneg %p84
      $region18: #{_lambda_.6} parent=11 // pred_check_branch
        %261 = sbr.rel (%p259) target = $region20
      $region19: #{_lambda_.6} parent=11 // pred_region
        _
      $region20: #{_lambda_.6} parent=11 // pred_fallthru
        _
      // Predicated region
      $region21: #{_lambda_.6} parent=11 // pred_check
        %p262 = pneg %p105
      $region22: #{_lambda_.6} parent=11 // pred_check_branch
        %264 = sbr.rel (%p262) target = $region24
      $region23: #{_lambda_.6} parent=11 // pred_region
        _
      $region24: #{_lambda_.6} parent=11 // pred_fallthru
        _
      // Predicated region
      $region25: #{_lambda_.6} parent=11 // pred_check
        %p265 = pneg %p126
      $region26: #{_lambda_.6} parent=11 // pred_check_branch
        %267 = sbr.rel (%p265) target = $region28
      $region27: #{_lambda_.6} parent=11 // pred_region
        _
      $region28: #{_lambda_.6} parent=11 // pred_fallthru
        _
      // Predicated region
      $region29: #{_lambda_.6} parent=11 // pred_check
        %p268 = pneg %p147
      $region30: #{_lambda_.6} parent=11 // pred_check_branch
        %270 = sbr.rel (%p268) target = $region32
      $region31: #{_lambda_.6} parent=11 // pred_region
        _
      $region32: #{_lambda_.6} parent=11 // pred_fallthru
        _
      // Predicated region
      $region33: #{_lambda_.6} parent=11 // pred_check
        %p271 = pneg %p168
      $region34: #{_lambda_.6} parent=11 // pred_check_branch
        %273 = sbr.rel (%p271) target = $region36
      $region35: #{_lambda_.6} parent=11 // pred_region
        _
      $region36: #{_lambda_.6} parent=11 // pred_fallthru
        _
      // Predicated region
      $region37: #{_lambda_.6} parent=11 // pred_check
        %p274 = pneg %p189
      $region38: #{_lambda_.6} parent=11 // pred_check_branch
        %276 = sbr.rel (%p274) target = $region40
      $region39: #{_lambda_.6} parent=11 // pred_region
        _
      $region40: #{_lambda_.6} parent=11 // pred_fallthru
        _
    $region12: #{_lambda_.6} parent=5 // pred_fallthru
      _
    %p277 = scmp.lt.s32.totalorder %s16, 2
    // Predicated region
    $region41: #{_lambda_.6} parent=5 // pred_check
      %p278 = pneg %p277
    $region42: #{_lambda_.6} parent=5 // pred_check_branch
      %280 = sbr.rel (%p278) target = $region44
    $region43: #{_lambda_.6} parent=5 // pred_region
      // Predicated region
      $region45: #{_lambda_.6} parent=43 // pred_check
        %p281 = pneg %p36
      $region46: #{_lambda_.6} parent=43 // pred_check_branch
        %283 = sbr.rel (%p281) target = $region48
      $region47: #{_lambda_.6} parent=43 // pred_region
        %p284 = scmp.lt.s32.totalorder %s16, 1
        %s285 = scalar_select %p284, %s16, 1
        %s286 = smul.addr %s285, 8
        %s287 = scalar_lea.vmem %s0, %s286
      $region48: #{_lambda_.6} parent=43 // pred_fallthru
        _
    $region44: #{_lambda_.6} parent=5 // pred_fallthru
      _
    %p288 = scmp.le.s32.totalorder 1, %s16
    %p289 = scmp.lt.s32.totalorder %s16, 3
    %p290 = pnand %p288, %p289
    %p291 = pneg %p290
    // Predicated region
    $region49: #{_lambda_.6} parent=5 // pred_check
      _
    $region50: #{_lambda_.6} parent=5 // pred_check_branch
      %293 = sbr.rel (%p290) target = $region52
    $region51: #{_lambda_.6} parent=5 // pred_region
      %s294 = ssub.s32 %s16, 1
      %p295 = scmp.lt.s32.totalorder %s21, 1
      %s296 = scalar_select %p295, %s21, 1
      %s297 = smul.addr %s296, 8
      %s298 = scalar_lea.vmem %s0, %s297
      %p299 = pneg %p42
      %p300 = pneg %p39
      %p301 = pneg %p63
      %p302 = pneg %p60
      %p303 = pneg %p84
      %p304 = pneg %p81
      %p305 = pneg %p105
      %p306 = pneg %p102
      %p307 = pneg %p126
      %p308 = pneg %p123
      %p309 = pneg %p147
      %p310 = pneg %p144
      %p311 = pneg %p168
      %p312 = pneg %p165
      %p313 = pneg %p189
      %p314 = pneg %p186
      %p315 = pneg %p215
      %p316 = pneg %p212
      %p317 = scmp.lt.s32.totalorder %s21, 1
      %s318 = scalar_select %p317, %s21, 1
      %s319 = smul.addr %s318, 8
      %s320 = scalar_lea.vmem %s8, %s319
      %p321 = pneg %p241
      %p322 = pneg %p238
      %p323 = scmp.lt.s32.totalorder %s21, 1
      %s324 = scalar_select %p323, %s21, 1
      %s325 = smul.addr %s324, 8
      %s326 = scalar_lea.vmem %s9, %s325
      %p327 = scmp.lt.s32.totalorder %s21, 1
      %s328 = scalar_select %p327, %s21, 1
      %s329 = smul.addr %s328, 8
      %s330 = scalar_lea.vmem %s0, %s329
      %p331 = scmp.lt.s32.totalorder %s21, 1
      %s332 = scalar_select %p331, %s21, 1
      %s333 = smul.addr %s332, 8
      %s334 = scalar_lea.vmem %s8, %s333
      %p335 = scmp.lt.s32.totalorder %s21, 1
      %s336 = scalar_select %p335, %s21, 1
      %s337 = smul.addr %s336, 8
      %s338 = scalar_lea.vmem %s9, %s337
      %v340 = vld [vmem:[%s5] sm:$0x1]
      %v341 = vld [vmem:[%s330] sm:$0xff]
      %342 = vrot.lane.b32.xlu0 %v341, 10
      %v343 = vpop.permute.xlu0 %342
      %344 = vrot.lane.b32.xlu0 %v341, 118
      %v345 = vpop.permute.xlu0 %344
      %346 = vrot.lane.b32.xlu0 %v343, 1
      %v347 = vpop.permute.xlu0 %346
      %348 = vst [vmem:[#allocation2] sm:$0xff] %v347
      %349 = vst [vmem:[#allocation2 + $0x8] sm:$0xff] %v343
      %350 = vrot.lane.b32.xlu0 %v343, 127
      %v351 = vpop.permute.xlu0 %350
      %352 = vst [vmem:[#allocation2 + $0x10] sm:$0xff] %v351
      %353 = vrot.lane.b32.xlu0 %v341, 1
      %v354 = vpop.permute.xlu0 %353
      %355 = vst [vmem:[#allocation2 + $0x18] sm:$0xff] %v354
      %356 = vst [vmem:[#allocation2 + $0x20] sm:$0xff] %v341
      %357 = vrot.lane.b32.xlu0 %v341, 127
      %v358 = vpop.permute.xlu0 %357
      %359 = vst [vmem:[#allocation2 + $0x28] sm:$0xff] %v358
      %360 = vrot.lane.b32.xlu0 %v345, 1
      %v361 = vpop.permute.xlu0 %360
      %362 = vst [vmem:[#allocation2 + $0x30] sm:$0xff] %v361
      %363 = vst [vmem:[#allocation2 + $0x38] sm:$0xff] %v345
      %364 = vrot.lane.b32.xlu0 %v345, 127
      %v365 = vpop.permute.xlu0 %364
      %366 = vst [vmem:[#allocation2 + $0x40] sm:$0xff] %v365
      %v367 = vld [vmem:[%s1] sm:$0xf]
      %v368 = vld [vmem:[#allocation2] sm:$0xff]
      %v369 = vld [vmem:[#allocation2 + $0x8] sm:$0xff]
      %v370 = vld [vmem:[#allocation2 + $0x10] sm:$0xff]
      %v371 = vld [vmem:[#allocation2 + $0x18] sm:$0xff]
      %v372 = vld [vmem:[#allocation2 + $0x20] sm:$0xff]
      %v373 = vld [vmem:[#allocation2 + $0x28] sm:$0xff]
      %v374 = vld [vmem:[#allocation2 + $0x30] sm:$0xff]
      %v375 = vld [vmem:[#allocation2 + $0x38] sm:$0xff]
      %v376 = vld [vmem:[#allocation2 + $0x40] sm:$0xff]
      %v377 = vpack.c.bf16 %v369, %v368
      %v378 = vpack.c.bf16 %v371, %v370
      %v379 = vpack.c.bf16 %v373, %v372
      %v380 = vpack.c.bf16 %v375, %v374
      %v381 = vpack.c.bf16 %v376, %v376
      %v382 = vld [vmem:[%s2] sm:$0xff]
      %384 = vset.pattern.permute.xlu0 0
      %385 = vperm.xlu0 %384, %v382
      %v386 = vpop.permute.xlu0 %385
      %vm388 = vcmask 588800
      %v390 = vsel %vm388, %v367, 0
      %vm392 = vcmask 1043456
      %v394 = vsel %vm392, %v381, 0
      %396 = vmatprep.subr.bf16.mxu0 0
      %397 = vmatpush1.bf16.msra.mxu0 %v377
      %398 = vmatprep.subr.bf16.mxu0 0
      %399 = vmatpush1.bf16.msra.mxu0 %v378
      %400 = vmatprep.subr.bf16.mxu0 0
      %401 = vmatpush1.bf16.msra.mxu0 %v379
      %402 = vmatprep.subr.bf16.mxu0 0
      %403 = vmatpush1.bf16.msra.mxu0 %v380
      %404 = vmatprep.subr.bf16.mxu0 0
      %405 = vmatpush1.bf16.msra.mxu0 %v394
      %406 = vmatprep.subr.bf16.mxu0 0
      %407 = vmatpush1.bf16.msra.mxu0 0
      %408 = vmatprep.subr.bf16.mxu0 0
      %409 = vmatpush1.bf16.msra.mxu0 0
      %410 = vmatprep.subr.bf16.mxu0 0
      %411 = vmatpush1.bf16.msra.mxu0 0
      %412 = vmatprep.subr.bf16.mxu0 0
      %413 = vmatpush1.bf16.msra.mxu0 0
      %414 = vmatprep.subr.bf16.mxu0 0
      %415 = vmatpush1.bf16.msra.mxu0 0
      %416 = vmatprep.subr.bf16.mxu0 0
      %417 = vmatpush1.bf16.msra.mxu0 0
      %418 = vmatprep.subr.bf16.mxu0 0
      %419 = vmatpush1.bf16.msra.mxu0 0
      %420 = vmatprep.subr.bf16.mxu0 0
      %421 = vmatpush1.bf16.msra.mxu0 0
      %422 = vmatprep.subr.bf16.mxu0 0
      %423 = vmatpush1.bf16.msra.mxu0 0
      %424 = vmatprep.subr.bf16.mxu0 0
      %425 = vmatpush1.bf16.msra.mxu0 0
      %426 = vmatprep.subr.bf16.mxu0 0
      %427 = vmatpush1.bf16.msra.mxu0 0
      %428 = vmatprep.mubr.bf16.mxu0 0
      %429 = vmatmul.mubr.bf16.gmra.mrb[0].mxu0 %v390
      %v430 = vpop.f32.mrb[0].mxu0
      %v431 = vadd.f32 %v386, %v430
      %v432 = vpop.f32.mrb[0].mxu0
      %v433 = vpop.f32.mrb[0].mxu0
      %v434 = vpop.f32.mrb[0].mxu0
      %435 = vdwg.mxu0
      %v436 = vmax.f32 %v431, 0.0
      %v438 = vlaneseq
      %v439 = vshrl.u32 %v438, 7
      %v440 = vsub.s32 0, %v439
      %v441 = vrot.slane %v340, %v440
      %v443 = vmul.f32 %v436, %v441
      %444 = vrot.lane.b32.xlu0 %v443, 10
      %v445 = vpop.permute.xlu0 %444
      %446 = vrot.lane.b32.xlu0 %v443, 118
      %v447 = vpop.permute.xlu0 %446
      %448 = vrot.lane.b32.xlu0 %v445, 1
      %v449 = vpop.permute.xlu0 %448
      %450 = vst [vmem:[#allocation2] sm:$0xff] %v449
      %451 = vst [vmem:[#allocation2 + $0x8] sm:$0xff] %v445
      %452 = vrot.lane.b32.xlu0 %v445, 127
      %v453 = vpop.permute.xlu0 %452
      %454 = vst [vmem:[#allocation2 + $0x10] sm:$0xff] %v453
      %455 = vrot.lane.b32.xlu0 %v443, 1
      %v456 = vpop.permute.xlu0 %455
      %457 = vst [vmem:[#allocation2 + $0x18] sm:$0xff] %v456
      %458 = vst [vmem:[#allocation2 + $0x20] sm:$0xff] %v443
      %459 = vrot.lane.b32.xlu0 %v443, 127
      %v460 = vpop.permute.xlu0 %459
      %461 = vst [vmem:[#allocation2 + $0x28] sm:$0xff] %v460
      %462 = vrot.lane.b32.xlu0 %v447, 1
      %v463 = vpop.permute.xlu0 %462
      %464 = vst [vmem:[#allocation2 + $0x30] sm:$0xff] %v463
      %465 = vst [vmem:[#allocation2 + $0x38] sm:$0xff] %v447
      %466 = vrot.lane.b32.xlu0 %v447, 127
      %v467 = vpop.permute.xlu0 %466
      %468 = vst [vmem:[#allocation2 + $0x40] sm:$0xff] %v467
      %v469 = vld [vmem:[%s3] sm:$0xf]
      %v470 = vld [vmem:[#allocation2] sm:$0xff]
      %v471 = vld [vmem:[#allocation2 + $0x8] sm:$0xff]
      %v472 = vld [vmem:[#allocation2 + $0x10] sm:$0xff]
      %v473 = vld [vmem:[#allocation2 + $0x18] sm:$0xff]
      %v474 = vld [vmem:[#allocation2 + $0x20] sm:$0xff]
      %v475 = vld [vmem:[#allocation2 + $0x28] sm:$0xff]
      %v476 = vld [vmem:[#allocation2 + $0x30] sm:$0xff]
      %v477 = vld [vmem:[#allocation2 + $0x38] sm:$0xff]
      %v478 = vld [vmem:[#allocation2 + $0x40] sm:$0xff]
      %v479 = vpack.c.bf16 %v471, %v470
      %v480 = vpack.c.bf16 %v473, %v472
      %v481 = vpack.c.bf16 %v475, %v474
      %v482 = vpack.c.bf16 %v477, %v476
      %v483 = vpack.c.bf16 %v478, %v478
      %v484 = vld [vmem:[%s4] sm:$0xff]
      %486 = vset.pattern.permute.xlu0 0
      %487 = vperm.xlu0 %486, %v484
      %v488 = vpop.permute.xlu0 %487
      %v491 = vsel %vm388, %v469, 0
      %v494 = vsel %vm392, %v483, 0
      %496 = vmatprep.subr.bf16.mxu0 0
      %497 = vmatpush1.bf16.msra.mxu0 %v479
      %498 = vmatprep.subr.bf16.mxu0 0
      %499 = vmatpush1.bf16.msra.mxu0 %v480
      %500 = vmatprep.subr.bf16.mxu0 0
      %501 = vmatpush1.bf16.msra.mxu0 %v481
      %502 = vmatprep.subr.bf16.mxu0 0
      %503 = vmatpush1.bf16.msra.mxu0 %v482
      %504 = vmatprep.subr.bf16.mxu0 0
      %505 = vmatpush1.bf16.msra.mxu0 %v494
      %506 = vmatprep.subr.bf16.mxu0 0
      %507 = vmatpush1.bf16.msra.mxu0 0
      %508 = vmatprep.subr.bf16.mxu0 0
      %509 = vmatpush1.bf16.msra.mxu0 0
      %510 = vmatprep.subr.bf16.mxu0 0
      %511 = vmatpush1.bf16.msra.mxu0 0
      %512 = vmatprep.subr.bf16.mxu0 0
      %513 = vmatpush1.bf16.msra.mxu0 0
      %514 = vmatprep.subr.bf16.mxu0 0
      %515 = vmatpush1.bf16.msra.mxu0 0
      %516 = vmatprep.subr.bf16.mxu0 0
      %517 = vmatpush1.bf16.msra.mxu0 0
      %518 = vmatprep.subr.bf16.mxu0 0
      %519 = vmatpush1.bf16.msra.mxu0 0
      %520 = vmatprep.subr.bf16.mxu0 0
      %521 = vmatpush1.bf16.msra.mxu0 0
      %522 = vmatprep.subr.bf16.mxu0 0
      %523 = vmatpush1.bf16.msra.mxu0 0
      %524 = vmatprep.subr.bf16.mxu0 0
      %525 = vmatpush1.bf16.msra.mxu0 0
      %526 = vmatprep.subr.bf16.mxu0 0
      %527 = vmatpush1.bf16.msra.mxu0 0
      %528 = vmatprep.mubr.bf16.mxu0 0
      %529 = vmatmul.mubr.bf16.gmra.mrb[0].mxu0 %v491
      %v530 = vpop.f32.mrb[0].mxu0
      %v531 = vadd.f32 %v488, %v530
      %v532 = vpop.f32.mrb[0].mxu0
      %v533 = vpop.f32.mrb[0].mxu0
      %v534 = vpop.f32.mrb[0].mxu0
      %535 = vdwg.mxu0
      %v536 = vmax.f32 %v531, 0.0
      %v537 = vmul.f32 %v536, %v441
      %538 = vst [vmem:[%s334] sm:$0xff] %v537
      %539 = vst [vmem:[%s338] sm:$0xff] 0.0
      %v540 = vld [vmem:[%s6] sm:$0xff]
      %v541 = vld [vmem:[%s6 + $0x8] sm:$0x3]
      %v542 = vld [vmem:[%s7] sm:$0xff]
      %v543 = vld [vmem:[%s7 + $0x8] sm:$0x3]
      %v544 = vld [vmem:[%s334] sm:$0xff]
      %546 = vrot.lane.b32.xlu0 %v544, 118
      %v547 = vpop.permute.xlu0 %546
      %v549 = vmax.f32 %v544, %v547
      %551 = vrot.lane.b32.xlu0 %v549, 118
      %v552 = vpop.permute.xlu0 %551
      %vm553 = vcmask 80896
      %v554 = vsel %vm553, %v552, 0
      %vm556 = vcmask 1041408
      %v558 = vsel %vm556, %v541, 0
      %560 = vmatprep.subr.mxu0 0.0
      %561 = vmatpush1.msra.mxu0 %v540
      %562 = vmatprep.subr.mxu0 0.0
      %563 = vmatpush1.msra.mxu0 %v558
      %564 = vmatprep.subr.mxu0 0.0
      %565 = vmatpush1.msra.mxu0 0.0
      %566 = vmatprep.subr.mxu0 0.0
      %567 = vmatpush1.msra.mxu0 0.0
      %568 = vmatprep.subr.mxu0 0.0
      %569 = vmatpush1.msra.mxu0 0.0
      %570 = vmatprep.subr.mxu0 0.0
      %571 = vmatpush1.msra.mxu0 0.0
      %572 = vmatprep.subr.mxu0 0.0
      %573 = vmatpush1.msra.mxu0 0.0
      %574 = vmatprep.subr.mxu0 0.0
      %575 = vmatpush1.msra.mxu0 0.0
      %576 = vmatprep.subr.mxu0 0.0
      %577 = vmatpush1.msra.mxu0 0.0
      %578 = vmatprep.subr.mxu0 0.0
      %579 = vmatpush1.msra.mxu0 0.0
      %580 = vmatprep.subr.mxu0 0.0
      %581 = vmatpush1.msra.mxu0 0.0
      %582 = vmatprep.subr.mxu0 0.0
      %583 = vmatpush1.msra.mxu0 0.0
      %584 = vmatprep.subr.mxu0 0.0
      %585 = vmatpush1.msra.mxu0 0.0
      %586 = vmatprep.subr.mxu0 0.0
      %587 = vmatpush1.msra.mxu0 0.0
      %588 = vmatprep.subr.mxu0 0.0
      %589 = vmatpush1.msra.mxu0 0.0
      %590 = vmatprep.subr.mxu0 0.0
      %591 = vmatpush1.msra.mxu0 0.0
      %592 = vmatprep.subr.mxu0 0.0
      %593 = vmatpush1.msra.mxu0 0.0
      %594 = vmatprep.subr.mxu0 0.0
      %595 = vmatpush1.msra.mxu0 0.0
      %596 = vmatprep.subr.mxu0 0.0
      %597 = vmatpush1.msra.mxu0 0.0
      %598 = vmatprep.subr.mxu0 0.0
      %599 = vmatpush1.msra.mxu0 0.0
      %600 = vmatprep.subr.mxu0 0.0
      %601 = vmatpush1.msra.mxu0 0.0
      %602 = vmatprep.subr.mxu0 0.0
      %603 = vmatpush1.msra.mxu0 0.0
      %604 = vmatprep.subr.mxu0 0.0
      %605 = vmatpush1.msra.mxu0 0.0
      %606 = vmatprep.subr.mxu0 0.0
      %607 = vmatpush1.msra.mxu0 0.0
      %608 = vmatprep.subr.mxu0 0.0
      %609 = vmatpush1.msra.mxu0 0.0
      %610 = vmatprep.subr.mxu0 0.0
      %611 = vmatpush1.msra.mxu0 0.0
      %612 = vmatprep.subr.mxu0 0.0
      %613 = vmatpush1.msra.mxu0 0.0
      %614 = vmatprep.subr.mxu0 0.0
      %615 = vmatpush1.msra.mxu0 0.0
      %616 = vmatprep.subr.mxu0 0.0
      %617 = vmatpush1.msra.mxu0 0.0
      %618 = vmatprep.subr.mxu0 0.0
      %619 = vmatpush1.msra.mxu0 0.0
      %620 = vmatprep.subr.mxu0 0.0
      %621 = vmatpush1.msra.mxu0 0.0
      %622 = vmatprep.subr.mxu0 0.0
      %623 = vmatpush1.msra.mxu0 0.0
      %624 = vmatprep.mubr.f32.mxu0 0.0
      %625 = vmatmul.mubr.f32.gmra.mrb[0].mxu0 %v554
      %v626 = vpop.f32.mrb[0].mxu0
      %v627 = vadd.f32 0.0, %v626
      %v628 = vpop.f32.mrb[0].mxu0
      %629 = vdwg.mxu0
      %v631 = vsel %vm556, %v543, 0
      %633 = vmatprep.subr.mxu0 0.0
      %634 = vmatpush1.msra.mxu0 %v542
      %635 = vmatprep.subr.mxu0 0.0
      %636 = vmatpush1.msra.mxu0 %v631
      %637 = vmatprep.subr.mxu0 0.0
      %638 = vmatpush1.msra.mxu0 0.0
      %639 = vmatprep.subr.mxu0 0.0
      %640 = vmatpush1.msra.mxu0 0.0
      %641 = vmatprep.subr.mxu0 0.0
      %642 = vmatpush1.msra.mxu0 0.0
      %643 = vmatprep.subr.mxu0 0.0
      %644 = vmatpush1.msra.mxu0 0.0
      %645 = vmatprep.subr.mxu0 0.0
      %646 = vmatpush1.msra.mxu0 0.0
      %647 = vmatprep.subr.mxu0 0.0
      %648 = vmatpush1.msra.mxu0 0.0
      %649 = vmatprep.subr.mxu0 0.0
      %650 = vmatpush1.msra.mxu0 0.0
      %651 = vmatprep.subr.mxu0 0.0
      %652 = vmatpush1.msra.mxu0 0.0
      %653 = vmatprep.subr.mxu0 0.0
      %654 = vmatpush1.msra.mxu0 0.0
      %655 = vmatprep.subr.mxu0 0.0
      %656 = vmatpush1.msra.mxu0 0.0
      %657 = vmatprep.subr.mxu0 0.0
      %658 = vmatpush1.msra.mxu0 0.0
      %659 = vmatprep.subr.mxu0 0.0
      %660 = vmatpush1.msra.mxu0 0.0
      %661 = vmatprep.subr.mxu0 0.0
      %662 = vmatpush1.msra.mxu0 0.0
      %663 = vmatprep.subr.mxu0 0.0
      %664 = vmatpush1.msra.mxu0 0.0
      %665 = vmatprep.subr.mxu0 0.0
      %666 = vmatpush1.msra.mxu0 0.0
      %667 = vmatprep.subr.mxu0 0.0
      %668 = vmatpush1.msra.mxu0 0.0
      %669 = vmatprep.subr.mxu0 0.0
      %670 = vmatpush1.msra.mxu0 0.0
      %671 = vmatprep.subr.mxu0 0.0
      %672 = vmatpush1.msra.mxu0 0.0
      %673 = vmatprep.subr.mxu0 0.0
      %674 = vmatpush1.msra.mxu0 0.0
      %675 = vmatprep.subr.mxu0 0.0
      %676 = vmatpush1.msra.mxu0 0.0
      %677 = vmatprep.subr.mxu0 0.0
      %678 = vmatpush1.msra.mxu0 0.0
      %679 = vmatprep.subr.mxu0 0.0
      %680 = vmatpush1.msra.mxu0 0.0
      %681 = vmatprep.subr.mxu0 0.0
      %682 = vmatpush1.msra.mxu0 0.0
      %683 = vmatprep.subr.mxu0 0.0
      %684 = vmatpush1.msra.mxu0 0.0
      %685 = vmatprep.subr.mxu0 0.0
      %686 = vmatpush1.msra.mxu0 0.0
      %687 = vmatprep.subr.mxu0 0.0
      %688 = vmatpush1.msra.mxu0 0.0
      %689 = vmatprep.subr.mxu0 0.0
      %690 = vmatpush1.msra.mxu0 0.0
      %691 = vmatprep.subr.mxu0 0.0
      %692 = vmatpush1.msra.mxu0 0.0
      %693 = vmatprep.subr.mxu0 0.0
      %694 = vmatpush1.msra.mxu0 0.0
      %695 = vmatprep.subr.mxu0 0.0
      %696 = vmatpush1.msra.mxu0 0.0
      %697 = vmatprep.mubr.f32.mxu0 0.0
      %698 = vmatmul.mubr.f32.gmra.mrb[0].mxu0 %v554
      %v699 = vpop.f32.mrb[0].mxu0
      %v700 = vadd.f32 0.0, %v699
      %v701 = vpop.f32.mrb[0].mxu0
      %702 = vdwg.mxu0
      %v703 = vmax.f32 %v627, %v700
      %705 = vrot.lane.b32.xlu0 %v703, 6
      %v706 = vpop.permute.xlu0 %705
      %vm708 = vcmask 97328
      %709 = vst.msk [vmem:[%s338] sm:$0xff] %vm708, %v706
      %v710 = vld [vmem:[%s334] sm:$0xff]
      %712 = vrot.lane.b32.xlu0 %v710, 118
      %v713 = vpop.permute.xlu0 %712
      %v715 = vmax.f32 %v710, %v713
      %717 = vrot.lane.b32.xlu0 %v715, 98
      %v718 = vpop.permute.xlu0 %717
      %v719 = vsel %vm553, %v718, 0
      %721 = vmatprep.subr.mxu0 0.0
      %722 = vmatpush1.msra.mxu0 %v540
      %723 = vmatprep.subr.mxu0 0.0
      %724 = vmatpush1.msra.mxu0 %v558
      %725 = vmatprep.subr.mxu0 0.0
      %726 = vmatpush1.msra.mxu0 0.0
      %727 = vmatprep.subr.mxu0 0.0
      %728 = vmatpush1.msra.mxu0 0.0
      %729 = vmatprep.subr.mxu0 0.0
      %730 = vmatpush1.msra.mxu0 0.0
      %731 = vmatprep.subr.mxu0 0.0
      %732 = vmatpush1.msra.mxu0 0.0
      %733 = vmatprep.subr.mxu0 0.0
      %734 = vmatpush1.msra.mxu0 0.0
      %735 = vmatprep.subr.mxu0 0.0
      %736 = vmatpush1.msra.mxu0 0.0
      %737 = vmatprep.subr.mxu0 0.0
      %738 = vmatpush1.msra.mxu0 0.0
      %739 = vmatprep.subr.mxu0 0.0
      %740 = vmatpush1.msra.mxu0 0.0
      %741 = vmatprep.subr.mxu0 0.0
      %742 = vmatpush1.msra.mxu0 0.0
      %743 = vmatprep.subr.mxu0 0.0
      %744 = vmatpush1.msra.mxu0 0.0
      %745 = vmatprep.subr.mxu0 0.0
      %746 = vmatpush1.msra.mxu0 0.0
      %747 = vmatprep.subr.mxu0 0.0
      %748 = vmatpush1.msra.mxu0 0.0
      %749 = vmatprep.subr.mxu0 0.0
      %750 = vmatpush1.msra.mxu0 0.0
      %751 = vmatprep.subr.mxu0 0.0
      %752 = vmatpush1.msra.mxu0 0.0
      %753 = vmatprep.subr.mxu0 0.0
      %754 = vmatpush1.msra.mxu0 0.0
      %755 = vmatprep.subr.mxu0 0.0
      %756 = vmatpush1.msra.mxu0 0.0
      %757 = vmatprep.subr.mxu0 0.0
      %758 = vmatpush1.msra.mxu0 0.0
      %759 = vmatprep.subr.mxu0 0.0
      %760 = vmatpush1.msra.mxu0 0.0
      %761 = vmatprep.subr.mxu0 0.0
      %762 = vmatpush1.msra.mxu0 0.0
      %763 = vmatprep.subr.mxu0 0.0
      %764 = vmatpush1.msra.mxu0 0.0
      %765 = vmatprep.subr.mxu0 0.0
      %766 = vmatpush1.msra.mxu0 0.0
      %767 = vmatprep.subr.mxu0 0.0
      %768 = vmatpush1.msra.mxu0 0.0
      %769 = vmatprep.subr.mxu0 0.0
      %770 = vmatpush1.msra.mxu0 0.0
      %771 = vmatprep.subr.mxu0 0.0
      %772 = vmatpush1.msra.mxu0 0.0
      %773 = vmatprep.subr.mxu0 0.0
      %774 = vmatpush1.msra.mxu0 0.0
      %775 = vmatprep.subr.mxu0 0.0
      %776 = vmatpush1.msra.mxu0 0.0
      %777 = vmatprep.subr.mxu0 0.0
      %778 = vmatpush1.msra.mxu0 0.0
      %779 = vmatprep.subr.mxu0 0.0
      %780 = vmatpush1.msra.mxu0 0.0
      %781 = vmatprep.subr.mxu0 0.0
      %782 = vmatpush1.msra.mxu0 0.0
      %783 = vmatprep.subr.mxu0 0.0
      %784 = vmatpush1.msra.mxu0 0.0
      %785 = vmatprep.mubr.f32.mxu0 0.0
      %786 = vmatmul.mubr.f32.gmra.mrb[0].mxu0 %v719
      %v787 = vpop.f32.mrb[0].mxu0
      %v788 = vadd.f32 0.0, %v787
      %v789 = vpop.f32.mrb[0].mxu0
      %790 = vdwg.mxu0
      %791 = vmatprep.subr.mxu0 0.0
      %792 = vmatpush1.msra.mxu0 %v542
      %793 = vmatprep.subr.mxu0 0.0
      %794 = vmatpush1.msra.mxu0 %v631
      %795 = vmatprep.subr.mxu0 0.0
      %796 = vmatpush1.msra.mxu0 0.0
      %797 = vmatprep.subr.mxu0 0.0
      %798 = vmatpush1.msra.mxu0 0.0
      %799 = vmatprep.subr.mxu0 0.0
      %800 = vmatpush1.msra.mxu0 0.0
      %801 = vmatprep.subr.mxu0 0.0
      %802 = vmatpush1.msra.mxu0 0.0
      %803 = vmatprep.subr.mxu0 0.0
      %804 = vmatpush1.msra.mxu0 0.0
      %805 = vmatprep.subr.mxu0 0.0
      %806 = vmatpush1.msra.mxu0 0.0
      %807 = vmatprep.subr.mxu0 0.0
      %808 = vmatpush1.msra.mxu0 0.0
      %809 = vmatprep.subr.mxu0 0.0
      %810 = vmatpush1.msra.mxu0 0.0
      %811 = vmatprep.subr.mxu0 0.0
      %812 = vmatpush1.msra.mxu0 0.0
      %813 = vmatprep.subr.mxu0 0.0
      %814 = vmatpush1.msra.mxu0 0.0
      %815 = vmatprep.subr.mxu0 0.0
      %816 = vmatpush1.msra.mxu0 0.0
      %817 = vmatprep.subr.mxu0 0.0
      %818 = vmatpush1.msra.mxu0 0.0
      %819 = vmatprep.subr.mxu0 0.0
      %820 = vmatpush1.msra.mxu0 0.0
      %821 = vmatprep.subr.mxu0 0.0
      %822 = vmatpush1.msra.mxu0 0.0
      %823 = vmatprep.subr.mxu0 0.0
      %824 = vmatpush1.msra.mxu0 0.0
      %825 = vmatprep.subr.mxu0 0.0
      %826 = vmatpush1.msra.mxu0 0.0
      %827 = vmatprep.subr.mxu0 0.0
      %828 = vmatpush1.msra.mxu0 0.0
      %829 = vmatprep.subr.mxu0 0.0
      %830 = vmatpush1.msra.mxu0 0.0
      %831 = vmatprep.subr.mxu0 0.0
      %832 = vmatpush1.msra.mxu0 0.0
      %833 = vmatprep.subr.mxu0 0.0
      %834 = vmatpush1.msra.mxu0 0.0
      %835 = vmatprep.subr.mxu0 0.0
      %836 = vmatpush1.msra.mxu0 0.0
      %837 = vmatprep.subr.mxu0 0.0
      %838 = vmatpush1.msra.mxu0 0.0
      %839 = vmatprep.subr.mxu0 0.0
      %840 = vmatpush1.msra.mxu0 0.0
      %841 = vmatprep.subr.mxu0 0.0
      %842 = vmatpush1.msra.mxu0 0.0
      %843 = vmatprep.subr.mxu0 0.0
      %844 = vmatpush1.msra.mxu0 0.0
      %845 = vmatprep.subr.mxu0 0.0
      %846 = vmatpush1.msra.mxu0 0.0
      %847 = vmatprep.subr.mxu0 0.0
      %848 = vmatpush1.msra.mxu0 0.0
      %849 = vmatprep.subr.mxu0 0.0
      %850 = vmatpush1.msra.mxu0 0.0
      %851 = vmatprep.subr.mxu0 0.0
      %852 = vmatpush1.msra.mxu0 0.0
      %853 = vmatprep.subr.mxu0 0.0
      %854 = vmatpush1.msra.mxu0 0.0
      %855 = vmatprep.mubr.f32.mxu0 0.0
      %856 = vmatmul.mubr.f32.gmra.mrb[0].mxu0 %v719
      %v857 = vpop.f32.mrb[0].mxu0
      %v858 = vadd.f32 0.0, %v857
      %v859 = vpop.f32.mrb[0].mxu0
      %860 = vdwg.mxu0
      %v861 = vmax.f32 %v788, %v858
      %863 = vrot.lane.b32.xlu0 %v861, 12
      %v864 = vpop.permute.xlu0 %863
      %vm866 = vcmask 146528
      %867 = vst.msk [vmem:[%s338] sm:$0xff] %vm866, %v864
      %v868 = vld [vmem:[%s334] sm:$0xff]
      %870 = vrot.lane.b32.xlu0 %v868, 118
      %v871 = vpop.permute.xlu0 %870
      %v873 = vmax.f32 %v868, %v871
      %875 = vrot.lane.b32.xlu0 %v873, 78
      %v876 = vpop.permute.xlu0 %875
      %v877 = vsel %vm553, %v876, 0
      %879 = vmatprep.subr.mxu0 0.0
      %880 = vmatpush1.msra.mxu0 %v540
      %881 = vmatprep.subr.mxu0 0.0
      %882 = vmatpush1.msra.mxu0 %v558
      %883 = vmatprep.subr.mxu0 0.0
      %884 = vmatpush1.msra.mxu0 0.0
      %885 = vmatprep.subr.mxu0 0.0
      %886 = vmatpush1.msra.mxu0 0.0
      %887 = vmatprep.subr.mxu0 0.0
      %888 = vmatpush1.msra.mxu0 0.0
      %889 = vmatprep.subr.mxu0 0.0
      %890 = vmatpush1.msra.mxu0 0.0
      %891 = vmatprep.subr.mxu0 0.0
      %892 = vmatpush1.msra.mxu0 0.0
      %893 = vmatprep.subr.mxu0 0.0
      %894 = vmatpush1.msra.mxu0 0.0
      %895 = vmatprep.subr.mxu0 0.0
      %896 = vmatpush1.msra.mxu0 0.0
      %897 = vmatprep.subr.mxu0 0.0
      %898 = vmatpush1.msra.mxu0 0.0
      %899 = vmatprep.subr.mxu0 0.0
      %900 = vmatpush1.msra.mxu0 0.0
      %901 = vmatprep.subr.mxu0 0.0
      %902 = vmatpush1.msra.mxu0 0.0
      %903 = vmatprep.subr.mxu0 0.0
      %904 = vmatpush1.msra.mxu0 0.0
      %905 = vmatprep.subr.mxu0 0.0
      %906 = vmatpush1.msra.mxu0 0.0
      %907 = vmatprep.subr.mxu0 0.0
      %908 = vmatpush1.msra.mxu0 0.0
      %909 = vmatprep.subr.mxu0 0.0
      %910 = vmatpush1.msra.mxu0 0.0
      %911 = vmatprep.subr.mxu0 0.0
      %912 = vmatpush1.msra.mxu0 0.0
      %913 = vmatprep.subr.mxu0 0.0
      %914 = vmatpush1.msra.mxu0 0.0
      %915 = vmatprep.subr.mxu0 0.0
      %916 = vmatpush1.msra.mxu0 0.0
      %917 = vmatprep.subr.mxu0 0.0
      %918 = vmatpush1.msra.mxu0 0.0
      %919 = vmatprep.subr.mxu0 0.0
      %920 = vmatpush1.msra.mxu0 0.0
      %921 = vmatprep.subr.mxu0 0.0
      %922 = vmatpush1.msra.mxu0 0.0
      %923 = vmatprep.subr.mxu0 0.0
      %924 = vmatpush1.msra.mxu0 0.0
      %925 = vmatprep.subr.mxu0 0.0
      %926 = vmatpush1.msra.mxu0 0.0
      %927 = vmatprep.subr.mxu0 0.0
      %928 = vmatpush1.msra.mxu0 0.0
      %929 = vmatprep.subr.mxu0 0.0
      %930 = vmatpush1.msra.mxu0 0.0
      %931 = vmatprep.subr.mxu0 0.0
      %932 = vmatpush1.msra.mxu0 0.0
      %933 = vmatprep.subr.mxu0 0.0
      %934 = vmatpush1.msra.mxu0 0.0
      %935 = vmatprep.subr.mxu0 0.0
      %936 = vmatpush1.msra.mxu0 0.0
      %937 = vmatprep.subr.mxu0 0.0
      %938 = vmatpush1.msra.mxu0 0.0
      %939 = vmatprep.subr.mxu0 0.0
      %940 = vmatpush1.msra.mxu0 0.0
      %941 = vmatprep.subr.mxu0 0.0
      %942 = vmatpush1.msra.mxu0 0.0
      %943 = vmatprep.mubr.f32.mxu0 0.0
      %944 = vmatmul.mubr.f32.gmra.mrb[0].mxu0 %v877
      %v945 = vpop.f32.mrb[0].mxu0
      %v946 = vadd.f32 0.0, %v945
      %v947 = vpop.f32.mrb[0].mxu0
      %948 = vdwg.mxu0
      %949 = vmatprep.subr.mxu0 0.0
      %950 = vmatpush1.msra.mxu0 %v542
      %951 = vmatprep.subr.mxu0 0.0
      %952 = vmatpush1.msra.mxu0 %v631
      %953 = vmatprep.subr.mxu0 0.0
      %954 = vmatpush1.msra.mxu0 0.0
      %955 = vmatprep.subr.mxu0 0.0
      %956 = vmatpush1.msra.mxu0 0.0
      %957 = vmatprep.subr.mxu0 0.0
      %958 = vmatpush1.msra.mxu0 0.0
      %959 = vmatprep.subr.mxu0 0.0
      %960 = vmatpush1.msra.mxu0 0.0
      %961 = vmatprep.subr.mxu0 0.0
      %962 = vmatpush1.msra.mxu0 0.0
      %963 = vmatprep.subr.mxu0 0.0
      %964 = vmatpush1.msra.mxu0 0.0
      %965 = vmatprep.subr.mxu0 0.0
      %966 = vmatpush1.msra.mxu0 0.0
      %967 = vmatprep.subr.mxu0 0.0
      %968 = vmatpush1.msra.mxu0 0.0
      %969 = vmatprep.subr.mxu0 0.0
      %970 = vmatpush1.msra.mxu0 0.0
      %971 = vmatprep.subr.mxu0 0.0
      %972 = vmatpush1.msra.mxu0 0.0
      %973 = vmatprep.subr.mxu0 0.0
      %974 = vmatpush1.msra.mxu0 0.0
      %975 = vmatprep.subr.mxu0 0.0
      %976 = vmatpush1.msra.mxu0 0.0
      %977 = vmatprep.subr.mxu0 0.0
      %978 = vmatpush1.msra.mxu0 0.0
      %979 = vmatprep.subr.mxu0 0.0
      %980 = vmatpush1.msra.mxu0 0.0
      %981 = vmatprep.subr.mxu0 0.0
      %982 = vmatpush1.msra.mxu0 0.0
      %983 = vmatprep.subr.mxu0 0.0
      %984 = vmatpush1.msra.mxu0 0.0
      %985 = vmatprep.subr.mxu0 0.0
      %986 = vmatpush1.msra.mxu0 0.0
      %987 = vmatprep.subr.mxu0 0.0
      %988 = vmatpush1.msra.mxu0 0.0
      %989 = vmatprep.subr.mxu0 0.0
      %990 = vmatpush1.msra.mxu0 0.0
      %991 = vmatprep.subr.mxu0 0.0
      %992 = vmatpush1.msra.mxu0 0.0
      %993 = vmatprep.subr.mxu0 0.0
      %994 = vmatpush1.msra.mxu0 0.0
      %995 = vmatprep.subr.mxu0 0.0
      %996 = vmatpush1.msra.mxu0 0.0
      %997 = vmatprep.subr.mxu0 0.0
      %998 = vmatpush1.msra.mxu0 0.0
      %999 = vmatprep.subr.mxu0 0.0
      %1000 = vmatpush1.msra.mxu0 0.0
      %1001 = vmatprep.subr.mxu0 0.0
      %1002 = vmatpush1.msra.mxu0 0.0
      %1003 = vmatprep.subr.mxu0 0.0
      %1004 = vmatpush1.msra.mxu0 0.0
      %1005 = vmatprep.subr.mxu0 0.0
      %1006 = vmatpush1.msra.mxu0 0.0
      %1007 = vmatprep.subr.mxu0 0.0
      %1008 = vmatpush1.msra.mxu0 0.0
      %1009 = vmatprep.subr.mxu0 0.0
      %1010 = vmatpush1.msra.mxu0 0.0
      %1011 = vmatprep.subr.mxu0 0.0
      %1012 = vmatpush1.msra.mxu0 0.0
      %1013 = vmatprep.mubr.f32.mxu0 0.0
      %1014 = vmatmul.mubr.f32.gmra.mrb[0].mxu0 %v877
      %v1015 = vpop.f32.mrb[0].mxu0
      %v1016 = vadd.f32 0.0, %v1015
      %v1017 = vpop.f32.mrb[0].mxu0
      %1018 = vdwg.mxu0
      %v1019 = vmax.f32 %v946, %v1016
      %1021 = vrot.lane.b32.xlu0 %v1019, 18
      %v1022 = vpop.permute.xlu0 %1021
      %vm1024 = vcmask 195728
      %1025 = vst.msk [vmem:[%s338] sm:$0xff] %vm1024, %v1022
      %v1026 = vld [vmem:[%s334] sm:$0xff]
      %1028 = vrot.lane.b32.xlu0 %v1026, 118
      %v1029 = vpop.permute.xlu0 %1028
      %v1031 = vmax.f32 %v1026, %v1029
      %1033 = vrot.lane.b32.xlu0 %v1031, 58
      %v1034 = vpop.permute.xlu0 %1033
      %v1035 = vsel %vm553, %v1034, 0
      %1037 = vmatprep.subr.mxu0 0.0
      %1038 = vmatpush1.msra.mxu0 %v540
      %1039 = vmatprep.subr.mxu0 0.0
      %1040 = vmatpush1.msra.mxu0 %v558
      %1041 = vmatprep.subr.mxu0 0.0
      %1042 = vmatpush1.msra.mxu0 0.0
      %1043 = vmatprep.subr.mxu0 0.0
      %1044 = vmatpush1.msra.mxu0 0.0
      %1045 = vmatprep.subr.mxu0 0.0
      %1046 = vmatpush1.msra.mxu0 0.0
      %1047 = vmatprep.subr.mxu0 0.0
      %1048 = vmatpush1.msra.mxu0 0.0
      %1049 = vmatprep.subr.mxu0 0.0
      %1050 = vmatpush1.msra.mxu0 0.0
      %1051 = vmatprep.subr.mxu0 0.0
      %1052 = vmatpush1.msra.mxu0 0.0
      %1053 = vmatprep.subr.mxu0 0.0
      %1054 = vmatpush1.msra.mxu0 0.0
      %1055 = vmatprep.subr.mxu0 0.0
      %1056 = vmatpush1.msra.mxu0 0.0
      %1057 = vmatprep.subr.mxu0 0.0
      %1058 = vmatpush1.msra.mxu0 0.0
      %1059 = vmatprep.subr.mxu0 0.0
      %1060 = vmatpush1.msra.mxu0 0.0
      %1061 = vmatprep.subr.mxu0 0.0
      %1062 = vmatpush1.msra.mxu0 0.0
      %1063 = vmatprep.subr.mxu0 0.0
      %1064 = vmatpush1.msra.mxu0 0.0
      %1065 = vmatprep.subr.mxu0 0.0
      %1066 = vmatpush1.msra.mxu0 0.0
      %1067 = vmatprep.subr.mxu0 0.0
      %1068 = vmatpush1.msra.mxu0 0.0
      %1069 = vmatprep.subr.mxu0 0.0
      %1070 = vmatpush1.msra.mxu0 0.0
      %1071 = vmatprep.subr.mxu0 0.0
      %1072 = vmatpush1.msra.mxu0 0.0
      %1073 = vmatprep.subr.mxu0 0.0
      %1074 = vmatpush1.msra.mxu0 0.0
      %1075 = vmatprep.subr.mxu0 0.0
      %1076 = vmatpush1.msra.mxu0 0.0
      %1077 = vmatprep.subr.mxu0 0.0
      %1078 = vmatpush1.msra.mxu0 0.0
      %1079 = vmatprep.subr.mxu0 0.0
      %1080 = vmatpush1.msra.mxu0 0.0
      %1081 = vmatprep.subr.mxu0 0.0
      %1082 = vmatpush1.msra.mxu0 0.0
      %1083 = vmatprep.subr.mxu0 0.0
      %1084 = vmatpush1.msra.mxu0 0.0
      %1085 = vmatprep.subr.mxu0 0.0
      %1086 = vmatpush1.msra.mxu0 0.0
      %1087 = vmatprep.subr.mxu0 0.0
      %1088 = vmatpush1.msra.mxu0 0.0
      %1089 = vmatprep.subr.mxu0 0.0
      %1090 = vmatpush1.msra.mxu0 0.0
      %1091 = vmatprep.subr.mxu0 0.0
      %1092 = vmatpush1.msra.mxu0 0.0
      %1093 = vmatprep.subr.mxu0 0.0
      %1094 = vmatpush1.msra.mxu0 0.0
      %1095 = vmatprep.subr.mxu0 0.0
      %1096 = vmatpush1.msra.mxu0 0.0
      %1097 = vmatprep.subr.mxu0 0.0
      %1098 = vmatpush1.msra.mxu0 0.0
      %1099 = vmatprep.subr.mxu0 0.0
      %1100 = vmatpush1.msra.mxu0 0.0
      %1101 = vmatprep.mubr.f32.mxu0 0.0
      %1102 = vmatmul.mubr.f32.gmra.mrb[0].mxu0 %v1035
      %v1103 = vpop.f32.mrb[0].mxu0
      %v1104 = vadd.f32 0.0, %v1103
      %v1105 = vpop.f32.mrb[0].mxu0
      %1106 = vdwg.mxu0
      %1107 = vmatprep.subr.mxu0 0.0
      %1108 = vmatpush1.msra.mxu0 %v542
      %1109 = vmatprep.subr.mxu0 0.0
      %1110 = vmatpush1.msra.mxu0 %v631
      %1111 = vmatprep.subr.mxu0 0.0
      %1112 = vmatpush1.msra.mxu0 0.0
      %1113 = vmatprep.subr.mxu0 0.0
      %1114 = vmatpush1.msra.mxu0 0.0
      %1115 = vmatprep.subr.mxu0 0.0
      %1116 = vmatpush1.msra.mxu0 0.0
      %1117 = vmatprep.subr.mxu0 0.0
      %1118 = vmatpush1.msra.mxu0 0.0
      %1119 = vmatprep.subr.mxu0 0.0
      %1120 = vmatpush1.msra.mxu0 0.0
      %1121 = vmatprep.subr.mxu0 0.0
      %1122 = vmatpush1.msra.mxu0 0.0
      %1123 = vmatprep.subr.mxu0 0.0
      %1124 = vmatpush1.msra.mxu0 0.0
      %1125 = vmatprep.subr.mxu0 0.0
      %1126 = vmatpush1.msra.mxu0 0.0
      %1127 = vmatprep.subr.mxu0 0.0
      %1128 = vmatpush1.msra.mxu0 0.0
      %1129 = vmatprep.subr.mxu0 0.0
      %1130 = vmatpush1.msra.mxu0 0.0
      %1131 = vmatprep.subr.mxu0 0.0
      %1132 = vmatpush1.msra.mxu0 0.0
      %1133 = vmatprep.subr.mxu0 0.0
      %1134 = vmatpush1.msra.mxu0 0.0
      %1135 = vmatprep.subr.mxu0 0.0
      %1136 = vmatpush1.msra.mxu0 0.0
      %1137 = vmatprep.subr.mxu0 0.0
      %1138 = vmatpush1.msra.mxu0 0.0
      %1139 = vmatprep.subr.mxu0 0.0
      %1140 = vmatpush1.msra.mxu0 0.0
      %1141 = vmatprep.subr.mxu0 0.0
      %1142 = vmatpush1.msra.mxu0 0.0
      %1143 = vmatprep.subr.mxu0 0.0
      %1144 = vmatpush1.msra.mxu0 0.0
      %1145 = vmatprep.subr.mxu0 0.0
      %1146 = vmatpush1.msra.mxu0 0.0
      %1147 = vmatprep.subr.mxu0 0.0
      %1148 = vmatpush1.msra.mxu0 0.0
      %1149 = vmatprep.subr.mxu0 0.0
      %1150 = vmatpush1.msra.mxu0 0.0
      %1151 = vmatprep.subr.mxu0 0.0
      %1152 = vmatpush1.msra.mxu0 0.0
      %1153 = vmatprep.subr.mxu0 0.0
      %1154 = vmatpush1.msra.mxu0 0.0
      %1155 = vmatprep.subr.mxu0 0.0
      %1156 = vmatpush1.msra.mxu0 0.0
      %1157 = vmatprep.subr.mxu0 0.0
      %1158 = vmatpush1.msra.mxu0 0.0
      %1159 = vmatprep.subr.mxu0 0.0
      %1160 = vmatpush1.msra.mxu0 0.0
      %1161 = vmatprep.subr.mxu0 0.0
      %1162 = vmatpush1.msra.mxu0 0.0
      %1163 = vmatprep.subr.mxu0 0.0
      %1164 = vmatpush1.msra.mxu0 0.0
      %1165 = vmatprep.subr.mxu0 0.0
      %1166 = vmatpush1.msra.mxu0 0.0
      %1167 = vmatprep.subr.mxu0 0.0
      %1168 = vmatpush1.msra.mxu0 0.0
      %1169 = vmatprep.subr.mxu0 0.0
      %1170 = vmatpush1.msra.mxu0 0.0
      %1171 = vmatprep.mubr.f32.mxu0 0.0
      %1172 = vmatmul.mubr.f32.gmra.mrb[0].mxu0 %v1035
      %v1173 = vpop.f32.mrb[0].mxu0
      %v1174 = vadd.f32 0.0, %v1173
      %v1175 = vpop.f32.mrb[0].mxu0
      %1176 = vdwg.mxu0
      %v1177 = vmax.f32 %v1104, %v1174
      %1179 = vrot.lane.b32.xlu0 %v1177, 24
      %v1180 = vpop.permute.xlu0 %1179
      %vm1182 = vcmask 244928
      %1183 = vst.msk [vmem:[%s338] sm:$0xff] %vm1182, %v1180
      %p1184 = scmp.lt.s32.totalorder %s21, 1
      %s1185 = scalar_select %p1184, %s21, 1
      %s1186 = smul.addr %s1185, 8
      %s1187 = scalar_lea.vmem %s8, %s1186
      %p1188 = scmp.lt.s32.totalorder %s21, 1
      %s1189 = scalar_select %p1188, %s21, 1
      %s1190 = smul.addr %s1189, 8
      %s1191 = scalar_lea.vmem %s9, %s1190
      // Predicated region
      $region53: #{_lambda_.6} parent=51 // pred_check
        %p1192 = pneg %p212
      $region54: #{_lambda_.6} parent=51 // pred_check_branch
        %1194 = sbr.rel (%p1192) target = $region56
      $region55: #{_lambda_.6} parent=51 // pred_region
        _
      $region56: #{_lambda_.6} parent=51 // pred_fallthru
        _
      // Predicated region
      $region57: #{_lambda_.6} parent=51 // pred_check
        %p1195 = pneg %p238
      $region58: #{_lambda_.6} parent=51 // pred_check_branch
        %1197 = sbr.rel (%p1195) target = $region60
      $region59: #{_lambda_.6} parent=51 // pred_region
        _
      $region60: #{_lambda_.6} parent=51 // pred_fallthru
        _
    $region52: #{_lambda_.6} parent=5 // pred_fallthru
      _
    %p1198 = scmp.le.s32.totalorder 2, %s16
    // Predicated region
    $region61: #{_lambda_.6} parent=5 // pred_check
      %p1199 = pneg %p1198
    $region62: #{_lambda_.6} parent=5 // pred_check_branch
      %1201 = sbr.rel (%p1199) target = $region64
    $region63: #{_lambda_.6} parent=5 // pred_region
      %s1202 = ssub.s32 %s16, 2
      // Predicated region
      $region65: #{_lambda_.6} parent=63 // pred_check
        %p1203 = pneg %p218
      $region66: #{_lambda_.6} parent=63 // pred_check_branch
        %1205 = sbr.rel (%p1203) target = $region68
      $region67: #{_lambda_.6} parent=63 // pred_region
        %p1206 = scmp.lt.s32.totalorder %s22, 1
        %s1207 = scalar_select %p1206, %s22, 1
        %s1208 = smul.addr %s1207, 8
        %s1209 = scalar_lea.vmem %s8, %s1208
      $region68: #{_lambda_.6} parent=63 // pred_fallthru
        _
      // Predicated region
      $region69: #{_lambda_.6} parent=63 // pred_check
        %p1210 = pneg %p244
      $region70: #{_lambda_.6} parent=63 // pred_check_branch
        %1212 = sbr.rel (%p1210) target = $region72
      $region71: #{_lambda_.6} parent=63 // pred_region
        %p1213 = scmp.lt.s32.totalorder %s22, 1
        %s1214 = scalar_select %p1213, %s22, 1
        %s1215 = smul.addr %s1214, 8
        %s1216 = scalar_lea.vmem %s9, %s1215
      $region72: #{_lambda_.6} parent=63 // pred_fallthru
        _
    $region64: #{_lambda_.6} parent=5 // pred_fallthru
      _
  $region6: #{_lambda_.6} parent=0 // loop_footer
    %s20 = sadd.s32 1, %s16
  $region7: #{_lambda_.6} parent=0 // loop_footer_branch
    %15 = sbr.rel target = $region3
  $region8: #{_lambda_.6} parent=0 // loop_exit
    _

// kernel: _lambda_.5
$region0: #{_lambda_.5}
  #allocation0 [shape = 'u32[]', space=smem, size = 0x4, offset = 0x4, fixed_abs, tag = 'smem constant byte address 0x4 - core index']
  #allocation1 [shape = 'u32[144,128]{1,0:T(1,128)}', space=vmem, size = 0x12000, scoped, tag = 'internal scratch']
  #allocation2 [shape = 'f32[72,384]{1,0:T(8,128)}', space=vmem, size = 0x1b000, scoped, tag = 'scratch operand']
  %s0 = inlined_call_operand.vmem [shape: f32[2,8,384], index: 0, kind: input, shape index: {}]
  %s1 = inlined_call_operand.vmem [shape: bf16[8,72], index: 1, kind: input, shape index: {}]
  %s2 = inlined_call_operand.vmem [shape: f32[8,1], index: 2, kind: input, shape index: {}]
  %s3 = inlined_call_operand.vmem [shape: bf16[8,72], index: 3, kind: input, shape index: {}]
  %s4 = inlined_call_operand.vmem [shape: f32[8,1], index: 4, kind: input, shape index: {}]
  %s5 = inlined_call_operand.vmem [shape: f32[1,384], index: 5, kind: input, shape index: {}]
  %s6 = inlined_call_operand.vmem [shape: f32[18,10], index: 6, kind: input, shape index: {}]
  %s7 = inlined_call_operand.vmem [shape: f32[18,10], index: 7, kind: input, shape index: {}]
  %s8 = inlined_call_operand.vmem [shape: f32[2,8,384], index: 8, kind: output, shape index: {0}]
  %s9 = inlined_call_operand.vmem [shape: f32[2,8,128], index: 9, kind: output, shape index: {1}]
  %10 = xla_tuple %s8, %s9
  %s11 = sld [smem:[#allocation0]]
  $region73: #{_lambda_.5} parent=0
    _
  %s13 = ssub.s32 1, %s11
  %s14 = scalar_select 0, %s13, %s11
  loop: start=0, step=1, limit=4
  $region2: #{_lambda_.5} parent=0 // loop_pre_header
    _
  $region3: #{_lambda_.5} parent=0 // loop_header
    %s16 = sphi 0, %s20
    %p17 = scmp.ge.s32.totalorder %s16, 4
    %s26 = sphi 0, %s28
    %s29 = sphi 0, %s26
    %s30 = sphi 0, %s29
    %s46 = sphi 0, %s30
    %s50 = sphi 0, %s50
    %s52 = sphi 0, %s50
    %s53 = sphi 0, %s52
    %s67 = sphi 0, %s53
    %s71 = sphi 0, %s71
    %s73 = sphi 0, %s71
    %s74 = sphi 0, %s73
    %s88 = sphi 0, %s74
    %s92 = sphi 0, %s92
    %s94 = sphi 0, %s92
    %s95 = sphi 0, %s94
    %s109 = sphi 0, %s95
    %s113 = sphi 0, %s113
    %s115 = sphi 0, %s113
    %s116 = sphi 0, %s115
    %s130 = sphi 0, %s116
    %s134 = sphi 0, %s134
    %s136 = sphi 0, %s134
    %s137 = sphi 0, %s136
    %s151 = sphi 0, %s137
    %s155 = sphi 0, %s155
    %s157 = sphi 0, %s155
    %s158 = sphi 0, %s157
    %s172 = sphi 0, %s158
    %s176 = sphi 0, %s176
    %s178 = sphi 0, %s176
    %s179 = sphi 0, %s178
    %s193 = sphi 0, %s179
    %s199 = sphi 0, %s201
    %s202 = sphi 0, %s199
    %s203 = sphi 0, %s202
    %s219 = sphi 0, %s203
    %s225 = sphi 0, %s227
    %s228 = sphi 0, %s225
    %s229 = sphi 0, %s228
    %s245 = sphi 0, %s229
  $region4: #{_lambda_.5} parent=0 // loop_header_branch
    %19 = sbr.rel (%p17) target = $region8
  $region5: #{_lambda_.5} parent=0 // loop_body
    %s21 = ssub.s32 %s16, 1
    %s22 = ssub.s32 %s16, 2
    %s23 = sadd.s32 %s16, 1
    %s24 = ssub.s32 %s16, %s23
    %p25 = scmp.eq.s32.totalorder %s24, 0
    %s27 = sadd.s32 %s26, 1
    %s28 = scalar_select %p25, %s26, %s27
    %p31 = pneg %p25
    %p32 = scmp.eq.s32.totalorder %s16, 1
    %p33 = por %p31, %p32
    %p34 = scmp.ne.s32.totalorder %s26, %s29
    %p35 = scmp.eq.s32.totalorder %s16, 0
    %p36 = por %p34, %p35
    %p37 = scmp.ne.s32.totalorder %s26, %s29
    %p38 = scmp.eq.s32.totalorder %s21, 1
    %p39 = por %p37, %p38
    %p40 = scmp.ne.s32.totalorder %s29, %s30
    %p41 = scmp.eq.s32.totalorder %s21, 0
    %p42 = por %p40, %p41
    %p43 = scmp.ne.s32.totalorder %s29, %s30
    %p44 = scmp.eq.s32.totalorder %s22, 1
    %p45 = por %p43, %p44
    %p47 = scmp.ne.s32.totalorder %s30, %s46
    %p48 = scmp.eq.s32.totalorder %s22, 0
    %p49 = por %p47, %p48
    %s51 = sadd.s32 %s50, 1
    %p54 = scmp.eq.s32.totalorder %s16, 1
    %p55 = scmp.ne.s32.totalorder %s50, %s52
    %p56 = scmp.eq.s32.totalorder %s16, 0
    %p57 = por %p55, %p56
    %p58 = scmp.ne.s32.totalorder %s50, %s52
    %p59 = scmp.eq.s32.totalorder %s21, 1
    %p60 = por %p58, %p59
    %p61 = scmp.ne.s32.totalorder %s52, %s53
    %p62 = scmp.eq.s32.totalorder %s21, 0
    %p63 = por %p61, %p62
    %p64 = scmp.ne.s32.totalorder %s52, %s53
    %p65 = scmp.eq.s32.totalorder %s22, 1
    %p66 = por %p64, %p65
    %p68 = scmp.ne.s32.totalorder %s53, %s67
    %p69 = scmp.eq.s32.totalorder %s22, 0
    %p70 = por %p68, %p69
    %s72 = sadd.s32 %s71, 1
    %p75 = scmp.eq.s32.totalorder %s16, 1
    %p76 = scmp.ne.s32.totalorder %s71, %s73
    %p77 = scmp.eq.s32.totalorder %s16, 0
    %p78 = por %p76, %p77
    %p79 = scmp.ne.s32.totalorder %s71, %s73
    %p80 = scmp.eq.s32.totalorder %s21, 1
    %p81 = por %p79, %p80
    %p82 = scmp.ne.s32.totalorder %s73, %s74
    %p83 = scmp.eq.s32.totalorder %s21, 0
    %p84 = por %p82, %p83
    %p85 = scmp.ne.s32.totalorder %s73, %s74
    %p86 = scmp.eq.s32.totalorder %s22, 1
    %p87 = por %p85, %p86
    %p89 = scmp.ne.s32.totalorder %s74, %s88
    %p90 = scmp.eq.s32.totalorder %s22, 0
    %p91 = por %p89, %p90
    %s93 = sadd.s32 %s92, 1
    %p96 = scmp.eq.s32.totalorder %s16, 1
    %p97 = scmp.ne.s32.totalorder %s92, %s94
    %p98 = scmp.eq.s32.totalorder %s16, 0
    %p99 = por %p97, %p98
    %p100 = scmp.ne.s32.totalorder %s92, %s94
    %p101 = scmp.eq.s32.totalorder %s21, 1
    %p102 = por %p100, %p101
    %p103 = scmp.ne.s32.totalorder %s94, %s95
    %p104 = scmp.eq.s32.totalorder %s21, 0
    %p105 = por %p103, %p104
    %p106 = scmp.ne.s32.totalorder %s94, %s95
    %p107 = scmp.eq.s32.totalorder %s22, 1
    %p108 = por %p106, %p107
    %p110 = scmp.ne.s32.totalorder %s95, %s109
    %p111 = scmp.eq.s32.totalorder %s22, 0
    %p112 = por %p110, %p111
    %s114 = sadd.s32 %s113, 1
    %p117 = scmp.eq.s32.totalorder %s16, 1
    %p118 = scmp.ne.s32.totalorder %s113, %s115
    %p119 = scmp.eq.s32.totalorder %s16, 0
    %p120 = por %p118, %p119
    %p121 = scmp.ne.s32.totalorder %s113, %s115
    %p122 = scmp.eq.s32.totalorder %s21, 1
    %p123 = por %p121, %p122
    %p124 = scmp.ne.s32.totalorder %s115, %s116
    %p125 = scmp.eq.s32.totalorder %s21, 0
    %p126 = por %p124, %p125
    %p127 = scmp.ne.s32.totalorder %s115, %s116
    %p128 = scmp.eq.s32.totalorder %s22, 1
    %p129 = por %p127, %p128
    %p131 = scmp.ne.s32.totalorder %s116, %s130
    %p132 = scmp.eq.s32.totalorder %s22, 0
    %p133 = por %p131, %p132
    %s135 = sadd.s32 %s134, 1
    %p138 = scmp.eq.s32.totalorder %s16, 1
    %p139 = scmp.ne.s32.totalorder %s134, %s136
    %p140 = scmp.eq.s32.totalorder %s16, 0
    %p141 = por %p139, %p140
    %p142 = scmp.ne.s32.totalorder %s134, %s136
    %p143 = scmp.eq.s32.totalorder %s21, 1
    %p144 = por %p142, %p143
    %p145 = scmp.ne.s32.totalorder %s136, %s137
    %p146 = scmp.eq.s32.totalorder %s21, 0
    %p147 = por %p145, %p146
    %p148 = scmp.ne.s32.totalorder %s136, %s137
    %p149 = scmp.eq.s32.totalorder %s22, 1
    %p150 = por %p148, %p149
    %p152 = scmp.ne.s32.totalorder %s137, %s151
    %p153 = scmp.eq.s32.totalorder %s22, 0
    %p154 = por %p152, %p153
    %s156 = sadd.s32 %s155, 1
    %p159 = scmp.eq.s32.totalorder %s16, 1
    %p160 = scmp.ne.s32.totalorder %s155, %s157
    %p161 = scmp.eq.s32.totalorder %s16, 0
    %p162 = por %p160, %p161
    %p163 = scmp.ne.s32.totalorder %s155, %s157
    %p164 = scmp.eq.s32.totalorder %s21, 1
    %p165 = por %p163, %p164
    %p166 = scmp.ne.s32.totalorder %s157, %s158
    %p167 = scmp.eq.s32.totalorder %s21, 0
    %p168 = por %p166, %p167
    %p169 = scmp.ne.s32.totalorder %s157, %s158
    %p170 = scmp.eq.s32.totalorder %s22, 1
    %p171 = por %p169, %p170
    %p173 = scmp.ne.s32.totalorder %s158, %s172
    %p174 = scmp.eq.s32.totalorder %s22, 0
    %p175 = por %p173, %p174
    %s177 = sadd.s32 %s176, 1
    %p180 = scmp.eq.s32.totalorder %s16, 1
    %p181 = scmp.ne.s32.totalorder %s176, %s178
    %p182 = scmp.eq.s32.totalorder %s16, 0
    %p183 = por %p181, %p182
    %p184 = scmp.ne.s32.totalorder %s176, %s178
    %p185 = scmp.eq.s32.totalorder %s21, 1
    %p186 = por %p184, %p185
    %p187 = scmp.ne.s32.totalorder %s178, %s179
    %p188 = scmp.eq.s32.totalorder %s21, 0
    %p189 = por %p187, %p188
    %p190 = scmp.ne.s32.totalorder %s178, %s179
    %p191 = scmp.eq.s32.totalorder %s22, 1
    %p192 = por %p190, %p191
    %p194 = scmp.ne.s32.totalorder %s179, %s193
    %p195 = scmp.eq.s32.totalorder %s22, 0
    %p196 = por %p194, %p195
    %s197 = ssub.s32 %s16, %s23
    %p198 = scmp.eq.s32.totalorder %s197, 0
    %s200 = sadd.s32 %s199, 1
    %s201 = scalar_select %p198, %s199, %s200
    %p204 = pneg %p198
    %p205 = scmp.eq.s32.totalorder %s16, 1
    %p206 = por %p204, %p205
    %p207 = scmp.ne.s32.totalorder %s199, %s202
    %p208 = scmp.eq.s32.totalorder %s16, 0
    %p209 = por %p207, %p208
    %p210 = scmp.ne.s32.totalorder %s199, %s202
    %p211 = scmp.eq.s32.totalorder %s21, 1
    %p212 = por %p210, %p211
    %p213 = scmp.ne.s32.totalorder %s202, %s203
    %p214 = scmp.eq.s32.totalorder %s21, 0
    %p215 = por %p213, %p214
    %p216 = scmp.ne.s32.totalorder %s202, %s203
    %p217 = scmp.eq.s32.totalorder %s22, 1
    %p218 = por %p216, %p217
    %p220 = scmp.ne.s32.totalorder %s203, %s219
    %p221 = scmp.eq.s32.totalorder %s22, 0
    %p222 = por %p220, %p221
    %s223 = ssub.s32 %s16, %s23
    %p224 = scmp.eq.s32.totalorder %s223, 0
    %s226 = sadd.s32 %s225, 1
    %s227 = scalar_select %p224, %s225, %s226
    %p230 = pneg %p224
    %p231 = scmp.eq.s32.totalorder %s16, 1
    %p232 = por %p230, %p231
    %p233 = scmp.ne.s32.totalorder %s225, %s228
    %p234 = scmp.eq.s32.totalorder %s16, 0
    %p235 = por %p233, %p234
    %p236 = scmp.ne.s32.totalorder %s225, %s228
    %p237 = scmp.eq.s32.totalorder %s21, 1
    %p238 = por %p236, %p237
    %p239 = scmp.ne.s32.totalorder %s228, %s229
    %p240 = scmp.eq.s32.totalorder %s21, 0
    %p241 = por %p239, %p240
    %p242 = scmp.ne.s32.totalorder %s228, %s229
    %p243 = scmp.eq.s32.totalorder %s22, 1
    %p244 = por %p242, %p243
    %p246 = scmp.ne.s32.totalorder %s229, %s245
    %p247 = scmp.eq.s32.totalorder %s22, 0
    %p248 = por %p246, %p247
    %p249 = scmp.le.s32.totalorder 1, %s16
    %p250 = scmp.lt.s32.totalorder %s16, 3
    %p251 = pnand %p249, %p250
    %p252 = pneg %p251
    // Predicated region
    $region9: #{_lambda_.5} parent=5 // pred_check
      _
    $region10: #{_lambda_.5} parent=5 // pred_check_branch
      %254 = sbr.rel (%p251) target = $region12
    $region11: #{_lambda_.5} parent=5 // pred_region
      %s255 = ssub.s32 %s16, 1
      // Predicated region
      $region13: #{_lambda_.5} parent=11 // pred_check
        %p256 = pneg %p63
      $region14: #{_lambda_.5} parent=11 // pred_check_branch
        %258 = sbr.rel (%p256) target = $region16
      $region15: #{_lambda_.5} parent=11 // pred_region
        _
      $region16: #{_lambda_.5} parent=11 // pred_fallthru
        _
      // Predicated region
      $region17: #{_lambda_.5} parent=11 // pred_check
        %p259 = pneg %p84
      $region18: #{_lambda_.5} parent=11 // pred_check_branch
        %261 = sbr.rel (%p259) target = $region20
      $region19: #{_lambda_.5} parent=11 // pred_region
        _
      $region20: #{_lambda_.5} parent=11 // pred_fallthru
        _
      // Predicated region
      $region21: #{_lambda_.5} parent=11 // pred_check
        %p262 = pneg %p105
      $region22: #{_lambda_.5} parent=11 // pred_check_branch
        %264 = sbr.rel (%p262) target = $region24
      $region23: #{_lambda_.5} parent=11 // pred_region
        _
      $region24: #{_lambda_.5} parent=11 // pred_fallthru
        _
      // Predicated region
      $region25: #{_lambda_.5} parent=11 // pred_check
        %p265 = pneg %p126
      $region26: #{_lambda_.5} parent=11 // pred_check_branch
        %267 = sbr.rel (%p265) target = $region28
      $region27: #{_lambda_.5} parent=11 // pred_region
        _
      $region28: #{_lambda_.5} parent=11 // pred_fallthru
        _
      // Predicated region
      $region29: #{_lambda_.5} parent=11 // pred_check
        %p268 = pneg %p147
      $region30: #{_lambda_.5} parent=11 // pred_check_branch
        %270 = sbr.rel (%p268) target = $region32
      $region31: #{_lambda_.5} parent=11 // pred_region
        _
      $region32: #{_lambda_.5} parent=11 // pred_fallthru
        _
      // Predicated region
      $region33: #{_lambda_.5} parent=11 // pred_check
        %p271 = pneg %p168
      $region34: #{_lambda_.5} parent=11 // pred_check_branch
        %273 = sbr.rel (%p271) target = $region36
      $region35: #{_lambda_.5} parent=11 // pred_region
        _
      $region36: #{_lambda_.5} parent=11 // pred_fallthru
        _
      // Predicated region
      $region37: #{_lambda_.5} parent=11 // pred_check
        %p274 = pneg %p189
      $region38: #{_lambda_.5} parent=11 // pred_check_branch
        %276 = sbr.rel (%p274) target = $region40
      $region39: #{_lambda_.5} parent=11 // pred_region
        _
      $region40: #{_lambda_.5} parent=11 // pred_fallthru
        _
    $region12: #{_lambda_.5} parent=5 // pred_fallthru
      _
    %p277 = scmp.lt.s32.totalorder %s16, 2
    // Predicated region
    $region41: #{_lambda_.5} parent=5 // pred_check
      %p278 = pneg %p277
    $region42: #{_lambda_.5} parent=5 // pred_check_branch
      %280 = sbr.rel (%p278) target = $region44
    $region43: #{_lambda_.5} parent=5 // pred_region
      // Predicated region
      $region45: #{_lambda_.5} parent=43 // pred_check
        %p281 = pneg %p36
      $region46: #{_lambda_.5} parent=43 // pred_check_branch
        %283 = sbr.rel (%p281) target = $region48
      $region47: #{_lambda_.5} parent=43 // pred_region
        %p284 = scmp.lt.s32.totalorder %s16, 1
        %s285 = scalar_select %p284, %s16, 1
        %s286 = smul.addr %s285, 3
        %s287 = smul.addr %s286, 8
        %s288 = scalar_lea.vmem %s0, %s287
      $region48: #{_lambda_.5} parent=43 // pred_fallthru
        _
    $region44: #{_lambda_.5} parent=5 // pred_fallthru
      _
    %p289 = scmp.le.s32.totalorder 1, %s16
    %p290 = scmp.lt.s32.totalorder %s16, 3
    %p291 = pnand %p289, %p290
    %p292 = pneg %p291
    // Predicated region
    $region49: #{_lambda_.5} parent=5 // pred_check
      _
    $region50: #{_lambda_.5} parent=5 // pred_check_branch
      %294 = sbr.rel (%p291) target = $region52
    $region51: #{_lambda_.5} parent=5 // pred_region
      %s295 = ssub.s32 %s16, 1
      %p296 = scmp.lt.s32.totalorder %s21, 1
      %s297 = scalar_select %p296, %s21, 1
      %s298 = smul.addr %s297, 3
      %s299 = smul.addr %s298, 8
      %s300 = scalar_lea.vmem %s0, %s299
      %p301 = pneg %p42
      %p302 = pneg %p39
      %p303 = pneg %p63
      %p304 = pneg %p60
      %p305 = pneg %p84
      %p306 = pneg %p81
      %p307 = pneg %p105
      %p308 = pneg %p102
      %p309 = pneg %p126
      %p310 = pneg %p123
      %p311 = pneg %p147
      %p312 = pneg %p144
      %p313 = pneg %p168
      %p314 = pneg %p165
      %p315 = pneg %p189
      %p316 = pneg %p186
      %p317 = pneg %p215
      %p318 = pneg %p212
      %p319 = scmp.lt.s32.totalorder %s21, 1
      %s320 = scalar_select %p319, %s21, 1
      %s321 = smul.addr %s320, 3
      %s322 = smul.addr %s321, 8
      %s323 = scalar_lea.vmem %s8, %s322
      %p324 = pneg %p241
      %p325 = pneg %p238
      %p326 = scmp.lt.s32.totalorder %s21, 1
      %s327 = scalar_select %p326, %s21, 1
      %s328 = smul.addr %s327, 8
      %s329 = scalar_lea.vmem %s9, %s328
      %p330 = scmp.lt.s32.totalorder %s21, 1
      %s331 = scalar_select %p330, %s21, 1
      %s332 = smul.addr %s331, 3
      %s333 = smul.addr %s332, 8
      %s334 = scalar_lea.vmem %s0, %s333
      %p335 = scmp.lt.s32.totalorder %s21, 1
      %s336 = scalar_select %p335, %s21, 1
      %s337 = smul.addr %s336, 3
      %s338 = smul.addr %s337, 8
      %s339 = scalar_lea.vmem %s8, %s338
      %p340 = scmp.lt.s32.totalorder %s21, 1
      %s341 = scalar_select %p340, %s21, 1
      %s342 = smul.addr %s341, 8
      %s343 = scalar_lea.vmem %s9, %s342
      %v345 = vld [vmem:[%s5] sm:$0x7]
      %v346 = vld [vmem:[%s334] sm:$0xff]
      %v347 = vld [vmem:[%s334 + $0x8] sm:$0xff]
      %v348 = vld [vmem:[%s334 + $0x10] sm:$0xff]
      %349 = vrot.lane.b32.xlu0 %v346, 18
      %v350 = vpop.permute.xlu0 %349
      %351 = vrot.lane.b32.xlu0 %v347, 18
      %v352 = vpop.permute.xlu0 %351
      %353 = vrot.lane.b32.xlu0 %v348, 18
      %v354 = vpop.permute.xlu0 %353
      %v355 = vlaneseq
      %v356 = vand.u32 %v355, 127
      %vm357 = vcmp.lt.s32.totalorder %v356, 18
      %v358 = vsel %vm357, %v352, %v354
      %v359 = vsel %vm357, %v350, %v352
      %v360 = vsel %vm357, %v354, %v350
      %361 = vrot.lane.b32.xlu0 %v346, 110
      %v362 = vpop.permute.xlu0 %361
      %363 = vrot.lane.b32.xlu0 %v347, 110
      %v364 = vpop.permute.xlu0 %363
      %365 = vrot.lane.b32.xlu0 %v348, 110
      %v366 = vpop.permute.xlu0 %365
      %vm367 = vcmp.lt.s32.totalorder %v356, 110
      %v368 = vsel %vm367, %v364, %v366
      %v369 = vsel %vm367, %v362, %v364
      %v370 = vsel %vm367, %v366, %v362
      %371 = vrot.lane.b32.xlu0 %v360, 1
      %v372 = vpop.permute.xlu0 %371
      %373 = vrot.lane.b32.xlu0 %v359, 1
      %v374 = vpop.permute.xlu0 %373
      %375 = vrot.lane.b32.xlu0 %v358, 1
      %v376 = vpop.permute.xlu0 %375
      %vm377 = vcmp.lt.s32.totalorder %v356, 1
      %v378 = vsel %vm377, %v374, %v376
      %v379 = vsel %vm377, %v372, %v374
      %v380 = vsel %vm377, %v376, %v372
      %381 = vst [vmem:[#allocation2] sm:$0xff] %v380
      %382 = vst [vmem:[#allocation2 + $0x8] sm:$0xff] %v379
      %383 = vst [vmem:[#allocation2 + $0x10] sm:$0xff] %v378
      %384 = vst [vmem:[#allocation2 + $0x18] sm:$0xff] %v360
      %385 = vst [vmem:[#allocation2 + $0x20] sm:$0xff] %v359
      %386 = vst [vmem:[#allocation2 + $0x28] sm:$0xff] %v358
      %387 = vrot.lane.b32.xlu0 %v360, 127
      %v388 = vpop.permute.xlu0 %387
      %389 = vrot.lane.b32.xlu0 %v359, 127
      %v390 = vpop.permute.xlu0 %389
      %391 = vrot.lane.b32.xlu0 %v358, 127
      %v392 = vpop.permute.xlu0 %391
      %vm393 = vcmp.lt.s32.totalorder %v356, 127
      %v394 = vsel %vm393, %v390, %v392
      %v395 = vsel %vm393, %v388, %v390
      %v396 = vsel %vm393, %v392, %v388
      %397 = vst [vmem:[#allocation2 + $0x30] sm:$0xff] %v395
      %398 = vst [vmem:[#allocation2 + $0x38] sm:$0xff] %v394
      %399 = vst [vmem:[#allocation2 + $0x40] sm:$0xff] %v396
      %400 = vrot.lane.b32.xlu0 %v346, 1
      %v401 = vpop.permute.xlu0 %400
      %402 = vrot.lane.b32.xlu0 %v347, 1
      %v403 = vpop.permute.xlu0 %402
      %404 = vrot.lane.b32.xlu0 %v348, 1
      %v405 = vpop.permute.xlu0 %404
      %v406 = vsel %vm377, %v403, %v405
      %v407 = vsel %vm377, %v401, %v403
      %v408 = vsel %vm377, %v405, %v401
      %409 = vst [vmem:[#allocation2 + $0x48] sm:$0xff] %v408
      %410 = vst [vmem:[#allocation2 + $0x50] sm:$0xff] %v407
      %411 = vst [vmem:[#allocation2 + $0x58] sm:$0xff] %v406
      %412 = vst [vmem:[#allocation2 + $0x60] sm:$0xff] %v346
      %413 = vst [vmem:[#allocation2 + $0x68] sm:$0xff] %v347
      %414 = vst [vmem:[#allocation2 + $0x70] sm:$0xff] %v348
      %415 = vrot.lane.b32.xlu0 %v346, 127
      %v416 = vpop.permute.xlu0 %415
      %417 = vrot.lane.b32.xlu0 %v347, 127
      %v418 = vpop.permute.xlu0 %417
      %419 = vrot.lane.b32.xlu0 %v348, 127
      %v420 = vpop.permute.xlu0 %419
      %v421 = vsel %vm393, %v418, %v420
      %v422 = vsel %vm393, %v416, %v418
      %v423 = vsel %vm393, %v420, %v416
      %424 = vst [vmem:[#allocation2 + $0x78] sm:$0xff] %v422
      %425 = vst [vmem:[#allocation2 + $0x80] sm:$0xff] %v421
      %426 = vst [vmem:[#allocation2 + $0x88] sm:$0xff] %v423
      %427 = vrot.lane.b32.xlu0 %v369, 1
      %v428 = vpop.permute.xlu0 %427
      %429 = vrot.lane.b32.xlu0 %v368, 1
      %v430 = vpop.permute.xlu0 %429
      %431 = vrot.lane.b32.xlu0 %v370, 1
      %v432 = vpop.permute.xlu0 %431
      %v433 = vsel %vm377, %v430, %v432
      %v434 = vsel %vm377, %v428, %v430
      %v435 = vsel %vm377, %v432, %v428
      %436 = vst [vmem:[#allocation2 + $0x90] sm:$0xff] %v435
      %437 = vst [vmem:[#allocation2 + $0x98] sm:$0xff] %v434
      %438 = vst [vmem:[#allocation2 + $0xa0] sm:$0xff] %v433
      %439 = vst [vmem:[#allocation2 + $0xa8] sm:$0xff] %v369
      %440 = vst [vmem:[#allocation2 + $0xb0] sm:$0xff] %v368
      %441 = vst [vmem:[#allocation2 + $0xb8] sm:$0xff] %v370
      %442 = vrot.lane.b32.xlu0 %v369, 127
      %v443 = vpop.permute.xlu0 %442
      %444 = vrot.lane.b32.xlu0 %v368, 127
      %v445 = vpop.permute.xlu0 %444
      %446 = vrot.lane.b32.xlu0 %v370, 127
      %v447 = vpop.permute.xlu0 %446
      %v448 = vsel %vm393, %v445, %v447
      %v449 = vsel %vm393, %v443, %v445
      %v450 = vsel %vm393, %v447, %v443
      %451 = vst [vmem:[#allocation2 + $0xc0] sm:$0xff] %v449
      %452 = vst [vmem:[#allocation2 + $0xc8] sm:$0xff] %v448
      %453 = vst [vmem:[#allocation2 + $0xd0] sm:$0xff] %v450
      %v454 = vld [vmem:[%s1] sm:$0xf]
      %v455 = vld [vmem:[#allocation2] sm:$0xff]
      %v456 = vld [vmem:[#allocation2 + $0x8] sm:$0xff]
      %v457 = vld [vmem:[#allocation2 + $0x10] sm:$0xff]
      %v458 = vld [vmem:[#allocation2 + $0x18] sm:$0xff]
      %v459 = vld [vmem:[#allocation2 + $0x20] sm:$0xff]
      %v460 = vld [vmem:[#allocation2 + $0x28] sm:$0xff]
      %v461 = vld [vmem:[#allocation2 + $0x30] sm:$0xff]
      %v462 = vld [vmem:[#allocation2 + $0x38] sm:$0xff]
      %v463 = vld [vmem:[#allocation2 + $0x40] sm:$0xff]
      %v464 = vld [vmem:[#allocation2 + $0x48] sm:$0xff]
      %v465 = vld [vmem:[#allocation2 + $0x50] sm:$0xff]
      %v466 = vld [vmem:[#allocation2 + $0x58] sm:$0xff]
      %v467 = vld [vmem:[#allocation2 + $0x60] sm:$0xff]
      %v468 = vld [vmem:[#allocation2 + $0x68] sm:$0xff]
      %v469 = vld [vmem:[#allocation2 + $0x70] sm:$0xff]
      %v470 = vld [vmem:[#allocation2 + $0x78] sm:$0xff]
      %v471 = vld [vmem:[#allocation2 + $0x80] sm:$0xff]
      %v472 = vld [vmem:[#allocation2 + $0x88] sm:$0xff]
      %v473 = vld [vmem:[#allocation2 + $0x90] sm:$0xff]
      %v474 = vld [vmem:[#allocation2 + $0x98] sm:$0xff]
      %v475 = vld [vmem:[#allocation2 + $0xa0] sm:$0xff]
      %v476 = vld [vmem:[#allocation2 + $0xa8] sm:$0xff]
      %v477 = vld [vmem:[#allocation2 + $0xb0] sm:$0xff]
      %v478 = vld [vmem:[#allocation2 + $0xb8] sm:$0xff]
      %v479 = vld [vmem:[#allocation2 + $0xc0] sm:$0xff]
      %v480 = vld [vmem:[#allocation2 + $0xc8] sm:$0xff]
      %v481 = vld [vmem:[#allocation2 + $0xd0] sm:$0xff]
      %v482 = vpack.c.bf16 %v458, %v455
      %v483 = vpack.c.bf16 %v459, %v456
      %v484 = vpack.c.bf16 %v460, %v457
      %v485 = vpack.c.bf16 %v464, %v461
      %v486 = vpack.c.bf16 %v465, %v462
      %v487 = vpack.c.bf16 %v466, %v463
      %v488 = vpack.c.bf16 %v470, %v467
      %v489 = vpack.c.bf16 %v471, %v468
      %v490 = vpack.c.bf16 %v472, %v469
      %v491 = vpack.c.bf16 %v476, %v473
      %v492 = vpack.c.bf16 %v477, %v474
      %v493 = vpack.c.bf16 %v478, %v475
      %v494 = vpack.c.bf16 %v479, %v479
      %v495 = vpack.c.bf16 %v480, %v480
      %v496 = vpack.c.bf16 %v481, %v481
      %v497 = vld [vmem:[%s2] sm:$0xff]
      %499 = vset.pattern.permute.xlu0 0
      %500 = vperm.xlu0 %499, %v497
      %v501 = vpop.permute.xlu0 %500
      %vm503 = vcmask 588800
      %v505 = vsel %vm503, %v454, 0
      %vm507 = vcmask 1043456
      %v509 = vsel %vm507, %v494, 0
      %v512 = vsel %vm507, %v495, 0
      %v515 = vsel %vm507, %v496, 0
      %517 = vmatprep.subr.bf16.mxu0 %v483
      %518 = vmatpush1.bf16.msra.mxu0 %v482
      %519 = vmatprep.subr.bf16.mxu0 %v486
      %520 = vmatpush1.bf16.msra.mxu0 %v485
      %521 = vmatprep.subr.bf16.mxu0 %v489
      %522 = vmatpush1.bf16.msra.mxu0 %v488
      %523 = vmatprep.subr.bf16.mxu0 %v492
      %524 = vmatpush1.bf16.msra.mxu0 %v491
      %525 = vmatprep.subr.bf16.mxu0 %v512
      %526 = vmatpush1.bf16.msra.mxu0 %v509
      %527 = vmatprep.subr.bf16.mxu0 0
      %528 = vmatpush1.bf16.msra.mxu0 0
      %529 = vmatprep.subr.bf16.mxu0 0
      %530 = vmatpush1.bf16.msra.mxu0 0
      %531 = vmatprep.subr.bf16.mxu0 0
      %532 = vmatpush1.bf16.msra.mxu0 0
      %533 = vmatprep.subr.bf16.mxu0 0
      %534 = vmatpush1.bf16.msra.mxu0 0
      %535 = vmatprep.subr.bf16.mxu0 0
      %536 = vmatpush1.bf16.msra.mxu0 0
      %537 = vmatprep.subr.bf16.mxu0 0
      %538 = vmatpush1.bf16.msra.mxu0 0
      %539 = vmatprep.subr.bf16.mxu0 0
      %540 = vmatpush1.bf16.msra.mxu0 0
      %541 = vmatprep.subr.bf16.mxu0 0
      %542 = vmatpush1.bf16.msra.mxu0 0
      %543 = vmatprep.subr.bf16.mxu0 0
      %544 = vmatpush1.bf16.msra.mxu0 0
      %545 = vmatprep.subr.bf16.mxu0 0
      %546 = vmatpush1.bf16.msra.mxu0 0
      %547 = vmatprep.subr.bf16.mxu0 0
      %548 = vmatpush1.bf16.msra.mxu0 0
      %549 = vmatprep.mubr.bf16.mxu0 0
      %550 = vmatmul.mubr.bf16.gmra.mrb[0].mxu0 %v505
      %v551 = vpop.f32.mrb[0].mxu0
      %v552 = vadd.f32 %v501, %v551
      %v553 = vpop.f32.mrb[0].mxu0
      %v554 = vadd.f32 %v501, %v553
      %v555 = vpop.f32.mrb[0].mxu0
      %v556 = vpop.f32.mrb[0].mxu0
      %557 = vdwg.mxu0
      %558 = vmatprep.subr.bf16.mxu0 0
      %559 = vmatpush1.bf16.msra.mxu0 %v484
      %560 = vmatprep.subr.bf16.mxu0 0
      %561 = vmatpush1.bf16.msra.mxu0 %v487
      %562 = vmatprep.subr.bf16.mxu0 0
      %563 = vmatpush1.bf16.msra.mxu0 %v490
      %564 = vmatprep.subr.bf16.mxu0 0
      %565 = vmatpush1.bf16.msra.mxu0 %v493
      %566 = vmatprep.subr.bf16.mxu0 0
      %567 = vmatpush1.bf16.msra.mxu0 %v515
      %568 = vmatprep.subr.bf16.mxu0 0
      %569 = vmatpush1.bf16.msra.mxu0 0
      %570 = vmatprep.subr.bf16.mxu0 0
      %571 = vmatpush1.bf16.msra.mxu0 0
      %572 = vmatprep.subr.bf16.mxu0 0
      %573 = vmatpush1.bf16.msra.mxu0 0
      %574 = vmatprep.subr.bf16.mxu0 0
      %575 = vmatpush1.bf16.msra.mxu0 0
      %576 = vmatprep.subr.bf16.mxu0 0
      %577 = vmatpush1.bf16.msra.mxu0 0
      %578 = vmatprep.subr.bf16.mxu0 0
      %579 = vmatpush1.bf16.msra.mxu0 0
      %580 = vmatprep.subr.bf16.mxu0 0
      %581 = vmatpush1.bf16.msra.mxu0 0
      %582 = vmatprep.subr.bf16.mxu0 0
      %583 = vmatpush1.bf16.msra.mxu0 0
      %584 = vmatprep.subr.bf16.mxu0 0
      %585 = vmatpush1.bf16.msra.mxu0 0
      %586 = vmatprep.subr.bf16.mxu0 0
      %587 = vmatpush1.bf16.msra.mxu0 0
      %588 = vmatprep.subr.bf16.mxu0 0
      %589 = vmatpush1.bf16.msra.mxu0 0
      %590 = vmatprep.mubr.bf16.mxu0 0
      %591 = vmatmul.mubr.bf16.gmra.mrb[0].mxu0 %v505
      %v592 = vpop.f32.mrb[0].mxu0
      %v593 = vadd.f32 %v501, %v592
      %v594 = vpop.f32.mrb[0].mxu0
      %v595 = vpop.f32.mrb[0].mxu0
      %v596 = vpop.f32.mrb[0].mxu0
      %597 = vdwg.mxu0
      %v598 = vmax.f32 %v552, 0.0
      %v599 = vmax.f32 %v554, 0.0
      %v600 = vmax.f32 %v593, 0.0
      %v602 = vlaneseq
      %v603 = vshrl.u32 %v602, 7
      %v604 = vsub.s32 0, %v603
      %v605 = vrot.slane %v345, %v604
      %v606 = vlaneseq
      %v607 = vshrl.u32 %v606, 7
      %v608 = vsub.s32 1, %v607
      %v609 = vrot.slane %v345, %v608
      %v610 = vlaneseq
      %v611 = vshrl.u32 %v610, 7
      %v612 = vsub.s32 2, %v611
      %v613 = vrot.slane %v345, %v612
      %v617 = vmul.f32 %v598, %v605
      %v618 = vmul.f32 %v599, %v609
      %v619 = vmul.f32 %v600, %v613
      %620 = vrot.lane.b32.xlu0 %v617, 18
      %v621 = vpop.permute.xlu0 %620
      %622 = vrot.lane.b32.xlu0 %v618, 18
      %v623 = vpop.permute.xlu0 %622
      %624 = vrot.lane.b32.xlu0 %v619, 18
      %v625 = vpop.permute.xlu0 %624
      %v626 = vsel %vm357, %v623, %v625
      %v627 = vsel %vm357, %v621, %v623
      %v628 = vsel %vm357, %v625, %v621
      %629 = vrot.lane.b32.xlu0 %v617, 110
      %v630 = vpop.permute.xlu0 %629
      %631 = vrot.lane.b32.xlu0 %v618, 110
      %v632 = vpop.permute.xlu0 %631
      %633 = vrot.lane.b32.xlu0 %v619, 110
      %v634 = vpop.permute.xlu0 %633
      %v635 = vsel %vm367, %v632, %v634
      %v636 = vsel %vm367, %v630, %v632
      %v637 = vsel %vm367, %v634, %v630
      %638 = vrot.lane.b32.xlu0 %v628, 1
      %v639 = vpop.permute.xlu0 %638
      %640 = vrot.lane.b32.xlu0 %v627, 1
      %v641 = vpop.permute.xlu0 %640
      %642 = vrot.lane.b32.xlu0 %v626, 1
      %v643 = vpop.permute.xlu0 %642
      %v644 = vsel %vm377, %v641, %v643
      %v645 = vsel %vm377, %v639, %v641
      %v646 = vsel %vm377, %v643, %v639
      %647 = vst [vmem:[#allocation2] sm:$0xff] %v646
      %648 = vst [vmem:[#allocation2 + $0x8] sm:$0xff] %v645
      %649 = vst [vmem:[#allocation2 + $0x10] sm:$0xff] %v644
      %650 = vst [vmem:[#allocation2 + $0x18] sm:$0xff] %v628
      %651 = vst [vmem:[#allocation2 + $0x20] sm:$0xff] %v627
      %652 = vst [vmem:[#allocation2 + $0x28] sm:$0xff] %v626
      %653 = vrot.lane.b32.xlu0 %v628, 127
      %v654 = vpop.permute.xlu0 %653
      %655 = vrot.lane.b32.xlu0 %v627, 127
      %v656 = vpop.permute.xlu0 %655
      %657 = vrot.lane.b32.xlu0 %v626, 127
      %v658 = vpop.permute.xlu0 %657
      %v659 = vsel %vm393, %v656, %v658
      %v660 = vsel %vm393, %v654, %v656
      %v661 = vsel %vm393, %v658, %v654
      %662 = vst [vmem:[#allocation2 + $0x30] sm:$0xff] %v660
      %663 = vst [vmem:[#allocation2 + $0x38] sm:$0xff] %v659
      %664 = vst [vmem:[#allocation2 + $0x40] sm:$0xff] %v661
      %665 = vrot.lane.b32.xlu0 %v617, 1
      %v666 = vpop.permute.xlu0 %665
      %667 = vrot.lane.b32.xlu0 %v618, 1
      %v668 = vpop.permute.xlu0 %667
      %669 = vrot.lane.b32.xlu0 %v619, 1
      %v670 = vpop.permute.xlu0 %669
      %v671 = vsel %vm377, %v668, %v670
      %v672 = vsel %vm377, %v666, %v668
      %v673 = vsel %vm377, %v670, %v666
      %674 = vst [vmem:[#allocation2 + $0x48] sm:$0xff] %v673
      %675 = vst [vmem:[#allocation2 + $0x50] sm:$0xff] %v672
      %676 = vst [vmem:[#allocation2 + $0x58] sm:$0xff] %v671
      %677 = vst [vmem:[#allocation2 + $0x60] sm:$0xff] %v617
      %678 = vst [vmem:[#allocation2 + $0x68] sm:$0xff] %v618
      %679 = vst [vmem:[#allocation2 + $0x70] sm:$0xff] %v619
      %680 = vrot.lane.b32.xlu0 %v617, 127
      %v681 = vpop.permute.xlu0 %680
      %682 = vrot.lane.b32.xlu0 %v618, 127
      %v683 = vpop.permute.xlu0 %682
      %684 = vrot.lane.b32.xlu0 %v619, 127
      %v685 = vpop.permute.xlu0 %684
      %v686 = vsel %vm393, %v683, %v685
      %v687 = vsel %vm393, %v681, %v683
      %v688 = vsel %vm393, %v685, %v681
      %689 = vst [vmem:[#allocation2 + $0x78] sm:$0xff] %v687
      %690 = vst [vmem:[#allocation2 + $0x80] sm:$0xff] %v686
      %691 = vst [vmem:[#allocation2 + $0x88] sm:$0xff] %v688
      %692 = vrot.lane.b32.xlu0 %v636, 1
      %v693 = vpop.permute.xlu0 %692
      %694 = vrot.lane.b32.xlu0 %v635, 1
      %v695 = vpop.permute.xlu0 %694
      %696 = vrot.lane.b32.xlu0 %v637, 1
      %v697 = vpop.permute.xlu0 %696
      %v698 = vsel %vm377, %v695, %v697
      %v699 = vsel %vm377, %v693, %v695
      %v700 = vsel %vm377, %v697, %v693
      %701 = vst [vmem:[#allocation2 + $0x90] sm:$0xff] %v700
      %702 = vst [vmem:[#allocation2 + $0x98] sm:$0xff] %v699
      %703 = vst [vmem:[#allocation2 + $0xa0] sm:$0xff] %v698
      %704 = vst [vmem:[#allocation2 + $0xa8] sm:$0xff] %v636
      %705 = vst [vmem:[#allocation2 + $0xb0] sm:$0xff] %v635
      %706 = vst [vmem:[#allocation2 + $0xb8] sm:$0xff] %v637
      %707 = vrot.lane.b32.xlu0 %v636, 127
      %v708 = vpop.permute.xlu0 %707
      %709 = vrot.lane.b32.xlu0 %v635, 127
      %v710 = vpop.permute.xlu0 %709
      %711 = vrot.lane.b32.xlu0 %v637, 127
      %v712 = vpop.permute.xlu0 %711
      %v713 = vsel %vm393, %v710, %v712
      %v714 = vsel %vm393, %v708, %v710
      %v715 = vsel %vm393, %v712, %v708
      %716 = vst [vmem:[#allocation2 + $0xc0] sm:$0xff] %v714
      %717 = vst [vmem:[#allocation2 + $0xc8] sm:$0xff] %v713
      %718 = vst [vmem:[#allocation2 + $0xd0] sm:$0xff] %v715
      %v719 = vld [vmem:[%s3] sm:$0xf]
      %v720 = vld [vmem:[#allocation2] sm:$0xff]
      %v721 = vld [vmem:[#allocation2 + $0x8] sm:$0xff]
      %v722 = vld [vmem:[#allocation2 + $0x10] sm:$0xff]
      %v723 = vld [vmem:[#allocation2 + $0x18] sm:$0xff]
      %v724 = vld [vmem:[#allocation2 + $0x20] sm:$0xff]
      %v725 = vld [vmem:[#allocation2 + $0x28] sm:$0xff]
      %v726 = vld [vmem:[#allocation2 + $0x30] sm:$0xff]
      %v727 = vld [vmem:[#allocation2 + $0x38] sm:$0xff]
      %v728 = vld [vmem:[#allocation2 + $0x40] sm:$0xff]
      %v729 = vld [vmem:[#allocation2 + $0x48] sm:$0xff]
      %v730 = vld [vmem:[#allocation2 + $0x50] sm:$0xff]
      %v731 = vld [vmem:[#allocation2 + $0x58] sm:$0xff]
      %v732 = vld [vmem:[#allocation2 + $0x60] sm:$0xff]
      %v733 = vld [vmem:[#allocation2 + $0x68] sm:$0xff]
      %v734 = vld [vmem:[#allocation2 + $0x70] sm:$0xff]
      %v735 = vld [vmem:[#allocation2 + $0x78] sm:$0xff]
      %v736 = vld [vmem:[#allocation2 + $0x80] sm:$0xff]
      %v737 = vld [vmem:[#allocation2 + $0x88] sm:$0xff]
      %v738 = vld [vmem:[#allocation2 + $0x90] sm:$0xff]
      %v739 = vld [vmem:[#allocation2 + $0x98] sm:$0xff]
      %v740 = vld [vmem:[#allocation2 + $0xa0] sm:$0xff]
      %v741 = vld [vmem:[#allocation2 + $0xa8] sm:$0xff]
      %v742 = vld [vmem:[#allocation2 + $0xb0] sm:$0xff]
      %v743 = vld [vmem:[#allocation2 + $0xb8] sm:$0xff]
      %v744 = vld [vmem:[#allocation2 + $0xc0] sm:$0xff]
      %v745 = vld [vmem:[#allocation2 + $0xc8] sm:$0xff]
      %v746 = vld [vmem:[#allocation2 + $0xd0] sm:$0xff]
      %v747 = vpack.c.bf16 %v723, %v720
      %v748 = vpack.c.bf16 %v724, %v721
      %v749 = vpack.c.bf16 %v725, %v722
      %v750 = vpack.c.bf16 %v729, %v726
      %v751 = vpack.c.bf16 %v730, %v727
      %v752 = vpack.c.bf16 %v731, %v728
      %v753 = vpack.c.bf16 %v735, %v732
      %v754 = vpack.c.bf16 %v736, %v733
      %v755 = vpack.c.bf16 %v737, %v734
      %v756 = vpack.c.bf16 %v741, %v738
      %v757 = vpack.c.bf16 %v742, %v739
      %v758 = vpack.c.bf16 %v743, %v740
      %v759 = vpack.c.bf16 %v744, %v744
      %v760 = vpack.c.bf16 %v745, %v745
      %v761 = vpack.c.bf16 %v746, %v746
      %v762 = vld [vmem:[%s4] sm:$0xff]
      %764 = vset.pattern.permute.xlu0 0
      %765 = vperm.xlu0 %764, %v762
      %v766 = vpop.permute.xlu0 %765
      %v769 = vsel %vm503, %v719, 0
      %v772 = vsel %vm507, %v759, 0
      %v775 = vsel %vm507, %v760, 0
      %v778 = vsel %vm507, %v761, 0
      %780 = vmatprep.subr.bf16.mxu0 %v748
      %781 = vmatpush1.bf16.msra.mxu0 %v747
      %782 = vmatprep.subr.bf16.mxu0 %v751
      %783 = vmatpush1.bf16.msra.mxu0 %v750
      %784 = vmatprep.subr.bf16.mxu0 %v754
      %785 = vmatpush1.bf16.msra.mxu0 %v753
      %786 = vmatprep.subr.bf16.mxu0 %v757
      %787 = vmatpush1.bf16.msra.mxu0 %v756
      %788 = vmatprep.subr.bf16.mxu0 %v775
      %789 = vmatpush1.bf16.msra.mxu0 %v772
      %790 = vmatprep.subr.bf16.mxu0 0
      %791 = vmatpush1.bf16.msra.mxu0 0
      %792 = vmatprep.subr.bf16.mxu0 0
      %793 = vmatpush1.bf16.msra.mxu0 0
      %794 = vmatprep.subr.bf16.mxu0 0
      %795 = vmatpush1.bf16.msra.mxu0 0
      %796 = vmatprep.subr.bf16.mxu0 0
      %797 = vmatpush1.bf16.msra.mxu0 0
      %798 = vmatprep.subr.bf16.mxu0 0
      %799 = vmatpush1.bf16.msra.mxu0 0
      %800 = vmatprep.subr.bf16.mxu0 0
      %801 = vmatpush1.bf16.msra.mxu0 0
      %802 = vmatprep.subr.bf16.mxu0 0
      %803 = vmatpush1.bf16.msra.mxu0 0
      %804 = vmatprep.subr.bf16.mxu0 0
      %805 = vmatpush1.bf16.msra.mxu0 0
      %806 = vmatprep.subr.bf16.mxu0 0
      %807 = vmatpush1.bf16.msra.mxu0 0
      %808 = vmatprep.subr.bf16.mxu0 0
      %809 = vmatpush1.bf16.msra.mxu0 0
      %810 = vmatprep.subr.bf16.mxu0 0
      %811 = vmatpush1.bf16.msra.mxu0 0
      %812 = vmatprep.mubr.bf16.mxu0 0
      %813 = vmatmul.mubr.bf16.gmra.mrb[0].mxu0 %v769
      %v814 = vpop.f32.mrb[0].mxu0
      %v815 = vadd.f32 %v766, %v814
      %v816 = vpop.f32.mrb[0].mxu0
      %v817 = vadd.f32 %v766, %v816
      %v818 = vpop.f32.mrb[0].mxu0
      %v819 = vpop.f32.mrb[0].mxu0
      %820 = vdwg.mxu0
      %821 = vmatprep.subr.bf16.mxu0 0
      %822 = vmatpush1.bf16.msra.mxu0 %v749
      %823 = vmatprep.subr.bf16.mxu0 0
      %824 = vmatpush1.bf16.msra.mxu0 %v752
      %825 = vmatprep.subr.bf16.mxu0 0
      %826 = vmatpush1.bf16.msra.mxu0 %v755
      %827 = vmatprep.subr.bf16.mxu0 0
      %828 = vmatpush1.bf16.msra.mxu0 %v758
      %829 = vmatprep.subr.bf16.mxu0 0
      %830 = vmatpush1.bf16.msra.mxu0 %v778
      %831 = vmatprep.subr.bf16.mxu0 0
      %832 = vmatpush1.bf16.msra.mxu0 0
      %833 = vmatprep.subr.bf16.mxu0 0
      %834 = vmatpush1.bf16.msra.mxu0 0
      %835 = vmatprep.subr.bf16.mxu0 0
      %836 = vmatpush1.bf16.msra.mxu0 0
      %837 = vmatprep.subr.bf16.mxu0 0
      %838 = vmatpush1.bf16.msra.mxu0 0
      %839 = vmatprep.subr.bf16.mxu0 0
      %840 = vmatpush1.bf16.msra.mxu0 0
      %841 = vmatprep.subr.bf16.mxu0 0
      %842 = vmatpush1.bf16.msra.mxu0 0
      %843 = vmatprep.subr.bf16.mxu0 0
      %844 = vmatpush1.bf16.msra.mxu0 0
      %845 = vmatprep.subr.bf16.mxu0 0
      %846 = vmatpush1.bf16.msra.mxu0 0
      %847 = vmatprep.subr.bf16.mxu0 0
      %848 = vmatpush1.bf16.msra.mxu0 0
      %849 = vmatprep.subr.bf16.mxu0 0
      %850 = vmatpush1.bf16.msra.mxu0 0
      %851 = vmatprep.subr.bf16.mxu0 0
      %852 = vmatpush1.bf16.msra.mxu0 0
      %853 = vmatprep.mubr.bf16.mxu0 0
      %854 = vmatmul.mubr.bf16.gmra.mrb[0].mxu0 %v769
      %v855 = vpop.f32.mrb[0].mxu0
      %v856 = vadd.f32 %v766, %v855
      %v857 = vpop.f32.mrb[0].mxu0
      %v858 = vpop.f32.mrb[0].mxu0
      %v859 = vpop.f32.mrb[0].mxu0
      %860 = vdwg.mxu0
      %v861 = vmax.f32 %v815, 0.0
      %v862 = vmax.f32 %v817, 0.0
      %v863 = vmax.f32 %v856, 0.0
      %v864 = vmul.f32 %v861, %v605
      %v865 = vmul.f32 %v862, %v609
      %v866 = vmul.f32 %v863, %v613
      %867 = vst [vmem:[%s339] sm:$0xff] %v864
      %868 = vst [vmem:[%s339 + $0x8] sm:$0xff] %v865
      %869 = vst [vmem:[%s339 + $0x10] sm:$0xff] %v866
      %870 = vst [vmem:[%s343] sm:$0xff] 0.0
      %v871 = vld [vmem:[%s6] sm:$0xff]
      %v872 = vld [vmem:[%s6 + $0x8] sm:$0xff]
      %v873 = vld [vmem:[%s6 + $0x10] sm:$0x3]
      %v874 = vld [vmem:[%s7] sm:$0xff]
      %v875 = vld [vmem:[%s7 + $0x8] sm:$0xff]
      %v876 = vld [vmem:[%s7 + $0x10] sm:$0x3]
      %v877 = vld [vmem:[%s339] sm:$0xff]
      %879 = vrot.lane.b32.xlu0 %v877, 110
      %v880 = vpop.permute.xlu0 %879
      %v882 = vmax.f32 %v877, %v880
      %884 = vrot.lane.b32.xlu0 %v882, 110
      %v885 = vpop.permute.xlu0 %884
      %vm886 = vcmask 146432
      %v887 = vsel %vm886, %v885, 0
      %vm889 = vcmask 1041408
      %v891 = vsel %vm889, %v873, 0
      %893 = vmatprep.subr.mxu0 0.0
      %894 = vmatpush1.msra.mxu0 %v871
      %895 = vmatprep.subr.mxu0 0.0
      %896 = vmatpush1.msra.mxu0 %v872
      %897 = vmatprep.subr.mxu0 0.0
      %898 = vmatpush1.msra.mxu0 %v891
      %899 = vmatprep.subr.mxu0 0.0
      %900 = vmatpush1.msra.mxu0 0.0
      %901 = vmatprep.subr.mxu0 0.0
      %902 = vmatpush1.msra.mxu0 0.0
      %903 = vmatprep.subr.mxu0 0.0
      %904 = vmatpush1.msra.mxu0 0.0
      %905 = vmatprep.subr.mxu0 0.0
      %906 = vmatpush1.msra.mxu0 0.0
      %907 = vmatprep.subr.mxu0 0.0
      %908 = vmatpush1.msra.mxu0 0.0
      %909 = vmatprep.subr.mxu0 0.0
      %910 = vmatpush1.msra.mxu0 0.0
      %911 = vmatprep.subr.mxu0 0.0
      %912 = vmatpush1.msra.mxu0 0.0
      %913 = vmatprep.subr.mxu0 0.0
      %914 = vmatpush1.msra.mxu0 0.0
      %915 = vmatprep.subr.mxu0 0.0
      %916 = vmatpush1.msra.mxu0 0.0
      %917 = vmatprep.subr.mxu0 0.0
      %918 = vmatpush1.msra.mxu0 0.0
      %919 = vmatprep.subr.mxu0 0.0
      %920 = vmatpush1.msra.mxu0 0.0
      %921 = vmatprep.subr.mxu0 0.0
      %922 = vmatpush1.msra.mxu0 0.0
      %923 = vmatprep.subr.mxu0 0.0
      %924 = vmatpush1.msra.mxu0 0.0
      %925 = vmatprep.subr.mxu0 0.0
      %926 = vmatpush1.msra.mxu0 0.0
      %927 = vmatprep.subr.mxu0 0.0
      %928 = vmatpush1.msra.mxu0 0.0
      %929 = vmatprep.subr.mxu0 0.0
      %930 = vmatpush1.msra.mxu0 0.0
      %931 = vmatprep.subr.mxu0 0.0
      %932 = vmatpush1.msra.mxu0 0.0
      %933 = vmatprep.subr.mxu0 0.0
      %934 = vmatpush1.msra.mxu0 0.0
      %935 = vmatprep.subr.mxu0 0.0
      %936 = vmatpush1.msra.mxu0 0.0
      %937 = vmatprep.subr.mxu0 0.0
      %938 = vmatpush1.msra.mxu0 0.0
      %939 = vmatprep.subr.mxu0 0.0
      %940 = vmatpush1.msra.mxu0 0.0
      %941 = vmatprep.subr.mxu0 0.0
      %942 = vmatpush1.msra.mxu0 0.0
      %943 = vmatprep.subr.mxu0 0.0
      %944 = vmatpush1.msra.mxu0 0.0
      %945 = vmatprep.subr.mxu0 0.0
      %946 = vmatpush1.msra.mxu0 0.0
      %947 = vmatprep.subr.mxu0 0.0
      %948 = vmatpush1.msra.mxu0 0.0
      %949 = vmatprep.subr.mxu0 0.0
      %950 = vmatpush1.msra.mxu0 0.0
      %951 = vmatprep.subr.mxu0 0.0
      %952 = vmatpush1.msra.mxu0 0.0
      %953 = vmatprep.subr.mxu0 0.0
      %954 = vmatpush1.msra.mxu0 0.0
      %955 = vmatprep.subr.mxu0 0.0
      %956 = vmatpush1.msra.mxu0 0.0
      %957 = vmatprep.mubr.f32.mxu0 0.0
      %958 = vmatmul.mubr.f32.gmra.mrb[0].mxu0 %v887
      %v959 = vpop.f32.mrb[0].mxu0
      %v960 = vadd.f32 0.0, %v959
      %v961 = vpop.f32.mrb[0].mxu0
      %962 = vdwg.mxu0
      %v964 = vsel %vm889, %v876, 0
      %966 = vmatprep.subr.mxu0 0.0
      %967 = vmatpush1.msra.mxu0 %v874
      %968 = vmatprep.subr.mxu0 0.0
      %969 = vmatpush1.msra.mxu0 %v875
      %970 = vmatprep.subr.mxu0 0.0
      %971 = vmatpush1.msra.mxu0 %v964
      %972 = vmatprep.subr.mxu0 0.0
      %973 = vmatpush1.msra.mxu0 0.0
      %974 = vmatprep.subr.mxu0 0.0
      %975 = vmatpush1.msra.mxu0 0.0
      %976 = vmatprep.subr.mxu0 0.0
      %977 = vmatpush1.msra.mxu0 0.0
      %978 = vmatprep.subr.mxu0 0.0
      %979 = vmatpush1.msra.mxu0 0.0
      %980 = vmatprep.subr.mxu0 0.0
      %981 = vmatpush1.msra.mxu0 0.0
      %982 = vmatprep.subr.mxu0 0.0
      %983 = vmatpush1.msra.mxu0 0.0
      %984 = vmatprep.subr.mxu0 0.0
      %985 = vmatpush1.msra.mxu0 0.0
      %986 = vmatprep.subr.mxu0 0.0
      %987 = vmatpush1.msra.mxu0 0.0
      %988 = vmatprep.subr.mxu0 0.0
      %989 = vmatpush1.msra.mxu0 0.0
      %990 = vmatprep.subr.mxu0 0.0
      %991 = vmatpush1.msra.mxu0 0.0
      %992 = vmatprep.subr.mxu0 0.0
      %993 = vmatpush1.msra.mxu0 0.0
      %994 = vmatprep.subr.mxu0 0.0
      %995 = vmatpush1.msra.mxu0 0.0
      %996 = vmatprep.subr.mxu0 0.0
      %997 = vmatpush1.msra.mxu0 0.0
      %998 = vmatprep.subr.mxu0 0.0
      %999 = vmatpush1.msra.mxu0 0.0
      %1000 = vmatprep.subr.mxu0 0.0
      %1001 = vmatpush1.msra.mxu0 0.0
      %1002 = vmatprep.subr.mxu0 0.0
      %1003 = vmatpush1.msra.mxu0 0.0
      %1004 = vmatprep.subr.mxu0 0.0
      %1005 = vmatpush1.msra.mxu0 0.0
      %1006 = vmatprep.subr.mxu0 0.0
      %1007 = vmatpush1.msra.mxu0 0.0
      %1008 = vmatprep.subr.mxu0 0.0
      %1009 = vmatpush1.msra.mxu0 0.0
      %1010 = vmatprep.subr.mxu0 0.0
      %1011 = vmatpush1.msra.mxu0 0.0
      %1012 = vmatprep.subr.mxu0 0.0
      %1013 = vmatpush1.msra.mxu0 0.0
      %1014 = vmatprep.subr.mxu0 0.0
      %1015 = vmatpush1.msra.mxu0 0.0
      %1016 = vmatprep.subr.mxu0 0.0
      %1017 = vmatpush1.msra.mxu0 0.0
      %1018 = vmatprep.subr.mxu0 0.0
      %1019 = vmatpush1.msra.mxu0 0.0
      %1020 = vmatprep.subr.mxu0 0.0
      %1021 = vmatpush1.msra.mxu0 0.0
      %1022 = vmatprep.subr.mxu0 0.0
      %1023 = vmatpush1.msra.mxu0 0.0
      %1024 = vmatprep.subr.mxu0 0.0
      %1025 = vmatpush1.msra.mxu0 0.0
      %1026 = vmatprep.subr.mxu0 0.0
      %1027 = vmatpush1.msra.mxu0 0.0
      %1028 = vmatprep.subr.mxu0 0.0
      %1029 = vmatpush1.msra.mxu0 0.0
      %1030 = vmatprep.mubr.f32.mxu0 0.0
      %1031 = vmatmul.mubr.f32.gmra.mrb[0].mxu0 %v887
      %v1032 = vpop.f32.mrb[0].mxu0
      %v1033 = vadd.f32 0.0, %v1032
      %v1034 = vpop.f32.mrb[0].mxu0
      %1035 = vdwg.mxu0
      %v1036 = vmax.f32 %v960, %v1033
      %1038 = vrot.lane.b32.xlu0 %v1036, 10
      %v1039 = vpop.permute.xlu0 %1038
      %vm1041 = vcmask 162896
      %1042 = vst.msk [vmem:[%s343] sm:$0xff] %vm1041, %v1039
      %v1043 = vld [vmem:[%s339] sm:$0xff]
      %1045 = vrot.lane.b32.xlu0 %v1043, 110
      %v1046 = vpop.permute.xlu0 %1045
      %v1048 = vmax.f32 %v1043, %v1046
      %1050 = vrot.lane.b32.xlu0 %v1048, 74
      %v1051 = vpop.permute.xlu0 %1050
      %v1052 = vsel %vm886, %v1051, 0
      %1054 = vmatprep.subr.mxu0 0.0
      %1055 = vmatpush1.msra.mxu0 %v871
      %1056 = vmatprep.subr.mxu0 0.0
      %1057 = vmatpush1.msra.mxu0 %v872
      %1058 = vmatprep.subr.mxu0 0.0
      %1059 = vmatpush1.msra.mxu0 %v891
      %1060 = vmatprep.subr.mxu0 0.0
      %1061 = vmatpush1.msra.mxu0 0.0
      %1062 = vmatprep.subr.mxu0 0.0
      %1063 = vmatpush1.msra.mxu0 0.0
      %1064 = vmatprep.subr.mxu0 0.0
      %1065 = vmatpush1.msra.mxu0 0.0
      %1066 = vmatprep.subr.mxu0 0.0
      %1067 = vmatpush1.msra.mxu0 0.0
      %1068 = vmatprep.subr.mxu0 0.0
      %1069 = vmatpush1.msra.mxu0 0.0
      %1070 = vmatprep.subr.mxu0 0.0
      %1071 = vmatpush1.msra.mxu0 0.0
      %1072 = vmatprep.subr.mxu0 0.0
      %1073 = vmatpush1.msra.mxu0 0.0
      %1074 = vmatprep.subr.mxu0 0.0
      %1075 = vmatpush1.msra.mxu0 0.0
      %1076 = vmatprep.subr.mxu0 0.0
      %1077 = vmatpush1.msra.mxu0 0.0
      %1078 = vmatprep.subr.mxu0 0.0
      %1079 = vmatpush1.msra.mxu0 0.0
      %1080 = vmatprep.subr.mxu0 0.0
      %1081 = vmatpush1.msra.mxu0 0.0
      %1082 = vmatprep.subr.mxu0 0.0
      %1083 = vmatpush1.msra.mxu0 0.0
      %1084 = vmatprep.subr.mxu0 0.0
      %1085 = vmatpush1.msra.mxu0 0.0
      %1086 = vmatprep.subr.mxu0 0.0
      %1087 = vmatpush1.msra.mxu0 0.0
      %1088 = vmatprep.subr.mxu0 0.0
      %1089 = vmatpush1.msra.mxu0 0.0
      %1090 = vmatprep.subr.mxu0 0.0
      %1091 = vmatpush1.msra.mxu0 0.0
      %1092 = vmatprep.subr.mxu0 0.0
      %1093 = vmatpush1.msra.mxu0 0.0
      %1094 = vmatprep.subr.mxu0 0.0
      %1095 = vmatpush1.msra.mxu0 0.0
      %1096 = vmatprep.subr.mxu0 0.0
      %1097 = vmatpush1.msra.mxu0 0.0
      %1098 = vmatprep.subr.mxu0 0.0
      %1099 = vmatpush1.msra.mxu0 0.0
      %1100 = vmatprep.subr.mxu0 0.0
      %1101 = vmatpush1.msra.mxu0 0.0
      %1102 = vmatprep.subr.mxu0 0.0
      %1103 = vmatpush1.msra.mxu0 0.0
      %1104 = vmatprep.subr.mxu0 0.0
      %1105 = vmatpush1.msra.mxu0 0.0
      %1106 = vmatprep.subr.mxu0 0.0
      %1107 = vmatpush1.msra.mxu0 0.0
      %1108 = vmatprep.subr.mxu0 0.0
      %1109 = vmatpush1.msra.mxu0 0.0
      %1110 = vmatprep.subr.mxu0 0.0
      %1111 = vmatpush1.msra.mxu0 0.0
      %1112 = vmatprep.subr.mxu0 0.0
      %1113 = vmatpush1.msra.mxu0 0.0
      %1114 = vmatprep.subr.mxu0 0.0
      %1115 = vmatpush1.msra.mxu0 0.0
      %1116 = vmatprep.subr.mxu0 0.0
      %1117 = vmatpush1.msra.mxu0 0.0
      %1118 = vmatprep.mubr.f32.mxu0 0.0
      %1119 = vmatmul.mubr.f32.gmra.mrb[0].mxu0 %v1052
      %v1120 = vpop.f32.mrb[0].mxu0
      %v1121 = vadd.f32 0.0, %v1120
      %v1122 = vpop.f32.mrb[0].mxu0
      %1123 = vdwg.mxu0
      %1124 = vmatprep.subr.mxu0 0.0
      %1125 = vmatpush1.msra.mxu0 %v874
      %1126 = vmatprep.subr.mxu0 0.0
      %1127 = vmatpush1.msra.mxu0 %v875
      %1128 = vmatprep.subr.mxu0 0.0
      %1129 = vmatpush1.msra.mxu0 %v964
      %1130 = vmatprep.subr.mxu0 0.0
      %1131 = vmatpush1.msra.mxu0 0.0
      %1132 = vmatprep.subr.mxu0 0.0
      %1133 = vmatpush1.msra.mxu0 0.0
      %1134 = vmatprep.subr.mxu0 0.0
      %1135 = vmatpush1.msra.mxu0 0.0
      %1136 = vmatprep.subr.mxu0 0.0
      %1137 = vmatpush1.msra.mxu0 0.0
      %1138 = vmatprep.subr.mxu0 0.0
      %1139 = vmatpush1.msra.mxu0 0.0
      %1140 = vmatprep.subr.mxu0 0.0
      %1141 = vmatpush1.msra.mxu0 0.0
      %1142 = vmatprep.subr.mxu0 0.0
      %1143 = vmatpush1.msra.mxu0 0.0
      %1144 = vmatprep.subr.mxu0 0.0
      %1145 = vmatpush1.msra.mxu0 0.0
      %1146 = vmatprep.subr.mxu0 0.0
      %1147 = vmatpush1.msra.mxu0 0.0
      %1148 = vmatprep.subr.mxu0 0.0
      %1149 = vmatpush1.msra.mxu0 0.0
      %1150 = vmatprep.subr.mxu0 0.0
      %1151 = vmatpush1.msra.mxu0 0.0
      %1152 = vmatprep.subr.mxu0 0.0
      %1153 = vmatpush1.msra.mxu0 0.0
      %1154 = vmatprep.subr.mxu0 0.0
      %1155 = vmatpush1.msra.mxu0 0.0
      %1156 = vmatprep.subr.mxu0 0.0
      %1157 = vmatpush1.msra.mxu0 0.0
      %1158 = vmatprep.subr.mxu0 0.0
      %1159 = vmatpush1.msra.mxu0 0.0
      %1160 = vmatprep.subr.mxu0 0.0
      %1161 = vmatpush1.msra.mxu0 0.0
      %1162 = vmatprep.subr.mxu0 0.0
      %1163 = vmatpush1.msra.mxu0 0.0
      %1164 = vmatprep.subr.mxu0 0.0
      %1165 = vmatpush1.msra.mxu0 0.0
      %1166 = vmatprep.subr.mxu0 0.0
      %1167 = vmatpush1.msra.mxu0 0.0
      %1168 = vmatprep.subr.mxu0 0.0
      %1169 = vmatpush1.msra.mxu0 0.0
      %1170 = vmatprep.subr.mxu0 0.0
      %1171 = vmatpush1.msra.mxu0 0.0
      %1172 = vmatprep.subr.mxu0 0.0
      %1173 = vmatpush1.msra.mxu0 0.0
      %1174 = vmatprep.subr.mxu0 0.0
      %1175 = vmatpush1.msra.mxu0 0.0
      %1176 = vmatprep.subr.mxu0 0.0
      %1177 = vmatpush1.msra.mxu0 0.0
      %1178 = vmatprep.subr.mxu0 0.0
      %1179 = vmatpush1.msra.mxu0 0.0
      %1180 = vmatprep.subr.mxu0 0.0
      %1181 = vmatpush1.msra.mxu0 0.0
      %1182 = vmatprep.subr.mxu0 0.0
      %1183 = vmatpush1.msra.mxu0 0.0
      %1184 = vmatprep.subr.mxu0 0.0
      %1185 = vmatpush1.msra.mxu0 0.0
      %1186 = vmatprep.subr.mxu0 0.0
      %1187 = vmatpush1.msra.mxu0 0.0
      %1188 = vmatprep.mubr.f32.mxu0 0.0
      %1189 = vmatmul.mubr.f32.gmra.mrb[0].mxu0 %v1052
      %v1190 = vpop.f32.mrb[0].mxu0
      %v1191 = vadd.f32 0.0, %v1190
      %v1192 = vpop.f32.mrb[0].mxu0
      %1193 = vdwg.mxu0
      %v1194 = vmax.f32 %v1121, %v1191
      %1196 = vrot.lane.b32.xlu0 %v1194, 20
      %v1197 = vpop.permute.xlu0 %1196
      %vm1199 = vcmask 244896
      %1200 = vst.msk [vmem:[%s343] sm:$0xff] %vm1199, %v1197
      %v1201 = vld [vmem:[%s339] sm:$0xff]
      %1203 = vrot.lane.b32.xlu0 %v1201, 110
      %v1204 = vpop.permute.xlu0 %1203
      %v1206 = vmax.f32 %v1201, %v1204
      %1208 = vrot.lane.b32.xlu0 %v1206, 38
      %v1209 = vpop.permute.xlu0 %1208
      %v1210 = vsel %vm886, %v1209, 0
      %1212 = vmatprep.subr.mxu0 0.0
      %1213 = vmatpush1.msra.mxu0 %v871
      %1214 = vmatprep.subr.mxu0 0.0
      %1215 = vmatpush1.msra.mxu0 %v872
      %1216 = vmatprep.subr.mxu0 0.0
      %1217 = vmatpush1.msra.mxu0 %v891
      %1218 = vmatprep.subr.mxu0 0.0
      %1219 = vmatpush1.msra.mxu0 0.0
      %1220 = vmatprep.subr.mxu0 0.0
      %1221 = vmatpush1.msra.mxu0 0.0
      %1222 = vmatprep.subr.mxu0 0.0
      %1223 = vmatpush1.msra.mxu0 0.0
      %1224 = vmatprep.subr.mxu0 0.0
      %1225 = vmatpush1.msra.mxu0 0.0
      %1226 = vmatprep.subr.mxu0 0.0
      %1227 = vmatpush1.msra.mxu0 0.0
      %1228 = vmatprep.subr.mxu0 0.0
      %1229 = vmatpush1.msra.mxu0 0.0
      %1230 = vmatprep.subr.mxu0 0.0
      %1231 = vmatpush1.msra.mxu0 0.0
      %1232 = vmatprep.subr.mxu0 0.0
      %1233 = vmatpush1.msra.mxu0 0.0
      %1234 = vmatprep.subr.mxu0 0.0
      %1235 = vmatpush1.msra.mxu0 0.0
      %1236 = vmatprep.subr.mxu0 0.0
      %1237 = vmatpush1.msra.mxu0 0.0
      %1238 = vmatprep.subr.mxu0 0.0
      %1239 = vmatpush1.msra.mxu0 0.0
      %1240 = vmatprep.subr.mxu0 0.0
      %1241 = vmatpush1.msra.mxu0 0.0
      %1242 = vmatprep.subr.mxu0 0.0
      %1243 = vmatpush1.msra.mxu0 0.0
      %1244 = vmatprep.subr.mxu0 0.0
      %1245 = vmatpush1.msra.mxu0 0.0
      %1246 = vmatprep.subr.mxu0 0.0
      %1247 = vmatpush1.msra.mxu0 0.0
      %1248 = vmatprep.subr.mxu0 0.0
      %1249 = vmatpush1.msra.mxu0 0.0
      %1250 = vmatprep.subr.mxu0 0.0
      %1251 = vmatpush1.msra.mxu0 0.0
      %1252 = vmatprep.subr.mxu0 0.0
      %1253 = vmatpush1.msra.mxu0 0.0
      %1254 = vmatprep.subr.mxu0 0.0
      %1255 = vmatpush1.msra.mxu0 0.0
      %1256 = vmatprep.subr.mxu0 0.0
      %1257 = vmatpush1.msra.mxu0 0.0
      %1258 = vmatprep.subr.mxu0 0.0
      %1259 = vmatpush1.msra.mxu0 0.0
      %1260 = vmatprep.subr.mxu0 0.0
      %1261 = vmatpush1.msra.mxu0 0.0
      %1262 = vmatprep.subr.mxu0 0.0
      %1263 = vmatpush1.msra.mxu0 0.0
      %1264 = vmatprep.subr.mxu0 0.0
      %1265 = vmatpush1.msra.mxu0 0.0
      %1266 = vmatprep.subr.mxu0 0.0
      %1267 = vmatpush1.msra.mxu0 0.0
      %1268 = vmatprep.subr.mxu0 0.0
      %1269 = vmatpush1.msra.mxu0 0.0
      %1270 = vmatprep.subr.mxu0 0.0
      %1271 = vmatpush1.msra.mxu0 0.0
      %1272 = vmatprep.subr.mxu0 0.0
      %1273 = vmatpush1.msra.mxu0 0.0
      %1274 = vmatprep.subr.mxu0 0.0
      %1275 = vmatpush1.msra.mxu0 0.0
      %1276 = vmatprep.mubr.f32.mxu0 0.0
      %1277 = vmatmul.mubr.f32.gmra.mrb[0].mxu0 %v1210
      %v1278 = vpop.f32.mrb[0].mxu0
      %v1279 = vadd.f32 0.0, %v1278
      %v1280 = vpop.f32.mrb[0].mxu0
      %1281 = vdwg.mxu0
      %1282 = vmatprep.subr.mxu0 0.0
      %1283 = vmatpush1.msra.mxu0 %v874
      %1284 = vmatprep.subr.mxu0 0.0
      %1285 = vmatpush1.msra.mxu0 %v875
      %1286 = vmatprep.subr.mxu0 0.0
      %1287 = vmatpush1.msra.mxu0 %v964
      %1288 = vmatprep.subr.mxu0 0.0
      %1289 = vmatpush1.msra.mxu0 0.0
      %1290 = vmatprep.subr.mxu0 0.0
      %1291 = vmatpush1.msra.mxu0 0.0
      %1292 = vmatprep.subr.mxu0 0.0
      %1293 = vmatpush1.msra.mxu0 0.0
      %1294 = vmatprep.subr.mxu0 0.0
      %1295 = vmatpush1.msra.mxu0 0.0
      %1296 = vmatprep.subr.mxu0 0.0
      %1297 = vmatpush1.msra.mxu0 0.0
      %1298 = vmatprep.subr.mxu0 0.0
      %1299 = vmatpush1.msra.mxu0 0.0
      %1300 = vmatprep.subr.mxu0 0.0
      %1301 = vmatpush1.msra.mxu0 0.0
      %1302 = vmatprep.subr.mxu0 0.0
      %1303 = vmatpush1.msra.mxu0 0.0
      %1304 = vmatprep.subr.mxu0 0.0
      %1305 = vmatpush1.msra.mxu0 0.0
      %1306 = vmatprep.subr.mxu0 0.0
      %1307 = vmatpush1.msra.mxu0 0.0
      %1308 = vmatprep.subr.mxu0 0.0
      %1309 = vmatpush1.msra.mxu0 0.0
      %1310 = vmatprep.subr.mxu0 0.0
      %1311 = vmatpush1.msra.mxu0 0.0
      %1312 = vmatprep.subr.mxu0 0.0
      %1313 = vmatpush1.msra.mxu0 0.0
      %1314 = vmatprep.subr.mxu0 0.0
      %1315 = vmatpush1.msra.mxu0 0.0
      %1316 = vmatprep.subr.mxu0 0.0
      %1317 = vmatpush1.msra.mxu0 0.0
      %1318 = vmatprep.subr.mxu0 0.0
      %1319 = vmatpush1.msra.mxu0 0.0
      %1320 = vmatprep.subr.mxu0 0.0
      %1321 = vmatpush1.msra.mxu0 0.0
      %1322 = vmatprep.subr.mxu0 0.0
      %1323 = vmatpush1.msra.mxu0 0.0
      %1324 = vmatprep.subr.mxu0 0.0
      %1325 = vmatpush1.msra.mxu0 0.0
      %1326 = vmatprep.subr.mxu0 0.0
      %1327 = vmatpush1.msra.mxu0 0.0
      %1328 = vmatprep.subr.mxu0 0.0
      %1329 = vmatpush1.msra.mxu0 0.0
      %1330 = vmatprep.subr.mxu0 0.0
      %1331 = vmatpush1.msra.mxu0 0.0
      %1332 = vmatprep.subr.mxu0 0.0
      %1333 = vmatpush1.msra.mxu0 0.0
      %1334 = vmatprep.subr.mxu0 0.0
      %1335 = vmatpush1.msra.mxu0 0.0
      %1336 = vmatprep.subr.mxu0 0.0
      %1337 = vmatpush1.msra.mxu0 0.0
      %1338 = vmatprep.subr.mxu0 0.0
      %1339 = vmatpush1.msra.mxu0 0.0
      %1340 = vmatprep.subr.mxu0 0.0
      %1341 = vmatpush1.msra.mxu0 0.0
      %1342 = vmatprep.subr.mxu0 0.0
      %1343 = vmatpush1.msra.mxu0 0.0
      %1344 = vmatprep.subr.mxu0 0.0
      %1345 = vmatpush1.msra.mxu0 0.0
      %1346 = vmatprep.mubr.f32.mxu0 0.0
      %1347 = vmatmul.mubr.f32.gmra.mrb[0].mxu0 %v1210
      %v1348 = vpop.f32.mrb[0].mxu0
      %v1349 = vadd.f32 0.0, %v1348
      %v1350 = vpop.f32.mrb[0].mxu0
      %1351 = vdwg.mxu0
      %v1352 = vmax.f32 %v1279, %v1349
      %1354 = vrot.lane.b32.xlu0 %v1352, 30
      %v1355 = vpop.permute.xlu0 %1354
      %vm1357 = vcmask 326896
      %1358 = vst.msk [vmem:[%s343] sm:$0xff] %vm1357, %v1355
      %v1359 = vld [vmem:[%s339] sm:$0xff]
      %v1360 = vld [vmem:[%s339 + $0x8] sm:$0xff]
      %1362 = vrot.lane.b32.xlu0 %v1360, 110
      %v1363 = vpop.permute.xlu0 %1362
      %v1365 = vmax.f32 %v1359, %v1363
      %v1366 = vmax.f32 %v1360, %v1363
      %1369 = vrot.lane.b32.xlu0 %v1365, 2
      %v1370 = vpop.permute.xlu0 %1369
      %1371 = vrot.lane.b32.xlu0 %v1366, 2
      %v1372 = vpop.permute.xlu0 %1371
      %vm1373 = vcmask 15360
      %v1374 = vsel %vm1373, %v1370, %v1372
      %v1375 = vsel %vm886, %v1374, 0
      %1377 = vmatprep.subr.mxu0 0.0
      %1378 = vmatpush1.msra.mxu0 %v871
      %1379 = vmatprep.subr.mxu0 0.0
      %1380 = vmatpush1.msra.mxu0 %v872
      %1381 = vmatprep.subr.mxu0 0.0
      %1382 = vmatpush1.msra.mxu0 %v891
      %1383 = vmatprep.subr.mxu0 0.0
      %1384 = vmatpush1.msra.mxu0 0.0
      %1385 = vmatprep.subr.mxu0 0.0
      %1386 = vmatpush1.msra.mxu0 0.0
      %1387 = vmatprep.subr.mxu0 0.0
      %1388 = vmatpush1.msra.mxu0 0.0
      %1389 = vmatprep.subr.mxu0 0.0
      %1390 = vmatpush1.msra.mxu0 0.0
      %1391 = vmatprep.subr.mxu0 0.0
      %1392 = vmatpush1.msra.mxu0 0.0
      %1393 = vmatprep.subr.mxu0 0.0
      %1394 = vmatpush1.msra.mxu0 0.0
      %1395 = vmatprep.subr.mxu0 0.0
      %1396 = vmatpush1.msra.mxu0 0.0
      %1397 = vmatprep.subr.mxu0 0.0
      %1398 = vmatpush1.msra.mxu0 0.0
      %1399 = vmatprep.subr.mxu0 0.0
      %1400 = vmatpush1.msra.mxu0 0.0
      %1401 = vmatprep.subr.mxu0 0.0
      %1402 = vmatpush1.msra.mxu0 0.0
      %1403 = vmatprep.subr.mxu0 0.0
      %1404 = vmatpush1.msra.mxu0 0.0
      %1405 = vmatprep.subr.mxu0 0.0
      %1406 = vmatpush1.msra.mxu0 0.0
      %1407 = vmatprep.subr.mxu0 0.0
      %1408 = vmatpush1.msra.mxu0 0.0
      %1409 = vmatprep.subr.mxu0 0.0
      %1410 = vmatpush1.msra.mxu0 0.0
      %1411 = vmatprep.subr.mxu0 0.0
      %1412 = vmatpush1.msra.mxu0 0.0
      %1413 = vmatprep.subr.mxu0 0.0
      %1414 = vmatpush1.msra.mxu0 0.0
      %1415 = vmatprep.subr.mxu0 0.0
      %1416 = vmatpush1.msra.mxu0 0.0
      %1417 = vmatprep.subr.mxu0 0.0
      %1418 = vmatpush1.msra.mxu0 0.0
      %1419 = vmatprep.subr.mxu0 0.0
      %1420 = vmatpush1.msra.mxu0 0.0
      %1421 = vmatprep.subr.mxu0 0.0
      %1422 = vmatpush1.msra.mxu0 0.0
      %1423 = vmatprep.subr.mxu0 0.0
      %1424 = vmatpush1.msra.mxu0 0.0
      %1425 = vmatprep.subr.mxu0 0.0
      %1426 = vmatpush1.msra.mxu0 0.0
      %1427 = vmatprep.subr.mxu0 0.0
      %1428 = vmatpush1.msra.mxu0 0.0
      %1429 = vmatprep.subr.mxu0 0.0
      %1430 = vmatpush1.msra.mxu0 0.0
      %1431 = vmatprep.subr.mxu0 0.0
      %1432 = vmatpush1.msra.mxu0 0.0
      %1433 = vmatprep.subr.mxu0 0.0
      %1434 = vmatpush1.msra.mxu0 0.0
      %1435 = vmatprep.subr.mxu0 0.0
      %1436 = vmatpush1.msra.mxu0 0.0
      %1437 = vmatprep.subr.mxu0 0.0
      %1438 = vmatpush1.msra.mxu0 0.0
      %1439 = vmatprep.subr.mxu0 0.0
      %1440 = vmatpush1.msra.mxu0 0.0
      %1441 = vmatprep.mubr.f32.mxu0 0.0
      %1442 = vmatmul.mubr.f32.gmra.mrb[0].mxu0 %v1375
      %v1443 = vpop.f32.mrb[0].mxu0
      %v1444 = vadd.f32 0.0, %v1443
      %v1445 = vpop.f32.mrb[0].mxu0
      %1446 = vdwg.mxu0
      %1447 = vmatprep.subr.mxu0 0.0
      %1448 = vmatpush1.msra.mxu0 %v874
      %1449 = vmatprep.subr.mxu0 0.0
      %1450 = vmatpush1.msra.mxu0 %v875
      %1451 = vmatprep.subr.mxu0 0.0
      %1452 = vmatpush1.msra.mxu0 %v964
      %1453 = vmatprep.subr.mxu0 0.0
      %1454 = vmatpush1.msra.mxu0 0.0
      %1455 = vmatprep.subr.mxu0 0.0
      %1456 = vmatpush1.msra.mxu0 0.0
      %1457 = vmatprep.subr.mxu0 0.0
      %1458 = vmatpush1.msra.mxu0 0.0
      %1459 = vmatprep.subr.mxu0 0.0
      %1460 = vmatpush1.msra.mxu0 0.0
      %1461 = vmatprep.subr.mxu0 0.0
      %1462 = vmatpush1.msra.mxu0 0.0
      %1463 = vmatprep.subr.mxu0 0.0
      %1464 = vmatpush1.msra.mxu0 0.0
      %1465 = vmatprep.subr.mxu0 0.0
      %1466 = vmatpush1.msra.mxu0 0.0
      %1467 = vmatprep.subr.mxu0 0.0
      %1468 = vmatpush1.msra.mxu0 0.0
      %1469 = vmatprep.subr.mxu0 0.0
      %1470 = vmatpush1.msra.mxu0 0.0
      %1471 = vmatprep.subr.mxu0 0.0
      %1472 = vmatpush1.msra.mxu0 0.0
      %1473 = vmatprep.subr.mxu0 0.0
      %1474 = vmatpush1.msra.mxu0 0.0
      %1475 = vmatprep.subr.mxu0 0.0
      %1476 = vmatpush1.msra.mxu0 0.0
      %1477 = vmatprep.subr.mxu0 0.0
      %1478 = vmatpush1.msra.mxu0 0.0
      %1479 = vmatprep.subr.mxu0 0.0
      %1480 = vmatpush1.msra.mxu0 0.0
      %1481 = vmatprep.subr.mxu0 0.0
      %1482 = vmatpush1.msra.mxu0 0.0
      %1483 = vmatprep.subr.mxu0 0.0
      %1484 = vmatpush1.msra.mxu0 0.0
      %1485 = vmatprep.subr.mxu0 0.0
      %1486 = vmatpush1.msra.mxu0 0.0
      %1487 = vmatprep.subr.mxu0 0.0
      %1488 = vmatpush1.msra.mxu0 0.0
      %1489 = vmatprep.subr.mxu0 0.0
      %1490 = vmatpush1.msra.mxu0 0.0
      %1491 = vmatprep.subr.mxu0 0.0
      %1492 = vmatpush1.msra.mxu0 0.0
      %1493 = vmatprep.subr.mxu0 0.0
      %1494 = vmatpush1.msra.mxu0 0.0
      %1495 = vmatprep.subr.mxu0 0.0
      %1496 = vmatpush1.msra.mxu0 0.0
      %1497 = vmatprep.subr.mxu0 0.0
      %1498 = vmatpush1.msra.mxu0 0.0
      %1499 = vmatprep.subr.mxu0 0.0
      %1500 = vmatpush1.msra.mxu0 0.0
      %1501 = vmatprep.subr.mxu0 0.0
      %1502 = vmatpush1.msra.mxu0 0.0
      %1503 = vmatprep.subr.mxu0 0.0
      %1504 = vmatpush1.msra.mxu0 0.0
      %1505 = vmatprep.subr.mxu0 0.0
      %1506 = vmatpush1.msra.mxu0 0.0
      %1507 = vmatprep.subr.mxu0 0.0
      %1508 = vmatpush1.msra.mxu0 0.0
      %1509 = vmatprep.subr.mxu0 0.0
      %1510 = vmatpush1.msra.mxu0 0.0
      %1511 = vmatprep.mubr.f32.mxu0 0.0
      %1512 = vmatmul.mubr.f32.gmra.mrb[0].mxu0 %v1375
      %v1513 = vpop.f32.mrb[0].mxu0
      %v1514 = vadd.f32 0.0, %v1513
      %v1515 = vpop.f32.mrb[0].mxu0
      %1516 = vdwg.mxu0
      %v1517 = vmax.f32 %v1444, %v1514
      %1519 = vrot.lane.b32.xlu0 %v1517, 40
      %v1520 = vpop.permute.xlu0 %1519
      %vm1522 = vcmask 408896
      %1523 = vst.msk [vmem:[%s343] sm:$0xff] %vm1522, %v1520
      %v1524 = vld [vmem:[%s339 + $0x8] sm:$0xff]
      %1526 = vrot.lane.b32.xlu0 %v1524, 110
      %v1527 = vpop.permute.xlu0 %1526
      %v1529 = vmax.f32 %v1524, %v1527
      %1531 = vrot.lane.b32.xlu0 %v1529, 94
      %v1532 = vpop.permute.xlu0 %1531
      %v1533 = vsel %vm886, %v1532, 0
      %1535 = vmatprep.subr.mxu0 0.0
      %1536 = vmatpush1.msra.mxu0 %v871
      %1537 = vmatprep.subr.mxu0 0.0
      %1538 = vmatpush1.msra.mxu0 %v872
      %1539 = vmatprep.subr.mxu0 0.0
      %1540 = vmatpush1.msra.mxu0 %v891
      %1541 = vmatprep.subr.mxu0 0.0
      %1542 = vmatpush1.msra.mxu0 0.0
      %1543 = vmatprep.subr.mxu0 0.0
      %1544 = vmatpush1.msra.mxu0 0.0
      %1545 = vmatprep.subr.mxu0 0.0
      %1546 = vmatpush1.msra.mxu0 0.0
      %1547 = vmatprep.subr.mxu0 0.0
      %1548 = vmatpush1.msra.mxu0 0.0
      %1549 = vmatprep.subr.mxu0 0.0
      %1550 = vmatpush1.msra.mxu0 0.0
      %1551 = vmatprep.subr.mxu0 0.0
      %1552 = vmatpush1.msra.mxu0 0.0
      %1553 = vmatprep.subr.mxu0 0.0
      %1554 = vmatpush1.msra.mxu0 0.0
      %1555 = vmatprep.subr.mxu0 0.0
      %1556 = vmatpush1.msra.mxu0 0.0
      %1557 = vmatprep.subr.mxu0 0.0
      %1558 = vmatpush1.msra.mxu0 0.0
      %1559 = vmatprep.subr.mxu0 0.0
      %1560 = vmatpush1.msra.mxu0 0.0
      %1561 = vmatprep.subr.mxu0 0.0
      %1562 = vmatpush1.msra.mxu0 0.0
      %1563 = vmatprep.subr.mxu0 0.0
      %1564 = vmatpush1.msra.mxu0 0.0
      %1565 = vmatprep.subr.mxu0 0.0
      %1566 = vmatpush1.msra.mxu0 0.0
      %1567 = vmatprep.subr.mxu0 0.0
      %1568 = vmatpush1.msra.mxu0 0.0
      %1569 = vmatprep.subr.mxu0 0.0
      %1570 = vmatpush1.msra.mxu0 0.0
      %1571 = vmatprep.subr.mxu0 0.0
      %1572 = vmatpush1.msra.mxu0 0.0
      %1573 = vmatprep.subr.mxu0 0.0
      %1574 = vmatpush1.msra.mxu0 0.0
      %1575 = vmatprep.subr.mxu0 0.0
      %1576 = vmatpush1.msra.mxu0 0.0
      %1577 = vmatprep.subr.mxu0 0.0
      %1578 = vmatpush1.msra.mxu0 0.0
      %1579 = vmatprep.subr.mxu0 0.0
      %1580 = vmatpush1.msra.mxu0 0.0
      %1581 = vmatprep.subr.mxu0 0.0
      %1582 = vmatpush1.msra.mxu0 0.0
      %1583 = vmatprep.subr.mxu0 0.0
      %1584 = vmatpush1.msra.mxu0 0.0
      %1585 = vmatprep.subr.mxu0 0.0
      %1586 = vmatpush1.msra.mxu0 0.0
      %1587 = vmatprep.subr.mxu0 0.0
      %1588 = vmatpush1.msra.mxu0 0.0
      %1589 = vmatprep.subr.mxu0 0.0
      %1590 = vmatpush1.msra.mxu0 0.0
      %1591 = vmatprep.subr.mxu0 0.0
      %1592 = vmatpush1.msra.mxu0 0.0
      %1593 = vmatprep.subr.mxu0 0.0
      %1594 = vmatpush1.msra.mxu0 0.0
      %1595 = vmatprep.subr.mxu0 0.0
      %1596 = vmatpush1.msra.mxu0 0.0
      %1597 = vmatprep.subr.mxu0 0.0
      %1598 = vmatpush1.msra.mxu0 0.0
      %1599 = vmatprep.mubr.f32.mxu0 0.0
      %1600 = vmatmul.mubr.f32.gmra.mrb[0].mxu0 %v1533
      %v1601 = vpop.f32.mrb[0].mxu0
      %v1602 = vadd.f32 0.0, %v1601
      %v1603 = vpop.f32.mrb[0].mxu0
      %1604 = vdwg.mxu0
      %1605 = vmatprep.subr.mxu0 0.0
      %1606 = vmatpush1.msra.mxu0 %v874
      %1607 = vmatprep.subr.mxu0 0.0
      %1608 = vmatpush1.msra.mxu0 %v875
      %1609 = vmatprep.subr.mxu0 0.0
      %1610 = vmatpush1.msra.mxu0 %v964
      %1611 = vmatprep.subr.mxu0 0.0
      %1612 = vmatpush1.msra.mxu0 0.0
      %1613 = vmatprep.subr.mxu0 0.0
      %1614 = vmatpush1.msra.mxu0 0.0
      %1615 = vmatprep.subr.mxu0 0.0
      %1616 = vmatpush1.msra.mxu0 0.0
      %1617 = vmatprep.subr.mxu0 0.0
      %1618 = vmatpush1.msra.mxu0 0.0
      %1619 = vmatprep.subr.mxu0 0.0
      %1620 = vmatpush1.msra.mxu0 0.0
      %1621 = vmatprep.subr.mxu0 0.0
      %1622 = vmatpush1.msra.mxu0 0.0
      %1623 = vmatprep.subr.mxu0 0.0
      %1624 = vmatpush1.msra.mxu0 0.0
      %1625 = vmatprep.subr.mxu0 0.0
      %1626 = vmatpush1.msra.mxu0 0.0
      %1627 = vmatprep.subr.mxu0 0.0
      %1628 = vmatpush1.msra.mxu0 0.0
      %1629 = vmatprep.subr.mxu0 0.0
      %1630 = vmatpush1.msra.mxu0 0.0
      %1631 = vmatprep.subr.mxu0 0.0
      %1632 = vmatpush1.msra.mxu0 0.0
      %1633 = vmatprep.subr.mxu0 0.0
      %1634 = vmatpush1.msra.mxu0 0.0
      %1635 = vmatprep.subr.mxu0 0.0
      %1636 = vmatpush1.msra.mxu0 0.0
      %1637 = vmatprep.subr.mxu0 0.0
      %1638 = vmatpush1.msra.mxu0 0.0
      %1639 = vmatprep.subr.mxu0 0.0
      %1640 = vmatpush1.msra.mxu0 0.0
      %1641 = vmatprep.subr.mxu0 0.0
      %1642 = vmatpush1.msra.mxu0 0.0
      %1643 = vmatprep.subr.mxu0 0.0
      %1644 = vmatpush1.msra.mxu0 0.0
      %1645 = vmatprep.subr.mxu0 0.0
      %1646 = vmatpush1.msra.mxu0 0.0
      %1647 = vmatprep.subr.mxu0 0.0
      %1648 = vmatpush1.msra.mxu0 0.0
      %1649 = vmatprep.subr.mxu0 0.0
      %1650 = vmatpush1.msra.mxu0 0.0
      %1651 = vmatprep.subr.mxu0 0.0
      %1652 = vmatpush1.msra.mxu0 0.0
      %1653 = vmatprep.subr.mxu0 0.0
      %1654 = vmatpush1.msra.mxu0 0.0
      %1655 = vmatprep.subr.mxu0 0.0
      %1656 = vmatpush1.msra.mxu0 0.0
      %1657 = vmatprep.subr.mxu0 0.0
      %1658 = vmatpush1.msra.mxu0 0.0
      %1659 = vmatprep.subr.mxu0 0.0
      %1660 = vmatpush1.msra.mxu0 0.0
      %1661 = vmatprep.subr.mxu0 0.0
      %1662 = vmatpush1.msra.mxu0 0.0
      %1663 = vmatprep.subr.mxu0 0.0
      %1664 = vmatpush1.msra.mxu0 0.0
      %1665 = vmatprep.subr.mxu0 0.0
      %1666 = vmatpush1.msra.mxu0 0.0
      %1667 = vmatprep.subr.mxu0 0.0
      %1668 = vmatpush1.msra.mxu0 0.0
      %1669 = vmatprep.mubr.f32.mxu0 0.0
      %1670 = vmatmul.mubr.f32.gmra.mrb[0].mxu0 %v1533
      %v1671 = vpop.f32.mrb[0].mxu0
      %v1672 = vadd.f32 0.0, %v1671
      %v1673 = vpop.f32.mrb[0].mxu0
      %1674 = vdwg.mxu0
      %v1675 = vmax.f32 %v1602, %v1672
      %1677 = vrot.lane.b32.xlu0 %v1675, 50
      %v1678 = vpop.permute.xlu0 %1677
      %vm1680 = vcmask 490896
      %1681 = vst.msk [vmem:[%s343] sm:$0xff] %vm1680, %v1678
      %v1682 = vld [vmem:[%s339 + $0x8] sm:$0xff]
      %1684 = vrot.lane.b32.xlu0 %v1682, 110
      %v1685 = vpop.permute.xlu0 %1684
      %v1687 = vmax.f32 %v1682, %v1685
      %1689 = vrot.lane.b32.xlu0 %v1687, 58
      %v1690 = vpop.permute.xlu0 %1689
      %v1691 = vsel %vm886, %v1690, 0
      %1693 = vmatprep.subr.mxu0 0.0
      %1694 = vmatpush1.msra.mxu0 %v871
      %1695 = vmatprep.subr.mxu0 0.0
      %1696 = vmatpush1.msra.mxu0 %v872
      %1697 = vmatprep.subr.mxu0 0.0
      %1698 = vmatpush1.msra.mxu0 %v891
      %1699 = vmatprep.subr.mxu0 0.0
      %1700 = vmatpush1.msra.mxu0 0.0
      %1701 = vmatprep.subr.mxu0 0.0
      %1702 = vmatpush1.msra.mxu0 0.0
      %1703 = vmatprep.subr.mxu0 0.0
      %1704 = vmatpush1.msra.mxu0 0.0
      %1705 = vmatprep.subr.mxu0 0.0
      %1706 = vmatpush1.msra.mxu0 0.0
      %1707 = vmatprep.subr.mxu0 0.0
      %1708 = vmatpush1.msra.mxu0 0.0
      %1709 = vmatprep.subr.mxu0 0.0
      %1710 = vmatpush1.msra.mxu0 0.0
      %1711 = vmatprep.subr.mxu0 0.0
      %1712 = vmatpush1.msra.mxu0 0.0
      %1713 = vmatprep.subr.mxu0 0.0
      %1714 = vmatpush1.msra.mxu0 0.0
      %1715 = vmatprep.subr.mxu0 0.0
      %1716 = vmatpush1.msra.mxu0 0.0
      %1717 = vmatprep.subr.mxu0 0.0
      %1718 = vmatpush1.msra.mxu0 0.0
      %1719 = vmatprep.subr.mxu0 0.0
      %1720 = vmatpush1.msra.mxu0 0.0
      %1721 = vmatprep.subr.mxu0 0.0
      %1722 = vmatpush1.msra.mxu0 0.0
      %1723 = vmatprep.subr.mxu0 0.0
      %1724 = vmatpush1.msra.mxu0 0.0
      %1725 = vmatprep.subr.mxu0 0.0
      %1726 = vmatpush1.msra.mxu0 0.0
      %1727 = vmatprep.subr.mxu0 0.0
      %1728 = vmatpush1.msra.mxu0 0.0
      %1729 = vmatprep.subr.mxu0 0.0
      %1730 = vmatpush1.msra.mxu0 0.0
      %1731 = vmatprep.subr.mxu0 0.0
      %1732 = vmatpush1.msra.mxu0 0.0
      %1733 = vmatprep.subr.mxu0 0.0
      %1734 = vmatpush1.msra.mxu0 0.0
      %1735 = vmatprep.subr.mxu0 0.0
      %1736 = vmatpush1.msra.mxu0 0.0
      %1737 = vmatprep.subr.mxu0 0.0
      %1738 = vmatpush1.msra.mxu0 0.0
      %1739 = vmatprep.subr.mxu0 0.0
      %1740 = vmatpush1.msra.mxu0 0.0
      %1741 = vmatprep.subr.mxu0 0.0
      %1742 = vmatpush1.msra.mxu0 0.0
      %1743 = vmatprep.subr.mxu0 0.0
      %1744 = vmatpush1.msra.mxu0 0.0
      %1745 = vmatprep.subr.mxu0 0.0
      %1746 = vmatpush1.msra.mxu0 0.0
      %1747 = vmatprep.subr.mxu0 0.0
      %1748 = vmatpush1.msra.mxu0 0.0
      %1749 = vmatprep.subr.mxu0 0.0
      %1750 = vmatpush1.msra.mxu0 0.0
      %1751 = vmatprep.subr.mxu0 0.0
      %1752 = vmatpush1.msra.mxu0 0.0
      %1753 = vmatprep.subr.mxu0 0.0
      %1754 = vmatpush1.msra.mxu0 0.0
      %1755 = vmatprep.subr.mxu0 0.0
      %1756 = vmatpush1.msra.mxu0 0.0
      %1757 = vmatprep.mubr.f32.mxu0 0.0
      %1758 = vmatmul.mubr.f32.gmra.mrb[0].mxu0 %v1691
      %v1759 = vpop.f32.mrb[0].mxu0
      %v1760 = vadd.f32 0.0, %v1759
      %v1761 = vpop.f32.mrb[0].mxu0
      %1762 = vdwg.mxu0
      %1763 = vmatprep.subr.mxu0 0.0
      %1764 = vmatpush1.msra.mxu0 %v874
      %1765 = vmatprep.subr.mxu0 0.0
      %1766 = vmatpush1.msra.mxu0 %v875
      %1767 = vmatprep.subr.mxu0 0.0
      %1768 = vmatpush1.msra.mxu0 %v964
      %1769 = vmatprep.subr.mxu0 0.0
      %1770 = vmatpush1.msra.mxu0 0.0
      %1771 = vmatprep.subr.mxu0 0.0
      %1772 = vmatpush1.msra.mxu0 0.0
      %1773 = vmatprep.subr.mxu0 0.0
      %1774 = vmatpush1.msra.mxu0 0.0
      %1775 = vmatprep.subr.mxu0 0.0
      %1776 = vmatpush1.msra.mxu0 0.0
      %1777 = vmatprep.subr.mxu0 0.0
      %1778 = vmatpush1.msra.mxu0 0.0
      %1779 = vmatprep.subr.mxu0 0.0
      %1780 = vmatpush1.msra.mxu0 0.0
      %1781 = vmatprep.subr.mxu0 0.0
      %1782 = vmatpush1.msra.mxu0 0.0
      %1783 = vmatprep.subr.mxu0 0.0
      %1784 = vmatpush1.msra.mxu0 0.0
      %1785 = vmatprep.subr.mxu0 0.0
      %1786 = vmatpush1.msra.mxu0 0.0
      %1787 = vmatprep.subr.mxu0 0.0
      %1788 = vmatpush1.msra.mxu0 0.0
      %1789 = vmatprep.subr.mxu0 0.0
      %1790 = vmatpush1.msra.mxu0 0.0
      %1791 = vmatprep.subr.mxu0 0.0
      %1792 = vmatpush1.msra.mxu0 0.0
      %1793 = vmatprep.subr.mxu0 0.0
      %1794 = vmatpush1.msra.mxu0 0.0
      %1795 = vmatprep.subr.mxu0 0.0
      %1796 = vmatpush1.msra.mxu0 0.0
      %1797 = vmatprep.subr.mxu0 0.0
      %1798 = vmatpush1.msra.mxu0 0.0
      %1799 = vmatprep.subr.mxu0 0.0
      %1800 = vmatpush1.msra.mxu0 0.0
      %1801 = vmatprep.subr.mxu0 0.0
      %1802 = vmatpush1.msra.mxu0 0.0
      %1803 = vmatprep.subr.mxu0 0.0
      %1804 = vmatpush1.msra.mxu0 0.0
      %1805 = vmatprep.subr.mxu0 0.0
      %1806 = vmatpush1.msra.mxu0 0.0
      %1807 = vmatprep.subr.mxu0 0.0
      %1808 = vmatpush1.msra.mxu0 0.0
      %1809 = vmatprep.subr.mxu0 0.0
      %1810 = vmatpush1.msra.mxu0 0.0
      %1811 = vmatprep.subr.mxu0 0.0
      %1812 = vmatpush1.msra.mxu0 0.0
      %1813 = vmatprep.subr.mxu0 0.0
      %1814 = vmatpush1.msra.mxu0 0.0
      %1815 = vmatprep.subr.mxu0 0.0
      %1816 = vmatpush1.msra.mxu0 0.0
      %1817 = vmatprep.subr.mxu0 0.0
      %1818 = vmatpush1.msra.mxu0 0.0
      %1819 = vmatprep.subr.mxu0 0.0
      %1820 = vmatpush1.msra.mxu0 0.0
      %1821 = vmatprep.subr.mxu0 0.0
      %1822 = vmatpush1.msra.mxu0 0.0
      %1823 = vmatprep.subr.mxu0 0.0
      %1824 = vmatpush1.msra.mxu0 0.0
      %1825 = vmatprep.subr.mxu0 0.0
      %1826 = vmatpush1.msra.mxu0 0.0
      %1827 = vmatprep.mubr.f32.mxu0 0.0
      %1828 = vmatmul.mubr.f32.gmra.mrb[0].mxu0 %v1691
      %v1829 = vpop.f32.mrb[0].mxu0
      %v1830 = vadd.f32 0.0, %v1829
      %v1831 = vpop.f32.mrb[0].mxu0
      %1832 = vdwg.mxu0
      %v1833 = vmax.f32 %v1760, %v1830
      %1835 = vrot.lane.b32.xlu0 %v1833, 60
      %v1836 = vpop.permute.xlu0 %1835
      %vm1838 = vcmask 572896
      %1839 = vst.msk [vmem:[%s343] sm:$0xff] %vm1838, %v1836
      %v1840 = vld [vmem:[%s339 + $0x8] sm:$0xff]
      %v1841 = vld [vmem:[%s339 + $0x8] sm:$0xff]
      %v1842 = vld [vmem:[%s339 + $0x10] sm:$0xff]
      %1845 = vrot.lane.b32.xlu0 %v1841, 110
      %v1846 = vpop.permute.xlu0 %1845
      %1847 = vrot.lane.b32.xlu0 %v1842, 110
      %v1848 = vpop.permute.xlu0 %1847
      %vm1849 = vcmask 900096
      %v1850 = vsel %vm1849, %v1846, %v1848
      %v1852 = vmax.f32 %v1840, %v1850
      %1854 = vrot.lane.b32.xlu0 %v1852, 22
      %v1855 = vpop.permute.xlu0 %1854
      %v1856 = vsel %vm886, %v1855, 0
      %1858 = vmatprep.subr.mxu0 0.0
      %1859 = vmatpush1.msra.mxu0 %v871
      %1860 = vmatprep.subr.mxu0 0.0
      %1861 = vmatpush1.msra.mxu0 %v872
      %1862 = vmatprep.subr.mxu0 0.0
      %1863 = vmatpush1.msra.mxu0 %v891
      %1864 = vmatprep.subr.mxu0 0.0
      %1865 = vmatpush1.msra.mxu0 0.0
      %1866 = vmatprep.subr.mxu0 0.0
      %1867 = vmatpush1.msra.mxu0 0.0
      %1868 = vmatprep.subr.mxu0 0.0
      %1869 = vmatpush1.msra.mxu0 0.0
      %1870 = vmatprep.subr.mxu0 0.0
      %1871 = vmatpush1.msra.mxu0 0.0
      %1872 = vmatprep.subr.mxu0 0.0
      %1873 = vmatpush1.msra.mxu0 0.0
      %1874 = vmatprep.subr.mxu0 0.0
      %1875 = vmatpush1.msra.mxu0 0.0
      %1876 = vmatprep.subr.mxu0 0.0
      %1877 = vmatpush1.msra.mxu0 0.0
      %1878 = vmatprep.subr.mxu0 0.0
      %1879 = vmatpush1.msra.mxu0 0.0
      %1880 = vmatprep.subr.mxu0 0.0
      %1881 = vmatpush1.msra.mxu0 0.0
      %1882 = vmatprep.subr.mxu0 0.0
      %1883 = vmatpush1.msra.mxu0 0.0
      %1884 = vmatprep.subr.mxu0 0.0
      %1885 = vmatpush1.msra.mxu0 0.0
      %1886 = vmatprep.subr.mxu0 0.0
      %1887 = vmatpush1.msra.mxu0 0.0
      %1888 = vmatprep.subr.mxu0 0.0
      %1889 = vmatpush1.msra.mxu0 0.0
      %1890 = vmatprep.subr.mxu0 0.0
      %1891 = vmatpush1.msra.mxu0 0.0
      %1892 = vmatprep.subr.mxu0 0.0
      %1893 = vmatpush1.msra.mxu0 0.0
      %1894 = vmatprep.subr.mxu0 0.0
      %1895 = vmatpush1.msra.mxu0 0.0
      %1896 = vmatprep.subr.mxu0 0.0
      %1897 = vmatpush1.msra.mxu0 0.0
      %1898 = vmatprep.subr.mxu0 0.0
      %1899 = vmatpush1.msra.mxu0 0.0
      %1900 = vmatprep.subr.mxu0 0.0
      %1901 = vmatpush1.msra.mxu0 0.0
      %1902 = vmatprep.subr.mxu0 0.0
      %1903 = vmatpush1.msra.mxu0 0.0
      %1904 = vmatprep.subr.mxu0 0.0
      %1905 = vmatpush1.msra.mxu0 0.0
      %1906 = vmatprep.subr.mxu0 0.0
      %1907 = vmatpush1.msra.mxu0 0.0
      %1908 = vmatprep.subr.mxu0 0.0
      %1909 = vmatpush1.msra.mxu0 0.0
      %1910 = vmatprep.subr.mxu0 0.0
      %1911 = vmatpush1.msra.mxu0 0.0
      %1912 = vmatprep.subr.mxu0 0.0
      %1913 = vmatpush1.msra.mxu0 0.0
      %1914 = vmatprep.subr.mxu0 0.0
      %1915 = vmatpush1.msra.mxu0 0.0
      %1916 = vmatprep.subr.mxu0 0.0
      %1917 = vmatpush1.msra.mxu0 0.0
      %1918 = vmatprep.subr.mxu0 0.0
      %1919 = vmatpush1.msra.mxu0 0.0
      %1920 = vmatprep.subr.mxu0 0.0
      %1921 = vmatpush1.msra.mxu0 0.0
      %1922 = vmatprep.mubr.f32.mxu0 0.0
      %1923 = vmatmul.mubr.f32.gmra.mrb[0].mxu0 %v1856
      %v1924 = vpop.f32.mrb[0].mxu0
      %v1925 = vadd.f32 0.0, %v1924
      %v1926 = vpop.f32.mrb[0].mxu0
      %1927 = vdwg.mxu0
      %1928 = vmatprep.subr.mxu0 0.0
      %1929 = vmatpush1.msra.mxu0 %v874
      %1930 = vmatprep.subr.mxu0 0.0
      %1931 = vmatpush1.msra.mxu0 %v875
      %1932 = vmatprep.subr.mxu0 0.0
      %1933 = vmatpush1.msra.mxu0 %v964
      %1934 = vmatprep.subr.mxu0 0.0
      %1935 = vmatpush1.msra.mxu0 0.0
      %1936 = vmatprep.subr.mxu0 0.0
      %1937 = vmatpush1.msra.mxu0 0.0
      %1938 = vmatprep.subr.mxu0 0.0
      %1939 = vmatpush1.msra.mxu0 0.0
      %1940 = vmatprep.subr.mxu0 0.0
      %1941 = vmatpush1.msra.mxu0 0.0
      %1942 = vmatprep.subr.mxu0 0.0
      %1943 = vmatpush1.msra.mxu0 0.0
      %1944 = vmatprep.subr.mxu0 0.0
      %1945 = vmatpush1.msra.mxu0 0.0
      %1946 = vmatprep.subr.mxu0 0.0
      %1947 = vmatpush1.msra.mxu0 0.0
      %1948 = vmatprep.subr.mxu0 0.0
      %1949 = vmatpush1.msra.mxu0 0.0
      %1950 = vmatprep.subr.mxu0 0.0
      %1951 = vmatpush1.msra.mxu0 0.0
      %1952 = vmatprep.subr.mxu0 0.0
      %1953 = vmatpush1.msra.mxu0 0.0
      %1954 = vmatprep.subr.mxu0 0.0
      %1955 = vmatpush1.msra.mxu0 0.0
      %1956 = vmatprep.subr.mxu0 0.0
      %1957 = vmatpush1.msra.mxu0 0.0
      %1958 = vmatprep.subr.mxu0 0.0
      %1959 = vmatpush1.msra.mxu0 0.0
      %1960 = vmatprep.subr.mxu0 0.0
      %1961 = vmatpush1.msra.mxu0 0.0
      %1962 = vmatprep.subr.mxu0 0.0
      %1963 = vmatpush1.msra.mxu0 0.0
      %1964 = vmatprep.subr.mxu0 0.0
      %1965 = vmatpush1.msra.mxu0 0.0
      %1966 = vmatprep.subr.mxu0 0.0
      %1967 = vmatpush1.msra.mxu0 0.0
      %1968 = vmatprep.subr.mxu0 0.0
      %1969 = vmatpush1.msra.mxu0 0.0
      %1970 = vmatprep.subr.mxu0 0.0
      %1971 = vmatpush1.msra.mxu0 0.0
      %1972 = vmatprep.subr.mxu0 0.0
      %1973 = vmatpush1.msra.mxu0 0.0
      %1974 = vmatprep.subr.mxu0 0.0
      %1975 = vmatpush1.msra.mxu0 0.0
      %1976 = vmatprep.subr.mxu0 0.0
      %1977 = vmatpush1.msra.mxu0 0.0
      %1978 = vmatprep.subr.mxu0 0.0
      %1979 = vmatpush1.msra.mxu0 0.0
      %1980 = vmatprep.subr.mxu0 0.0
      %1981 = vmatpush1.msra.mxu0 0.0
      %1982 = vmatprep.subr.mxu0 0.0
      %1983 = vmatpush1.msra.mxu0 0.0
      %1984 = vmatprep.subr.mxu0 0.0
      %1985 = vmatpush1.msra.mxu0 0.0
      %1986 = vmatprep.subr.mxu0 0.0
      %1987 = vmatpush1.msra.mxu0 0.0
      %1988 = vmatprep.subr.mxu0 0.0
      %1989 = vmatpush1.msra.mxu0 0.0
      %1990 = vmatprep.subr.mxu0 0.0
      %1991 = vmatpush1.msra.mxu0 0.0
      %1992 = vmatprep.mubr.f32.mxu0 0.0
      %1993 = vmatmul.mubr.f32.gmra.mrb[0].mxu0 %v1856
      %v1994 = vpop.f32.mrb[0].mxu0
      %v1995 = vadd.f32 0.0, %v1994
      %v1996 = vpop.f32.mrb[0].mxu0
      %1997 = vdwg.mxu0
      %v1998 = vmax.f32 %v1925, %v1995
      %2000 = vrot.lane.b32.xlu0 %v1998, 70
      %v2001 = vpop.permute.xlu0 %2000
      %vm2003 = vcmask 654896
      %2004 = vst.msk [vmem:[%s343] sm:$0xff] %vm2003, %v2001
      %v2005 = vld [vmem:[%s339 + $0x10] sm:$0xff]
      %2007 = vrot.lane.b32.xlu0 %v2005, 110
      %v2008 = vpop.permute.xlu0 %2007
      %v2010 = vmax.f32 %v2005, %v2008
      %2012 = vrot.lane.b32.xlu0 %v2010, 114
      %v2013 = vpop.permute.xlu0 %2012
      %v2014 = vsel %vm886, %v2013, 0
      %2016 = vmatprep.subr.mxu0 0.0
      %2017 = vmatpush1.msra.mxu0 %v871
      %2018 = vmatprep.subr.mxu0 0.0
      %2019 = vmatpush1.msra.mxu0 %v872
      %2020 = vmatprep.subr.mxu0 0.0
      %2021 = vmatpush1.msra.mxu0 %v891
      %2022 = vmatprep.subr.mxu0 0.0
      %2023 = vmatpush1.msra.mxu0 0.0
      %2024 = vmatprep.subr.mxu0 0.0
      %2025 = vmatpush1.msra.mxu0 0.0
      %2026 = vmatprep.subr.mxu0 0.0
      %2027 = vmatpush1.msra.mxu0 0.0
      %2028 = vmatprep.subr.mxu0 0.0
      %2029 = vmatpush1.msra.mxu0 0.0
      %2030 = vmatprep.subr.mxu0 0.0
      %2031 = vmatpush1.msra.mxu0 0.0
      %2032 = vmatprep.subr.mxu0 0.0
      %2033 = vmatpush1.msra.mxu0 0.0
      %2034 = vmatprep.subr.mxu0 0.0
      %2035 = vmatpush1.msra.mxu0 0.0
      %2036 = vmatprep.subr.mxu0 0.0
      %2037 = vmatpush1.msra.mxu0 0.0
      %2038 = vmatprep.subr.mxu0 0.0
      %2039 = vmatpush1.msra.mxu0 0.0
      %2040 = vmatprep.subr.mxu0 0.0
      %2041 = vmatpush1.msra.mxu0 0.0
      %2042 = vmatprep.subr.mxu0 0.0
      %2043 = vmatpush1.msra.mxu0 0.0
      %2044 = vmatprep.subr.mxu0 0.0
      %2045 = vmatpush1.msra.mxu0 0.0
      %2046 = vmatprep.subr.mxu0 0.0
      %2047 = vmatpush1.msra.mxu0 0.0
      %2048 = vmatprep.subr.mxu0 0.0
      %2049 = vmatpush1.msra.mxu0 0.0
      %2050 = vmatprep.subr.mxu0 0.0
      %2051 = vmatpush1.msra.mxu0 0.0
      %2052 = vmatprep.subr.mxu0 0.0
      %2053 = vmatpush1.msra.mxu0 0.0
      %2054 = vmatprep.subr.mxu0 0.0
      %2055 = vmatpush1.msra.mxu0 0.0
      %2056 = vmatprep.subr.mxu0 0.0
      %2057 = vmatpush1.msra.mxu0 0.0
      %2058 = vmatprep.subr.mxu0 0.0
      %2059 = vmatpush1.msra.mxu0 0.0
      %2060 = vmatprep.subr.mxu0 0.0
      %2061 = vmatpush1.msra.mxu0 0.0
      %2062 = vmatprep.subr.mxu0 0.0
      %2063 = vmatpush1.msra.mxu0 0.0
      %2064 = vmatprep.subr.mxu0 0.0
      %2065 = vmatpush1.msra.mxu0 0.0
      %2066 = vmatprep.subr.mxu0 0.0
      %2067 = vmatpush1.msra.mxu0 0.0
      %2068 = vmatprep.subr.mxu0 0.0
      %2069 = vmatpush1.msra.mxu0 0.0
      %2070 = vmatprep.subr.mxu0 0.0
      %2071 = vmatpush1.msra.mxu0 0.0
      %2072 = vmatprep.subr.mxu0 0.0
      %2073 = vmatpush1.msra.mxu0 0.0
      %2074 = vmatprep.subr.mxu0 0.0
      %2075 = vmatpush1.msra.mxu0 0.0
      %2076 = vmatprep.subr.mxu0 0.0
      %2077 = vmatpush1.msra.mxu0 0.0
      %2078 = vmatprep.subr.mxu0 0.0
      %2079 = vmatpush1.msra.mxu0 0.0
      %2080 = vmatprep.mubr.f32.mxu0 0.0
      %2081 = vmatmul.mubr.f32.gmra.mrb[0].mxu0 %v2014
      %v2082 = vpop.f32.mrb[0].mxu0
      %v2083 = vadd.f32 0.0, %v2082
      %v2084 = vpop.f32.mrb[0].mxu0
      %2085 = vdwg.mxu0
      %2086 = vmatprep.subr.mxu0 0.0
      %2087 = vmatpush1.msra.mxu0 %v874
      %2088 = vmatprep.subr.mxu0 0.0
      %2089 = vmatpush1.msra.mxu0 %v875
      %2090 = vmatprep.subr.mxu0 0.0
      %2091 = vmatpush1.msra.mxu0 %v964
      %2092 = vmatprep.subr.mxu0 0.0
      %2093 = vmatpush1.msra.mxu0 0.0
      %2094 = vmatprep.subr.mxu0 0.0
      %2095 = vmatpush1.msra.mxu0 0.0
      %2096 = vmatprep.subr.mxu0 0.0
      %2097 = vmatpush1.msra.mxu0 0.0
      %2098 = vmatprep.subr.mxu0 0.0
      %2099 = vmatpush1.msra.mxu0 0.0
      %2100 = vmatprep.subr.mxu0 0.0
      %2101 = vmatpush1.msra.mxu0 0.0
      %2102 = vmatprep.subr.mxu0 0.0
      %2103 = vmatpush1.msra.mxu0 0.0
      %2104 = vmatprep.subr.mxu0 0.0
      %2105 = vmatpush1.msra.mxu0 0.0
      %2106 = vmatprep.subr.mxu0 0.0
      %2107 = vmatpush1.msra.mxu0 0.0
      %2108 = vmatprep.subr.mxu0 0.0
      %2109 = vmatpush1.msra.mxu0 0.0
      %2110 = vmatprep.subr.mxu0 0.0
      %2111 = vmatpush1.msra.mxu0 0.0
      %2112 = vmatprep.subr.mxu0 0.0
      %2113 = vmatpush1.msra.mxu0 0.0
      %2114 = vmatprep.subr.mxu0 0.0
      %2115 = vmatpush1.msra.mxu0 0.0
      %2116 = vmatprep.subr.mxu0 0.0
      %2117 = vmatpush1.msra.mxu0 0.0
      %2118 = vmatprep.subr.mxu0 0.0
      %2119 = vmatpush1.msra.mxu0 0.0
      %2120 = vmatprep.subr.mxu0 0.0
      %2121 = vmatpush1.msra.mxu0 0.0
      %2122 = vmatprep.subr.mxu0 0.0
      %2123 = vmatpush1.msra.mxu0 0.0
      %2124 = vmatprep.subr.mxu0 0.0
      %2125 = vmatpush1.msra.mxu0 0.0
      %2126 = vmatprep.subr.mxu0 0.0
      %2127 = vmatpush1.msra.mxu0 0.0
      %2128 = vmatprep.subr.mxu0 0.0
      %2129 = vmatpush1.msra.mxu0 0.0
      %2130 = vmatprep.subr.mxu0 0.0
      %2131 = vmatpush1.msra.mxu0 0.0
      %2132 = vmatprep.subr.mxu0 0.0
      %2133 = vmatpush1.msra.mxu0 0.0
      %2134 = vmatprep.subr.mxu0 0.0
      %2135 = vmatpush1.msra.mxu0 0.0
      %2136 = vmatprep.subr.mxu0 0.0
      %2137 = vmatpush1.msra.mxu0 0.0
      %2138 = vmatprep.subr.mxu0 0.0
      %2139 = vmatpush1.msra.mxu0 0.0
      %2140 = vmatprep.subr.mxu0 0.0
      %2141 = vmatpush1.msra.mxu0 0.0
      %2142 = vmatprep.subr.mxu0 0.0
      %2143 = vmatpush1.msra.mxu0 0.0
      %2144 = vmatprep.subr.mxu0 0.0
      %2145 = vmatpush1.msra.mxu0 0.0
      %2146 = vmatprep.subr.mxu0 0.0
      %2147 = vmatpush1.msra.mxu0 0.0
      %2148 = vmatprep.subr.mxu0 0.0
      %2149 = vmatpush1.msra.mxu0 0.0
      %2150 = vmatprep.mubr.f32.mxu0 0.0
      %2151 = vmatmul.mubr.f32.gmra.mrb[0].mxu0 %v2014
      %v2152 = vpop.f32.mrb[0].mxu0
      %v2153 = vadd.f32 0.0, %v2152
      %v2154 = vpop.f32.mrb[0].mxu0
      %2155 = vdwg.mxu0
      %v2156 = vmax.f32 %v2083, %v2153
      %2158 = vrot.lane.b32.xlu0 %v2156, 80
      %v2159 = vpop.permute.xlu0 %2158
      %vm2161 = vcmask 736896
      %2162 = vst.msk [vmem:[%s343] sm:$0xff] %vm2161, %v2159
      %p2163 = scmp.lt.s32.totalorder %s21, 1
      %s2164 = scalar_select %p2163, %s21, 1
      %s2165 = smul.addr %s2164, 3
      %s2166 = smul.addr %s2165, 8
      %s2167 = scalar_lea.vmem %s8, %s2166
      %p2168 = scmp.lt.s32.totalorder %s21, 1
      %s2169 = scalar_select %p2168, %s21, 1
      %s2170 = smul.addr %s2169, 8
      %s2171 = scalar_lea.vmem %s9, %s2170
      // Predicated region
      $region53: #{_lambda_.5} parent=51 // pred_check
        %p2172 = pneg %p212
      $region54: #{_lambda_.5} parent=51 // pred_check_branch
        %2174 = sbr.rel (%p2172) target = $region56
      $region55: #{_lambda_.5} parent=51 // pred_region
        _
      $region56: #{_lambda_.5} parent=51 // pred_fallthru
        _
      // Predicated region
      $region57: #{_lambda_.5} parent=51 // pred_check
        %p2175 = pneg %p238
      $region58: #{_lambda_.5} parent=51 // pred_check_branch
        %2177 = sbr.rel (%p2175) target = $region60
      $region59: #{_lambda_.5} parent=51 // pred_region
        _
      $region60: #{_lambda_.5} parent=51 // pred_fallthru
        _
    $region52: #{_lambda_.5} parent=5 // pred_fallthru
      _
    %p2178 = scmp.le.s32.totalorder 2, %s16
    // Predicated region
    $region61: #{_lambda_.5} parent=5 // pred_check
      %p2179 = pneg %p2178
    $region62: #{_lambda_.5} parent=5 // pred_check_branch
      %2181 = sbr.rel (%p2179) target = $region64
    $region63: #{_lambda_.5} parent=5 // pred_region
      %s2182 = ssub.s32 %s16, 2
      // Predicated region
      $region65: #{_lambda_.5} parent=63 // pred_check
        %p2183 = pneg %p218
      $region66: #{_lambda_.5} parent=63 // pred_check_branch
        %2185 = sbr.rel (%p2183) target = $region68
      $region67: #{_lambda_.5} parent=63 // pred_region
        %p2186 = scmp.lt.s32.totalorder %s22, 1
        %s2187 = scalar_select %p2186, %s22, 1
        %s2188 = smul.addr %s2187, 3
        %s2189 = smul.addr %s2188, 8
        %s2190 = scalar_lea.vmem %s8, %s2189
      $region68: #{_lambda_.5} parent=63 // pred_fallthru
        _
      // Predicated region
      $region69: #{_lambda_.5} parent=63 // pred_check
        %p2191 = pneg %p244
      $region70: #{_lambda_.5} parent=63 // pred_check_branch
        %2193 = sbr.rel (%p2191) target = $region72
      $region71: #{_lambda_.5} parent=63 // pred_region
        %p2194 = scmp.lt.s32.totalorder %s22, 1
        %s2195 = scalar_select %p2194, %s22, 1
        %s2196 = smul.addr %s2195, 8
        %s2197 = scalar_lea.vmem %s9, %s2196
      $region72: #{_lambda_.5} parent=63 // pred_fallthru
        _
    $region64: #{_lambda_.5} parent=5 // pred_fallthru
      _
  $region6: #{_lambda_.5} parent=0 // loop_footer
    %s20 = sadd.s32 1, %s16
  $region7: #{_lambda_.5} parent=0 // loop_footer_branch
    %15 = sbr.rel target = $region3
  $region8: #{_lambda_.5} parent=0 // loop_exit
    _

// kernel: _lambda_.9
$region0: #{_lambda_.9}
  #allocation0 [shape = 'u32[]', space=smem, size = 0x4, offset = 0x4, fixed_abs, tag = 'smem constant byte address 0x4 - core index']
  #allocation1 [shape = 'u32[144,128]{1,0:T(1,128)}', space=vmem, size = 0x12000, scoped, tag = 'internal scratch']
  #allocation2 [shape = 'f32[8,384]{1,0:T(8,128)}', space=vmem, size = 0x3000, scoped, tag = 'scratch operand']
  #allocation3 [shape = 'f32[144,384]{1,0:T(8,128)}', space=vmem, size = 0x36000, scoped, tag = 'scratch operand']
  %s0 = inlined_call_operand.vmem [shape: f32[2,8,128], index: 0, kind: input, shape index: {}]
  %s1 = inlined_call_operand.vmem [shape: f32[2,8,384], index: 1, kind: input, shape index: {}]
  %s2 = inlined_call_operand.vmem [shape: f32[10,18], index: 2, kind: input, shape index: {}]
  %s3 = inlined_call_operand.vmem [shape: bf16[8,144], index: 3, kind: input, shape index: {}]
  %s4 = inlined_call_operand.vmem [shape: f32[8,1], index: 4, kind: input, shape index: {}]
  %s5 = inlined_call_operand.vmem [shape: bf16[8,72], index: 5, kind: input, shape index: {}]
  %s6 = inlined_call_operand.vmem [shape: f32[8,1], index: 6, kind: input, shape index: {}]
  %s7 = inlined_call_operand.vmem [shape: bf16[3,8], index: 7, kind: input, shape index: {}]
  %s8 = inlined_call_operand.vmem [shape: f32[3,1], index: 8, kind: input, shape index: {}]
  %s9 = inlined_call_operand.vmem [shape: f32[1,384], index: 9, kind: input, shape index: {}]
  %s10 = inlined_call_operand.vmem [shape: f32[2,3,384], index: 10, kind: output, shape index: {}]
  %s11 = sld [smem:[#allocation0]]
  $region73: #{_lambda_.9} parent=0
    _
  %s13 = ssub.s32 1, %s11
  %s14 = scalar_select 0, %s13, %s11
  loop: start=0, step=1, limit=4
  $region2: #{_lambda_.9} parent=0 // loop_pre_header
    _
  $region3: #{_lambda_.9} parent=0 // loop_header
    %s16 = sphi 0, %s20
    %p17 = scmp.ge.s32.totalorder %s16, 4
    %s26 = sphi 0, %s28
    %s29 = sphi 0, %s26
    %s30 = sphi 0, %s29
    %s46 = sphi 0, %s30
    %s52 = sphi 0, %s54
    %s55 = sphi 0, %s52
    %s56 = sphi 0, %s55
    %s72 = sphi 0, %s56
    %s76 = sphi 0, %s76
    %s78 = sphi 0, %s76
    %s79 = sphi 0, %s78
    %s93 = sphi 0, %s79
    %s97 = sphi 0, %s97
    %s99 = sphi 0, %s97
    %s100 = sphi 0, %s99
    %s114 = sphi 0, %s100
    %s118 = sphi 0, %s118
    %s120 = sphi 0, %s118
    %s121 = sphi 0, %s120
    %s135 = sphi 0, %s121
    %s139 = sphi 0, %s139
    %s141 = sphi 0, %s139
    %s142 = sphi 0, %s141
    %s156 = sphi 0, %s142
    %s160 = sphi 0, %s160
    %s162 = sphi 0, %s160
    %s163 = sphi 0, %s162
    %s177 = sphi 0, %s163
    %s181 = sphi 0, %s181
    %s183 = sphi 0, %s181
    %s184 = sphi 0, %s183
    %s198 = sphi 0, %s184
    %s202 = sphi 0, %s202
    %s204 = sphi 0, %s202
    %s205 = sphi 0, %s204
    %s219 = sphi 0, %s205
    %s223 = sphi 0, %s223
    %s225 = sphi 0, %s223
    %s226 = sphi 0, %s225
    %s240 = sphi 0, %s226
    %s246 = sphi 0, %s248
    %s249 = sphi 0, %s246
    %s250 = sphi 0, %s249
    %s266 = sphi 0, %s250
  $region4: #{_lambda_.9} parent=0 // loop_header_branch
    %19 = sbr.rel (%p17) target = $region8
  $region5: #{_lambda_.9} parent=0 // loop_body
    %s21 = ssub.s32 %s16, 1
    %s22 = ssub.s32 %s16, 2
    %s23 = sadd.s32 %s16, 1
    %s24 = ssub.s32 %s16, %s23
    %p25 = scmp.eq.s32.totalorder %s24, 0
    %s27 = sadd.s32 %s26, 1
    %s28 = scalar_select %p25, %s26, %s27
    %p31 = pneg %p25
    %p32 = scmp.eq.s32.totalorder %s16, 1
    %p33 = por %p31, %p32
    %p34 = scmp.ne.s32.totalorder %s26, %s29
    %p35 = scmp.eq.s32.totalorder %s16, 0
    %p36 = por %p34, %p35
    %p37 = scmp.ne.s32.totalorder %s26, %s29
    %p38 = scmp.eq.s32.totalorder %s21, 1
    %p39 = por %p37, %p38
    %p40 = scmp.ne.s32.totalorder %s29, %s30
    %p41 = scmp.eq.s32.totalorder %s21, 0
    %p42 = por %p40, %p41
    %p43 = scmp.ne.s32.totalorder %s29, %s30
    %p44 = scmp.eq.s32.totalorder %s22, 1
    %p45 = por %p43, %p44
    %p47 = scmp.ne.s32.totalorder %s30, %s46
    %p48 = scmp.eq.s32.totalorder %s22, 0
    %p49 = por %p47, %p48
    %s50 = ssub.s32 %s16, %s23
    %p51 = scmp.eq.s32.totalorder %s50, 0
    %s53 = sadd.s32 %s52, 1
    %s54 = scalar_select %p51, %s52, %s53
    %p57 = pneg %p51
    %p58 = scmp.eq.s32.totalorder %s16, 1
    %p59 = por %p57, %p58
    %p60 = scmp.ne.s32.totalorder %s52, %s55
    %p61 = scmp.eq.s32.totalorder %s16, 0
    %p62 = por %p60, %p61
    %p63 = scmp.ne.s32.totalorder %s52, %s55
    %p64 = scmp.eq.s32.totalorder %s21, 1
    %p65 = por %p63, %p64
    %p66 = scmp.ne.s32.totalorder %s55, %s56
    %p67 = scmp.eq.s32.totalorder %s21, 0
    %p68 = por %p66, %p67
    %p69 = scmp.ne.s32.totalorder %s55, %s56
    %p70 = scmp.eq.s32.totalorder %s22, 1
    %p71 = por %p69, %p70
    %p73 = scmp.ne.s32.totalorder %s56, %s72
    %p74 = scmp.eq.s32.totalorder %s22, 0
    %p75 = por %p73, %p74
    %s77 = sadd.s32 %s76, 1
    %p80 = scmp.eq.s32.totalorder %s16, 1
    %p81 = scmp.ne.s32.totalorder %s76, %s78
    %p82 = scmp.eq.s32.totalorder %s16, 0
    %p83 = por %p81, %p82
    %p84 = scmp.ne.s32.totalorder %s76, %s78
    %p85 = scmp.eq.s32.totalorder %s21, 1
    %p86 = por %p84, %p85
    %p87 = scmp.ne.s32.totalorder %s78, %s79
    %p88 = scmp.eq.s32.totalorder %s21, 0
    %p89 = por %p87, %p88
    %p90 = scmp.ne.s32.totalorder %s78, %s79
    %p91 = scmp.eq.s32.totalorder %s22, 1
    %p92 = por %p90, %p91
    %p94 = scmp.ne.s32.totalorder %s79, %s93
    %p95 = scmp.eq.s32.totalorder %s22, 0
    %p96 = por %p94, %p95
    %s98 = sadd.s32 %s97, 1
    %p101 = scmp.eq.s32.totalorder %s16, 1
    %p102 = scmp.ne.s32.totalorder %s97, %s99
    %p103 = scmp.eq.s32.totalorder %s16, 0
    %p104 = por %p102, %p103
    %p105 = scmp.ne.s32.totalorder %s97, %s99
    %p106 = scmp.eq.s32.totalorder %s21, 1
    %p107 = por %p105, %p106
    %p108 = scmp.ne.s32.totalorder %s99, %s100
    %p109 = scmp.eq.s32.totalorder %s21, 0
    %p110 = por %p108, %p109
    %p111 = scmp.ne.s32.totalorder %s99, %s100
    %p112 = scmp.eq.s32.totalorder %s22, 1
    %p113 = por %p111, %p112
    %p115 = scmp.ne.s32.totalorder %s100, %s114
    %p116 = scmp.eq.s32.totalorder %s22, 0
    %p117 = por %p115, %p116
    %s119 = sadd.s32 %s118, 1
    %p122 = scmp.eq.s32.totalorder %s16, 1
    %p123 = scmp.ne.s32.totalorder %s118, %s120
    %p124 = scmp.eq.s32.totalorder %s16, 0
    %p125 = por %p123, %p124
    %p126 = scmp.ne.s32.totalorder %s118, %s120
    %p127 = scmp.eq.s32.totalorder %s21, 1
    %p128 = por %p126, %p127
    %p129 = scmp.ne.s32.totalorder %s120, %s121
    %p130 = scmp.eq.s32.totalorder %s21, 0
    %p131 = por %p129, %p130
    %p132 = scmp.ne.s32.totalorder %s120, %s121
    %p133 = scmp.eq.s32.totalorder %s22, 1
    %p134 = por %p132, %p133
    %p136 = scmp.ne.s32.totalorder %s121, %s135
    %p137 = scmp.eq.s32.totalorder %s22, 0
    %p138 = por %p136, %p137
    %s140 = sadd.s32 %s139, 1
    %p143 = scmp.eq.s32.totalorder %s16, 1
    %p144 = scmp.ne.s32.totalorder %s139, %s141
    %p145 = scmp.eq.s32.totalorder %s16, 0
    %p146 = por %p144, %p145
    %p147 = scmp.ne.s32.totalorder %s139, %s141
    %p148 = scmp.eq.s32.totalorder %s21, 1
    %p149 = por %p147, %p148
    %p150 = scmp.ne.s32.totalorder %s141, %s142
    %p151 = scmp.eq.s32.totalorder %s21, 0
    %p152 = por %p150, %p151
    %p153 = scmp.ne.s32.totalorder %s141, %s142
    %p154 = scmp.eq.s32.totalorder %s22, 1
    %p155 = por %p153, %p154
    %p157 = scmp.ne.s32.totalorder %s142, %s156
    %p158 = scmp.eq.s32.totalorder %s22, 0
    %p159 = por %p157, %p158
    %s161 = sadd.s32 %s160, 1
    %p164 = scmp.eq.s32.totalorder %s16, 1
    %p165 = scmp.ne.s32.totalorder %s160, %s162
    %p166 = scmp.eq.s32.totalorder %s16, 0
    %p167 = por %p165, %p166
    %p168 = scmp.ne.s32.totalorder %s160, %s162
    %p169 = scmp.eq.s32.totalorder %s21, 1
    %p170 = por %p168, %p169
    %p171 = scmp.ne.s32.totalorder %s162, %s163
    %p172 = scmp.eq.s32.totalorder %s21, 0
    %p173 = por %p171, %p172
    %p174 = scmp.ne.s32.totalorder %s162, %s163
    %p175 = scmp.eq.s32.totalorder %s22, 1
    %p176 = por %p174, %p175
    %p178 = scmp.ne.s32.totalorder %s163, %s177
    %p179 = scmp.eq.s32.totalorder %s22, 0
    %p180 = por %p178, %p179
    %s182 = sadd.s32 %s181, 1
    %p185 = scmp.eq.s32.totalorder %s16, 1
    %p186 = scmp.ne.s32.totalorder %s181, %s183
    %p187 = scmp.eq.s32.totalorder %s16, 0
    %p188 = por %p186, %p187
    %p189 = scmp.ne.s32.totalorder %s181, %s183
    %p190 = scmp.eq.s32.totalorder %s21, 1
    %p191 = por %p189, %p190
    %p192 = scmp.ne.s32.totalorder %s183, %s184
    %p193 = scmp.eq.s32.totalorder %s21, 0
    %p194 = por %p192, %p193
    %p195 = scmp.ne.s32.totalorder %s183, %s184
    %p196 = scmp.eq.s32.totalorder %s22, 1
    %p197 = por %p195, %p196
    %p199 = scmp.ne.s32.totalorder %s184, %s198
    %p200 = scmp.eq.s32.totalorder %s22, 0
    %p201 = por %p199, %p200
    %s203 = sadd.s32 %s202, 1
    %p206 = scmp.eq.s32.totalorder %s16, 1
    %p207 = scmp.ne.s32.totalorder %s202, %s204
    %p208 = scmp.eq.s32.totalorder %s16, 0
    %p209 = por %p207, %p208
    %p210 = scmp.ne.s32.totalorder %s202, %s204
    %p211 = scmp.eq.s32.totalorder %s21, 1
    %p212 = por %p210, %p211
    %p213 = scmp.ne.s32.totalorder %s204, %s205
    %p214 = scmp.eq.s32.totalorder %s21, 0
    %p215 = por %p213, %p214
    %p216 = scmp.ne.s32.totalorder %s204, %s205
    %p217 = scmp.eq.s32.totalorder %s22, 1
    %p218 = por %p216, %p217
    %p220 = scmp.ne.s32.totalorder %s205, %s219
    %p221 = scmp.eq.s32.totalorder %s22, 0
    %p222 = por %p220, %p221
    %s224 = sadd.s32 %s223, 1
    %p227 = scmp.eq.s32.totalorder %s16, 1
    %p228 = scmp.ne.s32.totalorder %s223, %s225
    %p229 = scmp.eq.s32.totalorder %s16, 0
    %p230 = por %p228, %p229
    %p231 = scmp.ne.s32.totalorder %s223, %s225
    %p232 = scmp.eq.s32.totalorder %s21, 1
    %p233 = por %p231, %p232
    %p234 = scmp.ne.s32.totalorder %s225, %s226
    %p235 = scmp.eq.s32.totalorder %s21, 0
    %p236 = por %p234, %p235
    %p237 = scmp.ne.s32.totalorder %s225, %s226
    %p238 = scmp.eq.s32.totalorder %s22, 1
    %p239 = por %p237, %p238
    %p241 = scmp.ne.s32.totalorder %s226, %s240
    %p242 = scmp.eq.s32.totalorder %s22, 0
    %p243 = por %p241, %p242
    %s244 = ssub.s32 %s16, %s23
    %p245 = scmp.eq.s32.totalorder %s244, 0
    %s247 = sadd.s32 %s246, 1
    %s248 = scalar_select %p245, %s246, %s247
    %p251 = pneg %p245
    %p252 = scmp.eq.s32.totalorder %s16, 1
    %p253 = por %p251, %p252
    %p254 = scmp.ne.s32.totalorder %s246, %s249
    %p255 = scmp.eq.s32.totalorder %s16, 0
    %p256 = por %p254, %p255
    %p257 = scmp.ne.s32.totalorder %s246, %s249
    %p258 = scmp.eq.s32.totalorder %s21, 1
    %p259 = por %p257, %p258
    %p260 = scmp.ne.s32.totalorder %s249, %s250
    %p261 = scmp.eq.s32.totalorder %s21, 0
    %p262 = por %p260, %p261
    %p263 = scmp.ne.s32.totalorder %s249, %s250
    %p264 = scmp.eq.s32.totalorder %s22, 1
    %p265 = por %p263, %p264
    %p267 = scmp.ne.s32.totalorder %s250, %s266
    %p268 = scmp.eq.s32.totalorder %s22, 0
    %p269 = por %p267, %p268
    %p270 = scmp.le.s32.totalorder 1, %s16
    %p271 = scmp.lt.s32.totalorder %s16, 3
    %p272 = pnand %p270, %p271
    %p273 = pneg %p272
    // Predicated region
    $region9: #{_lambda_.9} parent=5 // pred_check
      _
    $region10: #{_lambda_.9} parent=5 // pred_check_branch
      %275 = sbr.rel (%p272) target = $region12
    $region11: #{_lambda_.9} parent=5 // pred_region
      %s276 = ssub.s32 %s16, 1
      // Predicated region
      $region13: #{_lambda_.9} parent=11 // pred_check
        %p277 = pneg %p89
      $region14: #{_lambda_.9} parent=11 // pred_check_branch
        %279 = sbr.rel (%p277) target = $region16
      $region15: #{_lambda_.9} parent=11 // pred_region
        _
      $region16: #{_lambda_.9} parent=11 // pred_fallthru
        _
      // Predicated region
      $region17: #{_lambda_.9} parent=11 // pred_check
        %p280 = pneg %p110
      $region18: #{_lambda_.9} parent=11 // pred_check_branch
        %282 = sbr.rel (%p280) target = $region20
      $region19: #{_lambda_.9} parent=11 // pred_region
        _
      $region20: #{_lambda_.9} parent=11 // pred_fallthru
        _
      // Predicated region
      $region21: #{_lambda_.9} parent=11 // pred_check
        %p283 = pneg %p131
      $region22: #{_lambda_.9} parent=11 // pred_check_branch
        %285 = sbr.rel (%p283) target = $region24
      $region23: #{_lambda_.9} parent=11 // pred_region
        _
      $region24: #{_lambda_.9} parent=11 // pred_fallthru
        _
      // Predicated region
      $region25: #{_lambda_.9} parent=11 // pred_check
        %p286 = pneg %p152
      $region26: #{_lambda_.9} parent=11 // pred_check_branch
        %288 = sbr.rel (%p286) target = $region28
      $region27: #{_lambda_.9} parent=11 // pred_region
        _
      $region28: #{_lambda_.9} parent=11 // pred_fallthru
        _
      // Predicated region
      $region29: #{_lambda_.9} parent=11 // pred_check
        %p289 = pneg %p173
      $region30: #{_lambda_.9} parent=11 // pred_check_branch
        %291 = sbr.rel (%p289) target = $region32
      $region31: #{_lambda_.9} parent=11 // pred_region
        _
      $region32: #{_lambda_.9} parent=11 // pred_fallthru
        _
      // Predicated region
      $region33: #{_lambda_.9} parent=11 // pred_check
        %p292 = pneg %p194
      $region34: #{_lambda_.9} parent=11 // pred_check_branch
        %294 = sbr.rel (%p292) target = $region36
      $region35: #{_lambda_.9} parent=11 // pred_region
        _
      $region36: #{_lambda_.9} parent=11 // pred_fallthru
        _
      // Predicated region
      $region37: #{_lambda_.9} parent=11 // pred_check
        %p295 = pneg %p215
      $region38: #{_lambda_.9} parent=11 // pred_check_branch
        %297 = sbr.rel (%p295) target = $region40
      $region39: #{_lambda_.9} parent=11 // pred_region
        _
      $region40: #{_lambda_.9} parent=11 // pred_fallthru
        _
      // Predicated region
      $region41: #{_lambda_.9} parent=11 // pred_check
        %p298 = pneg %p236
      $region42: #{_lambda_.9} parent=11 // pred_check_branch
        %300 = sbr.rel (%p298) target = $region44
      $region43: #{_lambda_.9} parent=11 // pred_region
        _
      $region44: #{_lambda_.9} parent=11 // pred_fallthru
        _
    $region12: #{_lambda_.9} parent=5 // pred_fallthru
      _
    %p301 = scmp.lt.s32.totalorder %s16, 2
    // Predicated region
    $region45: #{_lambda_.9} parent=5 // pred_check
      %p302 = pneg %p301
    $region46: #{_lambda_.9} parent=5 // pred_check_branch
      %304 = sbr.rel (%p302) target = $region48
    $region47: #{_lambda_.9} parent=5 // pred_region
      // Predicated region
      $region49: #{_lambda_.9} parent=47 // pred_check
        %p305 = pneg %p36
      $region50: #{_lambda_.9} parent=47 // pred_check_branch
        %307 = sbr.rel (%p305) target = $region52
      $region51: #{_lambda_.9} parent=47 // pred_region
        %p308 = scmp.lt.s32.totalorder %s16, 1
        %s309 = scalar_select %p308, %s16, 1
        %s310 = smul.addr %s309, 8
        %s311 = scalar_lea.vmem %s0, %s310
      $region52: #{_lambda_.9} parent=47 // pred_fallthru
        _
      // Predicated region
      $region53: #{_lambda_.9} parent=47 // pred_check
        %p312 = pneg %p62
      $region54: #{_lambda_.9} parent=47 // pred_check_branch
        %314 = sbr.rel (%p312) target = $region56
      $region55: #{_lambda_.9} parent=47 // pred_region
        %p315 = scmp.lt.s32.totalorder %s16, 1
        %s316 = scalar_select %p315, %s16, 1
        %s317 = smul.addr %s316, 3
        %s318 = smul.addr %s317, 8
        %s319 = scalar_lea.vmem %s1, %s318
      $region56: #{_lambda_.9} parent=47 // pred_fallthru
        _
    $region48: #{_lambda_.9} parent=5 // pred_fallthru
      _
    %p320 = scmp.le.s32.totalorder 1, %s16
    %p321 = scmp.lt.s32.totalorder %s16, 3
    %p322 = pnand %p320, %p321
    %p323 = pneg %p322
    // Predicated region
    $region57: #{_lambda_.9} parent=5 // pred_check
      _
    $region58: #{_lambda_.9} parent=5 // pred_check_branch
      %325 = sbr.rel (%p322) target = $region60
    $region59: #{_lambda_.9} parent=5 // pred_region
      %s326 = ssub.s32 %s16, 1
      %p327 = scmp.lt.s32.totalorder %s21, 1
      %s328 = scalar_select %p327, %s21, 1
      %s329 = smul.addr %s328, 8
      %s330 = scalar_lea.vmem %s0, %s329
      %p331 = pneg %p42
      %p332 = pneg %p39
      %p333 = scmp.lt.s32.totalorder %s21, 1
      %s334 = scalar_select %p333, %s21, 1
      %s335 = smul.addr %s334, 3
      %s336 = smul.addr %s335, 8
      %s337 = scalar_lea.vmem %s1, %s336
      %p338 = pneg %p68
      %p339 = pneg %p65
      %p340 = pneg %p89
      %p341 = pneg %p86
      %p342 = pneg %p110
      %p343 = pneg %p107
      %p344 = pneg %p131
      %p345 = pneg %p128
      %p346 = pneg %p152
      %p347 = pneg %p149
      %p348 = pneg %p173
      %p349 = pneg %p170
      %p350 = pneg %p194
      %p351 = pneg %p191
      %p352 = pneg %p215
      %p353 = pneg %p212
      %p354 = pneg %p236
      %p355 = pneg %p233
      %p356 = pneg %p262
      %p357 = pneg %p259
      %p358 = scmp.lt.s32.totalorder %s21, 1
      %s359 = scalar_select %p358, %s21, 1
      %s360 = smul.addr %s359, 3
      %s361 = smul.addr %s360, 4
      %s362 = scalar_lea.vmem %s10, %s361
      %p363 = scmp.lt.s32.totalorder %s21, 1
      %s364 = scalar_select %p363, %s21, 1
      %s365 = smul.addr %s364, 8
      %s366 = scalar_lea.vmem %s0, %s365
      %p367 = scmp.lt.s32.totalorder %s21, 1
      %s368 = scalar_select %p367, %s21, 1
      %s369 = smul.addr %s368, 3
      %s370 = smul.addr %s369, 8
      %s371 = scalar_lea.vmem %s1, %s370
      %p372 = scmp.lt.s32.totalorder %s21, 1
      %s373 = scalar_select %p372, %s21, 1
      %s374 = smul.addr %s373, 3
      %s375 = smul.addr %s374, 4
      %s376 = scalar_lea.vmem %s10, %s375
      %378 = vst [vmem:[#allocation2] sm:$0xff] 0.0
      %379 = vst [vmem:[#allocation2 + $0x8] sm:$0xff] 0.0
      %380 = vst [vmem:[#allocation2 + $0x10] sm:$0xff] 0.0
      %v381 = vld [vmem:[%s2] sm:$0xff]
      %v382 = vld [vmem:[%s2 + $0x8] sm:$0x3]
      %v383 = vld [vmem:[%s366] sm:$0xff]
      %385 = vrot.lane.b32.xlu0 %v383, 118
      %v386 = vpop.permute.xlu0 %385
      %vm387 = vcmask 80896
      %v388 = vsel %vm387, %v386, 0
      %vm390 = vcmask 1041408
      %v392 = vsel %vm390, %v382, 0
      %394 = vmatprep.subr.mxu0 0.0
      %395 = vmatpush1.msra.mxu0 %v381
      %396 = vmatprep.subr.mxu0 0.0
      %397 = vmatpush1.msra.mxu0 %v392
      %398 = vmatprep.subr.mxu0 0.0
      %399 = vmatpush1.msra.mxu0 0.0
      %400 = vmatprep.subr.mxu0 0.0
      %401 = vmatpush1.msra.mxu0 0.0
      %402 = vmatprep.subr.mxu0 0.0
      %403 = vmatpush1.msra.mxu0 0.0
      %404 = vmatprep.subr.mxu0 0.0
      %405 = vmatpush1.msra.mxu0 0.0
      %406 = vmatprep.subr.mxu0 0.0
      %407 = vmatpush1.msra.mxu0 0.0
      %408 = vmatprep.subr.mxu0 0.0
      %409 = vmatpush1.msra.mxu0 0.0
      %410 = vmatprep.subr.mxu0 0.0
      %411 = vmatpush1.msra.mxu0 0.0
      %412 = vmatprep.subr.mxu0 0.0
      %413 = vmatpush1.msra.mxu0 0.0
      %414 = vmatprep.subr.mxu0 0.0
      %415 = vmatpush1.msra.mxu0 0.0
      %416 = vmatprep.subr.mxu0 0.0
      %417 = vmatpush1.msra.mxu0 0.0
      %418 = vmatprep.subr.mxu0 0.0
      %419 = vmatpush1.msra.mxu0 0.0
      %420 = vmatprep.subr.mxu0 0.0
      %421 = vmatpush1.msra.mxu0 0.0
      %422 = vmatprep.subr.mxu0 0.0
      %423 = vmatpush1.msra.mxu0 0.0
      %424 = vmatprep.subr.mxu0 0.0
      %425 = vmatpush1.msra.mxu0 0.0
      %426 = vmatprep.subr.mxu0 0.0
      %427 = vmatpush1.msra.mxu0 0.0
      %428 = vmatprep.subr.mxu0 0.0
      %429 = vmatpush1.msra.mxu0 0.0
      %430 = vmatprep.subr.mxu0 0.0
      %431 = vmatpush1.msra.mxu0 0.0
      %432 = vmatprep.subr.mxu0 0.0
      %433 = vmatpush1.msra.mxu0 0.0
      %434 = vmatprep.subr.mxu0 0.0
      %435 = vmatpush1.msra.mxu0 0.0
      %436 = vmatprep.subr.mxu0 0.0
      %437 = vmatpush1.msra.mxu0 0.0
      %438 = vmatprep.subr.mxu0 0.0
      %439 = vmatpush1.msra.mxu0 0.0
      %440 = vmatprep.subr.mxu0 0.0
      %441 = vmatpush1.msra.mxu0 0.0
      %442 = vmatprep.subr.mxu0 0.0
      %443 = vmatpush1.msra.mxu0 0.0
      %444 = vmatprep.subr.mxu0 0.0
      %445 = vmatpush1.msra.mxu0 0.0
      %446 = vmatprep.subr.mxu0 0.0
      %447 = vmatpush1.msra.mxu0 0.0
      %448 = vmatprep.subr.mxu0 0.0
      %449 = vmatpush1.msra.mxu0 0.0
      %450 = vmatprep.subr.mxu0 0.0
      %451 = vmatpush1.msra.mxu0 0.0
      %452 = vmatprep.subr.mxu0 0.0
      %453 = vmatpush1.msra.mxu0 0.0
      %454 = vmatprep.subr.mxu0 0.0
      %455 = vmatpush1.msra.mxu0 0.0
      %456 = vmatprep.subr.mxu0 0.0
      %457 = vmatpush1.msra.mxu0 0.0
      %458 = vmatprep.mubr.f32.mxu0 0.0
      %459 = vmatmul.mubr.f32.gmra.mrb[0].mxu0 %v388
      %v460 = vpop.f32.mrb[0].mxu0
      %v461 = vadd.f32 0.0, %v460
      %v462 = vpop.f32.mrb[0].mxu0
      %463 = vdwg.mxu0
      %465 = vrot.lane.b32.xlu0 %v461, 18
      %v466 = vpop.permute.xlu0 %465
      %vm468 = vcmask 294032
      %469 = vst.msk [vmem:[#allocation2] sm:$0xff] %vm468, %v466
      %470 = vrot.lane.b32.xlu0 %v461, 36
      %v471 = vpop.permute.xlu0 %470
      %vm473 = vcmask 441632
      %474 = vst.msk [vmem:[#allocation2] sm:$0xff] %vm473, %v471
      %v475 = vld [vmem:[%s366] sm:$0xff]
      %477 = vrot.lane.b32.xlu0 %v475, 108
      %v478 = vpop.permute.xlu0 %477
      %v479 = vsel %vm387, %v478, 0
      %481 = vmatprep.subr.mxu0 0.0
      %482 = vmatpush1.msra.mxu0 %v381
      %483 = vmatprep.subr.mxu0 0.0
      %484 = vmatpush1.msra.mxu0 %v392
      %485 = vmatprep.subr.mxu0 0.0
      %486 = vmatpush1.msra.mxu0 0.0
      %487 = vmatprep.subr.mxu0 0.0
      %488 = vmatpush1.msra.mxu0 0.0
      %489 = vmatprep.subr.mxu0 0.0
      %490 = vmatpush1.msra.mxu0 0.0
      %491 = vmatprep.subr.mxu0 0.0
      %492 = vmatpush1.msra.mxu0 0.0
      %493 = vmatprep.subr.mxu0 0.0
      %494 = vmatpush1.msra.mxu0 0.0
      %495 = vmatprep.subr.mxu0 0.0
      %496 = vmatpush1.msra.mxu0 0.0
      %497 = vmatprep.subr.mxu0 0.0
      %498 = vmatpush1.msra.mxu0 0.0
      %499 = vmatprep.subr.mxu0 0.0
      %500 = vmatpush1.msra.mxu0 0.0
      %501 = vmatprep.subr.mxu0 0.0
      %502 = vmatpush1.msra.mxu0 0.0
      %503 = vmatprep.subr.mxu0 0.0
      %504 = vmatpush1.msra.mxu0 0.0
      %505 = vmatprep.subr.mxu0 0.0
      %506 = vmatpush1.msra.mxu0 0.0
      %507 = vmatprep.subr.mxu0 0.0
      %508 = vmatpush1.msra.mxu0 0.0
      %509 = vmatprep.subr.mxu0 0.0
      %510 = vmatpush1.msra.mxu0 0.0
      %511 = vmatprep.subr.mxu0 0.0
      %512 = vmatpush1.msra.mxu0 0.0
      %513 = vmatprep.subr.mxu0 0.0
      %514 = vmatpush1.msra.mxu0 0.0
      %515 = vmatprep.subr.mxu0 0.0
      %516 = vmatpush1.msra.mxu0 0.0
      %517 = vmatprep.subr.mxu0 0.0
      %518 = vmatpush1.msra.mxu0 0.0
      %519 = vmatprep.subr.mxu0 0.0
      %520 = vmatpush1.msra.mxu0 0.0
      %521 = vmatprep.subr.mxu0 0.0
      %522 = vmatpush1.msra.mxu0 0.0
      %523 = vmatprep.subr.mxu0 0.0
      %524 = vmatpush1.msra.mxu0 0.0
      %525 = vmatprep.subr.mxu0 0.0
      %526 = vmatpush1.msra.mxu0 0.0
      %527 = vmatprep.subr.mxu0 0.0
      %528 = vmatpush1.msra.mxu0 0.0
      %529 = vmatprep.subr.mxu0 0.0
      %530 = vmatpush1.msra.mxu0 0.0
      %531 = vmatprep.subr.mxu0 0.0
      %532 = vmatpush1.msra.mxu0 0.0
      %533 = vmatprep.subr.mxu0 0.0
      %534 = vmatpush1.msra.mxu0 0.0
      %535 = vmatprep.subr.mxu0 0.0
      %536 = vmatpush1.msra.mxu0 0.0
      %537 = vmatprep.subr.mxu0 0.0
      %538 = vmatpush1.msra.mxu0 0.0
      %539 = vmatprep.subr.mxu0 0.0
      %540 = vmatpush1.msra.mxu0 0.0
      %541 = vmatprep.subr.mxu0 0.0
      %542 = vmatpush1.msra.mxu0 0.0
      %543 = vmatprep.subr.mxu0 0.0
      %544 = vmatpush1.msra.mxu0 0.0
      %545 = vmatprep.mubr.f32.mxu0 0.0
      %546 = vmatmul.mubr.f32.gmra.mrb[0].mxu0 %v479
      %v547 = vpop.f32.mrb[0].mxu0
      %v548 = vadd.f32 0.0, %v547
      %v549 = vpop.f32.mrb[0].mxu0
      %550 = vdwg.mxu0
      %552 = vrot.lane.b32.xlu0 %v548, 54
      %v553 = vpop.permute.xlu0 %552
      %vm555 = vcmask 589232
      %556 = vst.msk [vmem:[#allocation2] sm:$0xff] %vm555, %v553
      %557 = vrot.lane.b32.xlu0 %v548, 72
      %v558 = vpop.permute.xlu0 %557
      %vm560 = vcmask 736832
      %561 = vst.msk [vmem:[#allocation2] sm:$0xff] %vm560, %v558
      %v562 = vld [vmem:[%s366] sm:$0xff]
      %564 = vrot.lane.b32.xlu0 %v562, 98
      %v565 = vpop.permute.xlu0 %564
      %v566 = vsel %vm387, %v565, 0
      %568 = vmatprep.subr.mxu0 0.0
      %569 = vmatpush1.msra.mxu0 %v381
      %570 = vmatprep.subr.mxu0 0.0
      %571 = vmatpush1.msra.mxu0 %v392
      %572 = vmatprep.subr.mxu0 0.0
      %573 = vmatpush1.msra.mxu0 0.0
      %574 = vmatprep.subr.mxu0 0.0
      %575 = vmatpush1.msra.mxu0 0.0
      %576 = vmatprep.subr.mxu0 0.0
      %577 = vmatpush1.msra.mxu0 0.0
      %578 = vmatprep.subr.mxu0 0.0
      %579 = vmatpush1.msra.mxu0 0.0
      %580 = vmatprep.subr.mxu0 0.0
      %581 = vmatpush1.msra.mxu0 0.0
      %582 = vmatprep.subr.mxu0 0.0
      %583 = vmatpush1.msra.mxu0 0.0
      %584 = vmatprep.subr.mxu0 0.0
      %585 = vmatpush1.msra.mxu0 0.0
      %586 = vmatprep.subr.mxu0 0.0
      %587 = vmatpush1.msra.mxu0 0.0
      %588 = vmatprep.subr.mxu0 0.0
      %589 = vmatpush1.msra.mxu0 0.0
      %590 = vmatprep.subr.mxu0 0.0
      %591 = vmatpush1.msra.mxu0 0.0
      %592 = vmatprep.subr.mxu0 0.0
      %593 = vmatpush1.msra.mxu0 0.0
      %594 = vmatprep.subr.mxu0 0.0
      %595 = vmatpush1.msra.mxu0 0.0
      %596 = vmatprep.subr.mxu0 0.0
      %597 = vmatpush1.msra.mxu0 0.0
      %598 = vmatprep.subr.mxu0 0.0
      %599 = vmatpush1.msra.mxu0 0.0
      %600 = vmatprep.subr.mxu0 0.0
      %601 = vmatpush1.msra.mxu0 0.0
      %602 = vmatprep.subr.mxu0 0.0
      %603 = vmatpush1.msra.mxu0 0.0
      %604 = vmatprep.subr.mxu0 0.0
      %605 = vmatpush1.msra.mxu0 0.0
      %606 = vmatprep.subr.mxu0 0.0
      %607 = vmatpush1.msra.mxu0 0.0
      %608 = vmatprep.subr.mxu0 0.0
      %609 = vmatpush1.msra.mxu0 0.0
      %610 = vmatprep.subr.mxu0 0.0
      %611 = vmatpush1.msra.mxu0 0.0
      %612 = vmatprep.subr.mxu0 0.0
      %613 = vmatpush1.msra.mxu0 0.0
      %614 = vmatprep.subr.mxu0 0.0
      %615 = vmatpush1.msra.mxu0 0.0
      %616 = vmatprep.subr.mxu0 0.0
      %617 = vmatpush1.msra.mxu0 0.0
      %618 = vmatprep.subr.mxu0 0.0
      %619 = vmatpush1.msra.mxu0 0.0
      %620 = vmatprep.subr.mxu0 0.0
      %621 = vmatpush1.msra.mxu0 0.0
      %622 = vmatprep.subr.mxu0 0.0
      %623 = vmatpush1.msra.mxu0 0.0
      %624 = vmatprep.subr.mxu0 0.0
      %625 = vmatpush1.msra.mxu0 0.0
      %626 = vmatprep.subr.mxu0 0.0
      %627 = vmatpush1.msra.mxu0 0.0
      %628 = vmatprep.subr.mxu0 0.0
      %629 = vmatpush1.msra.mxu0 0.0
      %630 = vmatprep.subr.mxu0 0.0
      %631 = vmatpush1.msra.mxu0 0.0
      %632 = vmatprep.mubr.f32.mxu0 0.0
      %633 = vmatmul.mubr.f32.gmra.mrb[0].mxu0 %v566
      %v634 = vpop.f32.mrb[0].mxu0
      %v635 = vadd.f32 0.0, %v634
      %v636 = vpop.f32.mrb[0].mxu0
      %637 = vdwg.mxu0
      %639 = vrot.lane.b32.xlu0 %v635, 90
      %v640 = vpop.permute.xlu0 %639
      %vm642 = vcmask 884432
      %643 = vst.msk [vmem:[#allocation2] sm:$0xff] %vm642, %v640
      %644 = vrot.lane.b32.xlu0 %v635, 108
      %v645 = vpop.permute.xlu0 %644
      %vm647 = vcmask 1032032
      %648 = vst.msk [vmem:[#allocation2] sm:$0xff] %vm647, %v645
      %v649 = vld [vmem:[%s366] sm:$0xff]
      %651 = vrot.lane.b32.xlu0 %v649, 88
      %v652 = vpop.permute.xlu0 %651
      %v653 = vsel %vm387, %v652, 0
      %655 = vmatprep.subr.mxu0 0.0
      %656 = vmatpush1.msra.mxu0 %v381
      %657 = vmatprep.subr.mxu0 0.0
      %658 = vmatpush1.msra.mxu0 %v392
      %659 = vmatprep.subr.mxu0 0.0
      %660 = vmatpush1.msra.mxu0 0.0
      %661 = vmatprep.subr.mxu0 0.0
      %662 = vmatpush1.msra.mxu0 0.0
      %663 = vmatprep.subr.mxu0 0.0
      %664 = vmatpush1.msra.mxu0 0.0
      %665 = vmatprep.subr.mxu0 0.0
      %666 = vmatpush1.msra.mxu0 0.0
      %667 = vmatprep.subr.mxu0 0.0
      %668 = vmatpush1.msra.mxu0 0.0
      %669 = vmatprep.subr.mxu0 0.0
      %670 = vmatpush1.msra.mxu0 0.0
      %671 = vmatprep.subr.mxu0 0.0
      %672 = vmatpush1.msra.mxu0 0.0
      %673 = vmatprep.subr.mxu0 0.0
      %674 = vmatpush1.msra.mxu0 0.0
      %675 = vmatprep.subr.mxu0 0.0
      %676 = vmatpush1.msra.mxu0 0.0
      %677 = vmatprep.subr.mxu0 0.0
      %678 = vmatpush1.msra.mxu0 0.0
      %679 = vmatprep.subr.mxu0 0.0
      %680 = vmatpush1.msra.mxu0 0.0
      %681 = vmatprep.subr.mxu0 0.0
      %682 = vmatpush1.msra.mxu0 0.0
      %683 = vmatprep.subr.mxu0 0.0
      %684 = vmatpush1.msra.mxu0 0.0
      %685 = vmatprep.subr.mxu0 0.0
      %686 = vmatpush1.msra.mxu0 0.0
      %687 = vmatprep.subr.mxu0 0.0
      %688 = vmatpush1.msra.mxu0 0.0
      %689 = vmatprep.subr.mxu0 0.0
      %690 = vmatpush1.msra.mxu0 0.0
      %691 = vmatprep.subr.mxu0 0.0
      %692 = vmatpush1.msra.mxu0 0.0
      %693 = vmatprep.subr.mxu0 0.0
      %694 = vmatpush1.msra.mxu0 0.0
      %695 = vmatprep.subr.mxu0 0.0
      %696 = vmatpush1.msra.mxu0 0.0
      %697 = vmatprep.subr.mxu0 0.0
      %698 = vmatpush1.msra.mxu0 0.0
      %699 = vmatprep.subr.mxu0 0.0
      %700 = vmatpush1.msra.mxu0 0.0
      %701 = vmatprep.subr.mxu0 0.0
      %702 = vmatpush1.msra.mxu0 0.0
      %703 = vmatprep.subr.mxu0 0.0
      %704 = vmatpush1.msra.mxu0 0.0
      %705 = vmatprep.subr.mxu0 0.0
      %706 = vmatpush1.msra.mxu0 0.0
      %707 = vmatprep.subr.mxu0 0.0
      %708 = vmatpush1.msra.mxu0 0.0
      %709 = vmatprep.subr.mxu0 0.0
      %710 = vmatpush1.msra.mxu0 0.0
      %711 = vmatprep.subr.mxu0 0.0
      %712 = vmatpush1.msra.mxu0 0.0
      %713 = vmatprep.subr.mxu0 0.0
      %714 = vmatpush1.msra.mxu0 0.0
      %715 = vmatprep.subr.mxu0 0.0
      %716 = vmatpush1.msra.mxu0 0.0
      %717 = vmatprep.subr.mxu0 0.0
      %718 = vmatpush1.msra.mxu0 0.0
      %719 = vmatprep.mubr.f32.mxu0 0.0
      %720 = vmatmul.mubr.f32.gmra.mrb[0].mxu0 %v653
      %v721 = vpop.f32.mrb[0].mxu0
      %v722 = vadd.f32 0.0, %v721
      %v723 = vpop.f32.mrb[0].mxu0
      %724 = vdwg.mxu0
      %726 = vrot.lane.b32.xlu0 %v722, 126
      %v727 = vpop.permute.xlu0 %726
      %vm729 = vcmask 1048560
      %730 = vst.msk [vmem:[#allocation2] sm:$0xff] %vm729, %v727
      %vm731 = vcmask 130048
      %732 = vst.msk [vmem:[#allocation2 + $0x8] sm:$0xff] %vm731, %v727
      %733 = vrot.lane.b32.xlu0 %v722, 16
      %v734 = vpop.permute.xlu0 %733
      %vm736 = vcmask 277632
      %737 = vst.msk [vmem:[#allocation2 + $0x8] sm:$0xff] %vm736, %v734
      %v738 = vld [vmem:[%s366] sm:$0xff]
      %740 = vrot.lane.b32.xlu0 %v738, 78
      %v741 = vpop.permute.xlu0 %740
      %v742 = vsel %vm387, %v741, 0
      %744 = vmatprep.subr.mxu0 0.0
      %745 = vmatpush1.msra.mxu0 %v381
      %746 = vmatprep.subr.mxu0 0.0
      %747 = vmatpush1.msra.mxu0 %v392
      %748 = vmatprep.subr.mxu0 0.0
      %749 = vmatpush1.msra.mxu0 0.0
      %750 = vmatprep.subr.mxu0 0.0
      %751 = vmatpush1.msra.mxu0 0.0
      %752 = vmatprep.subr.mxu0 0.0
      %753 = vmatpush1.msra.mxu0 0.0
      %754 = vmatprep.subr.mxu0 0.0
      %755 = vmatpush1.msra.mxu0 0.0
      %756 = vmatprep.subr.mxu0 0.0
      %757 = vmatpush1.msra.mxu0 0.0
      %758 = vmatprep.subr.mxu0 0.0
      %759 = vmatpush1.msra.mxu0 0.0
      %760 = vmatprep.subr.mxu0 0.0
      %761 = vmatpush1.msra.mxu0 0.0
      %762 = vmatprep.subr.mxu0 0.0
      %763 = vmatpush1.msra.mxu0 0.0
      %764 = vmatprep.subr.mxu0 0.0
      %765 = vmatpush1.msra.mxu0 0.0
      %766 = vmatprep.subr.mxu0 0.0
      %767 = vmatpush1.msra.mxu0 0.0
      %768 = vmatprep.subr.mxu0 0.0
      %769 = vmatpush1.msra.mxu0 0.0
      %770 = vmatprep.subr.mxu0 0.0
      %771 = vmatpush1.msra.mxu0 0.0
      %772 = vmatprep.subr.mxu0 0.0
      %773 = vmatpush1.msra.mxu0 0.0
      %774 = vmatprep.subr.mxu0 0.0
      %775 = vmatpush1.msra.mxu0 0.0
      %776 = vmatprep.subr.mxu0 0.0
      %777 = vmatpush1.msra.mxu0 0.0
      %778 = vmatprep.subr.mxu0 0.0
      %779 = vmatpush1.msra.mxu0 0.0
      %780 = vmatprep.subr.mxu0 0.0
      %781 = vmatpush1.msra.mxu0 0.0
      %782 = vmatprep.subr.mxu0 0.0
      %783 = vmatpush1.msra.mxu0 0.0
      %784 = vmatprep.subr.mxu0 0.0
      %785 = vmatpush1.msra.mxu0 0.0
      %786 = vmatprep.subr.mxu0 0.0
      %787 = vmatpush1.msra.mxu0 0.0
      %788 = vmatprep.subr.mxu0 0.0
      %789 = vmatpush1.msra.mxu0 0.0
      %790 = vmatprep.subr.mxu0 0.0
      %791 = vmatpush1.msra.mxu0 0.0
      %792 = vmatprep.subr.mxu0 0.0
      %793 = vmatpush1.msra.mxu0 0.0
      %794 = vmatprep.subr.mxu0 0.0
      %795 = vmatpush1.msra.mxu0 0.0
      %796 = vmatprep.subr.mxu0 0.0
      %797 = vmatpush1.msra.mxu0 0.0
      %798 = vmatprep.subr.mxu0 0.0
      %799 = vmatpush1.msra.mxu0 0.0
      %800 = vmatprep.subr.mxu0 0.0
      %801 = vmatpush1.msra.mxu0 0.0
      %802 = vmatprep.subr.mxu0 0.0
      %803 = vmatpush1.msra.mxu0 0.0
      %804 = vmatprep.subr.mxu0 0.0
      %805 = vmatpush1.msra.mxu0 0.0
      %806 = vmatprep.subr.mxu0 0.0
      %807 = vmatpush1.msra.mxu0 0.0
      %808 = vmatprep.mubr.f32.mxu0 0.0
      %809 = vmatmul.mubr.f32.gmra.mrb[0].mxu0 %v742
      %v810 = vpop.f32.mrb[0].mxu0
      %v811 = vadd.f32 0.0, %v810
      %v812 = vpop.f32.mrb[0].mxu0
      %813 = vdwg.mxu0
      %815 = vrot.lane.b32.xlu0 %v811, 34
      %v816 = vpop.permute.xlu0 %815
      %vm818 = vcmask 425232
      %819 = vst.msk [vmem:[#allocation2 + $0x8] sm:$0xff] %vm818, %v816
      %820 = vrot.lane.b32.xlu0 %v811, 52
      %v821 = vpop.permute.xlu0 %820
      %vm823 = vcmask 572832
      %824 = vst.msk [vmem:[#allocation2 + $0x8] sm:$0xff] %vm823, %v821
      %v825 = vld [vmem:[%s366] sm:$0xff]
      %827 = vrot.lane.b32.xlu0 %v825, 68
      %v828 = vpop.permute.xlu0 %827
      %v829 = vsel %vm387, %v828, 0
      %831 = vmatprep.subr.mxu0 0.0
      %832 = vmatpush1.msra.mxu0 %v381
      %833 = vmatprep.subr.mxu0 0.0
      %834 = vmatpush1.msra.mxu0 %v392
      %835 = vmatprep.subr.mxu0 0.0
      %836 = vmatpush1.msra.mxu0 0.0
      %837 = vmatprep.subr.mxu0 0.0
      %838 = vmatpush1.msra.mxu0 0.0
      %839 = vmatprep.subr.mxu0 0.0
      %840 = vmatpush1.msra.mxu0 0.0
      %841 = vmatprep.subr.mxu0 0.0
      %842 = vmatpush1.msra.mxu0 0.0
      %843 = vmatprep.subr.mxu0 0.0
      %844 = vmatpush1.msra.mxu0 0.0
      %845 = vmatprep.subr.mxu0 0.0
      %846 = vmatpush1.msra.mxu0 0.0
      %847 = vmatprep.subr.mxu0 0.0
      %848 = vmatpush1.msra.mxu0 0.0
      %849 = vmatprep.subr.mxu0 0.0
      %850 = vmatpush1.msra.mxu0 0.0
      %851 = vmatprep.subr.mxu0 0.0
      %852 = vmatpush1.msra.mxu0 0.0
      %853 = vmatprep.subr.mxu0 0.0
      %854 = vmatpush1.msra.mxu0 0.0
      %855 = vmatprep.subr.mxu0 0.0
      %856 = vmatpush1.msra.mxu0 0.0
      %857 = vmatprep.subr.mxu0 0.0
      %858 = vmatpush1.msra.mxu0 0.0
      %859 = vmatprep.subr.mxu0 0.0
      %860 = vmatpush1.msra.mxu0 0.0
      %861 = vmatprep.subr.mxu0 0.0
      %862 = vmatpush1.msra.mxu0 0.0
      %863 = vmatprep.subr.mxu0 0.0
      %864 = vmatpush1.msra.mxu0 0.0
      %865 = vmatprep.subr.mxu0 0.0
      %866 = vmatpush1.msra.mxu0 0.0
      %867 = vmatprep.subr.mxu0 0.0
      %868 = vmatpush1.msra.mxu0 0.0
      %869 = vmatprep.subr.mxu0 0.0
      %870 = vmatpush1.msra.mxu0 0.0
      %871 = vmatprep.subr.mxu0 0.0
      %872 = vmatpush1.msra.mxu0 0.0
      %873 = vmatprep.subr.mxu0 0.0
      %874 = vmatpush1.msra.mxu0 0.0
      %875 = vmatprep.subr.mxu0 0.0
      %876 = vmatpush1.msra.mxu0 0.0
      %877 = vmatprep.subr.mxu0 0.0
      %878 = vmatpush1.msra.mxu0 0.0
      %879 = vmatprep.subr.mxu0 0.0
      %880 = vmatpush1.msra.mxu0 0.0
      %881 = vmatprep.subr.mxu0 0.0
      %882 = vmatpush1.msra.mxu0 0.0
      %883 = vmatprep.subr.mxu0 0.0
      %884 = vmatpush1.msra.mxu0 0.0
      %885 = vmatprep.subr.mxu0 0.0
      %886 = vmatpush1.msra.mxu0 0.0
      %887 = vmatprep.subr.mxu0 0.0
      %888 = vmatpush1.msra.mxu0 0.0
      %889 = vmatprep.subr.mxu0 0.0
      %890 = vmatpush1.msra.mxu0 0.0
      %891 = vmatprep.subr.mxu0 0.0
      %892 = vmatpush1.msra.mxu0 0.0
      %893 = vmatprep.subr.mxu0 0.0
      %894 = vmatpush1.msra.mxu0 0.0
      %895 = vmatprep.mubr.f32.mxu0 0.0
      %896 = vmatmul.mubr.f32.gmra.mrb[0].mxu0 %v829
      %v897 = vpop.f32.mrb[0].mxu0
      %v898 = vadd.f32 0.0, %v897
      %v899 = vpop.f32.mrb[0].mxu0
      %900 = vdwg.mxu0
      %902 = vrot.lane.b32.xlu0 %v898, 70
      %v903 = vpop.permute.xlu0 %902
      %vm905 = vcmask 720432
      %906 = vst.msk [vmem:[#allocation2 + $0x8] sm:$0xff] %vm905, %v903
      %907 = vrot.lane.b32.xlu0 %v898, 88
      %v908 = vpop.permute.xlu0 %907
      %vm910 = vcmask 868032
      %911 = vst.msk [vmem:[#allocation2 + $0x8] sm:$0xff] %vm910, %v908
      %v912 = vld [vmem:[%s366] sm:$0xff]
      %914 = vrot.lane.b32.xlu0 %v912, 58
      %v915 = vpop.permute.xlu0 %914
      %v916 = vsel %vm387, %v915, 0
      %918 = vmatprep.subr.mxu0 0.0
      %919 = vmatpush1.msra.mxu0 %v381
      %920 = vmatprep.subr.mxu0 0.0
      %921 = vmatpush1.msra.mxu0 %v392
      %922 = vmatprep.subr.mxu0 0.0
      %923 = vmatpush1.msra.mxu0 0.0
      %924 = vmatprep.subr.mxu0 0.0
      %925 = vmatpush1.msra.mxu0 0.0
      %926 = vmatprep.subr.mxu0 0.0
      %927 = vmatpush1.msra.mxu0 0.0
      %928 = vmatprep.subr.mxu0 0.0
      %929 = vmatpush1.msra.mxu0 0.0
      %930 = vmatprep.subr.mxu0 0.0
      %931 = vmatpush1.msra.mxu0 0.0
      %932 = vmatprep.subr.mxu0 0.0
      %933 = vmatpush1.msra.mxu0 0.0
      %934 = vmatprep.subr.mxu0 0.0
      %935 = vmatpush1.msra.mxu0 0.0
      %936 = vmatprep.subr.mxu0 0.0
      %937 = vmatpush1.msra.mxu0 0.0
      %938 = vmatprep.subr.mxu0 0.0
      %939 = vmatpush1.msra.mxu0 0.0
      %940 = vmatprep.subr.mxu0 0.0
      %941 = vmatpush1.msra.mxu0 0.0
      %942 = vmatprep.subr.mxu0 0.0
      %943 = vmatpush1.msra.mxu0 0.0
      %944 = vmatprep.subr.mxu0 0.0
      %945 = vmatpush1.msra.mxu0 0.0
      %946 = vmatprep.subr.mxu0 0.0
      %947 = vmatpush1.msra.mxu0 0.0
      %948 = vmatprep.subr.mxu0 0.0
      %949 = vmatpush1.msra.mxu0 0.0
      %950 = vmatprep.subr.mxu0 0.0
      %951 = vmatpush1.msra.mxu0 0.0
      %952 = vmatprep.subr.mxu0 0.0
      %953 = vmatpush1.msra.mxu0 0.0
      %954 = vmatprep.subr.mxu0 0.0
      %955 = vmatpush1.msra.mxu0 0.0
      %956 = vmatprep.subr.mxu0 0.0
      %957 = vmatpush1.msra.mxu0 0.0
      %958 = vmatprep.subr.mxu0 0.0
      %959 = vmatpush1.msra.mxu0 0.0
      %960 = vmatprep.subr.mxu0 0.0
      %961 = vmatpush1.msra.mxu0 0.0
      %962 = vmatprep.subr.mxu0 0.0
      %963 = vmatpush1.msra.mxu0 0.0
      %964 = vmatprep.subr.mxu0 0.0
      %965 = vmatpush1.msra.mxu0 0.0
      %966 = vmatprep.subr.mxu0 0.0
      %967 = vmatpush1.msra.mxu0 0.0
      %968 = vmatprep.subr.mxu0 0.0
      %969 = vmatpush1.msra.mxu0 0.0
      %970 = vmatprep.subr.mxu0 0.0
      %971 = vmatpush1.msra.mxu0 0.0
      %972 = vmatprep.subr.mxu0 0.0
      %973 = vmatpush1.msra.mxu0 0.0
      %974 = vmatprep.subr.mxu0 0.0
      %975 = vmatpush1.msra.mxu0 0.0
      %976 = vmatprep.subr.mxu0 0.0
      %977 = vmatpush1.msra.mxu0 0.0
      %978 = vmatprep.subr.mxu0 0.0
      %979 = vmatpush1.msra.mxu0 0.0
      %980 = vmatprep.subr.mxu0 0.0
      %981 = vmatpush1.msra.mxu0 0.0
      %982 = vmatprep.mubr.f32.mxu0 0.0
      %983 = vmatmul.mubr.f32.gmra.mrb[0].mxu0 %v916
      %v984 = vpop.f32.mrb[0].mxu0
      %v985 = vadd.f32 0.0, %v984
      %v986 = vpop.f32.mrb[0].mxu0
      %987 = vdwg.mxu0
      %989 = vrot.lane.b32.xlu0 %v985, 106
      %v990 = vpop.permute.xlu0 %989
      %vm992 = vcmask 1015632
      %993 = vst.msk [vmem:[#allocation2 + $0x8] sm:$0xff] %vm992, %v990
      %994 = vrot.lane.b32.xlu0 %v985, 124
      %v995 = vpop.permute.xlu0 %994
      %vm997 = vcmask 1048544
      %998 = vst.msk [vmem:[#allocation2 + $0x8] sm:$0xff] %vm997, %v995
      %vm999 = vcmask 113664
      %1000 = vst.msk [vmem:[#allocation2 + $0x10] sm:$0xff] %vm999, %v995
      %v1001 = vld [vmem:[%s366] sm:$0xff]
      %1003 = vrot.lane.b32.xlu0 %v1001, 48
      %v1004 = vpop.permute.xlu0 %1003
      %v1005 = vsel %vm387, %v1004, 0
      %1007 = vmatprep.subr.mxu0 0.0
      %1008 = vmatpush1.msra.mxu0 %v381
      %1009 = vmatprep.subr.mxu0 0.0
      %1010 = vmatpush1.msra.mxu0 %v392
      %1011 = vmatprep.subr.mxu0 0.0
      %1012 = vmatpush1.msra.mxu0 0.0
      %1013 = vmatprep.subr.mxu0 0.0
      %1014 = vmatpush1.msra.mxu0 0.0
      %1015 = vmatprep.subr.mxu0 0.0
      %1016 = vmatpush1.msra.mxu0 0.0
      %1017 = vmatprep.subr.mxu0 0.0
      %1018 = vmatpush1.msra.mxu0 0.0
      %1019 = vmatprep.subr.mxu0 0.0
      %1020 = vmatpush1.msra.mxu0 0.0
      %1021 = vmatprep.subr.mxu0 0.0
      %1022 = vmatpush1.msra.mxu0 0.0
      %1023 = vmatprep.subr.mxu0 0.0
      %1024 = vmatpush1.msra.mxu0 0.0
      %1025 = vmatprep.subr.mxu0 0.0
      %1026 = vmatpush1.msra.mxu0 0.0
      %1027 = vmatprep.subr.mxu0 0.0
      %1028 = vmatpush1.msra.mxu0 0.0
      %1029 = vmatprep.subr.mxu0 0.0
      %1030 = vmatpush1.msra.mxu0 0.0
      %1031 = vmatprep.subr.mxu0 0.0
      %1032 = vmatpush1.msra.mxu0 0.0
      %1033 = vmatprep.subr.mxu0 0.0
      %1034 = vmatpush1.msra.mxu0 0.0
      %1035 = vmatprep.subr.mxu0 0.0
      %1036 = vmatpush1.msra.mxu0 0.0
      %1037 = vmatprep.subr.mxu0 0.0
      %1038 = vmatpush1.msra.mxu0 0.0
      %1039 = vmatprep.subr.mxu0 0.0
      %1040 = vmatpush1.msra.mxu0 0.0
      %1041 = vmatprep.subr.mxu0 0.0
      %1042 = vmatpush1.msra.mxu0 0.0
      %1043 = vmatprep.subr.mxu0 0.0
      %1044 = vmatpush1.msra.mxu0 0.0
      %1045 = vmatprep.subr.mxu0 0.0
      %1046 = vmatpush1.msra.mxu0 0.0
      %1047 = vmatprep.subr.mxu0 0.0
      %1048 = vmatpush1.msra.mxu0 0.0
      %1049 = vmatprep.subr.mxu0 0.0
      %1050 = vmatpush1.msra.mxu0 0.0
      %1051 = vmatprep.subr.mxu0 0.0
      %1052 = vmatpush1.msra.mxu0 0.0
      %1053 = vmatprep.subr.mxu0 0.0
      %1054 = vmatpush1.msra.mxu0 0.0
      %1055 = vmatprep.subr.mxu0 0.0
      %1056 = vmatpush1.msra.mxu0 0.0
      %1057 = vmatprep.subr.mxu0 0.0
      %1058 = vmatpush1.msra.mxu0 0.0
      %1059 = vmatprep.subr.mxu0 0.0
      %1060 = vmatpush1.msra.mxu0 0.0
      %1061 = vmatprep.subr.mxu0 0.0
      %1062 = vmatpush1.msra.mxu0 0.0
      %1063 = vmatprep.subr.mxu0 0.0
      %1064 = vmatpush1.msra.mxu0 0.0
      %1065 = vmatprep.subr.mxu0 0.0
      %1066 = vmatpush1.msra.mxu0 0.0
      %1067 = vmatprep.subr.mxu0 0.0
      %1068 = vmatpush1.msra.mxu0 0.0
      %1069 = vmatprep.subr.mxu0 0.0
      %1070 = vmatpush1.msra.mxu0 0.0
      %1071 = vmatprep.mubr.f32.mxu0 0.0
      %1072 = vmatmul.mubr.f32.gmra.mrb[0].mxu0 %v1005
      %v1073 = vpop.f32.mrb[0].mxu0
      %v1074 = vadd.f32 0.0, %v1073
      %v1075 = vpop.f32.mrb[0].mxu0
      %1076 = vdwg.mxu0
      %1078 = vrot.lane.b32.xlu0 %v1074, 14
      %v1079 = vpop.permute.xlu0 %1078
      %vm1081 = vcmask 261232
      %1082 = vst.msk [vmem:[#allocation2 + $0x10] sm:$0xff] %vm1081, %v1079
      %1083 = vrot.lane.b32.xlu0 %v1074, 32
      %v1084 = vpop.permute.xlu0 %1083
      %vm1086 = vcmask 408832
      %1087 = vst.msk [vmem:[#allocation2 + $0x10] sm:$0xff] %vm1086, %v1084
      %v1088 = vld [vmem:[%s9] sm:$0x7]
      %v1089 = vld [vmem:[#allocation2] sm:$0xff]
      %v1090 = vld [vmem:[#allocation2 + $0x8] sm:$0xff]
      %v1091 = vld [vmem:[#allocation2 + $0x10] sm:$0xff]
      %v1092 = vld [vmem:[%s371] sm:$0xff]
      %v1093 = vld [vmem:[%s371 + $0x8] sm:$0xff]
      %v1094 = vld [vmem:[%s371 + $0x10] sm:$0xff]
      %1095 = vrot.lane.b32.xlu0 %v1089, 18
      %v1096 = vpop.permute.xlu0 %1095
      %1097 = vrot.lane.b32.xlu0 %v1090, 18
      %v1098 = vpop.permute.xlu0 %1097
      %1099 = vrot.lane.b32.xlu0 %v1091, 18
      %v1100 = vpop.permute.xlu0 %1099
      %v1101 = vlaneseq
      %v1102 = vand.u32 %v1101, 127
      %vm1103 = vcmp.lt.s32.totalorder %v1102, 18
      %v1104 = vsel %vm1103, %v1098, %v1100
      %v1105 = vsel %vm1103, %v1096, %v1098
      %v1106 = vsel %vm1103, %v1100, %v1096
      %1107 = vrot.lane.b32.xlu0 %v1089, 110
      %v1108 = vpop.permute.xlu0 %1107
      %1109 = vrot.lane.b32.xlu0 %v1090, 110
      %v1110 = vpop.permute.xlu0 %1109
      %1111 = vrot.lane.b32.xlu0 %v1091, 110
      %v1112 = vpop.permute.xlu0 %1111
      %vm1113 = vcmp.lt.s32.totalorder %v1102, 110
      %v1114 = vsel %vm1113, %v1110, %v1112
      %v1115 = vsel %vm1113, %v1108, %v1110
      %v1116 = vsel %vm1113, %v1112, %v1108
      %1117 = vrot.lane.b32.xlu0 %v1106, 1
      %v1118 = vpop.permute.xlu0 %1117
      %1119 = vrot.lane.b32.xlu0 %v1105, 1
      %v1120 = vpop.permute.xlu0 %1119
      %1121 = vrot.lane.b32.xlu0 %v1104, 1
      %v1122 = vpop.permute.xlu0 %1121
      %vm1123 = vcmp.lt.s32.totalorder %v1102, 1
      %v1124 = vsel %vm1123, %v1120, %v1122
      %v1125 = vsel %vm1123, %v1118, %v1120
      %v1126 = vsel %vm1123, %v1122, %v1118
      %1127 = vst [vmem:[#allocation3] sm:$0xff] %v1126
      %1128 = vst [vmem:[#allocation3 + $0x8] sm:$0xff] %v1125
      %1129 = vst [vmem:[#allocation3 + $0x10] sm:$0xff] %v1124
      %1130 = vst [vmem:[#allocation3 + $0x18] sm:$0xff] %v1106
      %1131 = vst [vmem:[#allocation3 + $0x20] sm:$0xff] %v1105
      %1132 = vst [vmem:[#allocation3 + $0x28] sm:$0xff] %v1104
      %1133 = vrot.lane.b32.xlu0 %v1106, 127
      %v1134 = vpop.permute.xlu0 %1133
      %1135 = vrot.lane.b32.xlu0 %v1105, 127
      %v1136 = vpop.permute.xlu0 %1135
      %1137 = vrot.lane.b32.xlu0 %v1104, 127
      %v1138 = vpop.permute.xlu0 %1137
      %vm1139 = vcmp.lt.s32.totalorder %v1102, 127
      %v1140 = vsel %vm1139, %v1136, %v1138
      %v1141 = vsel %vm1139, %v1134, %v1136
      %v1142 = vsel %vm1139, %v1138, %v1134
      %1143 = vst [vmem:[#allocation3 + $0x30] sm:$0xff] %v1141
      %1144 = vst [vmem:[#allocation3 + $0x38] sm:$0xff] %v1140
      %1145 = vst [vmem:[#allocation3 + $0x40] sm:$0xff] %v1142
      %1146 = vrot.lane.b32.xlu0 %v1089, 1
      %v1147 = vpop.permute.xlu0 %1146
      %1148 = vrot.lane.b32.xlu0 %v1090, 1
      %v1149 = vpop.permute.xlu0 %1148
      %1150 = vrot.lane.b32.xlu0 %v1091, 1
      %v1151 = vpop.permute.xlu0 %1150
      %v1152 = vsel %vm1123, %v1149, %v1151
      %v1153 = vsel %vm1123, %v1147, %v1149
      %v1154 = vsel %vm1123, %v1151, %v1147
      %1155 = vst [vmem:[#allocation3 + $0x48] sm:$0xff] %v1154
      %1156 = vst [vmem:[#allocation3 + $0x50] sm:$0xff] %v1153
      %1157 = vst [vmem:[#allocation3 + $0x58] sm:$0xff] %v1152
      %1158 = vst [vmem:[#allocation3 + $0x60] sm:$0xff] %v1089
      %1159 = vst [vmem:[#allocation3 + $0x68] sm:$0xff] %v1090
      %1160 = vst [vmem:[#allocation3 + $0x70] sm:$0xff] %v1091
      %1161 = vrot.lane.b32.xlu0 %v1089, 127
      %v1162 = vpop.permute.xlu0 %1161
      %1163 = vrot.lane.b32.xlu0 %v1090, 127
      %v1164 = vpop.permute.xlu0 %1163
      %1165 = vrot.lane.b32.xlu0 %v1091, 127
      %v1166 = vpop.permute.xlu0 %1165
      %v1167 = vsel %vm1139, %v1164, %v1166
      %v1168 = vsel %vm1139, %v1162, %v1164
      %v1169 = vsel %vm1139, %v1166, %v1162
      %1170 = vst [vmem:[#allocation3 + $0x78] sm:$0xff] %v1168
      %1171 = vst [vmem:[#allocation3 + $0x80] sm:$0xff] %v1167
      %1172 = vst [vmem:[#allocation3 + $0x88] sm:$0xff] %v1169
      %1173 = vrot.lane.b32.xlu0 %v1115, 1
      %v1174 = vpop.permute.xlu0 %1173
      %1175 = vrot.lane.b32.xlu0 %v1114, 1
      %v1176 = vpop.permute.xlu0 %1175
      %1177 = vrot.lane.b32.xlu0 %v1116, 1
      %v1178 = vpop.permute.xlu0 %1177
      %v1179 = vsel %vm1123, %v1176, %v1178
      %v1180 = vsel %vm1123, %v1174, %v1176
      %v1181 = vsel %vm1123, %v1178, %v1174
      %1182 = vst [vmem:[#allocation3 + $0x90] sm:$0xff] %v1181
      %1183 = vst [vmem:[#allocation3 + $0x98] sm:$0xff] %v1180
      %1184 = vst [vmem:[#allocation3 + $0xa0] sm:$0xff] %v1179
      %1185 = vst [vmem:[#allocation3 + $0xa8] sm:$0xff] %v1115
      %1186 = vst [vmem:[#allocation3 + $0xb0] sm:$0xff] %v1114
      %1187 = vst [vmem:[#allocation3 + $0xb8] sm:$0xff] %v1116
      %1188 = vrot.lane.b32.xlu0 %v1115, 127
      %v1189 = vpop.permute.xlu0 %1188
      %1190 = vrot.lane.b32.xlu0 %v1114, 127
      %v1191 = vpop.permute.xlu0 %1190
      %1192 = vrot.lane.b32.xlu0 %v1116, 127
      %v1193 = vpop.permute.xlu0 %1192
      %v1194 = vsel %vm1139, %v1191, %v1193
      %v1195 = vsel %vm1139, %v1189, %v1191
      %v1196 = vsel %vm1139, %v1193, %v1189
      %1197 = vst [vmem:[#allocation3 + $0xc0] sm:$0xff] %v1195
      %1198 = vst [vmem:[#allocation3 + $0xc8] sm:$0xff] %v1194
      %1199 = vst [vmem:[#allocation3 + $0xd0] sm:$0xff] %v1196
      %1200 = vrot.lane.b32.xlu0 %v1092, 18
      %v1201 = vpop.permute.xlu0 %1200
      %1202 = vrot.lane.b32.xlu0 %v1093, 18
      %v1203 = vpop.permute.xlu0 %1202
      %1204 = vrot.lane.b32.xlu0 %v1094, 18
      %v1205 = vpop.permute.xlu0 %1204
      %v1206 = vsel %vm1103, %v1203, %v1205
      %v1207 = vsel %vm1103, %v1201, %v1203
      %v1208 = vsel %vm1103, %v1205, %v1201
      %1209 = vrot.lane.b32.xlu0 %v1092, 110
      %v1210 = vpop.permute.xlu0 %1209
      %1211 = vrot.lane.b32.xlu0 %v1093, 110
      %v1212 = vpop.permute.xlu0 %1211
      %1213 = vrot.lane.b32.xlu0 %v1094, 110
      %v1214 = vpop.permute.xlu0 %1213
      %v1215 = vsel %vm1113, %v1212, %v1214
      %v1216 = vsel %vm1113, %v1210, %v1212
      %v1217 = vsel %vm1113, %v1214, %v1210
      %1218 = vrot.lane.b32.xlu0 %v1208, 1
      %v1219 = vpop.permute.xlu0 %1218
      %1220 = vrot.lane.b32.xlu0 %v1207, 1
      %v1221 = vpop.permute.xlu0 %1220
      %1222 = vrot.lane.b32.xlu0 %v1206, 1
      %v1223 = vpop.permute.xlu0 %1222
      %v1224 = vsel %vm1123, %v1221, %v1223
      %v1225 = vsel %vm1123, %v1219, %v1221
      %v1226 = vsel %vm1123, %v1223, %v1219
      %1227 = vst [vmem:[#allocation3 + $0xd8] sm:$0xff] %v1226
      %1228 = vst [vmem:[#allocation3 + $0xe0] sm:$0xff] %v1225
      %1229 = vst [vmem:[#allocation3 + $0xe8] sm:$0xff] %v1224
      %1230 = vst [vmem:[#allocation3 + $0xf0] sm:$0xff] %v1208
      %1231 = vst [vmem:[#allocation3 + $0xf8] sm:$0xff] %v1207
      %1232 = vst [vmem:[#allocation3 + $0x100] sm:$0xff] %v1206
      %1233 = vrot.lane.b32.xlu0 %v1208, 127
      %v1234 = vpop.permute.xlu0 %1233
      %1235 = vrot.lane.b32.xlu0 %v1207, 127
      %v1236 = vpop.permute.xlu0 %1235
      %1237 = vrot.lane.b32.xlu0 %v1206, 127
      %v1238 = vpop.permute.xlu0 %1237
      %v1239 = vsel %vm1139, %v1236, %v1238
      %v1240 = vsel %vm1139, %v1234, %v1236
      %v1241 = vsel %vm1139, %v1238, %v1234
      %1242 = vst [vmem:[#allocation3 + $0x108] sm:$0xff] %v1240
      %1243 = vst [vmem:[#allocation3 + $0x110] sm:$0xff] %v1239
      %1244 = vst [vmem:[#allocation3 + $0x118] sm:$0xff] %v1241
      %1245 = vrot.lane.b32.xlu0 %v1092, 1
      %v1246 = vpop.permute.xlu0 %1245
      %1247 = vrot.lane.b32.xlu0 %v1093, 1
      %v1248 = vpop.permute.xlu0 %1247
      %1249 = vrot.lane.b32.xlu0 %v1094, 1
      %v1250 = vpop.permute.xlu0 %1249
      %v1251 = vsel %vm1123, %v1248, %v1250
      %v1252 = vsel %vm1123, %v1246, %v1248
      %v1253 = vsel %vm1123, %v1250, %v1246
      %1254 = vst [vmem:[#allocation3 + $0x120] sm:$0xff] %v1253
      %1255 = vst [vmem:[#allocation3 + $0x128] sm:$0xff] %v1252
      %1256 = vst [vmem:[#allocation3 + $0x130] sm:$0xff] %v1251
      %1257 = vst [vmem:[#allocation3 + $0x138] sm:$0xff] %v1092
      %1258 = vst [vmem:[#allocation3 + $0x140] sm:$0xff] %v1093
      %1259 = vst [vmem:[#allocation3 + $0x148] sm:$0xff] %v1094
      %1260 = vrot.lane.b32.xlu0 %v1092, 127
      %v1261 = vpop.permute.xlu0 %1260
      %1262 = vrot.lane.b32.xlu0 %v1093, 127
      %v1263 = vpop.permute.xlu0 %1262
      %1264 = vrot.lane.b32.xlu0 %v1094, 127
      %v1265 = vpop.permute.xlu0 %1264
      %v1266 = vsel %vm1139, %v1263, %v1265
      %v1267 = vsel %vm1139, %v1261, %v1263
      %v1268 = vsel %vm1139, %v1265, %v1261
      %1269 = vst [vmem:[#allocation3 + $0x150] sm:$0xff] %v1267
      %1270 = vst [vmem:[#allocation3 + $0x158] sm:$0xff] %v1266
      %1271 = vst [vmem:[#allocation3 + $0x160] sm:$0xff] %v1268
      %1272 = vrot.lane.b32.xlu0 %v1216, 1
      %v1273 = vpop.permute.xlu0 %1272
      %1274 = vrot.lane.b32.xlu0 %v1215, 1
      %v1275 = vpop.permute.xlu0 %1274
      %1276 = vrot.lane.b32.xlu0 %v1217, 1
      %v1277 = vpop.permute.xlu0 %1276
      %v1278 = vsel %vm1123, %v1275, %v1277
      %v1279 = vsel %vm1123, %v1273, %v1275
      %v1280 = vsel %vm1123, %v1277, %v1273
      %1281 = vst [vmem:[#allocation3 + $0x168] sm:$0xff] %v1280
      %1282 = vst [vmem:[#allocation3 + $0x170] sm:$0xff] %v1279
      %1283 = vst [vmem:[#allocation3 + $0x178] sm:$0xff] %v1278
      %1284 = vst [vmem:[#allocation3 + $0x180] sm:$0xff] %v1216
      %1285 = vst [vmem:[#allocation3 + $0x188] sm:$0xff] %v1215
      %1286 = vst [vmem:[#allocation3 + $0x190] sm:$0xff] %v1217
      %1287 = vrot.lane.b32.xlu0 %v1216, 127
      %v1288 = vpop.permute.xlu0 %1287
      %1289 = vrot.lane.b32.xlu0 %v1215, 127
      %v1290 = vpop.permute.xlu0 %1289
      %1291 = vrot.lane.b32.xlu0 %v1217, 127
      %v1292 = vpop.permute.xlu0 %1291
      %v1293 = vsel %vm1139, %v1290, %v1292
      %v1294 = vsel %vm1139, %v1288, %v1290
      %v1295 = vsel %vm1139, %v1292, %v1288
      %1296 = vst [vmem:[#allocation3 + $0x198] sm:$0xff] %v1294
      %1297 = vst [vmem:[#allocation3 + $0x1a0] sm:$0xff] %v1293
      %1298 = vst [vmem:[#allocation3 + $0x1a8] sm:$0xff] %v1295
      %v1299 = vld [vmem:[%s3] sm:$0xff]
      %v1300 = vld [vmem:[#allocation3] sm:$0xff]
      %v1301 = vld [vmem:[#allocation3 + $0x8] sm:$0xff]
      %v1302 = vld [vmem:[#allocation3 + $0x10] sm:$0xff]
      %v1303 = vld [vmem:[#allocation3 + $0x18] sm:$0xff]
      %v1304 = vld [vmem:[#allocation3 + $0x20] sm:$0xff]
      %v1305 = vld [vmem:[#allocation3 + $0x28] sm:$0xff]
      %v1306 = vld [vmem:[#allocation3 + $0x30] sm:$0xff]
      %v1307 = vld [vmem:[#allocation3 + $0x38] sm:$0xff]
      %v1308 = vld [vmem:[#allocation3 + $0x40] sm:$0xff]
      %v1309 = vld [vmem:[#allocation3 + $0x48] sm:$0xff]
      %v1310 = vld [vmem:[#allocation3 + $0x50] sm:$0xff]
      %v1311 = vld [vmem:[#allocation3 + $0x58] sm:$0xff]
      %v1312 = vld [vmem:[#allocation3 + $0x60] sm:$0xff]
      %v1313 = vld [vmem:[#allocation3 + $0x68] sm:$0xff]
      %v1314 = vld [vmem:[#allocation3 + $0x70] sm:$0xff]
      %v1315 = vld [vmem:[#allocation3 + $0x78] sm:$0xff]
      %v1316 = vld [vmem:[#allocation3 + $0x80] sm:$0xff]
      %v1317 = vld [vmem:[#allocation3 + $0x88] sm:$0xff]
      %v1318 = vld [vmem:[#allocation3 + $0x90] sm:$0xff]
      %v1319 = vld [vmem:[#allocation3 + $0x98] sm:$0xff]
      %v1320 = vld [vmem:[#allocation3 + $0xa0] sm:$0xff]
      %v1321 = vld [vmem:[#allocation3 + $0xa8] sm:$0xff]
      %v1322 = vld [vmem:[#allocation3 + $0xb0] sm:$0xff]
      %v1323 = vld [vmem:[#allocation3 + $0xb8] sm:$0xff]
      %v1324 = vld [vmem:[#allocation3 + $0xc0] sm:$0xff]
      %v1325 = vld [vmem:[#allocation3 + $0xc8] sm:$0xff]
      %v1326 = vld [vmem:[#allocation3 + $0xd0] sm:$0xff]
      %v1327 = vld [vmem:[#allocation3 + $0xd8] sm:$0xff]
      %v1328 = vld [vmem:[#allocation3 + $0xe0] sm:$0xff]
      %v1329 = vld [vmem:[#allocation3 + $0xe8] sm:$0xff]
      %v1330 = vld [vmem:[#allocation3 + $0xf0] sm:$0xff]
      %v1331 = vld [vmem:[#allocation3 + $0xf8] sm:$0xff]
      %v1332 = vld [vmem:[#allocation3 + $0x100] sm:$0xff]
      %v1333 = vld [vmem:[#allocation3 + $0x108] sm:$0xff]
      %v1334 = vld [vmem:[#allocation3 + $0x110] sm:$0xff]
      %v1335 = vld [vmem:[#allocation3 + $0x118] sm:$0xff]
      %v1336 = vld [vmem:[#allocation3 + $0x120] sm:$0xff]
      %v1337 = vld [vmem:[#allocation3 + $0x128] sm:$0xff]
      %v1338 = vld [vmem:[#allocation3 + $0x130] sm:$0xff]
      %v1339 = vld [vmem:[#allocation3 + $0x138] sm:$0xff]
      %v1340 = vld [vmem:[#allocation3 + $0x140] sm:$0xff]
      %v1341 = vld [vmem:[#allocation3 + $0x148] sm:$0xff]
      %v1342 = vld [vmem:[#allocation3 + $0x150] sm:$0xff]
      %v1343 = vld [vmem:[#allocation3 + $0x158] sm:$0xff]
      %v1344 = vld [vmem:[#allocation3 + $0x160] sm:$0xff]
      %v1345 = vld [vmem:[#allocation3 + $0x168] sm:$0xff]
      %v1346 = vld [vmem:[#allocation3 + $0x170] sm:$0xff]
      %v1347 = vld [vmem:[#allocation3 + $0x178] sm:$0xff]
      %v1348 = vld [vmem:[#allocation3 + $0x180] sm:$0xff]
      %v1349 = vld [vmem:[#allocation3 + $0x188] sm:$0xff]
      %v1350 = vld [vmem:[#allocation3 + $0x190] sm:$0xff]
      %v1351 = vld [vmem:[#allocation3 + $0x198] sm:$0xff]
      %v1352 = vld [vmem:[#allocation3 + $0x1a0] sm:$0xff]
      %v1353 = vld [vmem:[#allocation3 + $0x1a8] sm:$0xff]
      %v1354 = vpack.c.bf16 %v1303, %v1300
      %v1355 = vpack.c.bf16 %v1304, %v1301
      %v1356 = vpack.c.bf16 %v1305, %v1302
      %v1357 = vpack.c.bf16 %v1309, %v1306
      %v1358 = vpack.c.bf16 %v1310, %v1307
      %v1359 = vpack.c.bf16 %v1311, %v1308
      %v1360 = vpack.c.bf16 %v1315, %v1312
      %v1361 = vpack.c.bf16 %v1316, %v1313
      %v1362 = vpack.c.bf16 %v1317, %v1314
      %v1363 = vpack.c.bf16 %v1321, %v1318
      %v1364 = vpack.c.bf16 %v1322, %v1319
      %v1365 = vpack.c.bf16 %v1323, %v1320
      %v1366 = vpack.c.bf16 %v1327, %v1324
      %v1367 = vpack.c.bf16 %v1328, %v1325
      %v1368 = vpack.c.bf16 %v1329, %v1326
      %v1369 = vpack.c.bf16 %v1333, %v1330
      %v1370 = vpack.c.bf16 %v1334, %v1331
      %v1371 = vpack.c.bf16 %v1335, %v1332
      %v1372 = vpack.c.bf16 %v1339, %v1336
      %v1373 = vpack.c.bf16 %v1340, %v1337
      %v1374 = vpack.c.bf16 %v1341, %v1338
      %v1375 = vpack.c.bf16 %v1345, %v1342
      %v1376 = vpack.c.bf16 %v1346, %v1343
      %v1377 = vpack.c.bf16 %v1347, %v1344
      %v1378 = vpack.c.bf16 %v1351, %v1348
      %v1379 = vpack.c.bf16 %v1352, %v1349
      %v1380 = vpack.c.bf16 %v1353, %v1350
      %v1381 = vld [vmem:[%s4] sm:$0xff]
      %1383 = vset.pattern.permute.xlu0 0
      %1384 = vperm.xlu0 %1383, %v1381
      %v1385 = vpop.permute.xlu0 %1384
      %v1388 = vunpack.c.l.b16 %v1299
      %v1389 = vunpack.c.h.b16 %v1299
      %v1390 = vpack.c.b16 %v1388, %v1388
      %v1391 = vpack.c.b16 %v1389, %v1389
      %v1394 = vsel %vm731, %v1391, 0
      %1396 = vmatprep.subr.bf16.mxu0 %v1355
      %1397 = vmatpush1.bf16.msra.mxu0 %v1354
      %1398 = vmatprep.subr.bf16.mxu0 %v1358
      %1399 = vmatpush1.bf16.msra.mxu0 %v1357
      %1400 = vmatprep.subr.bf16.mxu0 %v1361
      %1401 = vmatpush1.bf16.msra.mxu0 %v1360
      %1402 = vmatprep.subr.bf16.mxu0 %v1364
      %1403 = vmatpush1.bf16.msra.mxu0 %v1363
      %1404 = vmatprep.subr.bf16.mxu0 %v1367
      %1405 = vmatpush1.bf16.msra.mxu0 %v1366
      %1406 = vmatprep.subr.bf16.mxu0 %v1370
      %1407 = vmatpush1.bf16.msra.mxu0 %v1369
      %1408 = vmatprep.subr.bf16.mxu0 %v1373
      %1409 = vmatpush1.bf16.msra.mxu0 %v1372
      %1410 = vmatprep.subr.bf16.mxu0 %v1376
      %1411 = vmatpush1.bf16.msra.mxu0 %v1375
      %1412 = vmatprep.subr.bf16.mxu0 %v1379
      %1413 = vmatpush1.bf16.msra.mxu0 %v1378
      %1414 = vmatprep.subr.bf16.mxu0 0
      %1415 = vmatpush1.bf16.msra.mxu0 0
      %1416 = vmatprep.subr.bf16.mxu0 0
      %1417 = vmatpush1.bf16.msra.mxu0 0
      %1418 = vmatprep.subr.bf16.mxu0 0
      %1419 = vmatpush1.bf16.msra.mxu0 0
      %1420 = vmatprep.subr.bf16.mxu0 0
      %1421 = vmatpush1.bf16.msra.mxu0 0
      %1422 = vmatprep.subr.bf16.mxu0 0
      %1423 = vmatpush1.bf16.msra.mxu0 0
      %1424 = vmatprep.subr.bf16.mxu0 0
      %1425 = vmatpush1.bf16.msra.mxu0 0
      %1426 = vmatprep.subr.bf16.mxu0 0
      %1427 = vmatpush1.bf16.msra.mxu0 0
      %1428 = vmatprep.mubr.bf16.mxu0 %v1394
      %1429 = vmatmul.mubr.bf16.gmra.mrb[0].mxu0 %v1390
      %v1430 = vpop.f32.mrb[0].mxu0
      %v1431 = vadd.f32 %v1385, %v1430
      %v1432 = vpop.f32.mrb[0].mxu0
      %v1433 = vadd.f32 %v1385, %v1432
      %v1434 = vpop.f32.mrb[0].mxu0
      %v1435 = vpop.f32.mrb[0].mxu0
      %1436 = vdwg.mxu0
      %1437 = vmatprep.subr.bf16.mxu0 0
      %1438 = vmatpush1.bf16.msra.mxu0 %v1356
      %1439 = vmatprep.subr.bf16.mxu0 0
      %1440 = vmatpush1.bf16.msra.mxu0 %v1359
      %1441 = vmatprep.subr.bf16.mxu0 0
      %1442 = vmatpush1.bf16.msra.mxu0 %v1362
      %1443 = vmatprep.subr.bf16.mxu0 0
      %1444 = vmatpush1.bf16.msra.mxu0 %v1365
      %1445 = vmatprep.subr.bf16.mxu0 0
      %1446 = vmatpush1.bf16.msra.mxu0 %v1368
      %1447 = vmatprep.subr.bf16.mxu0 0
      %1448 = vmatpush1.bf16.msra.mxu0 %v1371
      %1449 = vmatprep.subr.bf16.mxu0 0
      %1450 = vmatpush1.bf16.msra.mxu0 %v1374
      %1451 = vmatprep.subr.bf16.mxu0 0
      %1452 = vmatpush1.bf16.msra.mxu0 %v1377
      %1453 = vmatprep.subr.bf16.mxu0 0
      %1454 = vmatpush1.bf16.msra.mxu0 %v1380
      %1455 = vmatprep.subr.bf16.mxu0 0
      %1456 = vmatpush1.bf16.msra.mxu0 0
      %1457 = vmatprep.subr.bf16.mxu0 0
      %1458 = vmatpush1.bf16.msra.mxu0 0
      %1459 = vmatprep.subr.bf16.mxu0 0
      %1460 = vmatpush1.bf16.msra.mxu0 0
      %1461 = vmatprep.subr.bf16.mxu0 0
      %1462 = vmatpush1.bf16.msra.mxu0 0
      %1463 = vmatprep.subr.bf16.mxu0 0
      %1464 = vmatpush1.bf16.msra.mxu0 0
      %1465 = vmatprep.subr.bf16.mxu0 0
      %1466 = vmatpush1.bf16.msra.mxu0 0
      %1467 = vmatprep.subr.bf16.mxu0 0
      %1468 = vmatpush1.bf16.msra.mxu0 0
      %1469 = vmatprep.mubr.bf16.mxu0 %v1394
      %1470 = vmatmul.mubr.bf16.gmra.mrb[0].mxu0 %v1390
      %v1471 = vpop.f32.mrb[0].mxu0
      %v1472 = vadd.f32 %v1385, %v1471
      %v1473 = vpop.f32.mrb[0].mxu0
      %v1474 = vpop.f32.mrb[0].mxu0
      %v1475 = vpop.f32.mrb[0].mxu0
      %1476 = vdwg.mxu0
      %v1477 = vmax.f32 %v1431, 0.0
      %v1478 = vmax.f32 %v1433, 0.0
      %v1479 = vmax.f32 %v1472, 0.0
      %v1481 = vlaneseq
      %v1482 = vshrl.u32 %v1481, 7
      %v1483 = vsub.s32 0, %v1482
      %v1484 = vrot.slane %v1088, %v1483
      %v1485 = vlaneseq
      %v1486 = vshrl.u32 %v1485, 7
      %v1487 = vsub.s32 1, %v1486
      %v1488 = vrot.slane %v1088, %v1487
      %v1489 = vlaneseq
      %v1490 = vshrl.u32 %v1489, 7
      %v1491 = vsub.s32 2, %v1490
      %v1492 = vrot.slane %v1088, %v1491
      %v1496 = vmul.f32 %v1477, %v1484
      %v1497 = vmul.f32 %v1478, %v1488
      %v1498 = vmul.f32 %v1479, %v1492
      %1499 = vrot.lane.b32.xlu0 %v1496, 18
      %v1500 = vpop.permute.xlu0 %1499
      %1501 = vrot.lane.b32.xlu0 %v1497, 18
      %v1502 = vpop.permute.xlu0 %1501
      %1503 = vrot.lane.b32.xlu0 %v1498, 18
      %v1504 = vpop.permute.xlu0 %1503
      %v1505 = vsel %vm1103, %v1502, %v1504
      %v1506 = vsel %vm1103, %v1500, %v1502
      %v1507 = vsel %vm1103, %v1504, %v1500
      %1508 = vrot.lane.b32.xlu0 %v1496, 110
      %v1509 = vpop.permute.xlu0 %1508
      %1510 = vrot.lane.b32.xlu0 %v1497, 110
      %v1511 = vpop.permute.xlu0 %1510
      %1512 = vrot.lane.b32.xlu0 %v1498, 110
      %v1513 = vpop.permute.xlu0 %1512
      %v1514 = vsel %vm1113, %v1511, %v1513
      %v1515 = vsel %vm1113, %v1509, %v1511
      %v1516 = vsel %vm1113, %v1513, %v1509
      %1517 = vrot.lane.b32.xlu0 %v1507, 1
      %v1518 = vpop.permute.xlu0 %1517
      %1519 = vrot.lane.b32.xlu0 %v1506, 1
      %v1520 = vpop.permute.xlu0 %1519
      %1521 = vrot.lane.b32.xlu0 %v1505, 1
      %v1522 = vpop.permute.xlu0 %1521
      %v1523 = vsel %vm1123, %v1520, %v1522
      %v1524 = vsel %vm1123, %v1518, %v1520
      %v1525 = vsel %vm1123, %v1522, %v1518
      %1526 = vst [vmem:[#allocation3] sm:$0xff] %v1525
      %1527 = vst [vmem:[#allocation3 + $0x8] sm:$0xff] %v1524
      %1528 = vst [vmem:[#allocation3 + $0x10] sm:$0xff] %v1523
      %1529 = vst [vmem:[#allocation3 + $0x18] sm:$0xff] %v1507
      %1530 = vst [vmem:[#allocation3 + $0x20] sm:$0xff] %v1506
      %1531 = vst [vmem:[#allocation3 + $0x28] sm:$0xff] %v1505
      %1532 = vrot.lane.b32.xlu0 %v1507, 127
      %v1533 = vpop.permute.xlu0 %1532
      %1534 = vrot.lane.b32.xlu0 %v1506, 127
      %v1535 = vpop.permute.xlu0 %1534
      %1536 = vrot.lane.b32.xlu0 %v1505, 127
      %v1537 = vpop.permute.xlu0 %1536
      %v1538 = vsel %vm1139, %v1535, %v1537
      %v1539 = vsel %vm1139, %v1533, %v1535
      %v1540 = vsel %vm1139, %v1537, %v1533
      %1541 = vst [vmem:[#allocation3 + $0x30] sm:$0xff] %v1539
      %1542 = vst [vmem:[#allocation3 + $0x38] sm:$0xff] %v1538
      %1543 = vst [vmem:[#allocation3 + $0x40] sm:$0xff] %v1540
      %1544 = vrot.lane.b32.xlu0 %v1496, 1
      %v1545 = vpop.permute.xlu0 %1544
      %1546 = vrot.lane.b32.xlu0 %v1497, 1
      %v1547 = vpop.permute.xlu0 %1546
      %1548 = vrot.lane.b32.xlu0 %v1498, 1
      %v1549 = vpop.permute.xlu0 %1548
      %v1550 = vsel %vm1123, %v1547, %v1549
      %v1551 = vsel %vm1123, %v1545, %v1547
      %v1552 = vsel %vm1123, %v1549, %v1545
      %1553 = vst [vmem:[#allocation3 + $0x48] sm:$0xff] %v1552
      %1554 = vst [vmem:[#allocation3 + $0x50] sm:$0xff] %v1551
      %1555 = vst [vmem:[#allocation3 + $0x58] sm:$0xff] %v1550
      %1556 = vst [vmem:[#allocation3 + $0x60] sm:$0xff] %v1496
      %1557 = vst [vmem:[#allocation3 + $0x68] sm:$0xff] %v1497
      %1558 = vst [vmem:[#allocation3 + $0x70] sm:$0xff] %v1498
      %1559 = vrot.lane.b32.xlu0 %v1496, 127
      %v1560 = vpop.permute.xlu0 %1559
      %1561 = vrot.lane.b32.xlu0 %v1497, 127
      %v1562 = vpop.permute.xlu0 %1561
      %1563 = vrot.lane.b32.xlu0 %v1498, 127
      %v1564 = vpop.permute.xlu0 %1563
      %v1565 = vsel %vm1139, %v1562, %v1564
      %v1566 = vsel %vm1139, %v1560, %v1562
      %v1567 = vsel %vm1139, %v1564, %v1560
      %1568 = vst [vmem:[#allocation3 + $0x78] sm:$0xff] %v1566
      %1569 = vst [vmem:[#allocation3 + $0x80] sm:$0xff] %v1565
      %1570 = vst [vmem:[#allocation3 + $0x88] sm:$0xff] %v1567
      %1571 = vrot.lane.b32.xlu0 %v1515, 1
      %v1572 = vpop.permute.xlu0 %1571
      %1573 = vrot.lane.b32.xlu0 %v1514, 1
      %v1574 = vpop.permute.xlu0 %1573
      %1575 = vrot.lane.b32.xlu0 %v1516, 1
      %v1576 = vpop.permute.xlu0 %1575
      %v1577 = vsel %vm1123, %v1574, %v1576
      %v1578 = vsel %vm1123, %v1572, %v1574
      %v1579 = vsel %vm1123, %v1576, %v1572
      %1580 = vst [vmem:[#allocation3 + $0x90] sm:$0xff] %v1579
      %1581 = vst [vmem:[#allocation3 + $0x98] sm:$0xff] %v1578
      %1582 = vst [vmem:[#allocation3 + $0xa0] sm:$0xff] %v1577
      %1583 = vst [vmem:[#allocation3 + $0xa8] sm:$0xff] %v1515
      %1584 = vst [vmem:[#allocation3 + $0xb0] sm:$0xff] %v1514
      %1585 = vst [vmem:[#allocation3 + $0xb8] sm:$0xff] %v1516
      %1586 = vrot.lane.b32.xlu0 %v1515, 127
      %v1587 = vpop.permute.xlu0 %1586
      %1588 = vrot.lane.b32.xlu0 %v1514, 127
      %v1589 = vpop.permute.xlu0 %1588
      %1590 = vrot.lane.b32.xlu0 %v1516, 127
      %v1591 = vpop.permute.xlu0 %1590
      %v1592 = vsel %vm1139, %v1589, %v1591
      %v1593 = vsel %vm1139, %v1587, %v1589
      %v1594 = vsel %vm1139, %v1591, %v1587
      %1595 = vst [vmem:[#allocation3 + $0xc0] sm:$0xff] %v1593
      %1596 = vst [vmem:[#allocation3 + $0xc8] sm:$0xff] %v1592
      %1597 = vst [vmem:[#allocation3 + $0xd0] sm:$0xff] %v1594
      %v1598 = vld [vmem:[%s5] sm:$0xf]
      %v1599 = vld [vmem:[#allocation3] sm:$0xff]
      %v1600 = vld [vmem:[#allocation3 + $0x8] sm:$0xff]
      %v1601 = vld [vmem:[#allocation3 + $0x10] sm:$0xff]
      %v1602 = vld [vmem:[#allocation3 + $0x18] sm:$0xff]
      %v1603 = vld [vmem:[#allocation3 + $0x20] sm:$0xff]
      %v1604 = vld [vmem:[#allocation3 + $0x28] sm:$0xff]
      %v1605 = vld [vmem:[#allocation3 + $0x30] sm:$0xff]
      %v1606 = vld [vmem:[#allocation3 + $0x38] sm:$0xff]
      %v1607 = vld [vmem:[#allocation3 + $0x40] sm:$0xff]
      %v1608 = vld [vmem:[#allocation3 + $0x48] sm:$0xff]
      %v1609 = vld [vmem:[#allocation3 + $0x50] sm:$0xff]
      %v1610 = vld [vmem:[#allocation3 + $0x58] sm:$0xff]
      %v1611 = vld [vmem:[#allocation3 + $0x60] sm:$0xff]
      %v1612 = vld [vmem:[#allocation3 + $0x68] sm:$0xff]
      %v1613 = vld [vmem:[#allocation3 + $0x70] sm:$0xff]
      %v1614 = vld [vmem:[#allocation3 + $0x78] sm:$0xff]
      %v1615 = vld [vmem:[#allocation3 + $0x80] sm:$0xff]
      %v1616 = vld [vmem:[#allocation3 + $0x88] sm:$0xff]
      %v1617 = vld [vmem:[#allocation3 + $0x90] sm:$0xff]
      %v1618 = vld [vmem:[#allocation3 + $0x98] sm:$0xff]
      %v1619 = vld [vmem:[#allocation3 + $0xa0] sm:$0xff]
      %v1620 = vld [vmem:[#allocation3 + $0xa8] sm:$0xff]
      %v1621 = vld [vmem:[#allocation3 + $0xb0] sm:$0xff]
      %v1622 = vld [vmem:[#allocation3 + $0xb8] sm:$0xff]
      %v1623 = vld [vmem:[#allocation3 + $0xc0] sm:$0xff]
      %v1624 = vld [vmem:[#allocation3 + $0xc8] sm:$0xff]
      %v1625 = vld [vmem:[#allocation3 + $0xd0] sm:$0xff]
      %v1626 = vpack.c.bf16 %v1602, %v1599
      %v1627 = vpack.c.bf16 %v1603, %v1600
      %v1628 = vpack.c.bf16 %v1604, %v1601
      %v1629 = vpack.c.bf16 %v1608, %v1605
      %v1630 = vpack.c.bf16 %v1609, %v1606
      %v1631 = vpack.c.bf16 %v1610, %v1607
      %v1632 = vpack.c.bf16 %v1614, %v1611
      %v1633 = vpack.c.bf16 %v1615, %v1612
      %v1634 = vpack.c.bf16 %v1616, %v1613
      %v1635 = vpack.c.bf16 %v1620, %v1617
      %v1636 = vpack.c.bf16 %v1621, %v1618
      %v1637 = vpack.c.bf16 %v1622, %v1619
      %v1638 = vpack.c.bf16 %v1623, %v1623
      %v1639 = vpack.c.bf16 %v1624, %v1624
      %v1640 = vpack.c.bf16 %v1625, %v1625
      %v1641 = vld [vmem:[%s6] sm:$0xff]
      %1643 = vset.pattern.permute.xlu0 0
      %1644 = vperm.xlu0 %1643, %v1641
      %v1645 = vpop.permute.xlu0 %1644
      %vm1647 = vcmask 588800
      %v1649 = vsel %vm1647, %v1598, 0
      %vm1651 = vcmask 1043456
      %v1653 = vsel %vm1651, %v1638, 0
      %v1656 = vsel %vm1651, %v1639, 0
      %v1659 = vsel %vm1651, %v1640, 0
      %1661 = vmatprep.subr.bf16.mxu0 %v1627
      %1662 = vmatpush1.bf16.msra.mxu0 %v1626
      %1663 = vmatprep.subr.bf16.mxu0 %v1630
      %1664 = vmatpush1.bf16.msra.mxu0 %v1629
      %1665 = vmatprep.subr.bf16.mxu0 %v1633
      %1666 = vmatpush1.bf16.msra.mxu0 %v1632
      %1667 = vmatprep.subr.bf16.mxu0 %v1636
      %1668 = vmatpush1.bf16.msra.mxu0 %v1635
      %1669 = vmatprep.subr.bf16.mxu0 %v1656
      %1670 = vmatpush1.bf16.msra.mxu0 %v1653
      %1671 = vmatprep.subr.bf16.mxu0 0
      %1672 = vmatpush1.bf16.msra.mxu0 0
      %1673 = vmatprep.subr.bf16.mxu0 0
      %1674 = vmatpush1.bf16.msra.mxu0 0
      %1675 = vmatprep.subr.bf16.mxu0 0
      %1676 = vmatpush1.bf16.msra.mxu0 0
      %1677 = vmatprep.subr.bf16.mxu0 0
      %1678 = vmatpush1.bf16.msra.mxu0 0
      %1679 = vmatprep.subr.bf16.mxu0 0
      %1680 = vmatpush1.bf16.msra.mxu0 0
      %1681 = vmatprep.subr.bf16.mxu0 0
      %1682 = vmatpush1.bf16.msra.mxu0 0
      %1683 = vmatprep.subr.bf16.mxu0 0
      %1684 = vmatpush1.bf16.msra.mxu0 0
      %1685 = vmatprep.subr.bf16.mxu0 0
      %1686 = vmatpush1.bf16.msra.mxu0 0
      %1687 = vmatprep.subr.bf16.mxu0 0
      %1688 = vmatpush1.bf16.msra.mxu0 0
      %1689 = vmatprep.subr.bf16.mxu0 0
      %1690 = vmatpush1.bf16.msra.mxu0 0
      %1691 = vmatprep.subr.bf16.mxu0 0
      %1692 = vmatpush1.bf16.msra.mxu0 0
      %1693 = vmatprep.mubr.bf16.mxu0 0
      %1694 = vmatmul.mubr.bf16.gmra.mrb[0].mxu0 %v1649
      %v1695 = vpop.f32.mrb[0].mxu0
      %v1696 = vadd.f32 %v1645, %v1695
      %v1697 = vpop.f32.mrb[0].mxu0
      %v1698 = vadd.f32 %v1645, %v1697
      %v1699 = vpop.f32.mrb[0].mxu0
      %v1700 = vpop.f32.mrb[0].mxu0
      %1701 = vdwg.mxu0
      %1702 = vmatprep.subr.bf16.mxu0 0
      %1703 = vmatpush1.bf16.msra.mxu0 %v1628
      %1704 = vmatprep.subr.bf16.mxu0 0
      %1705 = vmatpush1.bf16.msra.mxu0 %v1631
      %1706 = vmatprep.subr.bf16.mxu0 0
      %1707 = vmatpush1.bf16.msra.mxu0 %v1634
      %1708 = vmatprep.subr.bf16.mxu0 0
      %1709 = vmatpush1.bf16.msra.mxu0 %v1637
      %1710 = vmatprep.subr.bf16.mxu0 0
      %1711 = vmatpush1.bf16.msra.mxu0 %v1659
      %1712 = vmatprep.subr.bf16.mxu0 0
      %1713 = vmatpush1.bf16.msra.mxu0 0
      %1714 = vmatprep.subr.bf16.mxu0 0
      %1715 = vmatpush1.bf16.msra.mxu0 0
      %1716 = vmatprep.subr.bf16.mxu0 0
      %1717 = vmatpush1.bf16.msra.mxu0 0
      %1718 = vmatprep.subr.bf16.mxu0 0
      %1719 = vmatpush1.bf16.msra.mxu0 0
      %1720 = vmatprep.subr.bf16.mxu0 0
      %1721 = vmatpush1.bf16.msra.mxu0 0
      %1722 = vmatprep.subr.bf16.mxu0 0
      %1723 = vmatpush1.bf16.msra.mxu0 0
      %1724 = vmatprep.subr.bf16.mxu0 0
      %1725 = vmatpush1.bf16.msra.mxu0 0
      %1726 = vmatprep.subr.bf16.mxu0 0
      %1727 = vmatpush1.bf16.msra.mxu0 0
      %1728 = vmatprep.subr.bf16.mxu0 0
      %1729 = vmatpush1.bf16.msra.mxu0 0
      %1730 = vmatprep.subr.bf16.mxu0 0
      %1731 = vmatpush1.bf16.msra.mxu0 0
      %1732 = vmatprep.subr.bf16.mxu0 0
      %1733 = vmatpush1.bf16.msra.mxu0 0
      %1734 = vmatprep.mubr.bf16.mxu0 0
      %1735 = vmatmul.mubr.bf16.gmra.mrb[0].mxu0 %v1649
      %v1736 = vpop.f32.mrb[0].mxu0
      %v1737 = vadd.f32 %v1645, %v1736
      %v1738 = vpop.f32.mrb[0].mxu0
      %v1739 = vpop.f32.mrb[0].mxu0
      %v1740 = vpop.f32.mrb[0].mxu0
      %1741 = vdwg.mxu0
      %v1742 = vmax.f32 %v1696, 0.0
      %v1743 = vmax.f32 %v1698, 0.0
      %v1744 = vmax.f32 %v1737, 0.0
      %v1745 = vmul.f32 %v1742, %v1484
      %v1746 = vmul.f32 %v1743, %v1488
      %v1747 = vmul.f32 %v1744, %v1492
      %v1748 = vld [vmem:[%s7] sm:$0x3]
      %v1749 = vpack.c.bf16 %v1745, %v1745
      %v1750 = vpack.c.bf16 %v1746, %v1746
      %v1751 = vpack.c.bf16 %v1747, %v1747
      %v1752 = vld [vmem:[%s8] sm:$0x7]
      %1754 = vset.pattern.permute.xlu0 0
      %1755 = vperm.xlu0 %1754, %v1752
      %v1756 = vpop.permute.xlu0 %1755
      %vm1758 = vcmask 64512
      %v1760 = vsel %vm1758, %v1748, 0
      %v1763 = vsel %vm1651, %v1749, 0
      %v1766 = vsel %vm1651, %v1750, 0
      %v1769 = vsel %vm1651, %v1751, 0
      %1771 = vmatprep.subr.bf16.mxu0 %v1766
      %1772 = vmatpush1.bf16.msra.mxu0 %v1763
      %1773 = vmatprep.subr.bf16.mxu0 0
      %1774 = vmatpush1.bf16.msra.mxu0 0
      %1775 = vmatprep.subr.bf16.mxu0 0
      %1776 = vmatpush1.bf16.msra.mxu0 0
      %1777 = vmatprep.subr.bf16.mxu0 0
      %1778 = vmatpush1.bf16.msra.mxu0 0
      %1779 = vmatprep.subr.bf16.mxu0 0
      %1780 = vmatpush1.bf16.msra.mxu0 0
      %1781 = vmatprep.subr.bf16.mxu0 0
      %1782 = vmatpush1.bf16.msra.mxu0 0
      %1783 = vmatprep.subr.bf16.mxu0 0
      %1784 = vmatpush1.bf16.msra.mxu0 0
      %1785 = vmatprep.subr.bf16.mxu0 0
      %1786 = vmatpush1.bf16.msra.mxu0 0
      %1787 = vmatprep.subr.bf16.mxu0 0
      %1788 = vmatpush1.bf16.msra.mxu0 0
      %1789 = vmatprep.subr.bf16.mxu0 0
      %1790 = vmatpush1.bf16.msra.mxu0 0
      %1791 = vmatprep.subr.bf16.mxu0 0
      %1792 = vmatpush1.bf16.msra.mxu0 0
      %1793 = vmatprep.subr.bf16.mxu0 0
      %1794 = vmatpush1.bf16.msra.mxu0 0
      %1795 = vmatprep.subr.bf16.mxu0 0
      %1796 = vmatpush1.bf16.msra.mxu0 0
      %1797 = vmatprep.subr.bf16.mxu0 0
      %1798 = vmatpush1.bf16.msra.mxu0 0
      %1799 = vmatprep.subr.bf16.mxu0 0
      %1800 = vmatpush1.bf16.msra.mxu0 0
      %1801 = vmatprep.subr.bf16.mxu0 0
      %1802 = vmatpush1.bf16.msra.mxu0 0
      %1803 = vmatprep.mubr.bf16.mxu0 0
      %1804 = vmatmul.mubr.bf16.gmra.mrb[0].mxu0 %v1760
      %v1805 = vpop.f32.mrb[0].mxu0
      %v1806 = vadd.f32 %v1756, %v1805
      %v1807 = vpop.f32.mrb[0].mxu0
      %v1808 = vadd.f32 %v1756, %v1807
      %v1809 = vpop.f32.mrb[0].mxu0
      %v1810 = vpop.f32.mrb[0].mxu0
      %1811 = vdwg.mxu0
      %1812 = vmatprep.subr.bf16.mxu0 0
      %1813 = vmatpush1.bf16.msra.mxu0 %v1769
      %1814 = vmatprep.subr.bf16.mxu0 0
      %1815 = vmatpush1.bf16.msra.mxu0 0
      %1816 = vmatprep.subr.bf16.mxu0 0
      %1817 = vmatpush1.bf16.msra.mxu0 0
      %1818 = vmatprep.subr.bf16.mxu0 0
      %1819 = vmatpush1.bf16.msra.mxu0 0
      %1820 = vmatprep.subr.bf16.mxu0 0
      %1821 = vmatpush1.bf16.msra.mxu0 0
      %1822 = vmatprep.subr.bf16.mxu0 0
      %1823 = vmatpush1.bf16.msra.mxu0 0
      %1824 = vmatprep.subr.bf16.mxu0 0
      %1825 = vmatpush1.bf16.msra.mxu0 0
      %1826 = vmatprep.subr.bf16.mxu0 0
      %1827 = vmatpush1.bf16.msra.mxu0 0
      %1828 = vmatprep.subr.bf16.mxu0 0
      %1829 = vmatpush1.bf16.msra.mxu0 0
      %1830 = vmatprep.subr.bf16.mxu0 0
      %1831 = vmatpush1.bf16.msra.mxu0 0
      %1832 = vmatprep.subr.bf16.mxu0 0
      %1833 = vmatpush1.bf16.msra.mxu0 0
      %1834 = vmatprep.subr.bf16.mxu0 0
      %1835 = vmatpush1.bf16.msra.mxu0 0
      %1836 = vmatprep.subr.bf16.mxu0 0
      %1837 = vmatpush1.bf16.msra.mxu0 0
      %1838 = vmatprep.subr.bf16.mxu0 0
      %1839 = vmatpush1.bf16.msra.mxu0 0
      %1840 = vmatprep.subr.bf16.mxu0 0
      %1841 = vmatpush1.bf16.msra.mxu0 0
      %1842 = vmatprep.subr.bf16.mxu0 0
      %1843 = vmatpush1.bf16.msra.mxu0 0
      %1844 = vmatprep.mubr.bf16.mxu0 0
      %1845 = vmatmul.mubr.bf16.gmra.mrb[0].mxu0 %v1760
      %v1846 = vpop.f32.mrb[0].mxu0
      %v1847 = vadd.f32 %v1756, %v1846
      %v1848 = vpop.f32.mrb[0].mxu0
      %v1849 = vpop.f32.mrb[0].mxu0
      %v1850 = vpop.f32.mrb[0].mxu0
      %1851 = vdwg.mxu0
      %v1854 = vcombine.low %v1806, %v1808
      %1856 = vst [vmem:[%s376] sm:$0x77] %v1854
      %1857 = vst [vmem:[%s376 + $0x8] sm:$0x7] %v1847
      %p1858 = scmp.lt.s32.totalorder %s21, 1
      %s1859 = scalar_select %p1858, %s21, 1
      %s1860 = smul.addr %s1859, 3
      %s1861 = smul.addr %s1860, 4
      %s1862 = scalar_lea.vmem %s10, %s1861
      // Predicated region
      $region61: #{_lambda_.9} parent=59 // pred_check
        %p1863 = pneg %p259
      $region62: #{_lambda_.9} parent=59 // pred_check_branch
        %1865 = sbr.rel (%p1863) target = $region64
      $region63: #{_lambda_.9} parent=59 // pred_region
        _
      $region64: #{_lambda_.9} parent=59 // pred_fallthru
        _
    $region60: #{_lambda_.9} parent=5 // pred_fallthru
      _
    %p1866 = scmp.le.s32.totalorder 2, %s16
    // Predicated region
    $region65: #{_lambda_.9} parent=5 // pred_check
      %p1867 = pneg %p1866
    $region66: #{_lambda_.9} parent=5 // pred_check_branch
      %1869 = sbr.rel (%p1867) target = $region68
    $region67: #{_lambda_.9} parent=5 // pred_region
      %s1870 = ssub.s32 %s16, 2
      // Predicated region
      $region69: #{_lambda_.9} parent=67 // pred_check
        %p1871 = pneg %p265
      $region70: #{_lambda_.9} parent=67 // pred_check_branch
        %1873 = sbr.rel (%p1871) target = $region72
      $region71: #{_lambda_.9} parent=67 // pred_region
        %p1874 = scmp.lt.s32.totalorder %s22, 1
        %s1875 = scalar_select %p1874, %s22, 1
        %s1876 = smul.addr %s1875, 3
        %s1877 = smul.addr %s1876, 4
        %s1878 = scalar_lea.vmem %s10, %s1877
      $region72: #{_lambda_.9} parent=67 // pred_fallthru
        _
    $region68: #{_lambda_.9} parent=5 // pred_fallthru
      _
  $region6: #{_lambda_.9} parent=0 // loop_footer
    %s20 = sadd.s32 1, %s16
  $region7: #{_lambda_.9} parent=0 // loop_footer_branch
    %15 = sbr.rel target = $region3
  $region8: #{_lambda_.9} parent=0 // loop_exit
    _

</llo_original>
